<compile_context>
chip_gen: v7x
topology: tpu7x:2x2x1
jax: 0.10.0
libtpu: 0.0.40
codegen_flags: <defaults>
</compile_context>

<pallas_src>
import jax
import jax.numpy as jnp
from jax.experimental import pallas as pl
from jax.experimental.pallas import tpu as pltpu

BN_EPS = 1e-3  # matches nn.BatchNorm2d(1024, eps=0.001) in the PyTorch module


def _round_up(x, m):
    return (x + m - 1) // m * m


def _pick_tk(k1_pad, target=2048):
    """Largest multiple-of-128 divisor of k1_pad that is <= target (K-stream chunk)."""
    blocks = k1_pad // 128
    best = 1
    for d in range(1, blocks + 1):
        if blocks % d == 0 and d * 128 <= target:
            best = d
    return best * 128


def _tpu_generation():
    try:
        kind = jax.devices()[0].device_kind.lower()
    except Exception:
        return "unknown"
    if "v7" in kind:
        return "v7x"
    if "v6" in kind:
        return "v6e"
    if "v5 lite" in kind or "v5lite" in kind or "v5e" in kind:
        return "v5e"
    return "unknown"


# ---------------------- parameter folding / packing ------------------------ #
def fold_and_pack_params(params, num_classes):
    """Fold BN into conv weights, K-pad w1, fuse + lane-pad the heads, cast to bf16."""
    s1 = params["g1"] * jax.lax.rsqrt(params["v1"] + BN_EPS)          # [1, H]
    w1 = params["w1"] * s1                                             # [K1, H]
    b1 = ((params["b1"] - params["m1"]) * s1 + params["be1"]).astype(jnp.float32)

    # Zero-pad the K axis (depth*pool*pool) to a multiple of 128 so the streamed
    # activation loads and MXU K pushes are lane/sublane dense (zero rows add 0).
    k1 = w1.shape[0]
    k1_pad = _round_up(k1, 128)
    w1 = jnp.pad(w1, ((0, k1_pad - k1), (0, 0))).astype(jnp.bfloat16)

    s2 = params["g2"] * jax.lax.rsqrt(params["v2"] + BN_EPS)
    w2 = (params["w2"] * s2).astype(jnp.bfloat16)                      # [H, H]
    b2 = ((params["b2"] - params["m2"]) * s2 + params["be2"]).astype(jnp.float32)

    # fused head: [logits | bbox], padded to a multiple of 128 lanes
    wh = jnp.concatenate([params["wc"], params["wb"]], axis=1)         # [H, 5C]
    bh = jnp.concatenate([params["bc"], params["bb"]], axis=1)         # [1, 5C]
    head_pad = _round_up(5 * num_classes, 128)
    wh = jnp.pad(wh, ((0, 0), (0, head_pad - wh.shape[1]))).astype(jnp.bfloat16)
    bh = jnp.pad(bh, ((0, 0), (0, head_pad - bh.shape[1]))).astype(jnp.float32)

    # TODO(synk): optional per-output-channel int8 quantization of w2/wh for
    # v5e/v6e (MXU int path, ~2x throughput); deliberately NOT applied on v7x
    # (its MXU has no int path, only bf16/fp8).
    return {"w1": w1, "b1": b1, "w2": w2, "b2": b2, "wh": wh, "bh": bh}


# ------------------------------ Pallas kernel ------------------------------ #
def classifier_forward(pooled, packed, num_classes):
    """pooled: [num_rois, depth, pool, pool] -> (logits, probs, bbox)."""
    n = pooled.shape[0]
    k1 = pooled.shape[1] * pooled.shape[2] * pooled.shape[3]
    k1_pad, hidden = packed["w1"].shape
    head_pad = packed["wh"].shape[1]                  # pad(5*num_classes, 128)
    probs_pad = _round_up(num_classes, 128)           # <= head_pad always

    # Generation-specific ROI tile and VMEM cap.
    gen = _tpu_generation()
    if gen == "v6e":
        tile_n_target, vmem_cap = 256, 112 << 20      # 128 MiB VMEM: use it
    elif gen == "v7x":
        tile_n_target, vmem_cap = 256, 52 << 20       # 64 MiB VMEM: leave headroom
    elif gen == "v5e":
        tile_n_target, vmem_cap = 128, 100 << 20      # native 128x128 MXU
    else:
        tile_n_target, vmem_cap = 128, 48 << 20       # conservative default

    tile_n = min(tile_n_target, _round_up(n, 16))     # bf16 sublane-dense ROI tile
    n_pad = _round_up(n, tile_n)
    tk = _pick_tk(k1_pad)                             # K-stream chunk (multiple of 128)
    grid = (n_pad // tile_n, k1_pad // tk)            # reduction axis last

    x = pooled.reshape(n, k1).astype(jnp.bfloat16)
    x = jnp.pad(x, ((0, n_pad - n), (0, k1_pad - k1)))

    def kernel(x_ref, w1_ref, b1_ref, w2_ref, b2_ref, wh_ref, bh_ref,
               head_ref, probs_ref, acc_ref):
        kk = pl.program_id(1)

        @pl.when(kk == 0)
        def _():
            acc_ref[...] = jnp.zeros_like(acc_ref)

        # conv1 (full-window conv == matmul), K-streamed with f32 accumulation.
        acc_ref[...] += jnp.dot(x_ref[...], w1_ref[...],
                                preferred_element_type=jnp.float32)

        # Epilogue only on the last K chunk.
        @pl.when(kk == pl.num_programs(1) - 1)
        def _():
            # folded-BN bias + relu
            h = jnp.maximum(acc_ref[...] + b1_ref[...], 0.0).astype(jnp.bfloat16)

            # conv2 (1x1 conv on 1x1 spatial == matmul) + folded-BN bias + relu
            h = jnp.dot(h, w2_ref[...], preferred_element_type=jnp.float32) + b2_ref[...]
            h = jnp.maximum(h, 0.0).astype(jnp.bfloat16)                 # [tn, H]

            # fused class+bbox head: [tn, head_pad] = [logits | bbox | zero pad]
            head = jnp.dot(h, wh_ref[...], preferred_element_type=jnp.float32) + bh_ref[...]
            head_ref[...] = head                                         # lane-dense store

            # softmax restricted to the probs_pad-wide logits slab (not head_pad)
            logit_slab = head[:, :probs_pad]
            col = jax.lax.broadcasted_iota(jnp.int32, logit_slab.shape, 1)
            masked = jnp.where(col < num_classes, logit_slab, -jnp.inf)
            lmax = jnp.max(masked, axis=1, keepdims=True)
            e = jnp.exp(masked - lmax)                                   # 0 outside logits
            inv = pl.reciprocal(jnp.sum(e, axis=1, keepdims=True), approx=True)
            probs_ref[...] = e * inv                                     # lane-dense store

    x_map = lambda i, k: (i, k)        # activations stream over ROIs and K
    w1_map = lambda i, k: (k, 0)       # w1 streams over K (double-buffered)
    res_map = lambda i, k: (0, 0)      # resident weights: constant block index
    out_map = lambda i, k: (i, 0)      # outputs revisit across K, written at last K

    def vmem_bytes(weight_bufs):
        total = 2 * tile_n * tk * 2                       # x chunks (2 bufs, bf16)
        total += 2 * tk * hidden * 2                      # w1 chunks (2 bufs, bf16)
        total += weight_bufs * hidden * 4                 # b1 (f32)
        total += weight_bufs * hidden * hidden * 2        # w2 (bf16)
        total += weight_bufs * hidden * 4                 # b2 (f32)
        total += weight_bufs * hidden * head_pad * 2      # wh (bf16)
        total += weight_bufs * head_pad * 4               # bh (f32)
        total += 2 * tile_n * head_pad * 4                # head output (f32)
        total += 2 * tile_n * probs_pad * 4               # probs output (f32)
        total += tile_n * hidden * 4                      # f32 accumulator scratch
        return total

    def run(single_buffer_weights):
        wkw = {"pipeline_mode": pl.Buffered(1)} if single_buffer_weights else {}
        in_specs = [
            pl.BlockSpec((tile_n, tk), x_map),
            pl.BlockSpec((tk, hidden), w1_map),
            pl.BlockSpec((1, hidden), res_map, **wkw),
            pl.BlockSpec((hidden, hidden), res_map, **wkw),
            pl.BlockSpec((1, hidden), res_map, **wkw),
            pl.BlockSpec((hidden, head_pad), res_map, **wkw),
            pl.BlockSpec((1, head_pad), res_map, **wkw),
        ]
        out_specs = (
            pl.BlockSpec((tile_n, head_pad), out_map),
            pl.BlockSpec((tile_n, probs_pad), out_map),
        )
        bufs = 1 if single_buffer_weights else 2
        vmem_limit = int(min(vmem_cap,
                             max(16 << 20, vmem_bytes(bufs) + (8 << 20))))
        out = pl.pallas_call(
            kernel,
            grid=grid,
            out_shape=(
                jax.ShapeDtypeStruct((n_pad, head_pad), jnp.float32),
                jax.ShapeDtypeStruct((n_pad, probs_pad), jnp.float32),
            ),
            in_specs=in_specs,
            out_specs=out_specs,
            scratch_shapes=[pltpu.VMEM((tile_n, hidden), jnp.float32)],
            compiler_params=pltpu.CompilerParams(
                dimension_semantics=("parallel", "arbitrary"),
                vmem_limit_bytes=vmem_limit,
            ),
        )(x, packed["w1"], packed["b1"], packed["w2"], packed["b2"],
          packed["wh"], packed["bh"])
        jax.block_until_ready(out)
        return out

    try:
        head_out, probs_out = run(single_buffer_weights=True)
    except Exception:
        # TODO(synk): pl.Buffered(1) single-buffering not supported by this jax
        # build; fall back to default double-buffered resident weights.
        head_out, probs_out = run(single_buffer_weights=False)

    logits = head_out[:n, :num_classes]
    bbox = head_out[:n, num_classes:5 * num_classes].reshape(n, num_classes, 4)
    probs = probs_out[:n, :num_classes]
    return logits, probs, bbox


# ------------------- pyramid_roi_align (simplified, JAX glue) -------------- #
# TODO(synk): full pyramid_roi_align assigns each ROI to an FPN level via
# log2(sqrt(h*w)/(224/sqrt(image_area))); here only a single level is used
# (bilinear crop-and-resize convention).  Gather-free: separable bilinear weight
# matrices + bf16 einsums with f32 accumulation (MXU path, no XLA gather).
def roi_align(feat, rois, pool_size):
    """feat: [C, H, W]; rois: [N, 4] normalized (y1, x1, y2, x2) -> [N, C, P, P]."""
    C, H, W = feat.shape
    y1, x1, y2, x2 = rois[:, 0], rois[:, 1], rois[:, 2], rois[:, 3]
    ii = jnp.arange(pool_size, dtype=jnp.float32)
    denom = max(pool_size - 1, 1)  # TODO(synk): pool_size==1 follows this guarded form
    ys = y1[:, None] * (H - 1) + ii[None, :] * ((y2 - y1) * (H - 1) / denom)[:, None]
    xs = x1[:, None] * (W - 1) + ii[None, :] * ((x2 - x1) * (W - 1) / denom)[:, None]

    def bilinear_weights(coords, size):
        c0 = jnp.floor(coords)
        frac = coords - c0
        i0 = jnp.clip(c0, 0, size - 1).astype(jnp.int32)
        i1 = jnp.clip(c0 + 1, 0, size - 1).astype(jnp.int32)
        oh0 = jax.nn.one_hot(i0, size, dtype=jnp.float32)   # [N, P, size]
        oh1 = jax.nn.one_hot(i1, size, dtype=jnp.float32)
        return oh0 * (1.0 - frac)[..., None] + oh1 * frac[..., None]

    Wy = bilinear_weights(ys, H).astype(jnp.bfloat16)        # [N, P, H]
    Wx = bilinear_weights(xs, W).astype(jnp.bfloat16)        # [N, P, W]
    f16 = feat.astype(jnp.bfloat16)
    tmp = jnp.einsum('nih,chw->nciw', Wy, f16,
                     preferred_element_type=jnp.float32)     # [N, C, P, W]
    return jnp.einsum('nciw,njw->ncij', tmp.astype(jnp.bfloat16), Wx,
                      preferred_element_type=jnp.float32)    # [N, C, P, P]


# ---------------------------- parameter init ------------------------------- #
def init_params(key, depth, pool_size, num_classes, hidden=1024):
    k1 = depth * pool_size * pool_size
    ks = jax.random.split(key, 12)
    f32 = jnp.float32

    def rnd(k, shape, scale=0.02):
        return scale * jax.random.normal(k, shape, dtype=f32)

    params = {
        # conv1 weight [1024, depth, ps, ps] flattened C-major -> [K1, 1024]
        "w1": rnd(ks[0], (k1, hidden)),
        "b1": rnd(ks[1], (1, hidden)),
        "g1": 1.0 + rnd(ks[2], (1, hidden)),
        "be1": rnd(ks[3], (1, hidden)),
        "m1": rnd(ks[4], (1, hidden)),
        "v1": 1.0 + jnp.abs(rnd(ks[5], (1, hidden))),
        # conv2 weight [1024, 1024, 1, 1] -> [1024, 1024]
        "w2": rnd(ks[6], (hidden, hidden)),
        "b2": rnd(ks[7], (1, hidden)),
        "g2": 1.0 + rnd(ks[8], (1, hidden)),
        "be2": rnd(ks[9], (1, hidden)),
        "m2": rnd(ks[10], (1, hidden)),
        "v2": 1.0 + jnp.abs(rnd(ks[11], (1, hidden))),
    }
    kh = jax.random.split(jax.random.fold_in(key, 123), 4)
    params["wc"] = rnd(kh[0], (hidden, num_classes))
    params["bc"] = rnd(kh[1], (1, num_classes))
    params["wb"] = rnd(kh[2], (hidden, num_classes * 4))
    params["bb"] = rnd(kh[3], (1, num_classes * 4))
    return params


# ------------------------- pure-JAX f32 reference --------------------------- #
def classifier_reference(x_flat, params, num_classes):
    h = x_flat @ params["w1"] + params["b1"]
    h = (h - params["m1"]) * jax.lax.rsqrt(params["v1"] + BN_EPS) * params["g1"] + params["be1"]
    h = jnp.maximum(h, 0.0)
    h = h @ params["w2"] + params["b2"]
    h = (h - params["m2"]) * jax.lax.rsqrt(params["v2"] + BN_EPS) * params["g2"] + params["be2"]
    h = jnp.maximum(h, 0.0)
    logits = h @ params["wc"] + params["bc"]
    probs = jax.nn.softmax(logits, axis=1)
    bbox = (h @ params["wb"] + params["bb"]).reshape(-1, num_classes, 4)
    return logits, probs, bbox


# --------------------------------- main ------------------------------------ #
if __name__ == "__main__":
    depth, pool_size, num_classes = 4, 4, 8
    num_rois = 8
    feat_h = feat_w = 16

    key = jax.random.PRNGKey(0)
    k_feat, k_roi, k_par = jax.random.split(key, 3)

    # single FPN level feature map, CHW
    feat = jax.random.normal(k_feat, (depth, feat_h, feat_w), dtype=jnp.float32)

    # ROIs: normalized (y1, x1, y2, x2) with y1<y2, x1<x2
    c = jax.random.uniform(k_roi, (num_rois, 4), minval=0.05, maxval=0.9)
    y_lo = jnp.minimum(c[:, 0], c[:, 2])
    y_hi = jnp.maximum(c[:, 0], c[:, 2]) + 0.05
    x_lo = jnp.minimum(c[:, 1], c[:, 3])
    x_hi = jnp.maximum(c[:, 1], c[:, 3]) + 0.05
    rois = jnp.stack([y_lo, x_lo, jnp.clip(y_hi, 0, 1), jnp.clip(x_hi, 0, 1)], axis=1)

    params = init_params(k_par, depth, pool_size, num_classes)
    packed = fold_and_pack_params(params, num_classes)

    pooled = roi_align(feat, rois, pool_size)                 # [N, depth, ps, ps]
    logits, probs, bbox = classifier_forward(pooled, packed, num_classes)
    jax.block_until_ready((logits, probs, bbox))

    # shape checks
    assert logits.shape == (num_rois, num_classes)
    assert probs.shape == (num_rois, num_classes)
    assert bbox.shape == (num_rois, num_classes, 4)

    # numeric checks vs pure-JAX f32 reference (bf16 matmuls + approx recip -> loose tol)
    x_flat = pooled.reshape(num_rois, depth * pool_size * pool_size).astype(jnp.float32)
    ref_logits, ref_probs, ref_bbox = classifier_reference(x_flat, params, num_classes)
    assert bool(jnp.allclose(logits, ref_logits, atol=2e-2, rtol=2e-2))
    assert bool(jnp.allclose(probs, ref_probs, atol=2e-2, rtol=2e-2))
    assert bool(jnp.allclose(bbox, ref_bbox, atol=2e-2, rtol=2e-2))
    assert bool(jnp.allclose(jnp.sum(probs, axis=1), 1.0, atol=5e-3))
    print("KERNEL_OK")
</pallas_src>

<mosaic_0001>
module attributes {stable_mosaic.version = 11 : i64} {
  func.func @kernel(%arg0: i32, %arg1: i32, %arg2: memref<16x128xbf16, #tpu.memory_space<vmem>>, %arg3: memref<128x1024xbf16, #tpu.memory_space<vmem>>, %arg4: memref<1x1024xf32, #tpu.memory_space<vmem>>, %arg5: memref<1024x1024xbf16, #tpu.memory_space<vmem>>, %arg6: memref<1x1024xf32, #tpu.memory_space<vmem>>, %arg7: memref<1024x128xbf16, #tpu.memory_space<vmem>>, %arg8: memref<1x128xf32, #tpu.memory_space<vmem>>, %arg9: memref<16x128xf32, #tpu.memory_space<vmem>>, %arg10: memref<16x128xf32, #tpu.memory_space<vmem>>, %arg11: memref<16x1024xf32, #tpu.memory_space<vmem>>) attributes {dimension_semantics = [#tpu.dimension_semantics<parallel>, #tpu.dimension_semantics<arbitrary>], iteration_bounds = array<i64: 1, 1>, scalar_prefetch = 0 : i64, scratch_operands = 1 : i64, tpu.core_type = #tpu.core_type<tc>, window_params = [{transform_indices = @transform_0, window_bounds = array<i64: 16, 128>}, {transform_indices = @transform_1, window_bounds = array<i64: 128, 1024>}, {pipeline_mode = #tpu.pipeline_mode<synchronous>, transform_indices = @transform_2, window_bounds = array<i64: 1, 1024>}, {pipeline_mode = #tpu.pipeline_mode<synchronous>, transform_indices = @transform_3, window_bounds = array<i64: 1024, 1024>}, {pipeline_mode = #tpu.pipeline_mode<synchronous>, transform_indices = @transform_4, window_bounds = array<i64: 1, 1024>}, {pipeline_mode = #tpu.pipeline_mode<synchronous>, transform_indices = @transform_5, window_bounds = array<i64: 1024, 128>}, {pipeline_mode = #tpu.pipeline_mode<synchronous>, transform_indices = @transform_6, window_bounds = array<i64: 1, 128>}, {transform_indices = @transform_7, window_bounds = array<i64: 16, 128>}, {transform_indices = @transform_8, window_bounds = array<i64: 16, 128>}]} {
    %c0_i32 = arith.constant 0 : i32
    %0 = arith.cmpi eq, %arg1, %c0_i32 : i32
    %1 = arith.extui %0 : i1 to i32
    %c0_i32_0 = arith.constant 0 : i32
    %2 = arith.cmpi ne, %1, %c0_i32_0 : i32
    scf.if %2 {
      %cst_10 = arith.constant 0.000000e+00 : f32
      %12 = vector.broadcast %cst_10 : f32 to vector<16x1024xf32>
      %c0_11 = arith.constant 0 : index
      %c0_12 = arith.constant 0 : index
      %13 = vector.load %arg11[%c0_11, %c0_12] : memref<16x1024xf32, #tpu.memory_space<vmem>>, vector<16x1024xf32>
      tpu.vector_store %arg11[%c0_11, %c0_12], %12 {strides = array<i32>} : memref<16x1024xf32, #tpu.memory_space<vmem>>, vector<16x1024xf32>,
    } else {
    }
    %c0 = arith.constant 0 : index
    %c0_1 = arith.constant 0 : index
    %3 = vector.load %arg11[%c0, %c0_1] : memref<16x1024xf32, #tpu.memory_space<vmem>>, vector<16x1024xf32>
    %c0_2 = arith.constant 0 : index
    %c0_3 = arith.constant 0 : index
    %4 = vector.load %arg2[%c0_2, %c0_3] : memref<16x128xbf16, #tpu.memory_space<vmem>>, vector<16x128xbf16>
    %c0_4 = arith.constant 0 : index
    %c0_5 = arith.constant 0 : index
    %5 = vector.load %arg3[%c0_4, %c0_5] : memref<128x1024xbf16, #tpu.memory_space<vmem>>, vector<128x1024xbf16>
    %cst = arith.constant dense<0.000000e+00> : vector<16x1024xf32>
    %6 = tpu.matmul %4, %5, %cst {dimension_numbers = #tpu.dot_dimension_numbers<[1], [0], [0], [1], [0, 0, 1, 1], [], []>} : vector<16x128xbf16>, vector<128x1024xbf16>, vector<16x1024xf32> -> vector<16x1024xf32>
    %7 = arith.addf %3, %6 : vector<16x1024xf32>
    %c0_6 = arith.constant 0 : index
    %c0_7 = arith.constant 0 : index
    %8 = vector.load %arg11[%c0_6, %c0_7] : memref<16x1024xf32, #tpu.memory_space<vmem>>, vector<16x1024xf32>
    tpu.vector_store %arg11[%c0_6, %c0_7], %7 {strides = array<i32>} : memref<16x1024xf32, #tpu.memory_space<vmem>>, vector<16x1024xf32>,
    %c0_i32_8 = arith.constant 0 : i32
    %9 = arith.cmpi eq, %arg1, %c0_i32_8 : i32
    %10 = arith.extui %9 : i1 to i32
    %c0_i32_9 = arith.constant 0 : i32
    %11 = arith.cmpi ne, %10, %c0_i32_9 : i32
    scf.if %11 {
      %c0_10 = arith.constant 0 : index
      %c0_11 = arith.constant 0 : index
      %12 = vector.load %arg11[%c0_10, %c0_11] : memref<16x1024xf32, #tpu.memory_space<vmem>>, vector<16x1024xf32>
      %c0_12 = arith.constant 0 : index
      %c0_13 = arith.constant 0 : index
      %13 = vector.load %arg4[%c0_12, %c0_13] : memref<1x1024xf32, #tpu.memory_space<vmem>>, vector<1x1024xf32>
      %14 = vector.broadcast %13 : vector<1x1024xf32> to vector<16x1024xf32>
      %15 = arith.addf %12, %14 : vector<16x1024xf32>
      %cst_14 = arith.constant 0.000000e+00 : f32
      %16 = vector.broadcast %cst_14 : f32 to vector<16x1024xf32>
      %17 = arith.maximumf %15, %16 : vector<16x1024xf32>
      %18 = arith.truncf %17 : vector<16x1024xf32> to vector<16x1024xbf16>
      %c0_15 = arith.constant 0 : index
      %c0_16 = arith.constant 0 : index
      %19 = vector.load %arg5[%c0_15, %c0_16] : memref<1024x1024xbf16, #tpu.memory_space<vmem>>, vector<1024x1024xbf16>
      %cst_17 = arith.constant dense<0.000000e+00> : vector<16x1024xf32>
      %20 = tpu.matmul %18, %19, %cst_17 {dimension_numbers = #tpu.dot_dimension_numbers<[1], [0], [0], [1], [0, 0, 1, 1], [], []>} : vector<16x1024xbf16>, vector<1024x1024xbf16>, vector<16x1024xf32> -> vector<16x1024xf32>
      %c0_18 = arith.constant 0 : index
      %c0_19 = arith.constant 0 : index
      %21 = vector.load %arg6[%c0_18, %c0_19] : memref<1x1024xf32, #tpu.memory_space<vmem>>, vector<1x1024xf32>
      %22 = vector.broadcast %21 : vector<1x1024xf32> to vector<16x1024xf32>
      %23 = arith.addf %20, %22 : vector<16x1024xf32>
      %cst_20 = arith.constant 0.000000e+00 : f32
      %24 = vector.broadcast %cst_20 : f32 to vector<16x1024xf32>
      %25 = arith.maximumf %23, %24 : vector<16x1024xf32>
      %26 = arith.truncf %25 : vector<16x1024xf32> to vector<16x1024xbf16>
      %c0_21 = arith.constant 0 : index
      %c0_22 = arith.constant 0 : index
      %27 = vector.load %arg7[%c0_21, %c0_22] : memref<1024x128xbf16, #tpu.memory_space<vmem>>, vector<1024x128xbf16>
      %cst_23 = arith.constant dense<0.000000e+00> : vector<16x128xf32>
      %28 = tpu.matmul %26, %27, %cst_23 {dimension_numbers = #tpu.dot_dimension_numbers<[1], [0], [0], [1], [0, 0, 1, 1], [], []>} : vector<16x1024xbf16>, vector<1024x128xbf16>, vector<16x128xf32> -> vector<16x128xf32>
      %c0_24 = arith.constant 0 : index
      %c0_25 = arith.constant 0 : index
      %29 = vector.load %arg8[%c0_24, %c0_25] : memref<1x128xf32, #tpu.memory_space<vmem>>, vector<1x128xf32>
      %30 = vector.broadcast %29 : vector<1x128xf32> to vector<16x128xf32>
      %31 = arith.addf %28, %30 : vector<16x128xf32>
      %c0_26 = arith.constant 0 : index
      %c0_27 = arith.constant 0 : index
      %32 = vector.load %arg9[%c0_26, %c0_27] : memref<16x128xf32, #tpu.memory_space<vmem>>, vector<16x128xf32>
      tpu.vector_store %arg9[%c0_26, %c0_27], %31 {strides = array<i32>} : memref<16x128xf32, #tpu.memory_space<vmem>>, vector<16x128xf32>,
      %33 = tpu.iota {dimensions = array<i32: 1>} : vector<16x128xi32>
      %c8_i32 = arith.constant 8 : i32
      %34 = vector.broadcast %c8_i32 : i32 to vector<16x128xi32>
      %35 = arith.cmpi slt, %33, %34 : vector<16x128xi32>
      %cst_28 = arith.constant 0xFF800000 : f32
      %36 = vector.broadcast %cst_28 : f32 to vector<16x128xf32>
      %37 = arith.select %35, %31, %36 : vector<16x128xi1>, vector<16x128xf32>
      %cst_29 = arith.constant dense<0xFF800000> : vector<16xf32>
      %38 = vector.multi_reduction <maximumf>, %37, %cst_29 [1] : vector<16x128xf32> to vector<16xf32>
      %39 = vector.shape_cast %38 : vector<16xf32> to vector<16x1xf32>
      %40 = vector.broadcast %39 : vector<16x1xf32> to vector<16x128xf32>
      %41 = arith.subf %37, %40 : vector<16x128xf32>
      %42 = math.exp %41 : vector<16x128xf32>
      %cst_30 = arith.constant dense<0.000000e+00> : vector<16xf32>
      %43 = vector.multi_reduction <add>, %42, %cst_30 [1] : vector<16x128xf32> to vector<16xf32>
      %44 = vector.shape_cast %43 : vector<16xf32> to vector<16x1xf32>
      %45 = tpu.reciprocal %44 {approx = true} : vector<16x1xf32> -> vector<16x1xf32>
      %46 = vector.broadcast %45 : vector<16x1xf32> to vector<16x128xf32>
      %47 = arith.mulf %42, %46 : vector<16x128xf32>
      %c0_31 = arith.constant 0 : index
      %c0_32 = arith.constant 0 : index
      %48 = vector.load %arg10[%c0_31, %c0_32] : memref<16x128xf32, #tpu.memory_space<vmem>>, vector<16x128xf32>
      tpu.vector_store %arg10[%c0_31, %c0_32], %47 {strides = array<i32>} : memref<16x128xf32, #tpu.memory_space<vmem>>, vector<16x128xf32>,
    } else {
    }
    return
  }
  func.func @transform_0(%arg0: i32, %arg1: i32) -> (i32, i32) {
    %c0_i32 = arith.constant 0 : i32
    return %arg0, %arg1 : i32, i32
  }
  func.func @transform_1(%arg0: i32, %arg1: i32) -> (i32, i32) {
    %c0_i32 = arith.constant 0 : i32
    %c0_i32_0 = arith.constant 0 : i32
    return %arg1, %c0_i32 : i32, i32
  }
  func.func @transform_2(%arg0: i32, %arg1: i32) -> (i32, i32) {
    %c0_i32 = arith.constant 0 : i32
    %c0_i32_0 = arith.constant 0 : i32
    %c0_i32_1 = arith.constant 0 : i32
    return %c0_i32, %c0_i32_0 : i32, i32
  }
  func.func @transform_3(%arg0: i32, %arg1: i32) -> (i32, i32) {
    %c0_i32 = arith.constant 0 : i32
    %c0_i32_0 = arith.constant 0 : i32
    %c0_i32_1 = arith.constant 0 : i32
    return %c0_i32, %c0_i32_0 : i32, i32
  }
  func.func @transform_4(%arg0: i32, %arg1: i32) -> (i32, i32) {
    %c0_i32 = arith.constant 0 : i32
    %c0_i32_0 = arith.constant 0 : i32
    %c0_i32_1 = arith.constant 0 : i32
    return %c0_i32, %c0_i32_0 : i32, i32
  }
  func.func @transform_5(%arg0: i32, %arg1: i32) -> (i32, i32) {
    %c0_i32 = arith.constant 0 : i32
    %c0_i32_0 = arith.constant 0 : i32
    %c0_i32_1 = arith.constant 0 : i32
    return %c0_i32, %c0_i32_0 : i32, i32
  }
  func.func @transform_6(%arg0: i32, %arg1: i32) -> (i32, i32) {
    %c0_i32 = arith.constant 0 : i32
    %c0_i32_0 = arith.constant 0 : i32
    %c0_i32_1 = arith.constant 0 : i32
    return %c0_i32, %c0_i32_0 : i32, i32
  }
  func.func @transform_7(%arg0: i32, %arg1: i32) -> (i32, i32) {
    %c0_i32 = arith.constant 0 : i32
    %c0_i32_0 = arith.constant 0 : i32
    return %arg0, %c0_i32 : i32, i32
  }
  func.func @transform_8(%arg0: i32, %arg1: i32) -> (i32, i32) {
    %c0_i32 = arith.constant 0 : i32
    %c0_i32_0 = arith.constant 0 : i32
    return %arg0, %c0_i32 : i32, i32
  }
}

module attributes {stable_mosaic.version = 11 : i64} {
  func.func @kernel(%arg0: i32, %arg1: i32, %arg2: memref<16x128xbf16, #tpu.memory_space<vmem>>, %arg3: memref<128x1024xbf16, #tpu.memory_space<vmem>>, %arg4: memref<1x1024xf32, #tpu.memory_space<vmem>>, %arg5: memref<1024x1024xbf16, #tpu.memory_space<vmem>>, %arg6: memref<1x1024xf32, #tpu.memory_space<vmem>>, %arg7: memref<1024x128xbf16, #tpu.memory_space<vmem>>, %arg8: memref<1x128xf32, #tpu.memory_space<vmem>>, %arg9: memref<16x128xf32, #tpu.memory_space<vmem>>, %arg10: memref<16x128xf32, #tpu.memory_space<vmem>>, %arg11: memref<16x1024xf32, #tpu.memory_space<vmem>>) attributes {dimension_semantics = [#tpu.dimension_semantics<parallel>, #tpu.dimension_semantics<arbitrary>], iteration_bounds = array<i64: 1, 1>, scalar_prefetch = 0 : i64, scratch_operands = 1 : i64, tpu.core_type = #tpu.core_type<tc>, window_params = [{transform_indices = @transform_0, window_bounds = array<i64: 16, 128>}, {transform_indices = @transform_1, window_bounds = array<i64: 128, 1024>}, {pipeline_mode = #tpu.pipeline_mode<synchronous>, transform_indices = @transform_2, window_bounds = array<i64: 1, 1024>}, {pipeline_mode = #tpu.pipeline_mode<synchronous>, transform_indices = @transform_3, window_bounds = array<i64: 1024, 1024>}, {pipeline_mode = #tpu.pipeline_mode<synchronous>, transform_indices = @transform_4, window_bounds = array<i64: 1, 1024>}, {pipeline_mode = #tpu.pipeline_mode<synchronous>, transform_indices = @transform_5, window_bounds = array<i64: 1024, 128>}, {pipeline_mode = #tpu.pipeline_mode<synchronous>, transform_indices = @transform_6, window_bounds = array<i64: 1, 128>}, {transform_indices = @transform_7, window_bounds = array<i64: 16, 128>}, {transform_indices = @transform_8, window_bounds = array<i64: 16, 128>}]} {
    %c0_i32 = arith.constant 0 : i32
    %0 = arith.cmpi eq, %arg1, %c0_i32 : i32
    %1 = arith.extui %0 : i1 to i32
    %c0_i32_0 = arith.constant 0 : i32
    %2 = arith.cmpi ne, %1, %c0_i32_0 : i32
    scf.if %2 {
      %cst_10 = arith.constant 0.000000e+00 : f32
      %12 = vector.broadcast %cst_10 : f32 to vector<16x1024xf32>
      %c0_11 = arith.constant 0 : index
      %c0_12 = arith.constant 0 : index
      %13 = vector.load %arg11[%c0_11, %c0_12] : memref<16x1024xf32, #tpu.memory_space<vmem>>, vector<16x1024xf32>
      tpu.vector_store %arg11[%c0_11, %c0_12], %12 {strides = array<i32>} : memref<16x1024xf32, #tpu.memory_space<vmem>>, vector<16x1024xf32>,
    } else {
    }
    %c0 = arith.constant 0 : index
    %c0_1 = arith.constant 0 : index
    %3 = vector.load %arg11[%c0, %c0_1] : memref<16x1024xf32, #tpu.memory_space<vmem>>, vector<16x1024xf32>
    %c0_2 = arith.constant 0 : index
    %c0_3 = arith.constant 0 : index
    %4 = vector.load %arg2[%c0_2, %c0_3] : memref<16x128xbf16, #tpu.memory_space<vmem>>, vector<16x128xbf16>
    %c0_4 = arith.constant 0 : index
    %c0_5 = arith.constant 0 : index
    %5 = vector.load %arg3[%c0_4, %c0_5] : memref<128x1024xbf16, #tpu.memory_space<vmem>>, vector<128x1024xbf16>
    %cst = arith.constant dense<0.000000e+00> : vector<16x1024xf32>
    %6 = tpu.matmul %4, %5, %cst {dimension_numbers = #tpu.dot_dimension_numbers<[1], [0], [0], [1], [0, 0, 1, 1], [], []>} : vector<16x128xbf16>, vector<128x1024xbf16>, vector<16x1024xf32> -> vector<16x1024xf32>
    %7 = arith.addf %3, %6 : vector<16x1024xf32>
    %c0_6 = arith.constant 0 : index
    %c0_7 = arith.constant 0 : index
    %8 = vector.load %arg11[%c0_6, %c0_7] : memref<16x1024xf32, #tpu.memory_space<vmem>>, vector<16x1024xf32>
    tpu.vector_store %arg11[%c0_6, %c0_7], %7 {strides = array<i32>} : memref<16x1024xf32, #tpu.memory_space<vmem>>, vector<16x1024xf32>,
    %c0_i32_8 = arith.constant 0 : i32
    %9 = arith.cmpi eq, %arg1, %c0_i32_8 : i32
    %10 = arith.extui %9 : i1 to i32
    %c0_i32_9 = arith.constant 0 : i32
    %11 = arith.cmpi ne, %10, %c0_i32_9 : i32
    scf.if %11 {
      %c0_10 = arith.constant 0 : index
      %c0_11 = arith.constant 0 : index
      %12 = vector.load %arg11[%c0_10, %c0_11] : memref<16x1024xf32, #tpu.memory_space<vmem>>, vector<16x1024xf32>
      %c0_12 = arith.constant 0 : index
      %c0_13 = arith.constant 0 : index
      %13 = vector.load %arg4[%c0_12, %c0_13] : memref<1x1024xf32, #tpu.memory_space<vmem>>, vector<1x1024xf32>
      %14 = vector.broadcast %13 : vector<1x1024xf32> to vector<16x1024xf32>
      %15 = arith.addf %12, %14 : vector<16x1024xf32>
      %cst_14 = arith.constant 0.000000e+00 : f32
      %16 = vector.broadcast %cst_14 : f32 to vector<16x1024xf32>
      %17 = arith.maximumf %15, %16 : vector<16x1024xf32>
      %18 = arith.truncf %17 : vector<16x1024xf32> to vector<16x1024xbf16>
      %c0_15 = arith.constant 0 : index
      %c0_16 = arith.constant 0 : index
      %19 = vector.load %arg5[%c0_15, %c0_16] : memref<1024x1024xbf16, #tpu.memory_space<vmem>>, vector<1024x1024xbf16>
      %cst_17 = arith.constant dense<0.000000e+00> : vector<16x1024xf32>
      %20 = tpu.matmul %18, %19, %cst_17 {dimension_numbers = #tpu.dot_dimension_numbers<[1], [0], [0], [1], [0, 0, 1, 1], [], []>} : vector<16x1024xbf16>, vector<1024x1024xbf16>, vector<16x1024xf32> -> vector<16x1024xf32>
      %c0_18 = arith.constant 0 : index
      %c0_19 = arith.constant 0 : index
      %21 = vector.load %arg6[%c0_18, %c0_19] : memref<1x1024xf32, #tpu.memory_space<vmem>>, vector<1x1024xf32>
      %22 = vector.broadcast %21 : vector<1x1024xf32> to vector<16x1024xf32>
      %23 = arith.addf %20, %22 : vector<16x1024xf32>
      %cst_20 = arith.constant 0.000000e+00 : f32
      %24 = vector.broadcast %cst_20 : f32 to vector<16x1024xf32>
      %25 = arith.maximumf %23, %24 : vector<16x1024xf32>
      %26 = arith.truncf %25 : vector<16x1024xf32> to vector<16x1024xbf16>
      %c0_21 = arith.constant 0 : index
      %c0_22 = arith.constant 0 : index
      %27 = vector.load %arg7[%c0_21, %c0_22] : memref<1024x128xbf16, #tpu.memory_space<vmem>>, vector<1024x128xbf16>
      %cst_23 = arith.constant dense<0.000000e+00> : vector<16x128xf32>
      %28 = tpu.matmul %26, %27, %cst_23 {dimension_numbers = #tpu.dot_dimension_numbers<[1], [0], [0], [1], [0, 0, 1, 1], [], []>} : vector<16x1024xbf16>, vector<1024x128xbf16>, vector<16x128xf32> -> vector<16x128xf32>
      %c0_24 = arith.constant 0 : index
      %c0_25 = arith.constant 0 : index
      %29 = vector.load %arg8[%c0_24, %c0_25] : memref<1x128xf32, #tpu.memory_space<vmem>>, vector<1x128xf32>
      %30 = vector.broadcast %29 : vector<1x128xf32> to vector<16x128xf32>
      %31 = arith.addf %28, %30 : vector<16x128xf32>
      %c0_26 = arith.constant 0 : index
      %c0_27 = arith.constant 0 : index
      %32 = vector.load %arg9[%c0_26, %c0_27] : memref<16x128xf32, #tpu.memory_space<vmem>>, vector<16x128xf32>
      tpu.vector_store %arg9[%c0_26, %c0_27], %31 {strides = array<i32>} : memref<16x128xf32, #tpu.memory_space<vmem>>, vector<16x128xf32>,
      %33 = tpu.iota {dimensions = array<i32: 1>} : vector<16x128xi32>
      %c8_i32 = arith.constant 8 : i32
      %34 = vector.broadcast %c8_i32 : i32 to vector<16x128xi32>
      %35 = arith.cmpi slt, %33, %34 : vector<16x128xi32>
      %cst_28 = arith.constant 0xFF800000 : f32
      %36 = vector.broadcast %cst_28 : f32 to vector<16x128xf32>
      %37 = arith.select %35, %31, %36 : vector<16x128xi1>, vector<16x128xf32>
      %cst_29 = arith.constant dense<0xFF800000> : vector<16xf32>
      %38 = vector.multi_reduction <maximumf>, %37, %cst_29 [1] : vector<16x128xf32> to vector<16xf32>
      %39 = vector.shape_cast %38 : vector<16xf32> to vector<16x1xf32>
      %40 = vector.broadcast %39 : vector<16x1xf32> to vector<16x128xf32>
      %41 = arith.subf %37, %40 : vector<16x128xf32>
      %42 = math.exp %41 : vector<16x128xf32>
      %cst_30 = arith.constant dense<0.000000e+00> : vector<16xf32>
      %43 = vector.multi_reduction <add>, %42, %cst_30 [1] : vector<16x128xf32> to vector<16xf32>
      %44 = vector.shape_cast %43 : vector<16xf32> to vector<16x1xf32>
      %45 = tpu.reciprocal %44 {approx = true} : vector<16x1xf32> -> vector<16x1xf32>
      %46 = vector.broadcast %45 : vector<16x1xf32> to vector<16x128xf32>
      %47 = arith.mulf %42, %46 : vector<16x128xf32>
      %c0_31 = arith.constant 0 : index
      %c0_32 = arith.constant 0 : index
      %48 = vector.load %arg10[%c0_31, %c0_32] : memref<16x128xf32, #tpu.memory_space<vmem>>, vector<16x128xf32>
      tpu.vector_store %arg10[%c0_31, %c0_32], %47 {strides = array<i32>} : memref<16x128xf32, #tpu.memory_space<vmem>>, vector<16x128xf32>,
    } else {
    }
    return
  }
  func.func @transform_0(%arg0: i32, %arg1: i32) -> (i32, i32) {
    %c0_i32 = arith.constant 0 : i32
    return %arg0, %arg1 : i32, i32
  }
  func.func @transform_1(%arg0: i32, %arg1: i32) -> (i32, i32) {
    %c0_i32 = arith.constant 0 : i32
    %c0_i32_0 = arith.constant 0 : i32
    return %arg1, %c0_i32 : i32, i32
  }
  func.func @transform_2(%arg0: i32, %arg1: i32) -> (i32, i32) {
    %c0_i32 = arith.constant 0 : i32
    %c0_i32_0 = arith.constant 0 : i32
    %c0_i32_1 = arith.constant 0 : i32
    return %c0_i32, %c0_i32_0 : i32, i32
  }
  func.func @transform_3(%arg0: i32, %arg1: i32) -> (i32, i32) {
    %c0_i32 = arith.constant 0 : i32
    %c0_i32_0 = arith.constant 0 : i32
    %c0_i32_1 = arith.constant 0 : i32
    return %c0_i32, %c0_i32_0 : i32, i32
  }
  func.func @transform_4(%arg0: i32, %arg1: i32) -> (i32, i32) {
    %c0_i32 = arith.constant 0 : i32
    %c0_i32_0 = arith.constant 0 : i32
    %c0_i32_1 = arith.constant 0 : i32
    return %c0_i32, %c0_i32_0 : i32, i32
  }
  func.func @transform_5(%arg0: i32, %arg1: i32) -> (i32, i32) {
    %c0_i32 = arith.constant 0 : i32
    %c0_i32_0 = arith.constant 0 : i32
    %c0_i32_1 = arith.constant 0 : i32
    return %c0_i32, %c0_i32_0 : i32, i32
  }
  func.func @transform_6(%arg0: i32, %arg1: i32) -> (i32, i32) {
    %c0_i32 = arith.constant 0 : i32
    %c0_i32_0 = arith.constant 0 : i32
    %c0_i32_1 = arith.constant 0 : i32
    return %c0_i32, %c0_i32_0 : i32, i32
  }
  func.func @transform_7(%arg0: i32, %arg1: i32) -> (i32, i32) {
    %c0_i32 = arith.constant 0 : i32
    %c0_i32_0 = arith.constant 0 : i32
    return %arg0, %c0_i32 : i32, i32
  }
  func.func @transform_8(%arg0: i32, %arg1: i32) -> (i32, i32) {
    %c0_i32 = arith.constant 0 : i32
    %c0_i32_0 = arith.constant 0 : i32
    return %arg0, %c0_i32 : i32, i32
  }
}

</mosaic_0001>

<llo_original>
// kernel: tpu_custom_call.1
$region0: #{tpu_custom_call.1}
  #allocation0 [shape = 'u32[]', space=smem, size = 0x4, offset = 0x4, fixed_abs, tag = 'smem constant byte address 0x4 - core index']
  #allocation1 [shape = 'u32[144,128]{1,0:T(1,128)}', space=vmem, size = 0x12000, scoped, tag = 'internal scratch']
  #allocation2 [shape = 'f32[16,1024]{1,0:T(8,128)}', space=vmem, size = 0x10000, scoped, tag = 'scratch operand']
  %s0 = inlined_call_operand.hbm [shape: bf16[16,128], index: 0, kind: input, shape index: {}]
  %s1 = inlined_call_operand.hbm [shape: bf16[128,1024], index: 1, kind: input, shape index: {}]
  %s2 = inlined_call_operand.hbm [shape: f32[1,1024], index: 2, kind: input, shape index: {}]
  %s3 = inlined_call_operand.hbm [shape: bf16[1024,1024], index: 3, kind: input, shape index: {}]
  %s4 = inlined_call_operand.hbm [shape: f32[1,1024], index: 4, kind: input, shape index: {}]
  %s5 = inlined_call_operand.hbm [shape: bf16[1024,128], index: 5, kind: input, shape index: {}]
  %s6 = inlined_call_operand.hbm [shape: f32[1,128], index: 6, kind: input, shape index: {}]
  %s7 = inlined_call_operand.hbm [shape: f32[16,128], index: 7, kind: output, shape index: {0}]
  %s8 = inlined_call_operand.hbm [shape: f32[16,128], index: 8, kind: output, shape index: {1}]
  %9 = xla_tuple %s7, %s8
  %s10 = sld [smem:[#allocation0]]
  $region82: #{tpu_custom_call.1} parent=0
    _
  %s12 = ssub.s32 1, %s10
  %s13 = scalar_select 0, %s12, %s10
  $region1: #{tpu_custom_call.1} parent=0
    #allocation3 [shape = 'u8[4096]{0}', space=vmem, size = 0x1000, scoped, tag = 'input window, operand 0, single buffered']
    #allocation4 [shape = 's32[1]{0}', space=sflag, size = 0x4, scoped, tag = 'scoped memory for tpu_custom_call.1']
    #allocation5 [shape = 's32[1]{0}', space=sflag, size = 0x4, scoped, tag = 'scoped memory for tpu_custom_call.1']
    #allocation6 [shape = 'u8[262144]{0}', space=vmem, size = 0x40000, scoped, tag = 'input window, operand 1, single buffered']
    #allocation7 [shape = 's32[1]{0}', space=sflag, size = 0x4, scoped, tag = 'scoped memory for tpu_custom_call.1']
    #allocation8 [shape = 'u8[4096]{0}', space=vmem, size = 0x1000, scoped, tag = 'input window, operand 2, single buffered']
    #allocation9 [shape = 'u8[2097152]{0}', space=vmem, size = 0x200000, scoped, tag = 'input window, operand 3, single buffered']
    #allocation10 [shape = 's32[1]{0}', space=sflag, size = 0x4, scoped, tag = 'scoped memory for tpu_custom_call.1']
    #allocation11 [shape = 'u8[4096]{0}', space=vmem, size = 0x1000, scoped, tag = 'input window, operand 4, single buffered']
    #allocation12 [shape = 'u8[262144]{0}', space=vmem, size = 0x40000, scoped, tag = 'input window, operand 5, single buffered']
    #allocation13 [shape = 's32[1]{0}', space=sflag, size = 0x4, scoped, tag = 'scoped memory for tpu_custom_call.1']
    #allocation14 [shape = 'u8[512]{0}', space=vmem, size = 0x400, scoped, tag = 'input window, operand 6, single buffered']
    #allocation15 [shape = 'u8[8192]{0}', space=vmem, size = 0x2000, scoped, tag = 'output window, operand 0, single buffered']
    #allocation16 [shape = 'u8[8192]{0}', space=vmem, size = 0x2000, scoped, tag = 'output window, operand 1, single buffered']
    #allocation17 [shape = 's32[1]{0}', space=sflag, size = 0x4, scoped, tag = 'scoped memory for tpu_custom_call.1']
    %14 = vsyncpa [#allocation4], 0
    %15 = vsyncpa [#allocation7], 0
    %16 = vsyncpa [#allocation10], 0
    %17 = vsyncpa [#allocation13], 0
    %18 = vsyncpa [#allocation5], 0
    %19 = vsyncpa [#allocation17], 0
    // Predicated region
    $region2: #{tpu_custom_call.1} parent=1 // pred_check
      _
    $region3: #{tpu_custom_call.1} parent=1 // pred_check_branch
      %21 = sbr.rel (0) target = $region5
    $region4: #{tpu_custom_call.1} parent=1 // pred_region
      %s23 = ssub.s32 128, 128
      %24 = vsyncadd [#allocation4], %s23
      %s25 = sshll.u32 [#allocation3], 4
      %s26 = int_to_ptr.vmem [resolvable:$true] %s25
      %31 = dma.hbm_to_vmem [thread:$0]  %s0, 128, %s26, [#allocation4], 64, 64, 4
    $region5: #{tpu_custom_call.1} parent=1 // pred_fallthru
      _
    // Predicated region
    $region6: #{tpu_custom_call.1} parent=1 // pred_check
      _
    $region7: #{tpu_custom_call.1} parent=1 // pred_check_branch
      %33 = sbr.rel (0) target = $region9
    $region8: #{tpu_custom_call.1} parent=1 // pred_region
      %s35 = ssub.s32 8192, 8192
      %36 = vsyncadd [#allocation7], %s35
      %s37 = sshll.u32 [#allocation6], 4
      %s38 = int_to_ptr.vmem [resolvable:$true] %s37
      %43 = dma.hbm_to_vmem [thread:$0]  %s1, 8192, %s38, [#allocation7], 512, 512, 32
    $region9: #{tpu_custom_call.1} parent=1 // pred_fallthru
      _
    // Predicated region
    $region10: #{tpu_custom_call.1} parent=1 // pred_check
      _
    $region11: #{tpu_custom_call.1} parent=1 // pred_check_branch
      %45 = sbr.rel (0) target = $region13
    $region12: #{tpu_custom_call.1} parent=1 // pred_region
      %s47 = ssub.s32 128, 128
      %48 = vsyncadd [#allocation7], %s47
      %s50 = sshll.u32 [#allocation8], 4
      %s51 = int_to_ptr.vmem [resolvable:$true] %s50
      %53 = dma.hbm_to_vmem [thread:$0]  %s2, 128, %s51, [#allocation7]
    $region13: #{tpu_custom_call.1} parent=1 // pred_fallthru
      _
    // Predicated region
    $region14: #{tpu_custom_call.1} parent=1 // pred_check
      _
    $region15: #{tpu_custom_call.1} parent=1 // pred_check_branch
      %55 = sbr.rel (0) target = $region17
    $region16: #{tpu_custom_call.1} parent=1 // pred_region
      %s57 = ssub.s32 65536, 65536
      %58 = vsyncadd [#allocation10], %s57
      %s59 = sshll.u32 [#allocation9], 4
      %s60 = int_to_ptr.vmem [resolvable:$true] %s59
      %65 = dma.hbm_to_vmem [thread:$0]  %s3, 65536, %s60, [#allocation10], 512, 512, 32
    $region17: #{tpu_custom_call.1} parent=1 // pred_fallthru
      _
    // Predicated region
    $region18: #{tpu_custom_call.1} parent=1 // pred_check
      _
    $region19: #{tpu_custom_call.1} parent=1 // pred_check_branch
      %67 = sbr.rel (0) target = $region21
    $region20: #{tpu_custom_call.1} parent=1 // pred_region
      %s69 = ssub.s32 128, 128
      %70 = vsyncadd [#allocation10], %s69
      %s72 = sshll.u32 [#allocation11], 4
      %s73 = int_to_ptr.vmem [resolvable:$true] %s72
      %75 = dma.hbm_to_vmem [thread:$0]  %s4, 128, %s73, [#allocation10]
    $region21: #{tpu_custom_call.1} parent=1 // pred_fallthru
      _
    // Predicated region
    $region22: #{tpu_custom_call.1} parent=1 // pred_check
      _
    $region23: #{tpu_custom_call.1} parent=1 // pred_check_branch
      %77 = sbr.rel (0) target = $region25
    $region24: #{tpu_custom_call.1} parent=1 // pred_region
      %s79 = ssub.s32 8192, 8192
      %80 = vsyncadd [#allocation13], %s79
      %s81 = sshll.u32 [#allocation12], 4
      %s82 = int_to_ptr.vmem [resolvable:$true] %s81
      %87 = dma.hbm_to_vmem [thread:$0]  %s5, 8192, %s82, [#allocation13], 64, 64, 4
    $region25: #{tpu_custom_call.1} parent=1 // pred_fallthru
      _
    // Predicated region
    $region26: #{tpu_custom_call.1} parent=1 // pred_check
      _
    $region27: #{tpu_custom_call.1} parent=1 // pred_check_branch
      %89 = sbr.rel (0) target = $region29
    $region28: #{tpu_custom_call.1} parent=1 // pred_region
      %s91 = ssub.s32 16, 16
      %92 = vsyncadd [#allocation13], %s91
      %s94 = sshll.u32 [#allocation14], 4
      %s95 = int_to_ptr.vmem [resolvable:$true] %s94
      %97 = dma.hbm_to_vmem [thread:$0]  %s6, 16, %s95, [#allocation13]
    $region29: #{tpu_custom_call.1} parent=1 // pred_fallthru
      _
    // Predicated region
    $region30: #{tpu_custom_call.1} parent=1 // pred_check
      _
    $region31: #{tpu_custom_call.1} parent=1 // pred_check_branch
      %99 = sbr.rel (0) target = $region33
    $region32: #{tpu_custom_call.1} parent=1 // pred_region
      %100 = dma.done [#allocation4], 128
    $region33: #{tpu_custom_call.1} parent=1 // pred_fallthru
      _
    // Predicated region
    $region34: #{tpu_custom_call.1} parent=1 // pred_check
      _
    $region35: #{tpu_custom_call.1} parent=1 // pred_check_branch
      %102 = sbr.rel (0) target = $region37
    $region36: #{tpu_custom_call.1} parent=1 // pred_region
      %103 = dma.done [#allocation7], 8192
    $region37: #{tpu_custom_call.1} parent=1 // pred_fallthru
      _
    // Predicated region
    $region38: #{tpu_custom_call.1} parent=1 // pred_check
      _
    $region39: #{tpu_custom_call.1} parent=1 // pred_check_branch
      %105 = sbr.rel (0) target = $region41
    $region40: #{tpu_custom_call.1} parent=1 // pred_region
      %106 = dma.done [#allocation7], 128
    $region41: #{tpu_custom_call.1} parent=1 // pred_fallthru
      _
    // Predicated region
    $region42: #{tpu_custom_call.1} parent=1 // pred_check
      _
    $region43: #{tpu_custom_call.1} parent=1 // pred_check_branch
      %108 = sbr.rel (0) target = $region45
    $region44: #{tpu_custom_call.1} parent=1 // pred_region
      %109 = dma.done [#allocation10], 65536
    $region45: #{tpu_custom_call.1} parent=1 // pred_fallthru
      _
    // Predicated region
    $region46: #{tpu_custom_call.1} parent=1 // pred_check
      _
    $region47: #{tpu_custom_call.1} parent=1 // pred_check_branch
      %111 = sbr.rel (0) target = $region49
    $region48: #{tpu_custom_call.1} parent=1 // pred_region
      %112 = dma.done [#allocation10], 128
    $region49: #{tpu_custom_call.1} parent=1 // pred_fallthru
      _
    // Predicated region
    $region50: #{tpu_custom_call.1} parent=1 // pred_check
      _
    $region51: #{tpu_custom_call.1} parent=1 // pred_check_branch
      %114 = sbr.rel (0) target = $region53
    $region52: #{tpu_custom_call.1} parent=1 // pred_region
      %115 = dma.done [#allocation13], 8192
    $region53: #{tpu_custom_call.1} parent=1 // pred_fallthru
      _
    // Predicated region
    $region54: #{tpu_custom_call.1} parent=1 // pred_check
      _
    $region55: #{tpu_custom_call.1} parent=1 // pred_check_branch
      %117 = sbr.rel (0) target = $region57
    $region56: #{tpu_custom_call.1} parent=1 // pred_region
      %118 = dma.done [#allocation13], 16
    $region57: #{tpu_custom_call.1} parent=1 // pred_fallthru
      _
    %p120 = scmp.eq.s32.totalorder 0, 0
    // Predicated region
    $region58: #{tpu_custom_call.1} parent=1 // pred_check
      %p121 = pneg %p120
    $region59: #{tpu_custom_call.1} parent=1 // pred_check_branch
      %123 = sbr.rel (%p121) target = $region61
    $region60: #{tpu_custom_call.1} parent=1 // pred_region
      %124 = vst [vmem:[#allocation2] sm:$0xff] 0.0
      %125 = vst [vmem:[#allocation2 + $0x8] sm:$0xff] 0.0
      %126 = vst [vmem:[#allocation2 + $0x10] sm:$0xff] 0.0
      %127 = vst [vmem:[#allocation2 + $0x18] sm:$0xff] 0.0
      %128 = vst [vmem:[#allocation2 + $0x20] sm:$0xff] 0.0
      %129 = vst [vmem:[#allocation2 + $0x28] sm:$0xff] 0.0
      %130 = vst [vmem:[#allocation2 + $0x30] sm:$0xff] 0.0
      %131 = vst [vmem:[#allocation2 + $0x38] sm:$0xff] 0.0
      %132 = vst [vmem:[#allocation2 + $0x40] sm:$0xff] 0.0
      %133 = vst [vmem:[#allocation2 + $0x48] sm:$0xff] 0.0
      %134 = vst [vmem:[#allocation2 + $0x50] sm:$0xff] 0.0
      %135 = vst [vmem:[#allocation2 + $0x58] sm:$0xff] 0.0
      %136 = vst [vmem:[#allocation2 + $0x60] sm:$0xff] 0.0
      %137 = vst [vmem:[#allocation2 + $0x68] sm:$0xff] 0.0
      %138 = vst [vmem:[#allocation2 + $0x70] sm:$0xff] 0.0
      %139 = vst [vmem:[#allocation2 + $0x78] sm:$0xff] 0.0
    $region61: #{tpu_custom_call.1} parent=1 // pred_fallthru
      _
    %v140 = vld [vmem:[#allocation2] sm:$0xff]
    %v141 = vld [vmem:[#allocation2 + $0x8] sm:$0xff]
    %v142 = vld [vmem:[#allocation2 + $0x10] sm:$0xff]
    %v143 = vld [vmem:[#allocation2 + $0x18] sm:$0xff]
    %v144 = vld [vmem:[#allocation2 + $0x20] sm:$0xff]
    %v145 = vld [vmem:[#allocation2 + $0x28] sm:$0xff]
    %v146 = vld [vmem:[#allocation2 + $0x30] sm:$0xff]
    %v147 = vld [vmem:[#allocation2 + $0x38] sm:$0xff]
    %v148 = vld [vmem:[#allocation2 + $0x40] sm:$0xff]
    %v149 = vld [vmem:[#allocation2 + $0x48] sm:$0xff]
    %v150 = vld [vmem:[#allocation2 + $0x50] sm:$0xff]
    %v151 = vld [vmem:[#allocation2 + $0x58] sm:$0xff]
    %v152 = vld [vmem:[#allocation2 + $0x60] sm:$0xff]
    %v153 = vld [vmem:[#allocation2 + $0x68] sm:$0xff]
    %v154 = vld [vmem:[#allocation2 + $0x70] sm:$0xff]
    %v155 = vld [vmem:[#allocation2 + $0x78] sm:$0xff]
    %v156 = vld [vmem:[#allocation3] sm:$0xf]
    %v157 = vld [vmem:[#allocation3 + $0x4] sm:$0xf]
    %v158 = vld [vmem:[#allocation6] sm:$0xff]
    %v159 = vld [vmem:[#allocation6 + $0x8] sm:$0xff]
    %v160 = vld [vmem:[#allocation6 + $0x10] sm:$0xff]
    %v161 = vld [vmem:[#allocation6 + $0x18] sm:$0xff]
    %v162 = vld [vmem:[#allocation6 + $0x20] sm:$0xff]
    %v163 = vld [vmem:[#allocation6 + $0x28] sm:$0xff]
    %v164 = vld [vmem:[#allocation6 + $0x30] sm:$0xff]
    %v165 = vld [vmem:[#allocation6 + $0x38] sm:$0xff]
    %v166 = vld [vmem:[#allocation6 + $0x40] sm:$0xff]
    %v167 = vld [vmem:[#allocation6 + $0x48] sm:$0xff]
    %v168 = vld [vmem:[#allocation6 + $0x50] sm:$0xff]
    %v169 = vld [vmem:[#allocation6 + $0x58] sm:$0xff]
    %v170 = vld [vmem:[#allocation6 + $0x60] sm:$0xff]
    %v171 = vld [vmem:[#allocation6 + $0x68] sm:$0xff]
    %v172 = vld [vmem:[#allocation6 + $0x70] sm:$0xff]
    %v173 = vld [vmem:[#allocation6 + $0x78] sm:$0xff]
    %v174 = vld [vmem:[#allocation6 + $0x80] sm:$0xff]
    %v175 = vld [vmem:[#allocation6 + $0x88] sm:$0xff]
    %v176 = vld [vmem:[#allocation6 + $0x90] sm:$0xff]
    %v177 = vld [vmem:[#allocation6 + $0x98] sm:$0xff]
    %v178 = vld [vmem:[#allocation6 + $0xa0] sm:$0xff]
    %v179 = vld [vmem:[#allocation6 + $0xa8] sm:$0xff]
    %v180 = vld [vmem:[#allocation6 + $0xb0] sm:$0xff]
    %v181 = vld [vmem:[#allocation6 + $0xb8] sm:$0xff]
    %v182 = vld [vmem:[#allocation6 + $0xc0] sm:$0xff]
    %v183 = vld [vmem:[#allocation6 + $0xc8] sm:$0xff]
    %v184 = vld [vmem:[#allocation6 + $0xd0] sm:$0xff]
    %v185 = vld [vmem:[#allocation6 + $0xd8] sm:$0xff]
    %v186 = vld [vmem:[#allocation6 + $0xe0] sm:$0xff]
    %v187 = vld [vmem:[#allocation6 + $0xe8] sm:$0xff]
    %v188 = vld [vmem:[#allocation6 + $0xf0] sm:$0xff]
    %v189 = vld [vmem:[#allocation6 + $0xf8] sm:$0xff]
    %v190 = vld [vmem:[#allocation6 + $0x100] sm:$0xff]
    %v191 = vld [vmem:[#allocation6 + $0x108] sm:$0xff]
    %v192 = vld [vmem:[#allocation6 + $0x110] sm:$0xff]
    %v193 = vld [vmem:[#allocation6 + $0x118] sm:$0xff]
    %v194 = vld [vmem:[#allocation6 + $0x120] sm:$0xff]
    %v195 = vld [vmem:[#allocation6 + $0x128] sm:$0xff]
    %v196 = vld [vmem:[#allocation6 + $0x130] sm:$0xff]
    %v197 = vld [vmem:[#allocation6 + $0x138] sm:$0xff]
    %v198 = vld [vmem:[#allocation6 + $0x140] sm:$0xff]
    %v199 = vld [vmem:[#allocation6 + $0x148] sm:$0xff]
    %v200 = vld [vmem:[#allocation6 + $0x150] sm:$0xff]
    %v201 = vld [vmem:[#allocation6 + $0x158] sm:$0xff]
    %v202 = vld [vmem:[#allocation6 + $0x160] sm:$0xff]
    %v203 = vld [vmem:[#allocation6 + $0x168] sm:$0xff]
    %v204 = vld [vmem:[#allocation6 + $0x170] sm:$0xff]
    %v205 = vld [vmem:[#allocation6 + $0x178] sm:$0xff]
    %v206 = vld [vmem:[#allocation6 + $0x180] sm:$0xff]
    %v207 = vld [vmem:[#allocation6 + $0x188] sm:$0xff]
    %v208 = vld [vmem:[#allocation6 + $0x190] sm:$0xff]
    %v209 = vld [vmem:[#allocation6 + $0x198] sm:$0xff]
    %v210 = vld [vmem:[#allocation6 + $0x1a0] sm:$0xff]
    %v211 = vld [vmem:[#allocation6 + $0x1a8] sm:$0xff]
    %v212 = vld [vmem:[#allocation6 + $0x1b0] sm:$0xff]
    %v213 = vld [vmem:[#allocation6 + $0x1b8] sm:$0xff]
    %v214 = vld [vmem:[#allocation6 + $0x1c0] sm:$0xff]
    %v215 = vld [vmem:[#allocation6 + $0x1c8] sm:$0xff]
    %v216 = vld [vmem:[#allocation6 + $0x1d0] sm:$0xff]
    %v217 = vld [vmem:[#allocation6 + $0x1d8] sm:$0xff]
    %v218 = vld [vmem:[#allocation6 + $0x1e0] sm:$0xff]
    %v219 = vld [vmem:[#allocation6 + $0x1e8] sm:$0xff]
    %v220 = vld [vmem:[#allocation6 + $0x1f0] sm:$0xff]
    %v221 = vld [vmem:[#allocation6 + $0x1f8] sm:$0xff]
    %v224 = vunpack.c.l.b16 %v156
    %v225 = vunpack.c.l.b16 %v157
    %v226 = vpack.c.b16 %v225, %v224
    %v292 = vunpack.c.l.b16 %v158
    %v293 = vunpack.c.h.b16 %v158
    %v294 = vunpack.c.l.b16 %v159
    %v295 = vunpack.c.h.b16 %v159
    %v296 = vunpack.c.l.b16 %v160
    %v297 = vunpack.c.h.b16 %v160
    %v298 = vunpack.c.l.b16 %v161
    %v299 = vunpack.c.h.b16 %v161
    %v300 = vunpack.c.l.b16 %v162
    %v301 = vunpack.c.h.b16 %v162
    %v302 = vunpack.c.l.b16 %v163
    %v303 = vunpack.c.h.b16 %v163
    %v304 = vunpack.c.l.b16 %v164
    %v305 = vunpack.c.h.b16 %v164
    %v306 = vunpack.c.l.b16 %v165
    %v307 = vunpack.c.h.b16 %v165
    %v308 = vunpack.c.l.b16 %v166
    %v309 = vunpack.c.h.b16 %v166
    %v310 = vunpack.c.l.b16 %v167
    %v311 = vunpack.c.h.b16 %v167
    %v312 = vunpack.c.l.b16 %v168
    %v313 = vunpack.c.h.b16 %v168
    %v314 = vunpack.c.l.b16 %v169
    %v315 = vunpack.c.h.b16 %v169
    %v316 = vunpack.c.l.b16 %v170
    %v317 = vunpack.c.h.b16 %v170
    %v318 = vunpack.c.l.b16 %v171
    %v319 = vunpack.c.h.b16 %v171
    %v320 = vunpack.c.l.b16 %v172
    %v321 = vunpack.c.h.b16 %v172
    %v322 = vunpack.c.l.b16 %v173
    %v323 = vunpack.c.h.b16 %v173
    %v324 = vunpack.c.l.b16 %v174
    %v325 = vunpack.c.h.b16 %v174
    %v326 = vunpack.c.l.b16 %v175
    %v327 = vunpack.c.h.b16 %v175
    %v328 = vunpack.c.l.b16 %v176
    %v329 = vunpack.c.h.b16 %v176
    %v330 = vunpack.c.l.b16 %v177
    %v331 = vunpack.c.h.b16 %v177
    %v332 = vunpack.c.l.b16 %v178
    %v333 = vunpack.c.h.b16 %v178
    %v334 = vunpack.c.l.b16 %v179
    %v335 = vunpack.c.h.b16 %v179
    %v336 = vunpack.c.l.b16 %v180
    %v337 = vunpack.c.h.b16 %v180
    %v338 = vunpack.c.l.b16 %v181
    %v339 = vunpack.c.h.b16 %v181
    %v340 = vunpack.c.l.b16 %v182
    %v341 = vunpack.c.h.b16 %v182
    %v342 = vunpack.c.l.b16 %v183
    %v343 = vunpack.c.h.b16 %v183
    %v344 = vunpack.c.l.b16 %v184
    %v345 = vunpack.c.h.b16 %v184
    %v346 = vunpack.c.l.b16 %v185
    %v347 = vunpack.c.h.b16 %v185
    %v348 = vunpack.c.l.b16 %v186
    %v349 = vunpack.c.h.b16 %v186
    %v350 = vunpack.c.l.b16 %v187
    %v351 = vunpack.c.h.b16 %v187
    %v352 = vunpack.c.l.b16 %v188
    %v353 = vunpack.c.h.b16 %v188
    %v354 = vunpack.c.l.b16 %v189
    %v355 = vunpack.c.h.b16 %v189
    %v356 = vunpack.c.l.b16 %v190
    %v357 = vunpack.c.h.b16 %v190
    %v358 = vunpack.c.l.b16 %v191
    %v359 = vunpack.c.h.b16 %v191
    %v360 = vunpack.c.l.b16 %v192
    %v361 = vunpack.c.h.b16 %v192
    %v362 = vunpack.c.l.b16 %v193
    %v363 = vunpack.c.h.b16 %v193
    %v364 = vunpack.c.l.b16 %v194
    %v365 = vunpack.c.h.b16 %v194
    %v366 = vunpack.c.l.b16 %v195
    %v367 = vunpack.c.h.b16 %v195
    %v368 = vunpack.c.l.b16 %v196
    %v369 = vunpack.c.h.b16 %v196
    %v370 = vunpack.c.l.b16 %v197
    %v371 = vunpack.c.h.b16 %v197
    %v372 = vunpack.c.l.b16 %v198
    %v373 = vunpack.c.h.b16 %v198
    %v374 = vunpack.c.l.b16 %v199
    %v375 = vunpack.c.h.b16 %v199
    %v376 = vunpack.c.l.b16 %v200
    %v377 = vunpack.c.h.b16 %v200
    %v378 = vunpack.c.l.b16 %v201
    %v379 = vunpack.c.h.b16 %v201
    %v380 = vunpack.c.l.b16 %v202
    %v381 = vunpack.c.h.b16 %v202
    %v382 = vunpack.c.l.b16 %v203
    %v383 = vunpack.c.h.b16 %v203
    %v384 = vunpack.c.l.b16 %v204
    %v385 = vunpack.c.h.b16 %v204
    %v386 = vunpack.c.l.b16 %v205
    %v387 = vunpack.c.h.b16 %v205
    %v388 = vunpack.c.l.b16 %v206
    %v389 = vunpack.c.h.b16 %v206
    %v390 = vunpack.c.l.b16 %v207
    %v391 = vunpack.c.h.b16 %v207
    %v392 = vunpack.c.l.b16 %v208
    %v393 = vunpack.c.h.b16 %v208
    %v394 = vunpack.c.l.b16 %v209
    %v395 = vunpack.c.h.b16 %v209
    %v396 = vunpack.c.l.b16 %v210
    %v397 = vunpack.c.h.b16 %v210
    %v398 = vunpack.c.l.b16 %v211
    %v399 = vunpack.c.h.b16 %v211
    %v400 = vunpack.c.l.b16 %v212
    %v401 = vunpack.c.h.b16 %v212
    %v402 = vunpack.c.l.b16 %v213
    %v403 = vunpack.c.h.b16 %v213
    %v404 = vunpack.c.l.b16 %v214
    %v405 = vunpack.c.h.b16 %v214
    %v406 = vunpack.c.l.b16 %v215
    %v407 = vunpack.c.h.b16 %v215
    %v408 = vunpack.c.l.b16 %v216
    %v409 = vunpack.c.h.b16 %v216
    %v410 = vunpack.c.l.b16 %v217
    %v411 = vunpack.c.h.b16 %v217
    %v412 = vunpack.c.l.b16 %v218
    %v413 = vunpack.c.h.b16 %v218
    %v414 = vunpack.c.l.b16 %v219
    %v415 = vunpack.c.h.b16 %v219
    %v416 = vunpack.c.l.b16 %v220
    %v417 = vunpack.c.h.b16 %v220
    %v418 = vunpack.c.l.b16 %v221
    %v419 = vunpack.c.h.b16 %v221
    %v420 = vpack.c.b16 %v300, %v292
    %v421 = vpack.c.b16 %v301, %v293
    %v422 = vpack.c.b16 %v302, %v294
    %v423 = vpack.c.b16 %v303, %v295
    %v424 = vpack.c.b16 %v304, %v296
    %v425 = vpack.c.b16 %v305, %v297
    %v426 = vpack.c.b16 %v306, %v298
    %v427 = vpack.c.b16 %v307, %v299
    %v428 = vpack.c.b16 %v316, %v308
    %v429 = vpack.c.b16 %v317, %v309
    %v430 = vpack.c.b16 %v318, %v310
    %v431 = vpack.c.b16 %v319, %v311
    %v432 = vpack.c.b16 %v320, %v312
    %v433 = vpack.c.b16 %v321, %v313
    %v434 = vpack.c.b16 %v322, %v314
    %v435 = vpack.c.b16 %v323, %v315
    %v436 = vpack.c.b16 %v332, %v324
    %v437 = vpack.c.b16 %v333, %v325
    %v438 = vpack.c.b16 %v334, %v326
    %v439 = vpack.c.b16 %v335, %v327
    %v440 = vpack.c.b16 %v336, %v328
    %v441 = vpack.c.b16 %v337, %v329
    %v442 = vpack.c.b16 %v338, %v330
    %v443 = vpack.c.b16 %v339, %v331
    %v444 = vpack.c.b16 %v348, %v340
    %v445 = vpack.c.b16 %v349, %v341
    %v446 = vpack.c.b16 %v350, %v342
    %v447 = vpack.c.b16 %v351, %v343
    %v448 = vpack.c.b16 %v352, %v344
    %v449 = vpack.c.b16 %v353, %v345
    %v450 = vpack.c.b16 %v354, %v346
    %v451 = vpack.c.b16 %v355, %v347
    %v452 = vpack.c.b16 %v364, %v356
    %v453 = vpack.c.b16 %v365, %v357
    %v454 = vpack.c.b16 %v366, %v358
    %v455 = vpack.c.b16 %v367, %v359
    %v456 = vpack.c.b16 %v368, %v360
    %v457 = vpack.c.b16 %v369, %v361
    %v458 = vpack.c.b16 %v370, %v362
    %v459 = vpack.c.b16 %v371, %v363
    %v460 = vpack.c.b16 %v380, %v372
    %v461 = vpack.c.b16 %v381, %v373
    %v462 = vpack.c.b16 %v382, %v374
    %v463 = vpack.c.b16 %v383, %v375
    %v464 = vpack.c.b16 %v384, %v376
    %v465 = vpack.c.b16 %v385, %v377
    %v466 = vpack.c.b16 %v386, %v378
    %v467 = vpack.c.b16 %v387, %v379
    %v468 = vpack.c.b16 %v396, %v388
    %v469 = vpack.c.b16 %v397, %v389
    %v470 = vpack.c.b16 %v398, %v390
    %v471 = vpack.c.b16 %v399, %v391
    %v472 = vpack.c.b16 %v400, %v392
    %v473 = vpack.c.b16 %v401, %v393
    %v474 = vpack.c.b16 %v402, %v394
    %v475 = vpack.c.b16 %v403, %v395
    %v476 = vpack.c.b16 %v412, %v404
    %v477 = vpack.c.b16 %v413, %v405
    %v478 = vpack.c.b16 %v414, %v406
    %v479 = vpack.c.b16 %v415, %v407
    %v480 = vpack.c.b16 %v416, %v408
    %v481 = vpack.c.b16 %v417, %v409
    %v482 = vpack.c.b16 %v418, %v410
    %v483 = vpack.c.b16 %v419, %v411
    %548 = vmatprep.subr.bf16.mxu0 %v421
    %549 = vmatpush1.bf16.msra.mxu0 %v420
    %550 = vmatprep.subr.bf16.mxu0 %v429
    %551 = vmatpush1.bf16.msra.mxu0 %v428
    %552 = vmatprep.subr.bf16.mxu0 %v437
    %553 = vmatpush1.bf16.msra.mxu0 %v436
    %554 = vmatprep.subr.bf16.mxu0 %v445
    %555 = vmatpush1.bf16.msra.mxu0 %v444
    %556 = vmatprep.subr.bf16.mxu0 %v453
    %557 = vmatpush1.bf16.msra.mxu0 %v452
    %558 = vmatprep.subr.bf16.mxu0 %v461
    %559 = vmatpush1.bf16.msra.mxu0 %v460
    %560 = vmatprep.subr.bf16.mxu0 %v469
    %561 = vmatpush1.bf16.msra.mxu0 %v468
    %562 = vmatprep.subr.bf16.mxu0 %v477
    %563 = vmatpush1.bf16.msra.mxu0 %v476
    %564 = vmatprep.subr.bf16.mxu0 0
    %565 = vmatpush1.bf16.msra.mxu0 0
    %566 = vmatprep.subr.bf16.mxu0 0
    %567 = vmatpush1.bf16.msra.mxu0 0
    %568 = vmatprep.subr.bf16.mxu0 0
    %569 = vmatpush1.bf16.msra.mxu0 0
    %570 = vmatprep.subr.bf16.mxu0 0
    %571 = vmatpush1.bf16.msra.mxu0 0
    %572 = vmatprep.subr.bf16.mxu0 0
    %573 = vmatpush1.bf16.msra.mxu0 0
    %574 = vmatprep.subr.bf16.mxu0 0
    %575 = vmatpush1.bf16.msra.mxu0 0
    %576 = vmatprep.subr.bf16.mxu0 0
    %577 = vmatpush1.bf16.msra.mxu0 0
    %578 = vmatprep.subr.bf16.mxu0 0
    %579 = vmatpush1.bf16.msra.mxu0 0
    %580 = vmatprep.mubr.bf16.mxu0 0
    %581 = vmatmul.mubr.bf16.gmra.mrb[0].mxu0 %v226
    %v582 = vpop.f32.mrb[0].mxu0
    %v583 = vadd.f32 0.0, %v582
    %v584 = vpop.f32.mrb[0].mxu0
    %v585 = vadd.f32 0.0, %v584
    %v586 = vpop.f32.mrb[0].mxu0
    %v587 = vadd.f32 0.0, %v586
    %v588 = vpop.f32.mrb[0].mxu0
    %v589 = vadd.f32 0.0, %v588
    %590 = vdwg.mxu0
    %591 = vmatprep.subr.bf16.mxu0 %v423
    %592 = vmatpush1.bf16.msra.mxu0 %v422
    %593 = vmatprep.subr.bf16.mxu0 %v431
    %594 = vmatpush1.bf16.msra.mxu0 %v430
    %595 = vmatprep.subr.bf16.mxu0 %v439
    %596 = vmatpush1.bf16.msra.mxu0 %v438
    %597 = vmatprep.subr.bf16.mxu0 %v447
    %598 = vmatpush1.bf16.msra.mxu0 %v446
    %599 = vmatprep.subr.bf16.mxu0 %v455
    %600 = vmatpush1.bf16.msra.mxu0 %v454
    %601 = vmatprep.subr.bf16.mxu0 %v463
    %602 = vmatpush1.bf16.msra.mxu0 %v462
    %603 = vmatprep.subr.bf16.mxu0 %v471
    %604 = vmatpush1.bf16.msra.mxu0 %v470
    %605 = vmatprep.subr.bf16.mxu0 %v479
    %606 = vmatpush1.bf16.msra.mxu0 %v478
    %607 = vmatprep.subr.bf16.mxu0 0
    %608 = vmatpush1.bf16.msra.mxu0 0
    %609 = vmatprep.subr.bf16.mxu0 0
    %610 = vmatpush1.bf16.msra.mxu0 0
    %611 = vmatprep.subr.bf16.mxu0 0
    %612 = vmatpush1.bf16.msra.mxu0 0
    %613 = vmatprep.subr.bf16.mxu0 0
    %614 = vmatpush1.bf16.msra.mxu0 0
    %615 = vmatprep.subr.bf16.mxu0 0
    %616 = vmatpush1.bf16.msra.mxu0 0
    %617 = vmatprep.subr.bf16.mxu0 0
    %618 = vmatpush1.bf16.msra.mxu0 0
    %619 = vmatprep.subr.bf16.mxu0 0
    %620 = vmatpush1.bf16.msra.mxu0 0
    %621 = vmatprep.subr.bf16.mxu0 0
    %622 = vmatpush1.bf16.msra.mxu0 0
    %623 = vmatprep.mubr.bf16.mxu0 0
    %624 = vmatmul.mubr.bf16.gmra.mrb[0].mxu0 %v226
    %v625 = vpop.f32.mrb[0].mxu0
    %v626 = vadd.f32 0.0, %v625
    %v627 = vpop.f32.mrb[0].mxu0
    %v628 = vadd.f32 0.0, %v627
    %v629 = vpop.f32.mrb[0].mxu0
    %v630 = vadd.f32 0.0, %v629
    %v631 = vpop.f32.mrb[0].mxu0
    %v632 = vadd.f32 0.0, %v631
    %633 = vdwg.mxu0
    %634 = vmatprep.subr.bf16.mxu0 %v425
    %635 = vmatpush1.bf16.msra.mxu0 %v424
    %636 = vmatprep.subr.bf16.mxu0 %v433
    %637 = vmatpush1.bf16.msra.mxu0 %v432
    %638 = vmatprep.subr.bf16.mxu0 %v441
    %639 = vmatpush1.bf16.msra.mxu0 %v440
    %640 = vmatprep.subr.bf16.mxu0 %v449
    %641 = vmatpush1.bf16.msra.mxu0 %v448
    %642 = vmatprep.subr.bf16.mxu0 %v457
    %643 = vmatpush1.bf16.msra.mxu0 %v456
    %644 = vmatprep.subr.bf16.mxu0 %v465
    %645 = vmatpush1.bf16.msra.mxu0 %v464
    %646 = vmatprep.subr.bf16.mxu0 %v473
    %647 = vmatpush1.bf16.msra.mxu0 %v472
    %648 = vmatprep.subr.bf16.mxu0 %v481
    %649 = vmatpush1.bf16.msra.mxu0 %v480
    %650 = vmatprep.subr.bf16.mxu0 0
    %651 = vmatpush1.bf16.msra.mxu0 0
    %652 = vmatprep.subr.bf16.mxu0 0
    %653 = vmatpush1.bf16.msra.mxu0 0
    %654 = vmatprep.subr.bf16.mxu0 0
    %655 = vmatpush1.bf16.msra.mxu0 0
    %656 = vmatprep.subr.bf16.mxu0 0
    %657 = vmatpush1.bf16.msra.mxu0 0
    %658 = vmatprep.subr.bf16.mxu0 0
    %659 = vmatpush1.bf16.msra.mxu0 0
    %660 = vmatprep.subr.bf16.mxu0 0
    %661 = vmatpush1.bf16.msra.mxu0 0
    %662 = vmatprep.subr.bf16.mxu0 0
    %663 = vmatpush1.bf16.msra.mxu0 0
    %664 = vmatprep.subr.bf16.mxu0 0
    %665 = vmatpush1.bf16.msra.mxu0 0
    %666 = vmatprep.mubr.bf16.mxu0 0
    %667 = vmatmul.mubr.bf16.gmra.mrb[0].mxu0 %v226
    %v668 = vpop.f32.mrb[0].mxu0
    %v669 = vadd.f32 0.0, %v668
    %v670 = vpop.f32.mrb[0].mxu0
    %v671 = vadd.f32 0.0, %v670
    %v672 = vpop.f32.mrb[0].mxu0
    %v673 = vadd.f32 0.0, %v672
    %v674 = vpop.f32.mrb[0].mxu0
    %v675 = vadd.f32 0.0, %v674
    %676 = vdwg.mxu0
    %677 = vmatprep.subr.bf16.mxu0 %v427
    %678 = vmatpush1.bf16.msra.mxu0 %v426
    %679 = vmatprep.subr.bf16.mxu0 %v435
    %680 = vmatpush1.bf16.msra.mxu0 %v434
    %681 = vmatprep.subr.bf16.mxu0 %v443
    %682 = vmatpush1.bf16.msra.mxu0 %v442
    %683 = vmatprep.subr.bf16.mxu0 %v451
    %684 = vmatpush1.bf16.msra.mxu0 %v450
    %685 = vmatprep.subr.bf16.mxu0 %v459
    %686 = vmatpush1.bf16.msra.mxu0 %v458
    %687 = vmatprep.subr.bf16.mxu0 %v467
    %688 = vmatpush1.bf16.msra.mxu0 %v466
    %689 = vmatprep.subr.bf16.mxu0 %v475
    %690 = vmatpush1.bf16.msra.mxu0 %v474
    %691 = vmatprep.subr.bf16.mxu0 %v483
    %692 = vmatpush1.bf16.msra.mxu0 %v482
    %693 = vmatprep.subr.bf16.mxu0 0
    %694 = vmatpush1.bf16.msra.mxu0 0
    %695 = vmatprep.subr.bf16.mxu0 0
    %696 = vmatpush1.bf16.msra.mxu0 0
    %697 = vmatprep.subr.bf16.mxu0 0
    %698 = vmatpush1.bf16.msra.mxu0 0
    %699 = vmatprep.subr.bf16.mxu0 0
    %700 = vmatpush1.bf16.msra.mxu0 0
    %701 = vmatprep.subr.bf16.mxu0 0
    %702 = vmatpush1.bf16.msra.mxu0 0
    %703 = vmatprep.subr.bf16.mxu0 0
    %704 = vmatpush1.bf16.msra.mxu0 0
    %705 = vmatprep.subr.bf16.mxu0 0
    %706 = vmatpush1.bf16.msra.mxu0 0
    %707 = vmatprep.subr.bf16.mxu0 0
    %708 = vmatpush1.bf16.msra.mxu0 0
    %709 = vmatprep.mubr.bf16.mxu0 0
    %710 = vmatmul.mubr.bf16.gmra.mrb[0].mxu0 %v226
    %v711 = vpop.f32.mrb[0].mxu0
    %v712 = vadd.f32 0.0, %v711
    %v713 = vpop.f32.mrb[0].mxu0
    %v714 = vadd.f32 0.0, %v713
    %v715 = vpop.f32.mrb[0].mxu0
    %v716 = vadd.f32 0.0, %v715
    %v717 = vpop.f32.mrb[0].mxu0
    %v718 = vadd.f32 0.0, %v717
    %719 = vdwg.mxu0
    %v720 = vadd.f32 %v140, %v583
    %v721 = vadd.f32 %v141, %v585
    %v722 = vadd.f32 %v142, %v626
    %v723 = vadd.f32 %v143, %v628
    %v724 = vadd.f32 %v144, %v669
    %v725 = vadd.f32 %v145, %v671
    %v726 = vadd.f32 %v146, %v712
    %v727 = vadd.f32 %v147, %v714
    %v728 = vadd.f32 %v148, %v587
    %v729 = vadd.f32 %v149, %v589
    %v730 = vadd.f32 %v150, %v630
    %v731 = vadd.f32 %v151, %v632
    %v732 = vadd.f32 %v152, %v673
    %v733 = vadd.f32 %v153, %v675
    %v734 = vadd.f32 %v154, %v716
    %v735 = vadd.f32 %v155, %v718
    %736 = vst [vmem:[#allocation2] sm:$0xff] %v720
    %737 = vst [vmem:[#allocation2 + $0x8] sm:$0xff] %v721
    %738 = vst [vmem:[#allocation2 + $0x10] sm:$0xff] %v722
    %739 = vst [vmem:[#allocation2 + $0x18] sm:$0xff] %v723
    %740 = vst [vmem:[#allocation2 + $0x20] sm:$0xff] %v724
    %741 = vst [vmem:[#allocation2 + $0x28] sm:$0xff] %v725
    %742 = vst [vmem:[#allocation2 + $0x30] sm:$0xff] %v726
    %743 = vst [vmem:[#allocation2 + $0x38] sm:$0xff] %v727
    %744 = vst [vmem:[#allocation2 + $0x40] sm:$0xff] %v728
    %745 = vst [vmem:[#allocation2 + $0x48] sm:$0xff] %v729
    %746 = vst [vmem:[#allocation2 + $0x50] sm:$0xff] %v730
    %747 = vst [vmem:[#allocation2 + $0x58] sm:$0xff] %v731
    %748 = vst [vmem:[#allocation2 + $0x60] sm:$0xff] %v732
    %749 = vst [vmem:[#allocation2 + $0x68] sm:$0xff] %v733
    %750 = vst [vmem:[#allocation2 + $0x70] sm:$0xff] %v734
    %751 = vst [vmem:[#allocation2 + $0x78] sm:$0xff] %v735
    // Predicated region
    $region62: #{tpu_custom_call.1} parent=1 // pred_check
      %p752 = pneg %p120
    $region63: #{tpu_custom_call.1} parent=1 // pred_check_branch
      %754 = sbr.rel (%p752) target = $region65
    $region64: #{tpu_custom_call.1} parent=1 // pred_region
      %v755 = vld [vmem:[#allocation2] sm:$0xff]
      %v756 = vld [vmem:[#allocation2 + $0x8] sm:$0xff]
      %v757 = vld [vmem:[#allocation2 + $0x10] sm:$0xff]
      %v758 = vld [vmem:[#allocation2 + $0x18] sm:$0xff]
      %v759 = vld [vmem:[#allocation2 + $0x20] sm:$0xff]
      %v760 = vld [vmem:[#allocation2 + $0x28] sm:$0xff]
      %v761 = vld [vmem:[#allocation2 + $0x30] sm:$0xff]
      %v762 = vld [vmem:[#allocation2 + $0x38] sm:$0xff]
      %v763 = vld [vmem:[#allocation2 + $0x40] sm:$0xff]
      %v764 = vld [vmem:[#allocation2 + $0x48] sm:$0xff]
      %v765 = vld [vmem:[#allocation2 + $0x50] sm:$0xff]
      %v766 = vld [vmem:[#allocation2 + $0x58] sm:$0xff]
      %v767 = vld [vmem:[#allocation2 + $0x60] sm:$0xff]
      %v768 = vld [vmem:[#allocation2 + $0x68] sm:$0xff]
      %v769 = vld [vmem:[#allocation2 + $0x70] sm:$0xff]
      %v770 = vld [vmem:[#allocation2 + $0x78] sm:$0xff]
      %v771 = vld [vmem:[#allocation8] sm:$0xff]
      %v773 = vlaneseq
      %v774 = vshrl.u32 %v773, 7
      %v775 = vsub.s32 0, %v774
      %v776 = vrot.slane %v771, %v775
      %v777 = vlaneseq
      %v778 = vshrl.u32 %v777, 7
      %v779 = vsub.s32 1, %v778
      %v780 = vrot.slane %v771, %v779
      %v781 = vlaneseq
      %v782 = vshrl.u32 %v781, 7
      %v783 = vsub.s32 2, %v782
      %v784 = vrot.slane %v771, %v783
      %v785 = vlaneseq
      %v786 = vshrl.u32 %v785, 7
      %v787 = vsub.s32 3, %v786
      %v788 = vrot.slane %v771, %v787
      %v789 = vlaneseq
      %v790 = vshrl.u32 %v789, 7
      %v791 = vsub.s32 4, %v790
      %v792 = vrot.slane %v771, %v791
      %v793 = vlaneseq
      %v794 = vshrl.u32 %v793, 7
      %v795 = vsub.s32 5, %v794
      %v796 = vrot.slane %v771, %v795
      %v797 = vlaneseq
      %v798 = vshrl.u32 %v797, 7
      %v799 = vsub.s32 6, %v798
      %v800 = vrot.slane %v771, %v799
      %v801 = vlaneseq
      %v802 = vshrl.u32 %v801, 7
      %v803 = vsub.s32 7, %v802
      %v804 = vrot.slane %v771, %v803
      %v813 = vadd.f32 %v755, %v776
      %v814 = vadd.f32 %v756, %v780
      %v815 = vadd.f32 %v757, %v784
      %v816 = vadd.f32 %v758, %v788
      %v817 = vadd.f32 %v759, %v792
      %v818 = vadd.f32 %v760, %v796
      %v819 = vadd.f32 %v761, %v800
      %v820 = vadd.f32 %v762, %v804
      %v821 = vadd.f32 %v763, %v776
      %v822 = vadd.f32 %v764, %v780
      %v823 = vadd.f32 %v765, %v784
      %v824 = vadd.f32 %v766, %v788
      %v825 = vadd.f32 %v767, %v792
      %v826 = vadd.f32 %v768, %v796
      %v827 = vadd.f32 %v769, %v800
      %v828 = vadd.f32 %v770, %v804
      %v829 = vmax.f32 %v813, 0.0
      %v830 = vmax.f32 %v814, 0.0
      %v831 = vmax.f32 %v815, 0.0
      %v832 = vmax.f32 %v816, 0.0
      %v833 = vmax.f32 %v817, 0.0
      %v834 = vmax.f32 %v818, 0.0
      %v835 = vmax.f32 %v819, 0.0
      %v836 = vmax.f32 %v820, 0.0
      %v837 = vmax.f32 %v821, 0.0
      %v838 = vmax.f32 %v822, 0.0
      %v839 = vmax.f32 %v823, 0.0
      %v840 = vmax.f32 %v824, 0.0
      %v841 = vmax.f32 %v825, 0.0
      %v842 = vmax.f32 %v826, 0.0
      %v843 = vmax.f32 %v827, 0.0
      %v844 = vmax.f32 %v828, 0.0
      %v845 = vpack.c.bf16 %v837, %v829
      %v846 = vpack.c.bf16 %v838, %v830
      %v847 = vpack.c.bf16 %v839, %v831
      %v848 = vpack.c.bf16 %v840, %v832
      %v849 = vpack.c.bf16 %v841, %v833
      %v850 = vpack.c.bf16 %v842, %v834
      %v851 = vpack.c.bf16 %v843, %v835
      %v852 = vpack.c.bf16 %v844, %v836
      %v853 = vld [vmem:[#allocation9] sm:$0xff]
      %v854 = vld [vmem:[#allocation9 + $0x8] sm:$0xff]
      %v855 = vld [vmem:[#allocation9 + $0x10] sm:$0xff]
      %v856 = vld [vmem:[#allocation9 + $0x18] sm:$0xff]
      %v857 = vld [vmem:[#allocation9 + $0x20] sm:$0xff]
      %v858 = vld [vmem:[#allocation9 + $0x28] sm:$0xff]
      %v859 = vld [vmem:[#allocation9 + $0x30] sm:$0xff]
      %v860 = vld [vmem:[#allocation9 + $0x38] sm:$0xff]
      %v861 = vld [vmem:[#allocation9 + $0x40] sm:$0xff]
      %v862 = vld [vmem:[#allocation9 + $0x48] sm:$0xff]
      %v863 = vld [vmem:[#allocation9 + $0x50] sm:$0xff]
      %v864 = vld [vmem:[#allocation9 + $0x58] sm:$0xff]
      %v865 = vld [vmem:[#allocation9 + $0x60] sm:$0xff]
      %v866 = vld [vmem:[#allocation9 + $0x68] sm:$0xff]
      %v867 = vld [vmem:[#allocation9 + $0x70] sm:$0xff]
      %v868 = vld [vmem:[#allocation9 + $0x78] sm:$0xff]
      %v869 = vld [vmem:[#allocation9 + $0x80] sm:$0xff]
      %v870 = vld [vmem:[#allocation9 + $0x88] sm:$0xff]
      %v871 = vld [vmem:[#allocation9 + $0x90] sm:$0xff]
      %v872 = vld [vmem:[#allocation9 + $0x98] sm:$0xff]
      %v873 = vld [vmem:[#allocation9 + $0xa0] sm:$0xff]
      %v874 = vld [vmem:[#allocation9 + $0xa8] sm:$0xff]
      %v875 = vld [vmem:[#allocation9 + $0xb0] sm:$0xff]
      %v876 = vld [vmem:[#allocation9 + $0xb8] sm:$0xff]
      %v877 = vld [vmem:[#allocation9 + $0xc0] sm:$0xff]
      %v878 = vld [vmem:[#allocation9 + $0xc8] sm:$0xff]
      %v879 = vld [vmem:[#allocation9 + $0xd0] sm:$0xff]
      %v880 = vld [vmem:[#allocation9 + $0xd8] sm:$0xff]
      %v881 = vld [vmem:[#allocation9 + $0xe0] sm:$0xff]
      %v882 = vld [vmem:[#allocation9 + $0xe8] sm:$0xff]
      %v883 = vld [vmem:[#allocation9 + $0xf0] sm:$0xff]
      %v884 = vld [vmem:[#allocation9 + $0xf8] sm:$0xff]
      %v885 = vld [vmem:[#allocation9 + $0x100] sm:$0xff]
      %v886 = vld [vmem:[#allocation9 + $0x108] sm:$0xff]
      %v887 = vld [vmem:[#allocation9 + $0x110] sm:$0xff]
      %v888 = vld [vmem:[#allocation9 + $0x118] sm:$0xff]
      %v889 = vld [vmem:[#allocation9 + $0x120] sm:$0xff]
      %v890 = vld [vmem:[#allocation9 + $0x128] sm:$0xff]
      %v891 = vld [vmem:[#allocation9 + $0x130] sm:$0xff]
      %v892 = vld [vmem:[#allocation9 + $0x138] sm:$0xff]
      %v893 = vld [vmem:[#allocation9 + $0x140] sm:$0xff]
      %v894 = vld [vmem:[#allocation9 + $0x148] sm:$0xff]
      %v895 = vld [vmem:[#allocation9 + $0x150] sm:$0xff]
      %v896 = vld [vmem:[#allocation9 + $0x158] sm:$0xff]
      %v897 = vld [vmem:[#allocation9 + $0x160] sm:$0xff]
      %v898 = vld [vmem:[#allocation9 + $0x168] sm:$0xff]
      %v899 = vld [vmem:[#allocation9 + $0x170] sm:$0xff]
      %v900 = vld [vmem:[#allocation9 + $0x178] sm:$0xff]
      %v901 = vld [vmem:[#allocation9 + $0x180] sm:$0xff]
      %v902 = vld [vmem:[#allocation9 + $0x188] sm:$0xff]
      %v903 = vld [vmem:[#allocation9 + $0x190] sm:$0xff]
      %v904 = vld [vmem:[#allocation9 + $0x198] sm:$0xff]
      %v905 = vld [vmem:[#allocation9 + $0x1a0] sm:$0xff]
      %v906 = vld [vmem:[#allocation9 + $0x1a8] sm:$0xff]
      %v907 = vld [vmem:[#allocation9 + $0x1b0] sm:$0xff]
      %v908 = vld [vmem:[#allocation9 + $0x1b8] sm:$0xff]
      %v909 = vld [vmem:[#allocation9 + $0x1c0] sm:$0xff]
      %v910 = vld [vmem:[#allocation9 + $0x1c8] sm:$0xff]
      %v911 = vld [vmem:[#allocation9 + $0x1d0] sm:$0xff]
      %v912 = vld [vmem:[#allocation9 + $0x1d8] sm:$0xff]
      %v913 = vld [vmem:[#allocation9 + $0x1e0] sm:$0xff]
      %v914 = vld [vmem:[#allocation9 + $0x1e8] sm:$0xff]
      %v915 = vld [vmem:[#allocation9 + $0x1f0] sm:$0xff]
      %v916 = vld [vmem:[#allocation9 + $0x1f8] sm:$0xff]
      %v917 = vld [vmem:[#allocation9 + $0x200] sm:$0xff]
      %v918 = vld [vmem:[#allocation9 + $0x208] sm:$0xff]
      %v919 = vld [vmem:[#allocation9 + $0x210] sm:$0xff]
      %v920 = vld [vmem:[#allocation9 + $0x218] sm:$0xff]
      %v921 = vld [vmem:[#allocation9 + $0x220] sm:$0xff]
      %v922 = vld [vmem:[#allocation9 + $0x228] sm:$0xff]
      %v923 = vld [vmem:[#allocation9 + $0x230] sm:$0xff]
      %v924 = vld [vmem:[#allocation9 + $0x238] sm:$0xff]
      %v925 = vld [vmem:[#allocation9 + $0x240] sm:$0xff]
      %v926 = vld [vmem:[#allocation9 + $0x248] sm:$0xff]
      %v927 = vld [vmem:[#allocation9 + $0x250] sm:$0xff]
      %v928 = vld [vmem:[#allocation9 + $0x258] sm:$0xff]
      %v929 = vld [vmem:[#allocation9 + $0x260] sm:$0xff]
      %v930 = vld [vmem:[#allocation9 + $0x268] sm:$0xff]
      %v931 = vld [vmem:[#allocation9 + $0x270] sm:$0xff]
      %v932 = vld [vmem:[#allocation9 + $0x278] sm:$0xff]
      %v933 = vld [vmem:[#allocation9 + $0x280] sm:$0xff]
      %v934 = vld [vmem:[#allocation9 + $0x288] sm:$0xff]
      %v935 = vld [vmem:[#allocation9 + $0x290] sm:$0xff]
      %v936 = vld [vmem:[#allocation9 + $0x298] sm:$0xff]
      %v937 = vld [vmem:[#allocation9 + $0x2a0] sm:$0xff]
      %v938 = vld [vmem:[#allocation9 + $0x2a8] sm:$0xff]
      %v939 = vld [vmem:[#allocation9 + $0x2b0] sm:$0xff]
      %v940 = vld [vmem:[#allocation9 + $0x2b8] sm:$0xff]
      %v941 = vld [vmem:[#allocation9 + $0x2c0] sm:$0xff]
      %v942 = vld [vmem:[#allocation9 + $0x2c8] sm:$0xff]
      %v943 = vld [vmem:[#allocation9 + $0x2d0] sm:$0xff]
      %v944 = vld [vmem:[#allocation9 + $0x2d8] sm:$0xff]
      %v945 = vld [vmem:[#allocation9 + $0x2e0] sm:$0xff]
      %v946 = vld [vmem:[#allocation9 + $0x2e8] sm:$0xff]
      %v947 = vld [vmem:[#allocation9 + $0x2f0] sm:$0xff]
      %v948 = vld [vmem:[#allocation9 + $0x2f8] sm:$0xff]
      %v949 = vld [vmem:[#allocation9 + $0x300] sm:$0xff]
      %v950 = vld [vmem:[#allocation9 + $0x308] sm:$0xff]
      %v951 = vld [vmem:[#allocation9 + $0x310] sm:$0xff]
      %v952 = vld [vmem:[#allocation9 + $0x318] sm:$0xff]
      %v953 = vld [vmem:[#allocation9 + $0x320] sm:$0xff]
      %v954 = vld [vmem:[#allocation9 + $0x328] sm:$0xff]
      %v955 = vld [vmem:[#allocation9 + $0x330] sm:$0xff]
      %v956 = vld [vmem:[#allocation9 + $0x338] sm:$0xff]
      %v957 = vld [vmem:[#allocation9 + $0x340] sm:$0xff]
      %v958 = vld [vmem:[#allocation9 + $0x348] sm:$0xff]
      %v959 = vld [vmem:[#allocation9 + $0x350] sm:$0xff]
      %v960 = vld [vmem:[#allocation9 + $0x358] sm:$0xff]
      %v961 = vld [vmem:[#allocation9 + $0x360] sm:$0xff]
      %v962 = vld [vmem:[#allocation9 + $0x368] sm:$0xff]
      %v963 = vld [vmem:[#allocation9 + $0x370] sm:$0xff]
      %v964 = vld [vmem:[#allocation9 + $0x378] sm:$0xff]
      %v965 = vld [vmem:[#allocation9 + $0x380] sm:$0xff]
      %v966 = vld [vmem:[#allocation9 + $0x388] sm:$0xff]
      %v967 = vld [vmem:[#allocation9 + $0x390] sm:$0xff]
      %v968 = vld [vmem:[#allocation9 + $0x398] sm:$0xff]
      %v969 = vld [vmem:[#allocation9 + $0x3a0] sm:$0xff]
      %v970 = vld [vmem:[#allocation9 + $0x3a8] sm:$0xff]
      %v971 = vld [vmem:[#allocation9 + $0x3b0] sm:$0xff]
      %v972 = vld [vmem:[#allocation9 + $0x3b8] sm:$0xff]
      %v973 = vld [vmem:[#allocation9 + $0x3c0] sm:$0xff]
      %v974 = vld [vmem:[#allocation9 + $0x3c8] sm:$0xff]
      %v975 = vld [vmem:[#allocation9 + $0x3d0] sm:$0xff]
      %v976 = vld [vmem:[#allocation9 + $0x3d8] sm:$0xff]
      %v977 = vld [vmem:[#allocation9 + $0x3e0] sm:$0xff]
      %v978 = vld [vmem:[#allocation9 + $0x3e8] sm:$0xff]
      %v979 = vld [vmem:[#allocation9 + $0x3f0] sm:$0xff]
      %v980 = vld [vmem:[#allocation9 + $0x3f8] sm:$0xff]
      %v981 = vld [vmem:[#allocation9 + $0x400] sm:$0xff]
      %v982 = vld [vmem:[#allocation9 + $0x408] sm:$0xff]
      %v983 = vld [vmem:[#allocation9 + $0x410] sm:$0xff]
      %v984 = vld [vmem:[#allocation9 + $0x418] sm:$0xff]
      %v985 = vld [vmem:[#allocation9 + $0x420] sm:$0xff]
      %v986 = vld [vmem:[#allocation9 + $0x428] sm:$0xff]
      %v987 = vld [vmem:[#allocation9 + $0x430] sm:$0xff]
      %v988 = vld [vmem:[#allocation9 + $0x438] sm:$0xff]
      %v989 = vld [vmem:[#allocation9 + $0x440] sm:$0xff]
      %v990 = vld [vmem:[#allocation9 + $0x448] sm:$0xff]
      %v991 = vld [vmem:[#allocation9 + $0x450] sm:$0xff]
      %v992 = vld [vmem:[#allocation9 + $0x458] sm:$0xff]
      %v993 = vld [vmem:[#allocation9 + $0x460] sm:$0xff]
      %v994 = vld [vmem:[#allocation9 + $0x468] sm:$0xff]
      %v995 = vld [vmem:[#allocation9 + $0x470] sm:$0xff]
      %v996 = vld [vmem:[#allocation9 + $0x478] sm:$0xff]
      %v997 = vld [vmem:[#allocation9 + $0x480] sm:$0xff]
      %v998 = vld [vmem:[#allocation9 + $0x488] sm:$0xff]
      %v999 = vld [vmem:[#allocation9 + $0x490] sm:$0xff]
      %v1000 = vld [vmem:[#allocation9 + $0x498] sm:$0xff]
      %v1001 = vld [vmem:[#allocation9 + $0x4a0] sm:$0xff]
      %v1002 = vld [vmem:[#allocation9 + $0x4a8] sm:$0xff]
      %v1003 = vld [vmem:[#allocation9 + $0x4b0] sm:$0xff]
      %v1004 = vld [vmem:[#allocation9 + $0x4b8] sm:$0xff]
      %v1005 = vld [vmem:[#allocation9 + $0x4c0] sm:$0xff]
      %v1006 = vld [vmem:[#allocation9 + $0x4c8] sm:$0xff]
      %v1007 = vld [vmem:[#allocation9 + $0x4d0] sm:$0xff]
      %v1008 = vld [vmem:[#allocation9 + $0x4d8] sm:$0xff]
      %v1009 = vld [vmem:[#allocation9 + $0x4e0] sm:$0xff]
      %v1010 = vld [vmem:[#allocation9 + $0x4e8] sm:$0xff]
      %v1011 = vld [vmem:[#allocation9 + $0x4f0] sm:$0xff]
      %v1012 = vld [vmem:[#allocation9 + $0x4f8] sm:$0xff]
      %v1013 = vld [vmem:[#allocation9 + $0x500] sm:$0xff]
      %v1014 = vld [vmem:[#allocation9 + $0x508] sm:$0xff]
      %v1015 = vld [vmem:[#allocation9 + $0x510] sm:$0xff]
      %v1016 = vld [vmem:[#allocation9 + $0x518] sm:$0xff]
      %v1017 = vld [vmem:[#allocation9 + $0x520] sm:$0xff]
      %v1018 = vld [vmem:[#allocation9 + $0x528] sm:$0xff]
      %v1019 = vld [vmem:[#allocation9 + $0x530] sm:$0xff]
      %v1020 = vld [vmem:[#allocation9 + $0x538] sm:$0xff]
      %v1021 = vld [vmem:[#allocation9 + $0x540] sm:$0xff]
      %v1022 = vld [vmem:[#allocation9 + $0x548] sm:$0xff]
      %v1023 = vld [vmem:[#allocation9 + $0x550] sm:$0xff]
      %v1024 = vld [vmem:[#allocation9 + $0x558] sm:$0xff]
      %v1025 = vld [vmem:[#allocation9 + $0x560] sm:$0xff]
      %v1026 = vld [vmem:[#allocation9 + $0x568] sm:$0xff]
      %v1027 = vld [vmem:[#allocation9 + $0x570] sm:$0xff]
      %v1028 = vld [vmem:[#allocation9 + $0x578] sm:$0xff]
      %v1029 = vld [vmem:[#allocation9 + $0x580] sm:$0xff]
      %v1030 = vld [vmem:[#allocation9 + $0x588] sm:$0xff]
      %v1031 = vld [vmem:[#allocation9 + $0x590] sm:$0xff]
      %v1032 = vld [vmem:[#allocation9 + $0x598] sm:$0xff]
      %v1033 = vld [vmem:[#allocation9 + $0x5a0] sm:$0xff]
      %v1034 = vld [vmem:[#allocation9 + $0x5a8] sm:$0xff]
      %v1035 = vld [vmem:[#allocation9 + $0x5b0] sm:$0xff]
      %v1036 = vld [vmem:[#allocation9 + $0x5b8] sm:$0xff]
      %v1037 = vld [vmem:[#allocation9 + $0x5c0] sm:$0xff]
      %v1038 = vld [vmem:[#allocation9 + $0x5c8] sm:$0xff]
      %v1039 = vld [vmem:[#allocation9 + $0x5d0] sm:$0xff]
      %v1040 = vld [vmem:[#allocation9 + $0x5d8] sm:$0xff]
      %v1041 = vld [vmem:[#allocation9 + $0x5e0] sm:$0xff]
      %v1042 = vld [vmem:[#allocation9 + $0x5e8] sm:$0xff]
      %v1043 = vld [vmem:[#allocation9 + $0x5f0] sm:$0xff]
      %v1044 = vld [vmem:[#allocation9 + $0x5f8] sm:$0xff]
      %v1045 = vld [vmem:[#allocation9 + $0x600] sm:$0xff]
      %v1046 = vld [vmem:[#allocation9 + $0x608] sm:$0xff]
      %v1047 = vld [vmem:[#allocation9 + $0x610] sm:$0xff]
      %v1048 = vld [vmem:[#allocation9 + $0x618] sm:$0xff]
      %v1049 = vld [vmem:[#allocation9 + $0x620] sm:$0xff]
      %v1050 = vld [vmem:[#allocation9 + $0x628] sm:$0xff]
      %v1051 = vld [vmem:[#allocation9 + $0x630] sm:$0xff]
      %v1052 = vld [vmem:[#allocation9 + $0x638] sm:$0xff]
      %v1053 = vld [vmem:[#allocation9 + $0x640] sm:$0xff]
      %v1054 = vld [vmem:[#allocation9 + $0x648] sm:$0xff]
      %v1055 = vld [vmem:[#allocation9 + $0x650] sm:$0xff]
      %v1056 = vld [vmem:[#allocation9 + $0x658] sm:$0xff]
      %v1057 = vld [vmem:[#allocation9 + $0x660] sm:$0xff]
      %v1058 = vld [vmem:[#allocation9 + $0x668] sm:$0xff]
      %v1059 = vld [vmem:[#allocation9 + $0x670] sm:$0xff]
      %v1060 = vld [vmem:[#allocation9 + $0x678] sm:$0xff]
      %v1061 = vld [vmem:[#allocation9 + $0x680] sm:$0xff]
      %v1062 = vld [vmem:[#allocation9 + $0x688] sm:$0xff]
      %v1063 = vld [vmem:[#allocation9 + $0x690] sm:$0xff]
      %v1064 = vld [vmem:[#allocation9 + $0x698] sm:$0xff]
      %v1065 = vld [vmem:[#allocation9 + $0x6a0] sm:$0xff]
      %v1066 = vld [vmem:[#allocation9 + $0x6a8] sm:$0xff]
      %v1067 = vld [vmem:[#allocation9 + $0x6b0] sm:$0xff]
      %v1068 = vld [vmem:[#allocation9 + $0x6b8] sm:$0xff]
      %v1069 = vld [vmem:[#allocation9 + $0x6c0] sm:$0xff]
      %v1070 = vld [vmem:[#allocation9 + $0x6c8] sm:$0xff]
      %v1071 = vld [vmem:[#allocation9 + $0x6d0] sm:$0xff]
      %v1072 = vld [vmem:[#allocation9 + $0x6d8] sm:$0xff]
      %v1073 = vld [vmem:[#allocation9 + $0x6e0] sm:$0xff]
      %v1074 = vld [vmem:[#allocation9 + $0x6e8] sm:$0xff]
      %v1075 = vld [vmem:[#allocation9 + $0x6f0] sm:$0xff]
      %v1076 = vld [vmem:[#allocation9 + $0x6f8] sm:$0xff]
      %v1077 = vld [vmem:[#allocation9 + $0x700] sm:$0xff]
      %v1078 = vld [vmem:[#allocation9 + $0x708] sm:$0xff]
      %v1079 = vld [vmem:[#allocation9 + $0x710] sm:$0xff]
      %v1080 = vld [vmem:[#allocation9 + $0x718] sm:$0xff]
      %v1081 = vld [vmem:[#allocation9 + $0x720] sm:$0xff]
      %v1082 = vld [vmem:[#allocation9 + $0x728] sm:$0xff]
      %v1083 = vld [vmem:[#allocation9 + $0x730] sm:$0xff]
      %v1084 = vld [vmem:[#allocation9 + $0x738] sm:$0xff]
      %v1085 = vld [vmem:[#allocation9 + $0x740] sm:$0xff]
      %v1086 = vld [vmem:[#allocation9 + $0x748] sm:$0xff]
      %v1087 = vld [vmem:[#allocation9 + $0x750] sm:$0xff]
      %v1088 = vld [vmem:[#allocation9 + $0x758] sm:$0xff]
      %v1089 = vld [vmem:[#allocation9 + $0x760] sm:$0xff]
      %v1090 = vld [vmem:[#allocation9 + $0x768] sm:$0xff]
      %v1091 = vld [vmem:[#allocation9 + $0x770] sm:$0xff]
      %v1092 = vld [vmem:[#allocation9 + $0x778] sm:$0xff]
      %v1093 = vld [vmem:[#allocation9 + $0x780] sm:$0xff]
      %v1094 = vld [vmem:[#allocation9 + $0x788] sm:$0xff]
      %v1095 = vld [vmem:[#allocation9 + $0x790] sm:$0xff]
      %v1096 = vld [vmem:[#allocation9 + $0x798] sm:$0xff]
      %v1097 = vld [vmem:[#allocation9 + $0x7a0] sm:$0xff]
      %v1098 = vld [vmem:[#allocation9 + $0x7a8] sm:$0xff]
      %v1099 = vld [vmem:[#allocation9 + $0x7b0] sm:$0xff]
      %v1100 = vld [vmem:[#allocation9 + $0x7b8] sm:$0xff]
      %v1101 = vld [vmem:[#allocation9 + $0x7c0] sm:$0xff]
      %v1102 = vld [vmem:[#allocation9 + $0x7c8] sm:$0xff]
      %v1103 = vld [vmem:[#allocation9 + $0x7d0] sm:$0xff]
      %v1104 = vld [vmem:[#allocation9 + $0x7d8] sm:$0xff]
      %v1105 = vld [vmem:[#allocation9 + $0x7e0] sm:$0xff]
      %v1106 = vld [vmem:[#allocation9 + $0x7e8] sm:$0xff]
      %v1107 = vld [vmem:[#allocation9 + $0x7f0] sm:$0xff]
      %v1108 = vld [vmem:[#allocation9 + $0x7f8] sm:$0xff]
      %v1109 = vld [vmem:[#allocation9 + $0x800] sm:$0xff]
      %v1110 = vld [vmem:[#allocation9 + $0x808] sm:$0xff]
      %v1111 = vld [vmem:[#allocation9 + $0x810] sm:$0xff]
      %v1112 = vld [vmem:[#allocation9 + $0x818] sm:$0xff]
      %v1113 = vld [vmem:[#allocation9 + $0x820] sm:$0xff]
      %v1114 = vld [vmem:[#allocation9 + $0x828] sm:$0xff]
      %v1115 = vld [vmem:[#allocation9 + $0x830] sm:$0xff]
      %v1116 = vld [vmem:[#allocation9 + $0x838] sm:$0xff]
      %v1117 = vld [vmem:[#allocation9 + $0x840] sm:$0xff]
      %v1118 = vld [vmem:[#allocation9 + $0x848] sm:$0xff]
      %v1119 = vld [vmem:[#allocation9 + $0x850] sm:$0xff]
      %v1120 = vld [vmem:[#allocation9 + $0x858] sm:$0xff]
      %v1121 = vld [vmem:[#allocation9 + $0x860] sm:$0xff]
      %v1122 = vld [vmem:[#allocation9 + $0x868] sm:$0xff]
      %v1123 = vld [vmem:[#allocation9 + $0x870] sm:$0xff]
      %v1124 = vld [vmem:[#allocation9 + $0x878] sm:$0xff]
      %v1125 = vld [vmem:[#allocation9 + $0x880] sm:$0xff]
      %v1126 = vld [vmem:[#allocation9 + $0x888] sm:$0xff]
      %v1127 = vld [vmem:[#allocation9 + $0x890] sm:$0xff]
      %v1128 = vld [vmem:[#allocation9 + $0x898] sm:$0xff]
      %v1129 = vld [vmem:[#allocation9 + $0x8a0] sm:$0xff]
      %v1130 = vld [vmem:[#allocation9 + $0x8a8] sm:$0xff]
      %v1131 = vld [vmem:[#allocation9 + $0x8b0] sm:$0xff]
      %v1132 = vld [vmem:[#allocation9 + $0x8b8] sm:$0xff]
      %v1133 = vld [vmem:[#allocation9 + $0x8c0] sm:$0xff]
      %v1134 = vld [vmem:[#allocation9 + $0x8c8] sm:$0xff]
      %v1135 = vld [vmem:[#allocation9 + $0x8d0] sm:$0xff]
      %v1136 = vld [vmem:[#allocation9 + $0x8d8] sm:$0xff]
      %v1137 = vld [vmem:[#allocation9 + $0x8e0] sm:$0xff]
      %v1138 = vld [vmem:[#allocation9 + $0x8e8] sm:$0xff]
      %v1139 = vld [vmem:[#allocation9 + $0x8f0] sm:$0xff]
      %v1140 = vld [vmem:[#allocation9 + $0x8f8] sm:$0xff]
      %v1141 = vld [vmem:[#allocation9 + $0x900] sm:$0xff]
      %v1142 = vld [vmem:[#allocation9 + $0x908] sm:$0xff]
      %v1143 = vld [vmem:[#allocation9 + $0x910] sm:$0xff]
      %v1144 = vld [vmem:[#allocation9 + $0x918] sm:$0xff]
      %v1145 = vld [vmem:[#allocation9 + $0x920] sm:$0xff]
      %v1146 = vld [vmem:[#allocation9 + $0x928] sm:$0xff]
      %v1147 = vld [vmem:[#allocation9 + $0x930] sm:$0xff]
      %v1148 = vld [vmem:[#allocation9 + $0x938] sm:$0xff]
      %v1149 = vld [vmem:[#allocation9 + $0x940] sm:$0xff]
      %v1150 = vld [vmem:[#allocation9 + $0x948] sm:$0xff]
      %v1151 = vld [vmem:[#allocation9 + $0x950] sm:$0xff]
      %v1152 = vld [vmem:[#allocation9 + $0x958] sm:$0xff]
      %v1153 = vld [vmem:[#allocation9 + $0x960] sm:$0xff]
      %v1154 = vld [vmem:[#allocation9 + $0x968] sm:$0xff]
      %v1155 = vld [vmem:[#allocation9 + $0x970] sm:$0xff]
      %v1156 = vld [vmem:[#allocation9 + $0x978] sm:$0xff]
      %v1157 = vld [vmem:[#allocation9 + $0x980] sm:$0xff]
      %v1158 = vld [vmem:[#allocation9 + $0x988] sm:$0xff]
      %v1159 = vld [vmem:[#allocation9 + $0x990] sm:$0xff]
      %v1160 = vld [vmem:[#allocation9 + $0x998] sm:$0xff]
      %v1161 = vld [vmem:[#allocation9 + $0x9a0] sm:$0xff]
      %v1162 = vld [vmem:[#allocation9 + $0x9a8] sm:$0xff]
      %v1163 = vld [vmem:[#allocation9 + $0x9b0] sm:$0xff]
      %v1164 = vld [vmem:[#allocation9 + $0x9b8] sm:$0xff]
      %v1165 = vld [vmem:[#allocation9 + $0x9c0] sm:$0xff]
      %v1166 = vld [vmem:[#allocation9 + $0x9c8] sm:$0xff]
      %v1167 = vld [vmem:[#allocation9 + $0x9d0] sm:$0xff]
      %v1168 = vld [vmem:[#allocation9 + $0x9d8] sm:$0xff]
      %v1169 = vld [vmem:[#allocation9 + $0x9e0] sm:$0xff]
      %v1170 = vld [vmem:[#allocation9 + $0x9e8] sm:$0xff]
      %v1171 = vld [vmem:[#allocation9 + $0x9f0] sm:$0xff]
      %v1172 = vld [vmem:[#allocation9 + $0x9f8] sm:$0xff]
      %v1173 = vld [vmem:[#allocation9 + $0xa00] sm:$0xff]
      %v1174 = vld [vmem:[#allocation9 + $0xa08] sm:$0xff]
      %v1175 = vld [vmem:[#allocation9 + $0xa10] sm:$0xff]
      %v1176 = vld [vmem:[#allocation9 + $0xa18] sm:$0xff]
      %v1177 = vld [vmem:[#allocation9 + $0xa20] sm:$0xff]
      %v1178 = vld [vmem:[#allocation9 + $0xa28] sm:$0xff]
      %v1179 = vld [vmem:[#allocation9 + $0xa30] sm:$0xff]
      %v1180 = vld [vmem:[#allocation9 + $0xa38] sm:$0xff]
      %v1181 = vld [vmem:[#allocation9 + $0xa40] sm:$0xff]
      %v1182 = vld [vmem:[#allocation9 + $0xa48] sm:$0xff]
      %v1183 = vld [vmem:[#allocation9 + $0xa50] sm:$0xff]
      %v1184 = vld [vmem:[#allocation9 + $0xa58] sm:$0xff]
      %v1185 = vld [vmem:[#allocation9 + $0xa60] sm:$0xff]
      %v1186 = vld [vmem:[#allocation9 + $0xa68] sm:$0xff]
      %v1187 = vld [vmem:[#allocation9 + $0xa70] sm:$0xff]
      %v1188 = vld [vmem:[#allocation9 + $0xa78] sm:$0xff]
      %v1189 = vld [vmem:[#allocation9 + $0xa80] sm:$0xff]
      %v1190 = vld [vmem:[#allocation9 + $0xa88] sm:$0xff]
      %v1191 = vld [vmem:[#allocation9 + $0xa90] sm:$0xff]
      %v1192 = vld [vmem:[#allocation9 + $0xa98] sm:$0xff]
      %v1193 = vld [vmem:[#allocation9 + $0xaa0] sm:$0xff]
      %v1194 = vld [vmem:[#allocation9 + $0xaa8] sm:$0xff]
      %v1195 = vld [vmem:[#allocation9 + $0xab0] sm:$0xff]
      %v1196 = vld [vmem:[#allocation9 + $0xab8] sm:$0xff]
      %v1197 = vld [vmem:[#allocation9 + $0xac0] sm:$0xff]
      %v1198 = vld [vmem:[#allocation9 + $0xac8] sm:$0xff]
      %v1199 = vld [vmem:[#allocation9 + $0xad0] sm:$0xff]
      %v1200 = vld [vmem:[#allocation9 + $0xad8] sm:$0xff]
      %v1201 = vld [vmem:[#allocation9 + $0xae0] sm:$0xff]
      %v1202 = vld [vmem:[#allocation9 + $0xae8] sm:$0xff]
      %v1203 = vld [vmem:[#allocation9 + $0xaf0] sm:$0xff]
      %v1204 = vld [vmem:[#allocation9 + $0xaf8] sm:$0xff]
      %v1205 = vld [vmem:[#allocation9 + $0xb00] sm:$0xff]
      %v1206 = vld [vmem:[#allocation9 + $0xb08] sm:$0xff]
      %v1207 = vld [vmem:[#allocation9 + $0xb10] sm:$0xff]
      %v1208 = vld [vmem:[#allocation9 + $0xb18] sm:$0xff]
      %v1209 = vld [vmem:[#allocation9 + $0xb20] sm:$0xff]
      %v1210 = vld [vmem:[#allocation9 + $0xb28] sm:$0xff]
      %v1211 = vld [vmem:[#allocation9 + $0xb30] sm:$0xff]
      %v1212 = vld [vmem:[#allocation9 + $0xb38] sm:$0xff]
      %v1213 = vld [vmem:[#allocation9 + $0xb40] sm:$0xff]
      %v1214 = vld [vmem:[#allocation9 + $0xb48] sm:$0xff]
      %v1215 = vld [vmem:[#allocation9 + $0xb50] sm:$0xff]
      %v1216 = vld [vmem:[#allocation9 + $0xb58] sm:$0xff]
      %v1217 = vld [vmem:[#allocation9 + $0xb60] sm:$0xff]
      %v1218 = vld [vmem:[#allocation9 + $0xb68] sm:$0xff]
      %v1219 = vld [vmem:[#allocation9 + $0xb70] sm:$0xff]
      %v1220 = vld [vmem:[#allocation9 + $0xb78] sm:$0xff]
      %v1221 = vld [vmem:[#allocation9 + $0xb80] sm:$0xff]
      %v1222 = vld [vmem:[#allocation9 + $0xb88] sm:$0xff]
      %v1223 = vld [vmem:[#allocation9 + $0xb90] sm:$0xff]
      %v1224 = vld [vmem:[#allocation9 + $0xb98] sm:$0xff]
      %v1225 = vld [vmem:[#allocation9 + $0xba0] sm:$0xff]
      %v1226 = vld [vmem:[#allocation9 + $0xba8] sm:$0xff]
      %v1227 = vld [vmem:[#allocation9 + $0xbb0] sm:$0xff]
      %v1228 = vld [vmem:[#allocation9 + $0xbb8] sm:$0xff]
      %v1229 = vld [vmem:[#allocation9 + $0xbc0] sm:$0xff]
      %v1230 = vld [vmem:[#allocation9 + $0xbc8] sm:$0xff]
      %v1231 = vld [vmem:[#allocation9 + $0xbd0] sm:$0xff]
      %v1232 = vld [vmem:[#allocation9 + $0xbd8] sm:$0xff]
      %v1233 = vld [vmem:[#allocation9 + $0xbe0] sm:$0xff]
      %v1234 = vld [vmem:[#allocation9 + $0xbe8] sm:$0xff]
      %v1235 = vld [vmem:[#allocation9 + $0xbf0] sm:$0xff]
      %v1236 = vld [vmem:[#allocation9 + $0xbf8] sm:$0xff]
      %v1237 = vld [vmem:[#allocation9 + $0xc00] sm:$0xff]
      %v1238 = vld [vmem:[#allocation9 + $0xc08] sm:$0xff]
      %v1239 = vld [vmem:[#allocation9 + $0xc10] sm:$0xff]
      %v1240 = vld [vmem:[#allocation9 + $0xc18] sm:$0xff]
      %v1241 = vld [vmem:[#allocation9 + $0xc20] sm:$0xff]
      %v1242 = vld [vmem:[#allocation9 + $0xc28] sm:$0xff]
      %v1243 = vld [vmem:[#allocation9 + $0xc30] sm:$0xff]
      %v1244 = vld [vmem:[#allocation9 + $0xc38] sm:$0xff]
      %v1245 = vld [vmem:[#allocation9 + $0xc40] sm:$0xff]
      %v1246 = vld [vmem:[#allocation9 + $0xc48] sm:$0xff]
      %v1247 = vld [vmem:[#allocation9 + $0xc50] sm:$0xff]
      %v1248 = vld [vmem:[#allocation9 + $0xc58] sm:$0xff]
      %v1249 = vld [vmem:[#allocation9 + $0xc60] sm:$0xff]
      %v1250 = vld [vmem:[#allocation9 + $0xc68] sm:$0xff]
      %v1251 = vld [vmem:[#allocation9 + $0xc70] sm:$0xff]
      %v1252 = vld [vmem:[#allocation9 + $0xc78] sm:$0xff]
      %v1253 = vld [vmem:[#allocation9 + $0xc80] sm:$0xff]
      %v1254 = vld [vmem:[#allocation9 + $0xc88] sm:$0xff]
      %v1255 = vld [vmem:[#allocation9 + $0xc90] sm:$0xff]
      %v1256 = vld [vmem:[#allocation9 + $0xc98] sm:$0xff]
      %v1257 = vld [vmem:[#allocation9 + $0xca0] sm:$0xff]
      %v1258 = vld [vmem:[#allocation9 + $0xca8] sm:$0xff]
      %v1259 = vld [vmem:[#allocation9 + $0xcb0] sm:$0xff]
      %v1260 = vld [vmem:[#allocation9 + $0xcb8] sm:$0xff]
      %v1261 = vld [vmem:[#allocation9 + $0xcc0] sm:$0xff]
      %v1262 = vld [vmem:[#allocation9 + $0xcc8] sm:$0xff]
      %v1263 = vld [vmem:[#allocation9 + $0xcd0] sm:$0xff]
      %v1264 = vld [vmem:[#allocation9 + $0xcd8] sm:$0xff]
      %v1265 = vld [vmem:[#allocation9 + $0xce0] sm:$0xff]
      %v1266 = vld [vmem:[#allocation9 + $0xce8] sm:$0xff]
      %v1267 = vld [vmem:[#allocation9 + $0xcf0] sm:$0xff]
      %v1268 = vld [vmem:[#allocation9 + $0xcf8] sm:$0xff]
      %v1269 = vld [vmem:[#allocation9 + $0xd00] sm:$0xff]
      %v1270 = vld [vmem:[#allocation9 + $0xd08] sm:$0xff]
      %v1271 = vld [vmem:[#allocation9 + $0xd10] sm:$0xff]
      %v1272 = vld [vmem:[#allocation9 + $0xd18] sm:$0xff]
      %v1273 = vld [vmem:[#allocation9 + $0xd20] sm:$0xff]
      %v1274 = vld [vmem:[#allocation9 + $0xd28] sm:$0xff]
      %v1275 = vld [vmem:[#allocation9 + $0xd30] sm:$0xff]
      %v1276 = vld [vmem:[#allocation9 + $0xd38] sm:$0xff]
      %v1277 = vld [vmem:[#allocation9 + $0xd40] sm:$0xff]
      %v1278 = vld [vmem:[#allocation9 + $0xd48] sm:$0xff]
      %v1279 = vld [vmem:[#allocation9 + $0xd50] sm:$0xff]
      %v1280 = vld [vmem:[#allocation9 + $0xd58] sm:$0xff]
      %v1281 = vld [vmem:[#allocation9 + $0xd60] sm:$0xff]
      %v1282 = vld [vmem:[#allocation9 + $0xd68] sm:$0xff]
      %v1283 = vld [vmem:[#allocation9 + $0xd70] sm:$0xff]
      %v1284 = vld [vmem:[#allocation9 + $0xd78] sm:$0xff]
      %v1285 = vld [vmem:[#allocation9 + $0xd80] sm:$0xff]
      %v1286 = vld [vmem:[#allocation9 + $0xd88] sm:$0xff]
      %v1287 = vld [vmem:[#allocation9 + $0xd90] sm:$0xff]
      %v1288 = vld [vmem:[#allocation9 + $0xd98] sm:$0xff]
      %v1289 = vld [vmem:[#allocation9 + $0xda0] sm:$0xff]
      %v1290 = vld [vmem:[#allocation9 + $0xda8] sm:$0xff]
      %v1291 = vld [vmem:[#allocation9 + $0xdb0] sm:$0xff]
      %v1292 = vld [vmem:[#allocation9 + $0xdb8] sm:$0xff]
      %v1293 = vld [vmem:[#allocation9 + $0xdc0] sm:$0xff]
      %v1294 = vld [vmem:[#allocation9 + $0xdc8] sm:$0xff]
      %v1295 = vld [vmem:[#allocation9 + $0xdd0] sm:$0xff]
      %v1296 = vld [vmem:[#allocation9 + $0xdd8] sm:$0xff]
      %v1297 = vld [vmem:[#allocation9 + $0xde0] sm:$0xff]
      %v1298 = vld [vmem:[#allocation9 + $0xde8] sm:$0xff]
      %v1299 = vld [vmem:[#allocation9 + $0xdf0] sm:$0xff]
      %v1300 = vld [vmem:[#allocation9 + $0xdf8] sm:$0xff]
      %v1301 = vld [vmem:[#allocation9 + $0xe00] sm:$0xff]
      %v1302 = vld [vmem:[#allocation9 + $0xe08] sm:$0xff]
      %v1303 = vld [vmem:[#allocation9 + $0xe10] sm:$0xff]
      %v1304 = vld [vmem:[#allocation9 + $0xe18] sm:$0xff]
      %v1305 = vld [vmem:[#allocation9 + $0xe20] sm:$0xff]
      %v1306 = vld [vmem:[#allocation9 + $0xe28] sm:$0xff]
      %v1307 = vld [vmem:[#allocation9 + $0xe30] sm:$0xff]
      %v1308 = vld [vmem:[#allocation9 + $0xe38] sm:$0xff]
      %v1309 = vld [vmem:[#allocation9 + $0xe40] sm:$0xff]
      %v1310 = vld [vmem:[#allocation9 + $0xe48] sm:$0xff]
      %v1311 = vld [vmem:[#allocation9 + $0xe50] sm:$0xff]
      %v1312 = vld [vmem:[#allocation9 + $0xe58] sm:$0xff]
      %v1313 = vld [vmem:[#allocation9 + $0xe60] sm:$0xff]
      %v1314 = vld [vmem:[#allocation9 + $0xe68] sm:$0xff]
      %v1315 = vld [vmem:[#allocation9 + $0xe70] sm:$0xff]
      %v1316 = vld [vmem:[#allocation9 + $0xe78] sm:$0xff]
      %v1317 = vld [vmem:[#allocation9 + $0xe80] sm:$0xff]
      %v1318 = vld [vmem:[#allocation9 + $0xe88] sm:$0xff]
      %v1319 = vld [vmem:[#allocation9 + $0xe90] sm:$0xff]
      %v1320 = vld [vmem:[#allocation9 + $0xe98] sm:$0xff]
      %v1321 = vld [vmem:[#allocation9 + $0xea0] sm:$0xff]
      %v1322 = vld [vmem:[#allocation9 + $0xea8] sm:$0xff]
      %v1323 = vld [vmem:[#allocation9 + $0xeb0] sm:$0xff]
      %v1324 = vld [vmem:[#allocation9 + $0xeb8] sm:$0xff]
      %v1325 = vld [vmem:[#allocation9 + $0xec0] sm:$0xff]
      %v1326 = vld [vmem:[#allocation9 + $0xec8] sm:$0xff]
      %v1327 = vld [vmem:[#allocation9 + $0xed0] sm:$0xff]
      %v1328 = vld [vmem:[#allocation9 + $0xed8] sm:$0xff]
      %v1329 = vld [vmem:[#allocation9 + $0xee0] sm:$0xff]
      %v1330 = vld [vmem:[#allocation9 + $0xee8] sm:$0xff]
      %v1331 = vld [vmem:[#allocation9 + $0xef0] sm:$0xff]
      %v1332 = vld [vmem:[#allocation9 + $0xef8] sm:$0xff]
      %v1333 = vld [vmem:[#allocation9 + $0xf00] sm:$0xff]
      %v1334 = vld [vmem:[#allocation9 + $0xf08] sm:$0xff]
      %v1335 = vld [vmem:[#allocation9 + $0xf10] sm:$0xff]
      %v1336 = vld [vmem:[#allocation9 + $0xf18] sm:$0xff]
      %v1337 = vld [vmem:[#allocation9 + $0xf20] sm:$0xff]
      %v1338 = vld [vmem:[#allocation9 + $0xf28] sm:$0xff]
      %v1339 = vld [vmem:[#allocation9 + $0xf30] sm:$0xff]
      %v1340 = vld [vmem:[#allocation9 + $0xf38] sm:$0xff]
      %v1341 = vld [vmem:[#allocation9 + $0xf40] sm:$0xff]
      %v1342 = vld [vmem:[#allocation9 + $0xf48] sm:$0xff]
      %v1343 = vld [vmem:[#allocation9 + $0xf50] sm:$0xff]
      %v1344 = vld [vmem:[#allocation9 + $0xf58] sm:$0xff]
      %v1345 = vld [vmem:[#allocation9 + $0xf60] sm:$0xff]
      %v1346 = vld [vmem:[#allocation9 + $0xf68] sm:$0xff]
      %v1347 = vld [vmem:[#allocation9 + $0xf70] sm:$0xff]
      %v1348 = vld [vmem:[#allocation9 + $0xf78] sm:$0xff]
      %v1349 = vld [vmem:[#allocation9 + $0xf80] sm:$0xff]
      %v1350 = vld [vmem:[#allocation9 + $0xf88] sm:$0xff]
      %v1351 = vld [vmem:[#allocation9 + $0xf90] sm:$0xff]
      %v1352 = vld [vmem:[#allocation9 + $0xf98] sm:$0xff]
      %v1353 = vld [vmem:[#allocation9 + $0xfa0] sm:$0xff]
      %v1354 = vld [vmem:[#allocation9 + $0xfa8] sm:$0xff]
      %v1355 = vld [vmem:[#allocation9 + $0xfb0] sm:$0xff]
      %v1356 = vld [vmem:[#allocation9 + $0xfb8] sm:$0xff]
      %v1357 = vld [vmem:[#allocation9 + $0xfc0] sm:$0xff]
      %v1358 = vld [vmem:[#allocation9 + $0xfc8] sm:$0xff]
      %v1359 = vld [vmem:[#allocation9 + $0xfd0] sm:$0xff]
      %v1360 = vld [vmem:[#allocation9 + $0xfd8] sm:$0xff]
      %v1361 = vld [vmem:[#allocation9 + $0xfe0] sm:$0xff]
      %v1362 = vld [vmem:[#allocation9 + $0xfe8] sm:$0xff]
      %v1363 = vld [vmem:[#allocation9 + $0xff0] sm:$0xff]
      %v1364 = vld [vmem:[#allocation9 + $0xff8] sm:$0xff]
      %v1365 = vld [vmem:[#allocation11] sm:$0xff]
      %v1367 = vlaneseq
      %v1368 = vshrl.u32 %v1367, 7
      %v1369 = vsub.s32 0, %v1368
      %v1370 = vrot.slane %v1365, %v1369
      %v1371 = vlaneseq
      %v1372 = vshrl.u32 %v1371, 7
      %v1373 = vsub.s32 1, %v1372
      %v1374 = vrot.slane %v1365, %v1373
      %v1375 = vlaneseq
      %v1376 = vshrl.u32 %v1375, 7
      %v1377 = vsub.s32 2, %v1376
      %v1378 = vrot.slane %v1365, %v1377
      %v1379 = vlaneseq
      %v1380 = vshrl.u32 %v1379, 7
      %v1381 = vsub.s32 3, %v1380
      %v1382 = vrot.slane %v1365, %v1381
      %v1383 = vlaneseq
      %v1384 = vshrl.u32 %v1383, 7
      %v1385 = vsub.s32 4, %v1384
      %v1386 = vrot.slane %v1365, %v1385
      %v1387 = vlaneseq
      %v1388 = vshrl.u32 %v1387, 7
      %v1389 = vsub.s32 5, %v1388
      %v1390 = vrot.slane %v1365, %v1389
      %v1391 = vlaneseq
      %v1392 = vshrl.u32 %v1391, 7
      %v1393 = vsub.s32 6, %v1392
      %v1394 = vrot.slane %v1365, %v1393
      %v1395 = vlaneseq
      %v1396 = vshrl.u32 %v1395, 7
      %v1397 = vsub.s32 7, %v1396
      %v1398 = vrot.slane %v1365, %v1397
      %v1919 = vunpack.c.l.b16 %v853
      %v1920 = vunpack.c.h.b16 %v853
      %v1921 = vunpack.c.l.b16 %v854
      %v1922 = vunpack.c.h.b16 %v854
      %v1923 = vunpack.c.l.b16 %v855
      %v1924 = vunpack.c.h.b16 %v855
      %v1925 = vunpack.c.l.b16 %v856
      %v1926 = vunpack.c.h.b16 %v856
      %v1927 = vunpack.c.l.b16 %v857
      %v1928 = vunpack.c.h.b16 %v857
      %v1929 = vunpack.c.l.b16 %v858
      %v1930 = vunpack.c.h.b16 %v858
      %v1931 = vunpack.c.l.b16 %v859
      %v1932 = vunpack.c.h.b16 %v859
      %v1933 = vunpack.c.l.b16 %v860
      %v1934 = vunpack.c.h.b16 %v860
      %v1935 = vunpack.c.l.b16 %v861
      %v1936 = vunpack.c.h.b16 %v861
      %v1937 = vunpack.c.l.b16 %v862
      %v1938 = vunpack.c.h.b16 %v862
      %v1939 = vunpack.c.l.b16 %v863
      %v1940 = vunpack.c.h.b16 %v863
      %v1941 = vunpack.c.l.b16 %v864
      %v1942 = vunpack.c.h.b16 %v864
      %v1943 = vunpack.c.l.b16 %v865
      %v1944 = vunpack.c.h.b16 %v865
      %v1945 = vunpack.c.l.b16 %v866
      %v1946 = vunpack.c.h.b16 %v866
      %v1947 = vunpack.c.l.b16 %v867
      %v1948 = vunpack.c.h.b16 %v867
      %v1949 = vunpack.c.l.b16 %v868
      %v1950 = vunpack.c.h.b16 %v868
      %v1951 = vunpack.c.l.b16 %v869
      %v1952 = vunpack.c.h.b16 %v869
      %v1953 = vunpack.c.l.b16 %v870
      %v1954 = vunpack.c.h.b16 %v870
      %v1955 = vunpack.c.l.b16 %v871
      %v1956 = vunpack.c.h.b16 %v871
      %v1957 = vunpack.c.l.b16 %v872
      %v1958 = vunpack.c.h.b16 %v872
      %v1959 = vunpack.c.l.b16 %v873
      %v1960 = vunpack.c.h.b16 %v873
      %v1961 = vunpack.c.l.b16 %v874
      %v1962 = vunpack.c.h.b16 %v874
      %v1963 = vunpack.c.l.b16 %v875
      %v1964 = vunpack.c.h.b16 %v875
      %v1965 = vunpack.c.l.b16 %v876
      %v1966 = vunpack.c.h.b16 %v876
      %v1967 = vunpack.c.l.b16 %v877
      %v1968 = vunpack.c.h.b16 %v877
      %v1969 = vunpack.c.l.b16 %v878
      %v1970 = vunpack.c.h.b16 %v878
      %v1971 = vunpack.c.l.b16 %v879
      %v1972 = vunpack.c.h.b16 %v879
      %v1973 = vunpack.c.l.b16 %v880
      %v1974 = vunpack.c.h.b16 %v880
      %v1975 = vunpack.c.l.b16 %v881
      %v1976 = vunpack.c.h.b16 %v881
      %v1977 = vunpack.c.l.b16 %v882
      %v1978 = vunpack.c.h.b16 %v882
      %v1979 = vunpack.c.l.b16 %v883
      %v1980 = vunpack.c.h.b16 %v883
      %v1981 = vunpack.c.l.b16 %v884
      %v1982 = vunpack.c.h.b16 %v884
      %v1983 = vunpack.c.l.b16 %v885
      %v1984 = vunpack.c.h.b16 %v885
      %v1985 = vunpack.c.l.b16 %v886
      %v1986 = vunpack.c.h.b16 %v886
      %v1987 = vunpack.c.l.b16 %v887
      %v1988 = vunpack.c.h.b16 %v887
      %v1989 = vunpack.c.l.b16 %v888
      %v1990 = vunpack.c.h.b16 %v888
      %v1991 = vunpack.c.l.b16 %v889
      %v1992 = vunpack.c.h.b16 %v889
      %v1993 = vunpack.c.l.b16 %v890
      %v1994 = vunpack.c.h.b16 %v890
      %v1995 = vunpack.c.l.b16 %v891
      %v1996 = vunpack.c.h.b16 %v891
      %v1997 = vunpack.c.l.b16 %v892
      %v1998 = vunpack.c.h.b16 %v892
      %v1999 = vunpack.c.l.b16 %v893
      %v2000 = vunpack.c.h.b16 %v893
      %v2001 = vunpack.c.l.b16 %v894
      %v2002 = vunpack.c.h.b16 %v894
      %v2003 = vunpack.c.l.b16 %v895
      %v2004 = vunpack.c.h.b16 %v895
      %v2005 = vunpack.c.l.b16 %v896
      %v2006 = vunpack.c.h.b16 %v896
      %v2007 = vunpack.c.l.b16 %v897
      %v2008 = vunpack.c.h.b16 %v897
      %v2009 = vunpack.c.l.b16 %v898
      %v2010 = vunpack.c.h.b16 %v898
      %v2011 = vunpack.c.l.b16 %v899
      %v2012 = vunpack.c.h.b16 %v899
      %v2013 = vunpack.c.l.b16 %v900
      %v2014 = vunpack.c.h.b16 %v900
      %v2015 = vunpack.c.l.b16 %v901
      %v2016 = vunpack.c.h.b16 %v901
      %v2017 = vunpack.c.l.b16 %v902
      %v2018 = vunpack.c.h.b16 %v902
      %v2019 = vunpack.c.l.b16 %v903
      %v2020 = vunpack.c.h.b16 %v903
      %v2021 = vunpack.c.l.b16 %v904
      %v2022 = vunpack.c.h.b16 %v904
      %v2023 = vunpack.c.l.b16 %v905
      %v2024 = vunpack.c.h.b16 %v905
      %v2025 = vunpack.c.l.b16 %v906
      %v2026 = vunpack.c.h.b16 %v906
      %v2027 = vunpack.c.l.b16 %v907
      %v2028 = vunpack.c.h.b16 %v907
      %v2029 = vunpack.c.l.b16 %v908
      %v2030 = vunpack.c.h.b16 %v908
      %v2031 = vunpack.c.l.b16 %v909
      %v2032 = vunpack.c.h.b16 %v909
      %v2033 = vunpack.c.l.b16 %v910
      %v2034 = vunpack.c.h.b16 %v910
      %v2035 = vunpack.c.l.b16 %v911
      %v2036 = vunpack.c.h.b16 %v911
      %v2037 = vunpack.c.l.b16 %v912
      %v2038 = vunpack.c.h.b16 %v912
      %v2039 = vunpack.c.l.b16 %v913
      %v2040 = vunpack.c.h.b16 %v913
      %v2041 = vunpack.c.l.b16 %v914
      %v2042 = vunpack.c.h.b16 %v914
      %v2043 = vunpack.c.l.b16 %v915
      %v2044 = vunpack.c.h.b16 %v915
      %v2045 = vunpack.c.l.b16 %v916
      %v2046 = vunpack.c.h.b16 %v916
      %v2047 = vunpack.c.l.b16 %v917
      %v2048 = vunpack.c.h.b16 %v917
      %v2049 = vunpack.c.l.b16 %v918
      %v2050 = vunpack.c.h.b16 %v918
      %v2051 = vunpack.c.l.b16 %v919
      %v2052 = vunpack.c.h.b16 %v919
      %v2053 = vunpack.c.l.b16 %v920
      %v2054 = vunpack.c.h.b16 %v920
      %v2055 = vunpack.c.l.b16 %v921
      %v2056 = vunpack.c.h.b16 %v921
      %v2057 = vunpack.c.l.b16 %v922
      %v2058 = vunpack.c.h.b16 %v922
      %v2059 = vunpack.c.l.b16 %v923
      %v2060 = vunpack.c.h.b16 %v923
      %v2061 = vunpack.c.l.b16 %v924
      %v2062 = vunpack.c.h.b16 %v924
      %v2063 = vunpack.c.l.b16 %v925
      %v2064 = vunpack.c.h.b16 %v925
      %v2065 = vunpack.c.l.b16 %v926
      %v2066 = vunpack.c.h.b16 %v926
      %v2067 = vunpack.c.l.b16 %v927
      %v2068 = vunpack.c.h.b16 %v927
      %v2069 = vunpack.c.l.b16 %v928
      %v2070 = vunpack.c.h.b16 %v928
      %v2071 = vunpack.c.l.b16 %v929
      %v2072 = vunpack.c.h.b16 %v929
      %v2073 = vunpack.c.l.b16 %v930
      %v2074 = vunpack.c.h.b16 %v930
      %v2075 = vunpack.c.l.b16 %v931
      %v2076 = vunpack.c.h.b16 %v931
      %v2077 = vunpack.c.l.b16 %v932
      %v2078 = vunpack.c.h.b16 %v932
      %v2079 = vunpack.c.l.b16 %v933
      %v2080 = vunpack.c.h.b16 %v933
      %v2081 = vunpack.c.l.b16 %v934
      %v2082 = vunpack.c.h.b16 %v934
      %v2083 = vunpack.c.l.b16 %v935
      %v2084 = vunpack.c.h.b16 %v935
      %v2085 = vunpack.c.l.b16 %v936
      %v2086 = vunpack.c.h.b16 %v936
      %v2087 = vunpack.c.l.b16 %v937
      %v2088 = vunpack.c.h.b16 %v937
      %v2089 = vunpack.c.l.b16 %v938
      %v2090 = vunpack.c.h.b16 %v938
      %v2091 = vunpack.c.l.b16 %v939
      %v2092 = vunpack.c.h.b16 %v939
      %v2093 = vunpack.c.l.b16 %v940
      %v2094 = vunpack.c.h.b16 %v940
      %v2095 = vunpack.c.l.b16 %v941
      %v2096 = vunpack.c.h.b16 %v941
      %v2097 = vunpack.c.l.b16 %v942
      %v2098 = vunpack.c.h.b16 %v942
      %v2099 = vunpack.c.l.b16 %v943
      %v2100 = vunpack.c.h.b16 %v943
      %v2101 = vunpack.c.l.b16 %v944
      %v2102 = vunpack.c.h.b16 %v944
      %v2103 = vunpack.c.l.b16 %v945
      %v2104 = vunpack.c.h.b16 %v945
      %v2105 = vunpack.c.l.b16 %v946
      %v2106 = vunpack.c.h.b16 %v946
      %v2107 = vunpack.c.l.b16 %v947
      %v2108 = vunpack.c.h.b16 %v947
      %v2109 = vunpack.c.l.b16 %v948
      %v2110 = vunpack.c.h.b16 %v948
      %v2111 = vunpack.c.l.b16 %v949
      %v2112 = vunpack.c.h.b16 %v949
      %v2113 = vunpack.c.l.b16 %v950
      %v2114 = vunpack.c.h.b16 %v950
      %v2115 = vunpack.c.l.b16 %v951
      %v2116 = vunpack.c.h.b16 %v951
      %v2117 = vunpack.c.l.b16 %v952
      %v2118 = vunpack.c.h.b16 %v952
      %v2119 = vunpack.c.l.b16 %v953
      %v2120 = vunpack.c.h.b16 %v953
      %v2121 = vunpack.c.l.b16 %v954
      %v2122 = vunpack.c.h.b16 %v954
      %v2123 = vunpack.c.l.b16 %v955
      %v2124 = vunpack.c.h.b16 %v955
      %v2125 = vunpack.c.l.b16 %v956
      %v2126 = vunpack.c.h.b16 %v956
      %v2127 = vunpack.c.l.b16 %v957
      %v2128 = vunpack.c.h.b16 %v957
      %v2129 = vunpack.c.l.b16 %v958
      %v2130 = vunpack.c.h.b16 %v958
      %v2131 = vunpack.c.l.b16 %v959
      %v2132 = vunpack.c.h.b16 %v959
      %v2133 = vunpack.c.l.b16 %v960
      %v2134 = vunpack.c.h.b16 %v960
      %v2135 = vunpack.c.l.b16 %v961
      %v2136 = vunpack.c.h.b16 %v961
      %v2137 = vunpack.c.l.b16 %v962
      %v2138 = vunpack.c.h.b16 %v962
      %v2139 = vunpack.c.l.b16 %v963
      %v2140 = vunpack.c.h.b16 %v963
      %v2141 = vunpack.c.l.b16 %v964
      %v2142 = vunpack.c.h.b16 %v964
      %v2143 = vunpack.c.l.b16 %v965
      %v2144 = vunpack.c.h.b16 %v965
      %v2145 = vunpack.c.l.b16 %v966
      %v2146 = vunpack.c.h.b16 %v966
      %v2147 = vunpack.c.l.b16 %v967
      %v2148 = vunpack.c.h.b16 %v967
      %v2149 = vunpack.c.l.b16 %v968
      %v2150 = vunpack.c.h.b16 %v968
      %v2151 = vunpack.c.l.b16 %v969
      %v2152 = vunpack.c.h.b16 %v969
      %v2153 = vunpack.c.l.b16 %v970
      %v2154 = vunpack.c.h.b16 %v970
      %v2155 = vunpack.c.l.b16 %v971
      %v2156 = vunpack.c.h.b16 %v971
      %v2157 = vunpack.c.l.b16 %v972
      %v2158 = vunpack.c.h.b16 %v972
      %v2159 = vunpack.c.l.b16 %v973
      %v2160 = vunpack.c.h.b16 %v973
      %v2161 = vunpack.c.l.b16 %v974
      %v2162 = vunpack.c.h.b16 %v974
      %v2163 = vunpack.c.l.b16 %v975
      %v2164 = vunpack.c.h.b16 %v975
      %v2165 = vunpack.c.l.b16 %v976
      %v2166 = vunpack.c.h.b16 %v976
      %v2167 = vunpack.c.l.b16 %v977
      %v2168 = vunpack.c.h.b16 %v977
      %v2169 = vunpack.c.l.b16 %v978
      %v2170 = vunpack.c.h.b16 %v978
      %v2171 = vunpack.c.l.b16 %v979
      %v2172 = vunpack.c.h.b16 %v979
      %v2173 = vunpack.c.l.b16 %v980
      %v2174 = vunpack.c.h.b16 %v980
      %v2175 = vunpack.c.l.b16 %v981
      %v2176 = vunpack.c.h.b16 %v981
      %v2177 = vunpack.c.l.b16 %v982
      %v2178 = vunpack.c.h.b16 %v982
      %v2179 = vunpack.c.l.b16 %v983
      %v2180 = vunpack.c.h.b16 %v983
      %v2181 = vunpack.c.l.b16 %v984
      %v2182 = vunpack.c.h.b16 %v984
      %v2183 = vunpack.c.l.b16 %v985
      %v2184 = vunpack.c.h.b16 %v985
      %v2185 = vunpack.c.l.b16 %v986
      %v2186 = vunpack.c.h.b16 %v986
      %v2187 = vunpack.c.l.b16 %v987
      %v2188 = vunpack.c.h.b16 %v987
      %v2189 = vunpack.c.l.b16 %v988
      %v2190 = vunpack.c.h.b16 %v988
      %v2191 = vunpack.c.l.b16 %v989
      %v2192 = vunpack.c.h.b16 %v989
      %v2193 = vunpack.c.l.b16 %v990
      %v2194 = vunpack.c.h.b16 %v990
      %v2195 = vunpack.c.l.b16 %v991
      %v2196 = vunpack.c.h.b16 %v991
      %v2197 = vunpack.c.l.b16 %v992
      %v2198 = vunpack.c.h.b16 %v992
      %v2199 = vunpack.c.l.b16 %v993
      %v2200 = vunpack.c.h.b16 %v993
      %v2201 = vunpack.c.l.b16 %v994
      %v2202 = vunpack.c.h.b16 %v994
      %v2203 = vunpack.c.l.b16 %v995
      %v2204 = vunpack.c.h.b16 %v995
      %v2205 = vunpack.c.l.b16 %v996
      %v2206 = vunpack.c.h.b16 %v996
      %v2207 = vunpack.c.l.b16 %v997
      %v2208 = vunpack.c.h.b16 %v997
      %v2209 = vunpack.c.l.b16 %v998
      %v2210 = vunpack.c.h.b16 %v998
      %v2211 = vunpack.c.l.b16 %v999
      %v2212 = vunpack.c.h.b16 %v999
      %v2213 = vunpack.c.l.b16 %v1000
      %v2214 = vunpack.c.h.b16 %v1000
      %v2215 = vunpack.c.l.b16 %v1001
      %v2216 = vunpack.c.h.b16 %v1001
      %v2217 = vunpack.c.l.b16 %v1002
      %v2218 = vunpack.c.h.b16 %v1002
      %v2219 = vunpack.c.l.b16 %v1003
      %v2220 = vunpack.c.h.b16 %v1003
      %v2221 = vunpack.c.l.b16 %v1004
      %v2222 = vunpack.c.h.b16 %v1004
      %v2223 = vunpack.c.l.b16 %v1005
      %v2224 = vunpack.c.h.b16 %v1005
      %v2225 = vunpack.c.l.b16 %v1006
      %v2226 = vunpack.c.h.b16 %v1006
      %v2227 = vunpack.c.l.b16 %v1007
      %v2228 = vunpack.c.h.b16 %v1007
      %v2229 = vunpack.c.l.b16 %v1008
      %v2230 = vunpack.c.h.b16 %v1008
      %v2231 = vunpack.c.l.b16 %v1009
      %v2232 = vunpack.c.h.b16 %v1009
      %v2233 = vunpack.c.l.b16 %v1010
      %v2234 = vunpack.c.h.b16 %v1010
      %v2235 = vunpack.c.l.b16 %v1011
      %v2236 = vunpack.c.h.b16 %v1011
      %v2237 = vunpack.c.l.b16 %v1012
      %v2238 = vunpack.c.h.b16 %v1012
      %v2239 = vunpack.c.l.b16 %v1013
      %v2240 = vunpack.c.h.b16 %v1013
      %v2241 = vunpack.c.l.b16 %v1014
      %v2242 = vunpack.c.h.b16 %v1014
      %v2243 = vunpack.c.l.b16 %v1015
      %v2244 = vunpack.c.h.b16 %v1015
      %v2245 = vunpack.c.l.b16 %v1016
      %v2246 = vunpack.c.h.b16 %v1016
      %v2247 = vunpack.c.l.b16 %v1017
      %v2248 = vunpack.c.h.b16 %v1017
      %v2249 = vunpack.c.l.b16 %v1018
      %v2250 = vunpack.c.h.b16 %v1018
      %v2251 = vunpack.c.l.b16 %v1019
      %v2252 = vunpack.c.h.b16 %v1019
      %v2253 = vunpack.c.l.b16 %v1020
      %v2254 = vunpack.c.h.b16 %v1020
      %v2255 = vunpack.c.l.b16 %v1021
      %v2256 = vunpack.c.h.b16 %v1021
      %v2257 = vunpack.c.l.b16 %v1022
      %v2258 = vunpack.c.h.b16 %v1022
      %v2259 = vunpack.c.l.b16 %v1023
      %v2260 = vunpack.c.h.b16 %v1023
      %v2261 = vunpack.c.l.b16 %v1024
      %v2262 = vunpack.c.h.b16 %v1024
      %v2263 = vunpack.c.l.b16 %v1025
      %v2264 = vunpack.c.h.b16 %v1025
      %v2265 = vunpack.c.l.b16 %v1026
      %v2266 = vunpack.c.h.b16 %v1026
      %v2267 = vunpack.c.l.b16 %v1027
      %v2268 = vunpack.c.h.b16 %v1027
      %v2269 = vunpack.c.l.b16 %v1028
      %v2270 = vunpack.c.h.b16 %v1028
      %v2271 = vunpack.c.l.b16 %v1029
      %v2272 = vunpack.c.h.b16 %v1029
      %v2273 = vunpack.c.l.b16 %v1030
      %v2274 = vunpack.c.h.b16 %v1030
      %v2275 = vunpack.c.l.b16 %v1031
      %v2276 = vunpack.c.h.b16 %v1031
      %v2277 = vunpack.c.l.b16 %v1032
      %v2278 = vunpack.c.h.b16 %v1032
      %v2279 = vunpack.c.l.b16 %v1033
      %v2280 = vunpack.c.h.b16 %v1033
      %v2281 = vunpack.c.l.b16 %v1034
      %v2282 = vunpack.c.h.b16 %v1034
      %v2283 = vunpack.c.l.b16 %v1035
      %v2284 = vunpack.c.h.b16 %v1035
      %v2285 = vunpack.c.l.b16 %v1036
      %v2286 = vunpack.c.h.b16 %v1036
      %v2287 = vunpack.c.l.b16 %v1037
      %v2288 = vunpack.c.h.b16 %v1037
      %v2289 = vunpack.c.l.b16 %v1038
      %v2290 = vunpack.c.h.b16 %v1038
      %v2291 = vunpack.c.l.b16 %v1039
      %v2292 = vunpack.c.h.b16 %v1039
      %v2293 = vunpack.c.l.b16 %v1040
      %v2294 = vunpack.c.h.b16 %v1040
      %v2295 = vunpack.c.l.b16 %v1041
      %v2296 = vunpack.c.h.b16 %v1041
      %v2297 = vunpack.c.l.b16 %v1042
      %v2298 = vunpack.c.h.b16 %v1042
      %v2299 = vunpack.c.l.b16 %v1043
      %v2300 = vunpack.c.h.b16 %v1043
      %v2301 = vunpack.c.l.b16 %v1044
      %v2302 = vunpack.c.h.b16 %v1044
      %v2303 = vunpack.c.l.b16 %v1045
      %v2304 = vunpack.c.h.b16 %v1045
      %v2305 = vunpack.c.l.b16 %v1046
      %v2306 = vunpack.c.h.b16 %v1046
      %v2307 = vunpack.c.l.b16 %v1047
      %v2308 = vunpack.c.h.b16 %v1047
      %v2309 = vunpack.c.l.b16 %v1048
      %v2310 = vunpack.c.h.b16 %v1048
      %v2311 = vunpack.c.l.b16 %v1049
      %v2312 = vunpack.c.h.b16 %v1049
      %v2313 = vunpack.c.l.b16 %v1050
      %v2314 = vunpack.c.h.b16 %v1050
      %v2315 = vunpack.c.l.b16 %v1051
      %v2316 = vunpack.c.h.b16 %v1051
      %v2317 = vunpack.c.l.b16 %v1052
      %v2318 = vunpack.c.h.b16 %v1052
      %v2319 = vunpack.c.l.b16 %v1053
      %v2320 = vunpack.c.h.b16 %v1053
      %v2321 = vunpack.c.l.b16 %v1054
      %v2322 = vunpack.c.h.b16 %v1054
      %v2323 = vunpack.c.l.b16 %v1055
      %v2324 = vunpack.c.h.b16 %v1055
      %v2325 = vunpack.c.l.b16 %v1056
      %v2326 = vunpack.c.h.b16 %v1056
      %v2327 = vunpack.c.l.b16 %v1057
      %v2328 = vunpack.c.h.b16 %v1057
      %v2329 = vunpack.c.l.b16 %v1058
      %v2330 = vunpack.c.h.b16 %v1058
      %v2331 = vunpack.c.l.b16 %v1059
      %v2332 = vunpack.c.h.b16 %v1059
      %v2333 = vunpack.c.l.b16 %v1060
      %v2334 = vunpack.c.h.b16 %v1060
      %v2335 = vunpack.c.l.b16 %v1061
      %v2336 = vunpack.c.h.b16 %v1061
      %v2337 = vunpack.c.l.b16 %v1062
      %v2338 = vunpack.c.h.b16 %v1062
      %v2339 = vunpack.c.l.b16 %v1063
      %v2340 = vunpack.c.h.b16 %v1063
      %v2341 = vunpack.c.l.b16 %v1064
      %v2342 = vunpack.c.h.b16 %v1064
      %v2343 = vunpack.c.l.b16 %v1065
      %v2344 = vunpack.c.h.b16 %v1065
      %v2345 = vunpack.c.l.b16 %v1066
      %v2346 = vunpack.c.h.b16 %v1066
      %v2347 = vunpack.c.l.b16 %v1067
      %v2348 = vunpack.c.h.b16 %v1067
      %v2349 = vunpack.c.l.b16 %v1068
      %v2350 = vunpack.c.h.b16 %v1068
      %v2351 = vunpack.c.l.b16 %v1069
      %v2352 = vunpack.c.h.b16 %v1069
      %v2353 = vunpack.c.l.b16 %v1070
      %v2354 = vunpack.c.h.b16 %v1070
      %v2355 = vunpack.c.l.b16 %v1071
      %v2356 = vunpack.c.h.b16 %v1071
      %v2357 = vunpack.c.l.b16 %v1072
      %v2358 = vunpack.c.h.b16 %v1072
      %v2359 = vunpack.c.l.b16 %v1073
      %v2360 = vunpack.c.h.b16 %v1073
      %v2361 = vunpack.c.l.b16 %v1074
      %v2362 = vunpack.c.h.b16 %v1074
      %v2363 = vunpack.c.l.b16 %v1075
      %v2364 = vunpack.c.h.b16 %v1075
      %v2365 = vunpack.c.l.b16 %v1076
      %v2366 = vunpack.c.h.b16 %v1076
      %v2367 = vunpack.c.l.b16 %v1077
      %v2368 = vunpack.c.h.b16 %v1077
      %v2369 = vunpack.c.l.b16 %v1078
      %v2370 = vunpack.c.h.b16 %v1078
      %v2371 = vunpack.c.l.b16 %v1079
      %v2372 = vunpack.c.h.b16 %v1079
      %v2373 = vunpack.c.l.b16 %v1080
      %v2374 = vunpack.c.h.b16 %v1080
      %v2375 = vunpack.c.l.b16 %v1081
      %v2376 = vunpack.c.h.b16 %v1081
      %v2377 = vunpack.c.l.b16 %v1082
      %v2378 = vunpack.c.h.b16 %v1082
      %v2379 = vunpack.c.l.b16 %v1083
      %v2380 = vunpack.c.h.b16 %v1083
      %v2381 = vunpack.c.l.b16 %v1084
      %v2382 = vunpack.c.h.b16 %v1084
      %v2383 = vunpack.c.l.b16 %v1085
      %v2384 = vunpack.c.h.b16 %v1085
      %v2385 = vunpack.c.l.b16 %v1086
      %v2386 = vunpack.c.h.b16 %v1086
      %v2387 = vunpack.c.l.b16 %v1087
      %v2388 = vunpack.c.h.b16 %v1087
      %v2389 = vunpack.c.l.b16 %v1088
      %v2390 = vunpack.c.h.b16 %v1088
      %v2391 = vunpack.c.l.b16 %v1089
      %v2392 = vunpack.c.h.b16 %v1089
      %v2393 = vunpack.c.l.b16 %v1090
      %v2394 = vunpack.c.h.b16 %v1090
      %v2395 = vunpack.c.l.b16 %v1091
      %v2396 = vunpack.c.h.b16 %v1091
      %v2397 = vunpack.c.l.b16 %v1092
      %v2398 = vunpack.c.h.b16 %v1092
      %v2399 = vunpack.c.l.b16 %v1093
      %v2400 = vunpack.c.h.b16 %v1093
      %v2401 = vunpack.c.l.b16 %v1094
      %v2402 = vunpack.c.h.b16 %v1094
      %v2403 = vunpack.c.l.b16 %v1095
      %v2404 = vunpack.c.h.b16 %v1095
      %v2405 = vunpack.c.l.b16 %v1096
      %v2406 = vunpack.c.h.b16 %v1096
      %v2407 = vunpack.c.l.b16 %v1097
      %v2408 = vunpack.c.h.b16 %v1097
      %v2409 = vunpack.c.l.b16 %v1098
      %v2410 = vunpack.c.h.b16 %v1098
      %v2411 = vunpack.c.l.b16 %v1099
      %v2412 = vunpack.c.h.b16 %v1099
      %v2413 = vunpack.c.l.b16 %v1100
      %v2414 = vunpack.c.h.b16 %v1100
      %v2415 = vunpack.c.l.b16 %v1101
      %v2416 = vunpack.c.h.b16 %v1101
      %v2417 = vunpack.c.l.b16 %v1102
      %v2418 = vunpack.c.h.b16 %v1102
      %v2419 = vunpack.c.l.b16 %v1103
      %v2420 = vunpack.c.h.b16 %v1103
      %v2421 = vunpack.c.l.b16 %v1104
      %v2422 = vunpack.c.h.b16 %v1104
      %v2423 = vunpack.c.l.b16 %v1105
      %v2424 = vunpack.c.h.b16 %v1105
      %v2425 = vunpack.c.l.b16 %v1106
      %v2426 = vunpack.c.h.b16 %v1106
      %v2427 = vunpack.c.l.b16 %v1107
      %v2428 = vunpack.c.h.b16 %v1107
      %v2429 = vunpack.c.l.b16 %v1108
      %v2430 = vunpack.c.h.b16 %v1108
      %v2431 = vunpack.c.l.b16 %v1109
      %v2432 = vunpack.c.h.b16 %v1109
      %v2433 = vunpack.c.l.b16 %v1110
      %v2434 = vunpack.c.h.b16 %v1110
      %v2435 = vunpack.c.l.b16 %v1111
      %v2436 = vunpack.c.h.b16 %v1111
      %v2437 = vunpack.c.l.b16 %v1112
      %v2438 = vunpack.c.h.b16 %v1112
      %v2439 = vunpack.c.l.b16 %v1113
      %v2440 = vunpack.c.h.b16 %v1113
      %v2441 = vunpack.c.l.b16 %v1114
      %v2442 = vunpack.c.h.b16 %v1114
      %v2443 = vunpack.c.l.b16 %v1115
      %v2444 = vunpack.c.h.b16 %v1115
      %v2445 = vunpack.c.l.b16 %v1116
      %v2446 = vunpack.c.h.b16 %v1116
      %v2447 = vunpack.c.l.b16 %v1117
      %v2448 = vunpack.c.h.b16 %v1117
      %v2449 = vunpack.c.l.b16 %v1118
      %v2450 = vunpack.c.h.b16 %v1118
      %v2451 = vunpack.c.l.b16 %v1119
      %v2452 = vunpack.c.h.b16 %v1119
      %v2453 = vunpack.c.l.b16 %v1120
      %v2454 = vunpack.c.h.b16 %v1120
      %v2455 = vunpack.c.l.b16 %v1121
      %v2456 = vunpack.c.h.b16 %v1121
      %v2457 = vunpack.c.l.b16 %v1122
      %v2458 = vunpack.c.h.b16 %v1122
      %v2459 = vunpack.c.l.b16 %v1123
      %v2460 = vunpack.c.h.b16 %v1123
      %v2461 = vunpack.c.l.b16 %v1124
      %v2462 = vunpack.c.h.b16 %v1124
      %v2463 = vunpack.c.l.b16 %v1125
      %v2464 = vunpack.c.h.b16 %v1125
      %v2465 = vunpack.c.l.b16 %v1126
      %v2466 = vunpack.c.h.b16 %v1126
      %v2467 = vunpack.c.l.b16 %v1127
      %v2468 = vunpack.c.h.b16 %v1127
      %v2469 = vunpack.c.l.b16 %v1128
      %v2470 = vunpack.c.h.b16 %v1128
      %v2471 = vunpack.c.l.b16 %v1129
      %v2472 = vunpack.c.h.b16 %v1129
      %v2473 = vunpack.c.l.b16 %v1130
      %v2474 = vunpack.c.h.b16 %v1130
      %v2475 = vunpack.c.l.b16 %v1131
      %v2476 = vunpack.c.h.b16 %v1131
      %v2477 = vunpack.c.l.b16 %v1132
      %v2478 = vunpack.c.h.b16 %v1132
      %v2479 = vunpack.c.l.b16 %v1133
      %v2480 = vunpack.c.h.b16 %v1133
      %v2481 = vunpack.c.l.b16 %v1134
      %v2482 = vunpack.c.h.b16 %v1134
      %v2483 = vunpack.c.l.b16 %v1135
      %v2484 = vunpack.c.h.b16 %v1135
      %v2485 = vunpack.c.l.b16 %v1136
      %v2486 = vunpack.c.h.b16 %v1136
      %v2487 = vunpack.c.l.b16 %v1137
      %v2488 = vunpack.c.h.b16 %v1137
      %v2489 = vunpack.c.l.b16 %v1138
      %v2490 = vunpack.c.h.b16 %v1138
      %v2491 = vunpack.c.l.b16 %v1139
      %v2492 = vunpack.c.h.b16 %v1139
      %v2493 = vunpack.c.l.b16 %v1140
      %v2494 = vunpack.c.h.b16 %v1140
      %v2495 = vunpack.c.l.b16 %v1141
      %v2496 = vunpack.c.h.b16 %v1141
      %v2497 = vunpack.c.l.b16 %v1142
      %v2498 = vunpack.c.h.b16 %v1142
      %v2499 = vunpack.c.l.b16 %v1143
      %v2500 = vunpack.c.h.b16 %v1143
      %v2501 = vunpack.c.l.b16 %v1144
      %v2502 = vunpack.c.h.b16 %v1144
      %v2503 = vunpack.c.l.b16 %v1145
      %v2504 = vunpack.c.h.b16 %v1145
      %v2505 = vunpack.c.l.b16 %v1146
      %v2506 = vunpack.c.h.b16 %v1146
      %v2507 = vunpack.c.l.b16 %v1147
      %v2508 = vunpack.c.h.b16 %v1147
      %v2509 = vunpack.c.l.b16 %v1148
      %v2510 = vunpack.c.h.b16 %v1148
      %v2511 = vunpack.c.l.b16 %v1149
      %v2512 = vunpack.c.h.b16 %v1149
      %v2513 = vunpack.c.l.b16 %v1150
      %v2514 = vunpack.c.h.b16 %v1150
      %v2515 = vunpack.c.l.b16 %v1151
      %v2516 = vunpack.c.h.b16 %v1151
      %v2517 = vunpack.c.l.b16 %v1152
      %v2518 = vunpack.c.h.b16 %v1152
      %v2519 = vunpack.c.l.b16 %v1153
      %v2520 = vunpack.c.h.b16 %v1153
      %v2521 = vunpack.c.l.b16 %v1154
      %v2522 = vunpack.c.h.b16 %v1154
      %v2523 = vunpack.c.l.b16 %v1155
      %v2524 = vunpack.c.h.b16 %v1155
      %v2525 = vunpack.c.l.b16 %v1156
      %v2526 = vunpack.c.h.b16 %v1156
      %v2527 = vunpack.c.l.b16 %v1157
      %v2528 = vunpack.c.h.b16 %v1157
      %v2529 = vunpack.c.l.b16 %v1158
      %v2530 = vunpack.c.h.b16 %v1158
      %v2531 = vunpack.c.l.b16 %v1159
      %v2532 = vunpack.c.h.b16 %v1159
      %v2533 = vunpack.c.l.b16 %v1160
      %v2534 = vunpack.c.h.b16 %v1160
      %v2535 = vunpack.c.l.b16 %v1161
      %v2536 = vunpack.c.h.b16 %v1161
      %v2537 = vunpack.c.l.b16 %v1162
      %v2538 = vunpack.c.h.b16 %v1162
      %v2539 = vunpack.c.l.b16 %v1163
      %v2540 = vunpack.c.h.b16 %v1163
      %v2541 = vunpack.c.l.b16 %v1164
      %v2542 = vunpack.c.h.b16 %v1164
      %v2543 = vunpack.c.l.b16 %v1165
      %v2544 = vunpack.c.h.b16 %v1165
      %v2545 = vunpack.c.l.b16 %v1166
      %v2546 = vunpack.c.h.b16 %v1166
      %v2547 = vunpack.c.l.b16 %v1167
      %v2548 = vunpack.c.h.b16 %v1167
      %v2549 = vunpack.c.l.b16 %v1168
      %v2550 = vunpack.c.h.b16 %v1168
      %v2551 = vunpack.c.l.b16 %v1169
      %v2552 = vunpack.c.h.b16 %v1169
      %v2553 = vunpack.c.l.b16 %v1170
      %v2554 = vunpack.c.h.b16 %v1170
      %v2555 = vunpack.c.l.b16 %v1171
      %v2556 = vunpack.c.h.b16 %v1171
      %v2557 = vunpack.c.l.b16 %v1172
      %v2558 = vunpack.c.h.b16 %v1172
      %v2559 = vunpack.c.l.b16 %v1173
      %v2560 = vunpack.c.h.b16 %v1173
      %v2561 = vunpack.c.l.b16 %v1174
      %v2562 = vunpack.c.h.b16 %v1174
      %v2563 = vunpack.c.l.b16 %v1175
      %v2564 = vunpack.c.h.b16 %v1175
      %v2565 = vunpack.c.l.b16 %v1176
      %v2566 = vunpack.c.h.b16 %v1176
      %v2567 = vunpack.c.l.b16 %v1177
      %v2568 = vunpack.c.h.b16 %v1177
      %v2569 = vunpack.c.l.b16 %v1178
      %v2570 = vunpack.c.h.b16 %v1178
      %v2571 = vunpack.c.l.b16 %v1179
      %v2572 = vunpack.c.h.b16 %v1179
      %v2573 = vunpack.c.l.b16 %v1180
      %v2574 = vunpack.c.h.b16 %v1180
      %v2575 = vunpack.c.l.b16 %v1181
      %v2576 = vunpack.c.h.b16 %v1181
      %v2577 = vunpack.c.l.b16 %v1182
      %v2578 = vunpack.c.h.b16 %v1182
      %v2579 = vunpack.c.l.b16 %v1183
      %v2580 = vunpack.c.h.b16 %v1183
      %v2581 = vunpack.c.l.b16 %v1184
      %v2582 = vunpack.c.h.b16 %v1184
      %v2583 = vunpack.c.l.b16 %v1185
      %v2584 = vunpack.c.h.b16 %v1185
      %v2585 = vunpack.c.l.b16 %v1186
      %v2586 = vunpack.c.h.b16 %v1186
      %v2587 = vunpack.c.l.b16 %v1187
      %v2588 = vunpack.c.h.b16 %v1187
      %v2589 = vunpack.c.l.b16 %v1188
      %v2590 = vunpack.c.h.b16 %v1188
      %v2591 = vunpack.c.l.b16 %v1189
      %v2592 = vunpack.c.h.b16 %v1189
      %v2593 = vunpack.c.l.b16 %v1190
      %v2594 = vunpack.c.h.b16 %v1190
      %v2595 = vunpack.c.l.b16 %v1191
      %v2596 = vunpack.c.h.b16 %v1191
      %v2597 = vunpack.c.l.b16 %v1192
      %v2598 = vunpack.c.h.b16 %v1192
      %v2599 = vunpack.c.l.b16 %v1193
      %v2600 = vunpack.c.h.b16 %v1193
      %v2601 = vunpack.c.l.b16 %v1194
      %v2602 = vunpack.c.h.b16 %v1194
      %v2603 = vunpack.c.l.b16 %v1195
      %v2604 = vunpack.c.h.b16 %v1195
      %v2605 = vunpack.c.l.b16 %v1196
      %v2606 = vunpack.c.h.b16 %v1196
      %v2607 = vunpack.c.l.b16 %v1197
      %v2608 = vunpack.c.h.b16 %v1197
      %v2609 = vunpack.c.l.b16 %v1198
      %v2610 = vunpack.c.h.b16 %v1198
      %v2611 = vunpack.c.l.b16 %v1199
      %v2612 = vunpack.c.h.b16 %v1199
      %v2613 = vunpack.c.l.b16 %v1200
      %v2614 = vunpack.c.h.b16 %v1200
      %v2615 = vunpack.c.l.b16 %v1201
      %v2616 = vunpack.c.h.b16 %v1201
      %v2617 = vunpack.c.l.b16 %v1202
      %v2618 = vunpack.c.h.b16 %v1202
      %v2619 = vunpack.c.l.b16 %v1203
      %v2620 = vunpack.c.h.b16 %v1203
      %v2621 = vunpack.c.l.b16 %v1204
      %v2622 = vunpack.c.h.b16 %v1204
      %v2623 = vunpack.c.l.b16 %v1205
      %v2624 = vunpack.c.h.b16 %v1205
      %v2625 = vunpack.c.l.b16 %v1206
      %v2626 = vunpack.c.h.b16 %v1206
      %v2627 = vunpack.c.l.b16 %v1207
      %v2628 = vunpack.c.h.b16 %v1207
      %v2629 = vunpack.c.l.b16 %v1208
      %v2630 = vunpack.c.h.b16 %v1208
      %v2631 = vunpack.c.l.b16 %v1209
      %v2632 = vunpack.c.h.b16 %v1209
      %v2633 = vunpack.c.l.b16 %v1210
      %v2634 = vunpack.c.h.b16 %v1210
      %v2635 = vunpack.c.l.b16 %v1211
      %v2636 = vunpack.c.h.b16 %v1211
      %v2637 = vunpack.c.l.b16 %v1212
      %v2638 = vunpack.c.h.b16 %v1212
      %v2639 = vunpack.c.l.b16 %v1213
      %v2640 = vunpack.c.h.b16 %v1213
      %v2641 = vunpack.c.l.b16 %v1214
      %v2642 = vunpack.c.h.b16 %v1214
      %v2643 = vunpack.c.l.b16 %v1215
      %v2644 = vunpack.c.h.b16 %v1215
      %v2645 = vunpack.c.l.b16 %v1216
      %v2646 = vunpack.c.h.b16 %v1216
      %v2647 = vunpack.c.l.b16 %v1217
      %v2648 = vunpack.c.h.b16 %v1217
      %v2649 = vunpack.c.l.b16 %v1218
      %v2650 = vunpack.c.h.b16 %v1218
      %v2651 = vunpack.c.l.b16 %v1219
      %v2652 = vunpack.c.h.b16 %v1219
      %v2653 = vunpack.c.l.b16 %v1220
      %v2654 = vunpack.c.h.b16 %v1220
      %v2655 = vunpack.c.l.b16 %v1221
      %v2656 = vunpack.c.h.b16 %v1221
      %v2657 = vunpack.c.l.b16 %v1222
      %v2658 = vunpack.c.h.b16 %v1222
      %v2659 = vunpack.c.l.b16 %v1223
      %v2660 = vunpack.c.h.b16 %v1223
      %v2661 = vunpack.c.l.b16 %v1224
      %v2662 = vunpack.c.h.b16 %v1224
      %v2663 = vunpack.c.l.b16 %v1225
      %v2664 = vunpack.c.h.b16 %v1225
      %v2665 = vunpack.c.l.b16 %v1226
      %v2666 = vunpack.c.h.b16 %v1226
      %v2667 = vunpack.c.l.b16 %v1227
      %v2668 = vunpack.c.h.b16 %v1227
      %v2669 = vunpack.c.l.b16 %v1228
      %v2670 = vunpack.c.h.b16 %v1228
      %v2671 = vunpack.c.l.b16 %v1229
      %v2672 = vunpack.c.h.b16 %v1229
      %v2673 = vunpack.c.l.b16 %v1230
      %v2674 = vunpack.c.h.b16 %v1230
      %v2675 = vunpack.c.l.b16 %v1231
      %v2676 = vunpack.c.h.b16 %v1231
      %v2677 = vunpack.c.l.b16 %v1232
      %v2678 = vunpack.c.h.b16 %v1232
      %v2679 = vunpack.c.l.b16 %v1233
      %v2680 = vunpack.c.h.b16 %v1233
      %v2681 = vunpack.c.l.b16 %v1234
      %v2682 = vunpack.c.h.b16 %v1234
      %v2683 = vunpack.c.l.b16 %v1235
      %v2684 = vunpack.c.h.b16 %v1235
      %v2685 = vunpack.c.l.b16 %v1236
      %v2686 = vunpack.c.h.b16 %v1236
      %v2687 = vunpack.c.l.b16 %v1237
      %v2688 = vunpack.c.h.b16 %v1237
      %v2689 = vunpack.c.l.b16 %v1238
      %v2690 = vunpack.c.h.b16 %v1238
      %v2691 = vunpack.c.l.b16 %v1239
      %v2692 = vunpack.c.h.b16 %v1239
      %v2693 = vunpack.c.l.b16 %v1240
      %v2694 = vunpack.c.h.b16 %v1240
      %v2695 = vunpack.c.l.b16 %v1241
      %v2696 = vunpack.c.h.b16 %v1241
      %v2697 = vunpack.c.l.b16 %v1242
      %v2698 = vunpack.c.h.b16 %v1242
      %v2699 = vunpack.c.l.b16 %v1243
      %v2700 = vunpack.c.h.b16 %v1243
      %v2701 = vunpack.c.l.b16 %v1244
      %v2702 = vunpack.c.h.b16 %v1244
      %v2703 = vunpack.c.l.b16 %v1245
      %v2704 = vunpack.c.h.b16 %v1245
      %v2705 = vunpack.c.l.b16 %v1246
      %v2706 = vunpack.c.h.b16 %v1246
      %v2707 = vunpack.c.l.b16 %v1247
      %v2708 = vunpack.c.h.b16 %v1247
      %v2709 = vunpack.c.l.b16 %v1248
      %v2710 = vunpack.c.h.b16 %v1248
      %v2711 = vunpack.c.l.b16 %v1249
      %v2712 = vunpack.c.h.b16 %v1249
      %v2713 = vunpack.c.l.b16 %v1250
      %v2714 = vunpack.c.h.b16 %v1250
      %v2715 = vunpack.c.l.b16 %v1251
      %v2716 = vunpack.c.h.b16 %v1251
      %v2717 = vunpack.c.l.b16 %v1252
      %v2718 = vunpack.c.h.b16 %v1252
      %v2719 = vunpack.c.l.b16 %v1253
      %v2720 = vunpack.c.h.b16 %v1253
      %v2721 = vunpack.c.l.b16 %v1254
      %v2722 = vunpack.c.h.b16 %v1254
      %v2723 = vunpack.c.l.b16 %v1255
      %v2724 = vunpack.c.h.b16 %v1255
      %v2725 = vunpack.c.l.b16 %v1256
      %v2726 = vunpack.c.h.b16 %v1256
      %v2727 = vunpack.c.l.b16 %v1257
      %v2728 = vunpack.c.h.b16 %v1257
      %v2729 = vunpack.c.l.b16 %v1258
      %v2730 = vunpack.c.h.b16 %v1258
      %v2731 = vunpack.c.l.b16 %v1259
      %v2732 = vunpack.c.h.b16 %v1259
      %v2733 = vunpack.c.l.b16 %v1260
      %v2734 = vunpack.c.h.b16 %v1260
      %v2735 = vunpack.c.l.b16 %v1261
      %v2736 = vunpack.c.h.b16 %v1261
      %v2737 = vunpack.c.l.b16 %v1262
      %v2738 = vunpack.c.h.b16 %v1262
      %v2739 = vunpack.c.l.b16 %v1263
      %v2740 = vunpack.c.h.b16 %v1263
      %v2741 = vunpack.c.l.b16 %v1264
      %v2742 = vunpack.c.h.b16 %v1264
      %v2743 = vunpack.c.l.b16 %v1265
      %v2744 = vunpack.c.h.b16 %v1265
      %v2745 = vunpack.c.l.b16 %v1266
      %v2746 = vunpack.c.h.b16 %v1266
      %v2747 = vunpack.c.l.b16 %v1267
      %v2748 = vunpack.c.h.b16 %v1267
      %v2749 = vunpack.c.l.b16 %v1268
      %v2750 = vunpack.c.h.b16 %v1268
      %v2751 = vunpack.c.l.b16 %v1269
      %v2752 = vunpack.c.h.b16 %v1269
      %v2753 = vunpack.c.l.b16 %v1270
      %v2754 = vunpack.c.h.b16 %v1270
      %v2755 = vunpack.c.l.b16 %v1271
      %v2756 = vunpack.c.h.b16 %v1271
      %v2757 = vunpack.c.l.b16 %v1272
      %v2758 = vunpack.c.h.b16 %v1272
      %v2759 = vunpack.c.l.b16 %v1273
      %v2760 = vunpack.c.h.b16 %v1273
      %v2761 = vunpack.c.l.b16 %v1274
      %v2762 = vunpack.c.h.b16 %v1274
      %v2763 = vunpack.c.l.b16 %v1275
      %v2764 = vunpack.c.h.b16 %v1275
      %v2765 = vunpack.c.l.b16 %v1276
      %v2766 = vunpack.c.h.b16 %v1276
      %v2767 = vunpack.c.l.b16 %v1277
      %v2768 = vunpack.c.h.b16 %v1277
      %v2769 = vunpack.c.l.b16 %v1278
      %v2770 = vunpack.c.h.b16 %v1278
      %v2771 = vunpack.c.l.b16 %v1279
      %v2772 = vunpack.c.h.b16 %v1279
      %v2773 = vunpack.c.l.b16 %v1280
      %v2774 = vunpack.c.h.b16 %v1280
      %v2775 = vunpack.c.l.b16 %v1281
      %v2776 = vunpack.c.h.b16 %v1281
      %v2777 = vunpack.c.l.b16 %v1282
      %v2778 = vunpack.c.h.b16 %v1282
      %v2779 = vunpack.c.l.b16 %v1283
      %v2780 = vunpack.c.h.b16 %v1283
      %v2781 = vunpack.c.l.b16 %v1284
      %v2782 = vunpack.c.h.b16 %v1284
      %v2783 = vunpack.c.l.b16 %v1285
      %v2784 = vunpack.c.h.b16 %v1285
      %v2785 = vunpack.c.l.b16 %v1286
      %v2786 = vunpack.c.h.b16 %v1286
      %v2787 = vunpack.c.l.b16 %v1287
      %v2788 = vunpack.c.h.b16 %v1287
      %v2789 = vunpack.c.l.b16 %v1288
      %v2790 = vunpack.c.h.b16 %v1288
      %v2791 = vunpack.c.l.b16 %v1289
      %v2792 = vunpack.c.h.b16 %v1289
      %v2793 = vunpack.c.l.b16 %v1290
      %v2794 = vunpack.c.h.b16 %v1290
      %v2795 = vunpack.c.l.b16 %v1291
      %v2796 = vunpack.c.h.b16 %v1291
      %v2797 = vunpack.c.l.b16 %v1292
      %v2798 = vunpack.c.h.b16 %v1292
      %v2799 = vunpack.c.l.b16 %v1293
      %v2800 = vunpack.c.h.b16 %v1293
      %v2801 = vunpack.c.l.b16 %v1294
      %v2802 = vunpack.c.h.b16 %v1294
      %v2803 = vunpack.c.l.b16 %v1295
      %v2804 = vunpack.c.h.b16 %v1295
      %v2805 = vunpack.c.l.b16 %v1296
      %v2806 = vunpack.c.h.b16 %v1296
      %v2807 = vunpack.c.l.b16 %v1297
      %v2808 = vunpack.c.h.b16 %v1297
      %v2809 = vunpack.c.l.b16 %v1298
      %v2810 = vunpack.c.h.b16 %v1298
      %v2811 = vunpack.c.l.b16 %v1299
      %v2812 = vunpack.c.h.b16 %v1299
      %v2813 = vunpack.c.l.b16 %v1300
      %v2814 = vunpack.c.h.b16 %v1300
      %v2815 = vunpack.c.l.b16 %v1301
      %v2816 = vunpack.c.h.b16 %v1301
      %v2817 = vunpack.c.l.b16 %v1302
      %v2818 = vunpack.c.h.b16 %v1302
      %v2819 = vunpack.c.l.b16 %v1303
      %v2820 = vunpack.c.h.b16 %v1303
      %v2821 = vunpack.c.l.b16 %v1304
      %v2822 = vunpack.c.h.b16 %v1304
      %v2823 = vunpack.c.l.b16 %v1305
      %v2824 = vunpack.c.h.b16 %v1305
      %v2825 = vunpack.c.l.b16 %v1306
      %v2826 = vunpack.c.h.b16 %v1306
      %v2827 = vunpack.c.l.b16 %v1307
      %v2828 = vunpack.c.h.b16 %v1307
      %v2829 = vunpack.c.l.b16 %v1308
      %v2830 = vunpack.c.h.b16 %v1308
      %v2831 = vunpack.c.l.b16 %v1309
      %v2832 = vunpack.c.h.b16 %v1309
      %v2833 = vunpack.c.l.b16 %v1310
      %v2834 = vunpack.c.h.b16 %v1310
      %v2835 = vunpack.c.l.b16 %v1311
      %v2836 = vunpack.c.h.b16 %v1311
      %v2837 = vunpack.c.l.b16 %v1312
      %v2838 = vunpack.c.h.b16 %v1312
      %v2839 = vunpack.c.l.b16 %v1313
      %v2840 = vunpack.c.h.b16 %v1313
      %v2841 = vunpack.c.l.b16 %v1314
      %v2842 = vunpack.c.h.b16 %v1314
      %v2843 = vunpack.c.l.b16 %v1315
      %v2844 = vunpack.c.h.b16 %v1315
      %v2845 = vunpack.c.l.b16 %v1316
      %v2846 = vunpack.c.h.b16 %v1316
      %v2847 = vunpack.c.l.b16 %v1317
      %v2848 = vunpack.c.h.b16 %v1317
      %v2849 = vunpack.c.l.b16 %v1318
      %v2850 = vunpack.c.h.b16 %v1318
      %v2851 = vunpack.c.l.b16 %v1319
      %v2852 = vunpack.c.h.b16 %v1319
      %v2853 = vunpack.c.l.b16 %v1320
      %v2854 = vunpack.c.h.b16 %v1320
      %v2855 = vunpack.c.l.b16 %v1321
      %v2856 = vunpack.c.h.b16 %v1321
      %v2857 = vunpack.c.l.b16 %v1322
      %v2858 = vunpack.c.h.b16 %v1322
      %v2859 = vunpack.c.l.b16 %v1323
      %v2860 = vunpack.c.h.b16 %v1323
      %v2861 = vunpack.c.l.b16 %v1324
      %v2862 = vunpack.c.h.b16 %v1324
      %v2863 = vunpack.c.l.b16 %v1325
      %v2864 = vunpack.c.h.b16 %v1325
      %v2865 = vunpack.c.l.b16 %v1326
      %v2866 = vunpack.c.h.b16 %v1326
      %v2867 = vunpack.c.l.b16 %v1327
      %v2868 = vunpack.c.h.b16 %v1327
      %v2869 = vunpack.c.l.b16 %v1328
      %v2870 = vunpack.c.h.b16 %v1328
      %v2871 = vunpack.c.l.b16 %v1329
      %v2872 = vunpack.c.h.b16 %v1329
      %v2873 = vunpack.c.l.b16 %v1330
      %v2874 = vunpack.c.h.b16 %v1330
      %v2875 = vunpack.c.l.b16 %v1331
      %v2876 = vunpack.c.h.b16 %v1331
      %v2877 = vunpack.c.l.b16 %v1332
      %v2878 = vunpack.c.h.b16 %v1332
      %v2879 = vunpack.c.l.b16 %v1333
      %v2880 = vunpack.c.h.b16 %v1333
      %v2881 = vunpack.c.l.b16 %v1334
      %v2882 = vunpack.c.h.b16 %v1334
      %v2883 = vunpack.c.l.b16 %v1335
      %v2884 = vunpack.c.h.b16 %v1335
      %v2885 = vunpack.c.l.b16 %v1336
      %v2886 = vunpack.c.h.b16 %v1336
      %v2887 = vunpack.c.l.b16 %v1337
      %v2888 = vunpack.c.h.b16 %v1337
      %v2889 = vunpack.c.l.b16 %v1338
      %v2890 = vunpack.c.h.b16 %v1338
      %v2891 = vunpack.c.l.b16 %v1339
      %v2892 = vunpack.c.h.b16 %v1339
      %v2893 = vunpack.c.l.b16 %v1340
      %v2894 = vunpack.c.h.b16 %v1340
      %v2895 = vunpack.c.l.b16 %v1341
      %v2896 = vunpack.c.h.b16 %v1341
      %v2897 = vunpack.c.l.b16 %v1342
      %v2898 = vunpack.c.h.b16 %v1342
      %v2899 = vunpack.c.l.b16 %v1343
      %v2900 = vunpack.c.h.b16 %v1343
      %v2901 = vunpack.c.l.b16 %v1344
      %v2902 = vunpack.c.h.b16 %v1344
      %v2903 = vunpack.c.l.b16 %v1345
      %v2904 = vunpack.c.h.b16 %v1345
      %v2905 = vunpack.c.l.b16 %v1346
      %v2906 = vunpack.c.h.b16 %v1346
      %v2907 = vunpack.c.l.b16 %v1347
      %v2908 = vunpack.c.h.b16 %v1347
      %v2909 = vunpack.c.l.b16 %v1348
      %v2910 = vunpack.c.h.b16 %v1348
      %v2911 = vunpack.c.l.b16 %v1349
      %v2912 = vunpack.c.h.b16 %v1349
      %v2913 = vunpack.c.l.b16 %v1350
      %v2914 = vunpack.c.h.b16 %v1350
      %v2915 = vunpack.c.l.b16 %v1351
      %v2916 = vunpack.c.h.b16 %v1351
      %v2917 = vunpack.c.l.b16 %v1352
      %v2918 = vunpack.c.h.b16 %v1352
      %v2919 = vunpack.c.l.b16 %v1353
      %v2920 = vunpack.c.h.b16 %v1353
      %v2921 = vunpack.c.l.b16 %v1354
      %v2922 = vunpack.c.h.b16 %v1354
      %v2923 = vunpack.c.l.b16 %v1355
      %v2924 = vunpack.c.h.b16 %v1355
      %v2925 = vunpack.c.l.b16 %v1356
      %v2926 = vunpack.c.h.b16 %v1356
      %v2927 = vunpack.c.l.b16 %v1357
      %v2928 = vunpack.c.h.b16 %v1357
      %v2929 = vunpack.c.l.b16 %v1358
      %v2930 = vunpack.c.h.b16 %v1358
      %v2931 = vunpack.c.l.b16 %v1359
      %v2932 = vunpack.c.h.b16 %v1359
      %v2933 = vunpack.c.l.b16 %v1360
      %v2934 = vunpack.c.h.b16 %v1360
      %v2935 = vunpack.c.l.b16 %v1361
      %v2936 = vunpack.c.h.b16 %v1361
      %v2937 = vunpack.c.l.b16 %v1362
      %v2938 = vunpack.c.h.b16 %v1362
      %v2939 = vunpack.c.l.b16 %v1363
      %v2940 = vunpack.c.h.b16 %v1363
      %v2941 = vunpack.c.l.b16 %v1364
      %v2942 = vunpack.c.h.b16 %v1364
      %v2943 = vpack.c.b16 %v1927, %v1919
      %v2944 = vpack.c.b16 %v1928, %v1920
      %v2945 = vpack.c.b16 %v1929, %v1921
      %v2946 = vpack.c.b16 %v1930, %v1922
      %v2947 = vpack.c.b16 %v1931, %v1923
      %v2948 = vpack.c.b16 %v1932, %v1924
      %v2949 = vpack.c.b16 %v1933, %v1925
      %v2950 = vpack.c.b16 %v1934, %v1926
      %v2951 = vpack.c.b16 %v1943, %v1935
      %v2952 = vpack.c.b16 %v1944, %v1936
      %v2953 = vpack.c.b16 %v1945, %v1937
      %v2954 = vpack.c.b16 %v1946, %v1938
      %v2955 = vpack.c.b16 %v1947, %v1939
      %v2956 = vpack.c.b16 %v1948, %v1940
      %v2957 = vpack.c.b16 %v1949, %v1941
      %v2958 = vpack.c.b16 %v1950, %v1942
      %v2959 = vpack.c.b16 %v1959, %v1951
      %v2960 = vpack.c.b16 %v1960, %v1952
      %v2961 = vpack.c.b16 %v1961, %v1953
      %v2962 = vpack.c.b16 %v1962, %v1954
      %v2963 = vpack.c.b16 %v1963, %v1955
      %v2964 = vpack.c.b16 %v1964, %v1956
      %v2965 = vpack.c.b16 %v1965, %v1957
      %v2966 = vpack.c.b16 %v1966, %v1958
      %v2967 = vpack.c.b16 %v1975, %v1967
      %v2968 = vpack.c.b16 %v1976, %v1968
      %v2969 = vpack.c.b16 %v1977, %v1969
      %v2970 = vpack.c.b16 %v1978, %v1970
      %v2971 = vpack.c.b16 %v1979, %v1971
      %v2972 = vpack.c.b16 %v1980, %v1972
      %v2973 = vpack.c.b16 %v1981, %v1973
      %v2974 = vpack.c.b16 %v1982, %v1974
      %v2975 = vpack.c.b16 %v1991, %v1983
      %v2976 = vpack.c.b16 %v1992, %v1984
      %v2977 = vpack.c.b16 %v1993, %v1985
      %v2978 = vpack.c.b16 %v1994, %v1986
      %v2979 = vpack.c.b16 %v1995, %v1987
      %v2980 = vpack.c.b16 %v1996, %v1988
      %v2981 = vpack.c.b16 %v1997, %v1989
      %v2982 = vpack.c.b16 %v1998, %v1990
      %v2983 = vpack.c.b16 %v2007, %v1999
      %v2984 = vpack.c.b16 %v2008, %v2000
      %v2985 = vpack.c.b16 %v2009, %v2001
      %v2986 = vpack.c.b16 %v2010, %v2002
      %v2987 = vpack.c.b16 %v2011, %v2003
      %v2988 = vpack.c.b16 %v2012, %v2004
      %v2989 = vpack.c.b16 %v2013, %v2005
      %v2990 = vpack.c.b16 %v2014, %v2006
      %v2991 = vpack.c.b16 %v2023, %v2015
      %v2992 = vpack.c.b16 %v2024, %v2016
      %v2993 = vpack.c.b16 %v2025, %v2017
      %v2994 = vpack.c.b16 %v2026, %v2018
      %v2995 = vpack.c.b16 %v2027, %v2019
      %v2996 = vpack.c.b16 %v2028, %v2020
      %v2997 = vpack.c.b16 %v2029, %v2021
      %v2998 = vpack.c.b16 %v2030, %v2022
      %v2999 = vpack.c.b16 %v2039, %v2031
      %v3000 = vpack.c.b16 %v2040, %v2032
      %v3001 = vpack.c.b16 %v2041, %v2033
      %v3002 = vpack.c.b16 %v2042, %v2034
      %v3003 = vpack.c.b16 %v2043, %v2035
      %v3004 = vpack.c.b16 %v2044, %v2036
      %v3005 = vpack.c.b16 %v2045, %v2037
      %v3006 = vpack.c.b16 %v2046, %v2038
      %v3007 = vpack.c.b16 %v2055, %v2047
      %v3008 = vpack.c.b16 %v2056, %v2048
      %v3009 = vpack.c.b16 %v2057, %v2049
      %v3010 = vpack.c.b16 %v2058, %v2050
      %v3011 = vpack.c.b16 %v2059, %v2051
      %v3012 = vpack.c.b16 %v2060, %v2052
      %v3013 = vpack.c.b16 %v2061, %v2053
      %v3014 = vpack.c.b16 %v2062, %v2054
      %v3015 = vpack.c.b16 %v2071, %v2063
      %v3016 = vpack.c.b16 %v2072, %v2064
      %v3017 = vpack.c.b16 %v2073, %v2065
      %v3018 = vpack.c.b16 %v2074, %v2066
      %v3019 = vpack.c.b16 %v2075, %v2067
      %v3020 = vpack.c.b16 %v2076, %v2068
      %v3021 = vpack.c.b16 %v2077, %v2069
      %v3022 = vpack.c.b16 %v2078, %v2070
      %v3023 = vpack.c.b16 %v2087, %v2079
      %v3024 = vpack.c.b16 %v2088, %v2080
      %v3025 = vpack.c.b16 %v2089, %v2081
      %v3026 = vpack.c.b16 %v2090, %v2082
      %v3027 = vpack.c.b16 %v2091, %v2083
      %v3028 = vpack.c.b16 %v2092, %v2084
      %v3029 = vpack.c.b16 %v2093, %v2085
      %v3030 = vpack.c.b16 %v2094, %v2086
      %v3031 = vpack.c.b16 %v2103, %v2095
      %v3032 = vpack.c.b16 %v2104, %v2096
      %v3033 = vpack.c.b16 %v2105, %v2097
      %v3034 = vpack.c.b16 %v2106, %v2098
      %v3035 = vpack.c.b16 %v2107, %v2099
      %v3036 = vpack.c.b16 %v2108, %v2100
      %v3037 = vpack.c.b16 %v2109, %v2101
      %v3038 = vpack.c.b16 %v2110, %v2102
      %v3039 = vpack.c.b16 %v2119, %v2111
      %v3040 = vpack.c.b16 %v2120, %v2112
      %v3041 = vpack.c.b16 %v2121, %v2113
      %v3042 = vpack.c.b16 %v2122, %v2114
      %v3043 = vpack.c.b16 %v2123, %v2115
      %v3044 = vpack.c.b16 %v2124, %v2116
      %v3045 = vpack.c.b16 %v2125, %v2117
      %v3046 = vpack.c.b16 %v2126, %v2118
      %v3047 = vpack.c.b16 %v2135, %v2127
      %v3048 = vpack.c.b16 %v2136, %v2128
      %v3049 = vpack.c.b16 %v2137, %v2129
      %v3050 = vpack.c.b16 %v2138, %v2130
      %v3051 = vpack.c.b16 %v2139, %v2131
      %v3052 = vpack.c.b16 %v2140, %v2132
      %v3053 = vpack.c.b16 %v2141, %v2133
      %v3054 = vpack.c.b16 %v2142, %v2134
      %v3055 = vpack.c.b16 %v2151, %v2143
      %v3056 = vpack.c.b16 %v2152, %v2144
      %v3057 = vpack.c.b16 %v2153, %v2145
      %v3058 = vpack.c.b16 %v2154, %v2146
      %v3059 = vpack.c.b16 %v2155, %v2147
      %v3060 = vpack.c.b16 %v2156, %v2148
      %v3061 = vpack.c.b16 %v2157, %v2149
      %v3062 = vpack.c.b16 %v2158, %v2150
      %v3063 = vpack.c.b16 %v2167, %v2159
      %v3064 = vpack.c.b16 %v2168, %v2160
      %v3065 = vpack.c.b16 %v2169, %v2161
      %v3066 = vpack.c.b16 %v2170, %v2162
      %v3067 = vpack.c.b16 %v2171, %v2163
      %v3068 = vpack.c.b16 %v2172, %v2164
      %v3069 = vpack.c.b16 %v2173, %v2165
      %v3070 = vpack.c.b16 %v2174, %v2166
      %v3071 = vpack.c.b16 %v2183, %v2175
      %v3072 = vpack.c.b16 %v2184, %v2176
      %v3073 = vpack.c.b16 %v2185, %v2177
      %v3074 = vpack.c.b16 %v2186, %v2178
      %v3075 = vpack.c.b16 %v2187, %v2179
      %v3076 = vpack.c.b16 %v2188, %v2180
      %v3077 = vpack.c.b16 %v2189, %v2181
      %v3078 = vpack.c.b16 %v2190, %v2182
      %v3079 = vpack.c.b16 %v2199, %v2191
      %v3080 = vpack.c.b16 %v2200, %v2192
      %v3081 = vpack.c.b16 %v2201, %v2193
      %v3082 = vpack.c.b16 %v2202, %v2194
      %v3083 = vpack.c.b16 %v2203, %v2195
      %v3084 = vpack.c.b16 %v2204, %v2196
      %v3085 = vpack.c.b16 %v2205, %v2197
      %v3086 = vpack.c.b16 %v2206, %v2198
      %v3087 = vpack.c.b16 %v2215, %v2207
      %v3088 = vpack.c.b16 %v2216, %v2208
      %v3089 = vpack.c.b16 %v2217, %v2209
      %v3090 = vpack.c.b16 %v2218, %v2210
      %v3091 = vpack.c.b16 %v2219, %v2211
      %v3092 = vpack.c.b16 %v2220, %v2212
      %v3093 = vpack.c.b16 %v2221, %v2213
      %v3094 = vpack.c.b16 %v2222, %v2214
      %v3095 = vpack.c.b16 %v2231, %v2223
      %v3096 = vpack.c.b16 %v2232, %v2224
      %v3097 = vpack.c.b16 %v2233, %v2225
      %v3098 = vpack.c.b16 %v2234, %v2226
      %v3099 = vpack.c.b16 %v2235, %v2227
      %v3100 = vpack.c.b16 %v2236, %v2228
      %v3101 = vpack.c.b16 %v2237, %v2229
      %v3102 = vpack.c.b16 %v2238, %v2230
      %v3103 = vpack.c.b16 %v2247, %v2239
      %v3104 = vpack.c.b16 %v2248, %v2240
      %v3105 = vpack.c.b16 %v2249, %v2241
      %v3106 = vpack.c.b16 %v2250, %v2242
      %v3107 = vpack.c.b16 %v2251, %v2243
      %v3108 = vpack.c.b16 %v2252, %v2244
      %v3109 = vpack.c.b16 %v2253, %v2245
      %v3110 = vpack.c.b16 %v2254, %v2246
      %v3111 = vpack.c.b16 %v2263, %v2255
      %v3112 = vpack.c.b16 %v2264, %v2256
      %v3113 = vpack.c.b16 %v2265, %v2257
      %v3114 = vpack.c.b16 %v2266, %v2258
      %v3115 = vpack.c.b16 %v2267, %v2259
      %v3116 = vpack.c.b16 %v2268, %v2260
      %v3117 = vpack.c.b16 %v2269, %v2261
      %v3118 = vpack.c.b16 %v2270, %v2262
      %v3119 = vpack.c.b16 %v2279, %v2271
      %v3120 = vpack.c.b16 %v2280, %v2272
      %v3121 = vpack.c.b16 %v2281, %v2273
      %v3122 = vpack.c.b16 %v2282, %v2274
      %v3123 = vpack.c.b16 %v2283, %v2275
      %v3124 = vpack.c.b16 %v2284, %v2276
      %v3125 = vpack.c.b16 %v2285, %v2277
      %v3126 = vpack.c.b16 %v2286, %v2278
      %v3127 = vpack.c.b16 %v2295, %v2287
      %v3128 = vpack.c.b16 %v2296, %v2288
      %v3129 = vpack.c.b16 %v2297, %v2289
      %v3130 = vpack.c.b16 %v2298, %v2290
      %v3131 = vpack.c.b16 %v2299, %v2291
      %v3132 = vpack.c.b16 %v2300, %v2292
      %v3133 = vpack.c.b16 %v2301, %v2293
      %v3134 = vpack.c.b16 %v2302, %v2294
      %v3135 = vpack.c.b16 %v2311, %v2303
      %v3136 = vpack.c.b16 %v2312, %v2304
      %v3137 = vpack.c.b16 %v2313, %v2305
      %v3138 = vpack.c.b16 %v2314, %v2306
      %v3139 = vpack.c.b16 %v2315, %v2307
      %v3140 = vpack.c.b16 %v2316, %v2308
      %v3141 = vpack.c.b16 %v2317, %v2309
      %v3142 = vpack.c.b16 %v2318, %v2310
      %v3143 = vpack.c.b16 %v2327, %v2319
      %v3144 = vpack.c.b16 %v2328, %v2320
      %v3145 = vpack.c.b16 %v2329, %v2321
      %v3146 = vpack.c.b16 %v2330, %v2322
      %v3147 = vpack.c.b16 %v2331, %v2323
      %v3148 = vpack.c.b16 %v2332, %v2324
      %v3149 = vpack.c.b16 %v2333, %v2325
      %v3150 = vpack.c.b16 %v2334, %v2326
      %v3151 = vpack.c.b16 %v2343, %v2335
      %v3152 = vpack.c.b16 %v2344, %v2336
      %v3153 = vpack.c.b16 %v2345, %v2337
      %v3154 = vpack.c.b16 %v2346, %v2338
      %v3155 = vpack.c.b16 %v2347, %v2339
      %v3156 = vpack.c.b16 %v2348, %v2340
      %v3157 = vpack.c.b16 %v2349, %v2341
      %v3158 = vpack.c.b16 %v2350, %v2342
      %v3159 = vpack.c.b16 %v2359, %v2351
      %v3160 = vpack.c.b16 %v2360, %v2352
      %v3161 = vpack.c.b16 %v2361, %v2353
      %v3162 = vpack.c.b16 %v2362, %v2354
      %v3163 = vpack.c.b16 %v2363, %v2355
      %v3164 = vpack.c.b16 %v2364, %v2356
      %v3165 = vpack.c.b16 %v2365, %v2357
      %v3166 = vpack.c.b16 %v2366, %v2358
      %v3167 = vpack.c.b16 %v2375, %v2367
      %v3168 = vpack.c.b16 %v2376, %v2368
      %v3169 = vpack.c.b16 %v2377, %v2369
      %v3170 = vpack.c.b16 %v2378, %v2370
      %v3171 = vpack.c.b16 %v2379, %v2371
      %v3172 = vpack.c.b16 %v2380, %v2372
      %v3173 = vpack.c.b16 %v2381, %v2373
      %v3174 = vpack.c.b16 %v2382, %v2374
      %v3175 = vpack.c.b16 %v2391, %v2383
      %v3176 = vpack.c.b16 %v2392, %v2384
      %v3177 = vpack.c.b16 %v2393, %v2385
      %v3178 = vpack.c.b16 %v2394, %v2386
      %v3179 = vpack.c.b16 %v2395, %v2387
      %v3180 = vpack.c.b16 %v2396, %v2388
      %v3181 = vpack.c.b16 %v2397, %v2389
      %v3182 = vpack.c.b16 %v2398, %v2390
      %v3183 = vpack.c.b16 %v2407, %v2399
      %v3184 = vpack.c.b16 %v2408, %v2400
      %v3185 = vpack.c.b16 %v2409, %v2401
      %v3186 = vpack.c.b16 %v2410, %v2402
      %v3187 = vpack.c.b16 %v2411, %v2403
      %v3188 = vpack.c.b16 %v2412, %v2404
      %v3189 = vpack.c.b16 %v2413, %v2405
      %v3190 = vpack.c.b16 %v2414, %v2406
      %v3191 = vpack.c.b16 %v2423, %v2415
      %v3192 = vpack.c.b16 %v2424, %v2416
      %v3193 = vpack.c.b16 %v2425, %v2417
      %v3194 = vpack.c.b16 %v2426, %v2418
      %v3195 = vpack.c.b16 %v2427, %v2419
      %v3196 = vpack.c.b16 %v2428, %v2420
      %v3197 = vpack.c.b16 %v2429, %v2421
      %v3198 = vpack.c.b16 %v2430, %v2422
      %v3199 = vpack.c.b16 %v2439, %v2431
      %v3200 = vpack.c.b16 %v2440, %v2432
      %v3201 = vpack.c.b16 %v2441, %v2433
      %v3202 = vpack.c.b16 %v2442, %v2434
      %v3203 = vpack.c.b16 %v2443, %v2435
      %v3204 = vpack.c.b16 %v2444, %v2436
      %v3205 = vpack.c.b16 %v2445, %v2437
      %v3206 = vpack.c.b16 %v2446, %v2438
      %v3207 = vpack.c.b16 %v2455, %v2447
      %v3208 = vpack.c.b16 %v2456, %v2448
      %v3209 = vpack.c.b16 %v2457, %v2449
      %v3210 = vpack.c.b16 %v2458, %v2450
      %v3211 = vpack.c.b16 %v2459, %v2451
      %v3212 = vpack.c.b16 %v2460, %v2452
      %v3213 = vpack.c.b16 %v2461, %v2453
      %v3214 = vpack.c.b16 %v2462, %v2454
      %v3215 = vpack.c.b16 %v2471, %v2463
      %v3216 = vpack.c.b16 %v2472, %v2464
      %v3217 = vpack.c.b16 %v2473, %v2465
      %v3218 = vpack.c.b16 %v2474, %v2466
      %v3219 = vpack.c.b16 %v2475, %v2467
      %v3220 = vpack.c.b16 %v2476, %v2468
      %v3221 = vpack.c.b16 %v2477, %v2469
      %v3222 = vpack.c.b16 %v2478, %v2470
      %v3223 = vpack.c.b16 %v2487, %v2479
      %v3224 = vpack.c.b16 %v2488, %v2480
      %v3225 = vpack.c.b16 %v2489, %v2481
      %v3226 = vpack.c.b16 %v2490, %v2482
      %v3227 = vpack.c.b16 %v2491, %v2483
      %v3228 = vpack.c.b16 %v2492, %v2484
      %v3229 = vpack.c.b16 %v2493, %v2485
      %v3230 = vpack.c.b16 %v2494, %v2486
      %v3231 = vpack.c.b16 %v2503, %v2495
      %v3232 = vpack.c.b16 %v2504, %v2496
      %v3233 = vpack.c.b16 %v2505, %v2497
      %v3234 = vpack.c.b16 %v2506, %v2498
      %v3235 = vpack.c.b16 %v2507, %v2499
      %v3236 = vpack.c.b16 %v2508, %v2500
      %v3237 = vpack.c.b16 %v2509, %v2501
      %v3238 = vpack.c.b16 %v2510, %v2502
      %v3239 = vpack.c.b16 %v2519, %v2511
      %v3240 = vpack.c.b16 %v2520, %v2512
      %v3241 = vpack.c.b16 %v2521, %v2513
      %v3242 = vpack.c.b16 %v2522, %v2514
      %v3243 = vpack.c.b16 %v2523, %v2515
      %v3244 = vpack.c.b16 %v2524, %v2516
      %v3245 = vpack.c.b16 %v2525, %v2517
      %v3246 = vpack.c.b16 %v2526, %v2518
      %v3247 = vpack.c.b16 %v2535, %v2527
      %v3248 = vpack.c.b16 %v2536, %v2528
      %v3249 = vpack.c.b16 %v2537, %v2529
      %v3250 = vpack.c.b16 %v2538, %v2530
      %v3251 = vpack.c.b16 %v2539, %v2531
      %v3252 = vpack.c.b16 %v2540, %v2532
      %v3253 = vpack.c.b16 %v2541, %v2533
      %v3254 = vpack.c.b16 %v2542, %v2534
      %v3255 = vpack.c.b16 %v2551, %v2543
      %v3256 = vpack.c.b16 %v2552, %v2544
      %v3257 = vpack.c.b16 %v2553, %v2545
      %v3258 = vpack.c.b16 %v2554, %v2546
      %v3259 = vpack.c.b16 %v2555, %v2547
      %v3260 = vpack.c.b16 %v2556, %v2548
      %v3261 = vpack.c.b16 %v2557, %v2549
      %v3262 = vpack.c.b16 %v2558, %v2550
      %v3263 = vpack.c.b16 %v2567, %v2559
      %v3264 = vpack.c.b16 %v2568, %v2560
      %v3265 = vpack.c.b16 %v2569, %v2561
      %v3266 = vpack.c.b16 %v2570, %v2562
      %v3267 = vpack.c.b16 %v2571, %v2563
      %v3268 = vpack.c.b16 %v2572, %v2564
      %v3269 = vpack.c.b16 %v2573, %v2565
      %v3270 = vpack.c.b16 %v2574, %v2566
      %v3271 = vpack.c.b16 %v2583, %v2575
      %v3272 = vpack.c.b16 %v2584, %v2576
      %v3273 = vpack.c.b16 %v2585, %v2577
      %v3274 = vpack.c.b16 %v2586, %v2578
      %v3275 = vpack.c.b16 %v2587, %v2579
      %v3276 = vpack.c.b16 %v2588, %v2580
      %v3277 = vpack.c.b16 %v2589, %v2581
      %v3278 = vpack.c.b16 %v2590, %v2582
      %v3279 = vpack.c.b16 %v2599, %v2591
      %v3280 = vpack.c.b16 %v2600, %v2592
      %v3281 = vpack.c.b16 %v2601, %v2593
      %v3282 = vpack.c.b16 %v2602, %v2594
      %v3283 = vpack.c.b16 %v2603, %v2595
      %v3284 = vpack.c.b16 %v2604, %v2596
      %v3285 = vpack.c.b16 %v2605, %v2597
      %v3286 = vpack.c.b16 %v2606, %v2598
      %v3287 = vpack.c.b16 %v2615, %v2607
      %v3288 = vpack.c.b16 %v2616, %v2608
      %v3289 = vpack.c.b16 %v2617, %v2609
      %v3290 = vpack.c.b16 %v2618, %v2610
      %v3291 = vpack.c.b16 %v2619, %v2611
      %v3292 = vpack.c.b16 %v2620, %v2612
      %v3293 = vpack.c.b16 %v2621, %v2613
      %v3294 = vpack.c.b16 %v2622, %v2614
      %v3295 = vpack.c.b16 %v2631, %v2623
      %v3296 = vpack.c.b16 %v2632, %v2624
      %v3297 = vpack.c.b16 %v2633, %v2625
      %v3298 = vpack.c.b16 %v2634, %v2626
      %v3299 = vpack.c.b16 %v2635, %v2627
      %v3300 = vpack.c.b16 %v2636, %v2628
      %v3301 = vpack.c.b16 %v2637, %v2629
      %v3302 = vpack.c.b16 %v2638, %v2630
      %v3303 = vpack.c.b16 %v2647, %v2639
      %v3304 = vpack.c.b16 %v2648, %v2640
      %v3305 = vpack.c.b16 %v2649, %v2641
      %v3306 = vpack.c.b16 %v2650, %v2642
      %v3307 = vpack.c.b16 %v2651, %v2643
      %v3308 = vpack.c.b16 %v2652, %v2644
      %v3309 = vpack.c.b16 %v2653, %v2645
      %v3310 = vpack.c.b16 %v2654, %v2646
      %v3311 = vpack.c.b16 %v2663, %v2655
      %v3312 = vpack.c.b16 %v2664, %v2656
      %v3313 = vpack.c.b16 %v2665, %v2657
      %v3314 = vpack.c.b16 %v2666, %v2658
      %v3315 = vpack.c.b16 %v2667, %v2659
      %v3316 = vpack.c.b16 %v2668, %v2660
      %v3317 = vpack.c.b16 %v2669, %v2661
      %v3318 = vpack.c.b16 %v2670, %v2662
      %v3319 = vpack.c.b16 %v2679, %v2671
      %v3320 = vpack.c.b16 %v2680, %v2672
      %v3321 = vpack.c.b16 %v2681, %v2673
      %v3322 = vpack.c.b16 %v2682, %v2674
      %v3323 = vpack.c.b16 %v2683, %v2675
      %v3324 = vpack.c.b16 %v2684, %v2676
      %v3325 = vpack.c.b16 %v2685, %v2677
      %v3326 = vpack.c.b16 %v2686, %v2678
      %v3327 = vpack.c.b16 %v2695, %v2687
      %v3328 = vpack.c.b16 %v2696, %v2688
      %v3329 = vpack.c.b16 %v2697, %v2689
      %v3330 = vpack.c.b16 %v2698, %v2690
      %v3331 = vpack.c.b16 %v2699, %v2691
      %v3332 = vpack.c.b16 %v2700, %v2692
      %v3333 = vpack.c.b16 %v2701, %v2693
      %v3334 = vpack.c.b16 %v2702, %v2694
      %v3335 = vpack.c.b16 %v2711, %v2703
      %v3336 = vpack.c.b16 %v2712, %v2704
      %v3337 = vpack.c.b16 %v2713, %v2705
      %v3338 = vpack.c.b16 %v2714, %v2706
      %v3339 = vpack.c.b16 %v2715, %v2707
      %v3340 = vpack.c.b16 %v2716, %v2708
      %v3341 = vpack.c.b16 %v2717, %v2709
      %v3342 = vpack.c.b16 %v2718, %v2710
      %v3343 = vpack.c.b16 %v2727, %v2719
      %v3344 = vpack.c.b16 %v2728, %v2720
      %v3345 = vpack.c.b16 %v2729, %v2721
      %v3346 = vpack.c.b16 %v2730, %v2722
      %v3347 = vpack.c.b16 %v2731, %v2723
      %v3348 = vpack.c.b16 %v2732, %v2724
      %v3349 = vpack.c.b16 %v2733, %v2725
      %v3350 = vpack.c.b16 %v2734, %v2726
      %v3351 = vpack.c.b16 %v2743, %v2735
      %v3352 = vpack.c.b16 %v2744, %v2736
      %v3353 = vpack.c.b16 %v2745, %v2737
      %v3354 = vpack.c.b16 %v2746, %v2738
      %v3355 = vpack.c.b16 %v2747, %v2739
      %v3356 = vpack.c.b16 %v2748, %v2740
      %v3357 = vpack.c.b16 %v2749, %v2741
      %v3358 = vpack.c.b16 %v2750, %v2742
      %v3359 = vpack.c.b16 %v2759, %v2751
      %v3360 = vpack.c.b16 %v2760, %v2752
      %v3361 = vpack.c.b16 %v2761, %v2753
      %v3362 = vpack.c.b16 %v2762, %v2754
      %v3363 = vpack.c.b16 %v2763, %v2755
      %v3364 = vpack.c.b16 %v2764, %v2756
      %v3365 = vpack.c.b16 %v2765, %v2757
      %v3366 = vpack.c.b16 %v2766, %v2758
      %v3367 = vpack.c.b16 %v2775, %v2767
      %v3368 = vpack.c.b16 %v2776, %v2768
      %v3369 = vpack.c.b16 %v2777, %v2769
      %v3370 = vpack.c.b16 %v2778, %v2770
      %v3371 = vpack.c.b16 %v2779, %v2771
      %v3372 = vpack.c.b16 %v2780, %v2772
      %v3373 = vpack.c.b16 %v2781, %v2773
      %v3374 = vpack.c.b16 %v2782, %v2774
      %v3375 = vpack.c.b16 %v2791, %v2783
      %v3376 = vpack.c.b16 %v2792, %v2784
      %v3377 = vpack.c.b16 %v2793, %v2785
      %v3378 = vpack.c.b16 %v2794, %v2786
      %v3379 = vpack.c.b16 %v2795, %v2787
      %v3380 = vpack.c.b16 %v2796, %v2788
      %v3381 = vpack.c.b16 %v2797, %v2789
      %v3382 = vpack.c.b16 %v2798, %v2790
      %v3383 = vpack.c.b16 %v2807, %v2799
      %v3384 = vpack.c.b16 %v2808, %v2800
      %v3385 = vpack.c.b16 %v2809, %v2801
      %v3386 = vpack.c.b16 %v2810, %v2802
      %v3387 = vpack.c.b16 %v2811, %v2803
      %v3388 = vpack.c.b16 %v2812, %v2804
      %v3389 = vpack.c.b16 %v2813, %v2805
      %v3390 = vpack.c.b16 %v2814, %v2806
      %v3391 = vpack.c.b16 %v2823, %v2815
      %v3392 = vpack.c.b16 %v2824, %v2816
      %v3393 = vpack.c.b16 %v2825, %v2817
      %v3394 = vpack.c.b16 %v2826, %v2818
      %v3395 = vpack.c.b16 %v2827, %v2819
      %v3396 = vpack.c.b16 %v2828, %v2820
      %v3397 = vpack.c.b16 %v2829, %v2821
      %v3398 = vpack.c.b16 %v2830, %v2822
      %v3399 = vpack.c.b16 %v2839, %v2831
      %v3400 = vpack.c.b16 %v2840, %v2832
      %v3401 = vpack.c.b16 %v2841, %v2833
      %v3402 = vpack.c.b16 %v2842, %v2834
      %v3403 = vpack.c.b16 %v2843, %v2835
      %v3404 = vpack.c.b16 %v2844, %v2836
      %v3405 = vpack.c.b16 %v2845, %v2837
      %v3406 = vpack.c.b16 %v2846, %v2838
      %v3407 = vpack.c.b16 %v2855, %v2847
      %v3408 = vpack.c.b16 %v2856, %v2848
      %v3409 = vpack.c.b16 %v2857, %v2849
      %v3410 = vpack.c.b16 %v2858, %v2850
      %v3411 = vpack.c.b16 %v2859, %v2851
      %v3412 = vpack.c.b16 %v2860, %v2852
      %v3413 = vpack.c.b16 %v2861, %v2853
      %v3414 = vpack.c.b16 %v2862, %v2854
      %v3415 = vpack.c.b16 %v2871, %v2863
      %v3416 = vpack.c.b16 %v2872, %v2864
      %v3417 = vpack.c.b16 %v2873, %v2865
      %v3418 = vpack.c.b16 %v2874, %v2866
      %v3419 = vpack.c.b16 %v2875, %v2867
      %v3420 = vpack.c.b16 %v2876, %v2868
      %v3421 = vpack.c.b16 %v2877, %v2869
      %v3422 = vpack.c.b16 %v2878, %v2870
      %v3423 = vpack.c.b16 %v2887, %v2879
      %v3424 = vpack.c.b16 %v2888, %v2880
      %v3425 = vpack.c.b16 %v2889, %v2881
      %v3426 = vpack.c.b16 %v2890, %v2882
      %v3427 = vpack.c.b16 %v2891, %v2883
      %v3428 = vpack.c.b16 %v2892, %v2884
      %v3429 = vpack.c.b16 %v2893, %v2885
      %v3430 = vpack.c.b16 %v2894, %v2886
      %v3431 = vpack.c.b16 %v2903, %v2895
      %v3432 = vpack.c.b16 %v2904, %v2896
      %v3433 = vpack.c.b16 %v2905, %v2897
      %v3434 = vpack.c.b16 %v2906, %v2898
      %v3435 = vpack.c.b16 %v2907, %v2899
      %v3436 = vpack.c.b16 %v2908, %v2900
      %v3437 = vpack.c.b16 %v2909, %v2901
      %v3438 = vpack.c.b16 %v2910, %v2902
      %v3439 = vpack.c.b16 %v2919, %v2911
      %v3440 = vpack.c.b16 %v2920, %v2912
      %v3441 = vpack.c.b16 %v2921, %v2913
      %v3442 = vpack.c.b16 %v2922, %v2914
      %v3443 = vpack.c.b16 %v2923, %v2915
      %v3444 = vpack.c.b16 %v2924, %v2916
      %v3445 = vpack.c.b16 %v2925, %v2917
      %v3446 = vpack.c.b16 %v2926, %v2918
      %v3447 = vpack.c.b16 %v2935, %v2927
      %v3448 = vpack.c.b16 %v2936, %v2928
      %v3449 = vpack.c.b16 %v2937, %v2929
      %v3450 = vpack.c.b16 %v2938, %v2930
      %v3451 = vpack.c.b16 %v2939, %v2931
      %v3452 = vpack.c.b16 %v2940, %v2932
      %v3453 = vpack.c.b16 %v2941, %v2933
      %v3454 = vpack.c.b16 %v2942, %v2934
      %3967 = vmatprep.subr.bf16.mxu0 %v2944
      %3968 = vmatpush1.bf16.msra.mxu0 %v2943
      %3969 = vmatprep.subr.bf16.mxu0 %v2952
      %3970 = vmatpush1.bf16.msra.mxu0 %v2951
      %3971 = vmatprep.subr.bf16.mxu0 %v2960
      %3972 = vmatpush1.bf16.msra.mxu0 %v2959
      %3973 = vmatprep.subr.bf16.mxu0 %v2968
      %3974 = vmatpush1.bf16.msra.mxu0 %v2967
      %3975 = vmatprep.subr.bf16.mxu0 %v2976
      %3976 = vmatpush1.bf16.msra.mxu0 %v2975
      %3977 = vmatprep.subr.bf16.mxu0 %v2984
      %3978 = vmatpush1.bf16.msra.mxu0 %v2983
      %3979 = vmatprep.subr.bf16.mxu0 %v2992
      %3980 = vmatpush1.bf16.msra.mxu0 %v2991
      %3981 = vmatprep.subr.bf16.mxu0 %v3000
      %3982 = vmatpush1.bf16.msra.mxu0 %v2999
      %3983 = vmatprep.subr.bf16.mxu0 %v3008
      %3984 = vmatpush1.bf16.msra.mxu0 %v3007
      %3985 = vmatprep.subr.bf16.mxu0 %v3016
      %3986 = vmatpush1.bf16.msra.mxu0 %v3015
      %3987 = vmatprep.subr.bf16.mxu0 %v3024
      %3988 = vmatpush1.bf16.msra.mxu0 %v3023
      %3989 = vmatprep.subr.bf16.mxu0 %v3032
      %3990 = vmatpush1.bf16.msra.mxu0 %v3031
      %3991 = vmatprep.subr.bf16.mxu0 %v3040
      %3992 = vmatpush1.bf16.msra.mxu0 %v3039
      %3993 = vmatprep.subr.bf16.mxu0 %v3048
      %3994 = vmatpush1.bf16.msra.mxu0 %v3047
      %3995 = vmatprep.subr.bf16.mxu0 %v3056
      %3996 = vmatpush1.bf16.msra.mxu0 %v3055
      %3997 = vmatprep.subr.bf16.mxu0 %v3064
      %3998 = vmatpush1.bf16.msra.mxu0 %v3063
      %3999 = vmatprep.mubr.bf16.mxu0 %v846
      %4000 = vmatmul.mubr.bf16.gmra.mrb[0].mxu0 %v845
      %v4001 = vpop.f32.mrb[0].mxu0
      %v4002 = vadd.f32 %v1370, %v4001
      %v4003 = vpop.f32.mrb[0].mxu0
      %v4004 = vadd.f32 %v1374, %v4003
      %v4005 = vpop.f32.mrb[0].mxu0
      %v4006 = vadd.f32 %v1370, %v4005
      %v4007 = vpop.f32.mrb[0].mxu0
      %v4008 = vadd.f32 %v1374, %v4007
      %4009 = vdwg.mxu0
      %4010 = vmatprep.subr.bf16.mxu0 %v3072
      %4011 = vmatpush1.bf16.msra.mxu0 %v3071
      %4012 = vmatprep.subr.bf16.mxu0 %v3080
      %4013 = vmatpush1.bf16.msra.mxu0 %v3079
      %4014 = vmatprep.subr.bf16.mxu0 %v3088
      %4015 = vmatpush1.bf16.msra.mxu0 %v3087
      %4016 = vmatprep.subr.bf16.mxu0 %v3096
      %4017 = vmatpush1.bf16.msra.mxu0 %v3095
      %4018 = vmatprep.subr.bf16.mxu0 %v3104
      %4019 = vmatpush1.bf16.msra.mxu0 %v3103
      %4020 = vmatprep.subr.bf16.mxu0 %v3112
      %4021 = vmatpush1.bf16.msra.mxu0 %v3111
      %4022 = vmatprep.subr.bf16.mxu0 %v3120
      %4023 = vmatpush1.bf16.msra.mxu0 %v3119
      %4024 = vmatprep.subr.bf16.mxu0 %v3128
      %4025 = vmatpush1.bf16.msra.mxu0 %v3127
      %4026 = vmatprep.subr.bf16.mxu0 %v3136
      %4027 = vmatpush1.bf16.msra.mxu0 %v3135
      %4028 = vmatprep.subr.bf16.mxu0 %v3144
      %4029 = vmatpush1.bf16.msra.mxu0 %v3143
      %4030 = vmatprep.subr.bf16.mxu0 %v3152
      %4031 = vmatpush1.bf16.msra.mxu0 %v3151
      %4032 = vmatprep.subr.bf16.mxu0 %v3160
      %4033 = vmatpush1.bf16.msra.mxu0 %v3159
      %4034 = vmatprep.subr.bf16.mxu0 %v3168
      %4035 = vmatpush1.bf16.msra.mxu0 %v3167
      %4036 = vmatprep.subr.bf16.mxu0 %v3176
      %4037 = vmatpush1.bf16.msra.mxu0 %v3175
      %4038 = vmatprep.subr.bf16.mxu0 %v3184
      %4039 = vmatpush1.bf16.msra.mxu0 %v3183
      %4040 = vmatprep.subr.bf16.mxu0 %v3192
      %4041 = vmatpush1.bf16.msra.mxu0 %v3191
      %4042 = vmatprep.mubr.bf16.mxu0 %v848
      %4043 = vmatmul.mubr.bf16.gmra.mrb[0].mxu0 %v847
      %v4044 = vpop.f32.mrb[0].mxu0
      %v4045 = vadd.f32 %v4002, %v4044
      %v4046 = vpop.f32.mrb[0].mxu0
      %v4047 = vadd.f32 %v4004, %v4046
      %v4048 = vpop.f32.mrb[0].mxu0
      %v4049 = vadd.f32 %v4006, %v4048
      %v4050 = vpop.f32.mrb[0].mxu0
      %v4051 = vadd.f32 %v4008, %v4050
      %4052 = vdwg.mxu0
      %4053 = vmatprep.subr.bf16.mxu0 %v3200
      %4054 = vmatpush1.bf16.msra.mxu0 %v3199
      %4055 = vmatprep.subr.bf16.mxu0 %v3208
      %4056 = vmatpush1.bf16.msra.mxu0 %v3207
      %4057 = vmatprep.subr.bf16.mxu0 %v3216
      %4058 = vmatpush1.bf16.msra.mxu0 %v3215
      %4059 = vmatprep.subr.bf16.mxu0 %v3224
      %4060 = vmatpush1.bf16.msra.mxu0 %v3223
      %4061 = vmatprep.subr.bf16.mxu0 %v3232
      %4062 = vmatpush1.bf16.msra.mxu0 %v3231
      %4063 = vmatprep.subr.bf16.mxu0 %v3240
      %4064 = vmatpush1.bf16.msra.mxu0 %v3239
      %4065 = vmatprep.subr.bf16.mxu0 %v3248
      %4066 = vmatpush1.bf16.msra.mxu0 %v3247
      %4067 = vmatprep.subr.bf16.mxu0 %v3256
      %4068 = vmatpush1.bf16.msra.mxu0 %v3255
      %4069 = vmatprep.subr.bf16.mxu0 %v3264
      %4070 = vmatpush1.bf16.msra.mxu0 %v3263
      %4071 = vmatprep.subr.bf16.mxu0 %v3272
      %4072 = vmatpush1.bf16.msra.mxu0 %v3271
      %4073 = vmatprep.subr.bf16.mxu0 %v3280
      %4074 = vmatpush1.bf16.msra.mxu0 %v3279
      %4075 = vmatprep.subr.bf16.mxu0 %v3288
      %4076 = vmatpush1.bf16.msra.mxu0 %v3287
      %4077 = vmatprep.subr.bf16.mxu0 %v3296
      %4078 = vmatpush1.bf16.msra.mxu0 %v3295
      %4079 = vmatprep.subr.bf16.mxu0 %v3304
      %4080 = vmatpush1.bf16.msra.mxu0 %v3303
      %4081 = vmatprep.subr.bf16.mxu0 %v3312
      %4082 = vmatpush1.bf16.msra.mxu0 %v3311
      %4083 = vmatprep.subr.bf16.mxu0 %v3320
      %4084 = vmatpush1.bf16.msra.mxu0 %v3319
      %4085 = vmatprep.mubr.bf16.mxu0 %v850
      %4086 = vmatmul.mubr.bf16.gmra.mrb[0].mxu0 %v849
      %v4087 = vpop.f32.mrb[0].mxu0
      %v4088 = vadd.f32 %v4045, %v4087
      %v4089 = vpop.f32.mrb[0].mxu0
      %v4090 = vadd.f32 %v4047, %v4089
      %v4091 = vpop.f32.mrb[0].mxu0
      %v4092 = vadd.f32 %v4049, %v4091
      %v4093 = vpop.f32.mrb[0].mxu0
      %v4094 = vadd.f32 %v4051, %v4093
      %4095 = vdwg.mxu0
      %4096 = vmatprep.subr.bf16.mxu0 %v3328
      %4097 = vmatpush1.bf16.msra.mxu0 %v3327
      %4098 = vmatprep.subr.bf16.mxu0 %v3336
      %4099 = vmatpush1.bf16.msra.mxu0 %v3335
      %4100 = vmatprep.subr.bf16.mxu0 %v3344
      %4101 = vmatpush1.bf16.msra.mxu0 %v3343
      %4102 = vmatprep.subr.bf16.mxu0 %v3352
      %4103 = vmatpush1.bf16.msra.mxu0 %v3351
      %4104 = vmatprep.subr.bf16.mxu0 %v3360
      %4105 = vmatpush1.bf16.msra.mxu0 %v3359
      %4106 = vmatprep.subr.bf16.mxu0 %v3368
      %4107 = vmatpush1.bf16.msra.mxu0 %v3367
      %4108 = vmatprep.subr.bf16.mxu0 %v3376
      %4109 = vmatpush1.bf16.msra.mxu0 %v3375
      %4110 = vmatprep.subr.bf16.mxu0 %v3384
      %4111 = vmatpush1.bf16.msra.mxu0 %v3383
      %4112 = vmatprep.subr.bf16.mxu0 %v3392
      %4113 = vmatpush1.bf16.msra.mxu0 %v3391
      %4114 = vmatprep.subr.bf16.mxu0 %v3400
      %4115 = vmatpush1.bf16.msra.mxu0 %v3399
      %4116 = vmatprep.subr.bf16.mxu0 %v3408
      %4117 = vmatpush1.bf16.msra.mxu0 %v3407
      %4118 = vmatprep.subr.bf16.mxu0 %v3416
      %4119 = vmatpush1.bf16.msra.mxu0 %v3415
      %4120 = vmatprep.subr.bf16.mxu0 %v3424
      %4121 = vmatpush1.bf16.msra.mxu0 %v3423
      %4122 = vmatprep.subr.bf16.mxu0 %v3432
      %4123 = vmatpush1.bf16.msra.mxu0 %v3431
      %4124 = vmatprep.subr.bf16.mxu0 %v3440
      %4125 = vmatpush1.bf16.msra.mxu0 %v3439
      %4126 = vmatprep.subr.bf16.mxu0 %v3448
      %4127 = vmatpush1.bf16.msra.mxu0 %v3447
      %4128 = vmatprep.mubr.bf16.mxu0 %v852
      %4129 = vmatmul.mubr.bf16.gmra.mrb[0].mxu0 %v851
      %v4130 = vpop.f32.mrb[0].mxu0
      %v4131 = vadd.f32 %v4088, %v4130
      %v4132 = vpop.f32.mrb[0].mxu0
      %v4133 = vadd.f32 %v4090, %v4132
      %v4134 = vpop.f32.mrb[0].mxu0
      %v4135 = vadd.f32 %v4092, %v4134
      %v4136 = vpop.f32.mrb[0].mxu0
      %v4137 = vadd.f32 %v4094, %v4136
      %4138 = vdwg.mxu0
      %4139 = vmatprep.subr.bf16.mxu0 %v2946
      %4140 = vmatpush1.bf16.msra.mxu0 %v2945
      %4141 = vmatprep.subr.bf16.mxu0 %v2954
      %4142 = vmatpush1.bf16.msra.mxu0 %v2953
      %4143 = vmatprep.subr.bf16.mxu0 %v2962
      %4144 = vmatpush1.bf16.msra.mxu0 %v2961
      %4145 = vmatprep.subr.bf16.mxu0 %v2970
      %4146 = vmatpush1.bf16.msra.mxu0 %v2969
      %4147 = vmatprep.subr.bf16.mxu0 %v2978
      %4148 = vmatpush1.bf16.msra.mxu0 %v2977
      %4149 = vmatprep.subr.bf16.mxu0 %v2986
      %4150 = vmatpush1.bf16.msra.mxu0 %v2985
      %4151 = vmatprep.subr.bf16.mxu0 %v2994
      %4152 = vmatpush1.bf16.msra.mxu0 %v2993
      %4153 = vmatprep.subr.bf16.mxu0 %v3002
      %4154 = vmatpush1.bf16.msra.mxu0 %v3001
      %4155 = vmatprep.subr.bf16.mxu0 %v3010
      %4156 = vmatpush1.bf16.msra.mxu0 %v3009
      %4157 = vmatprep.subr.bf16.mxu0 %v3018
      %4158 = vmatpush1.bf16.msra.mxu0 %v3017
      %4159 = vmatprep.subr.bf16.mxu0 %v3026
      %4160 = vmatpush1.bf16.msra.mxu0 %v3025
      %4161 = vmatprep.subr.bf16.mxu0 %v3034
      %4162 = vmatpush1.bf16.msra.mxu0 %v3033
      %4163 = vmatprep.subr.bf16.mxu0 %v3042
      %4164 = vmatpush1.bf16.msra.mxu0 %v3041
      %4165 = vmatprep.subr.bf16.mxu0 %v3050
      %4166 = vmatpush1.bf16.msra.mxu0 %v3049
      %4167 = vmatprep.subr.bf16.mxu0 %v3058
      %4168 = vmatpush1.bf16.msra.mxu0 %v3057
      %4169 = vmatprep.subr.bf16.mxu0 %v3066
      %4170 = vmatpush1.bf16.msra.mxu0 %v3065
      %4171 = vmatprep.mubr.bf16.mxu0 %v846
      %4172 = vmatmul.mubr.bf16.gmra.mrb[0].mxu0 %v845
      %v4173 = vpop.f32.mrb[0].mxu0
      %v4174 = vadd.f32 %v1378, %v4173
      %v4175 = vpop.f32.mrb[0].mxu0
      %v4176 = vadd.f32 %v1382, %v4175
      %v4177 = vpop.f32.mrb[0].mxu0
      %v4178 = vadd.f32 %v1378, %v4177
      %v4179 = vpop.f32.mrb[0].mxu0
      %v4180 = vadd.f32 %v1382, %v4179
      %4181 = vdwg.mxu0
      %4182 = vmatprep.subr.bf16.mxu0 %v3074
      %4183 = vmatpush1.bf16.msra.mxu0 %v3073
      %4184 = vmatprep.subr.bf16.mxu0 %v3082
      %4185 = vmatpush1.bf16.msra.mxu0 %v3081
      %4186 = vmatprep.subr.bf16.mxu0 %v3090
      %4187 = vmatpush1.bf16.msra.mxu0 %v3089
      %4188 = vmatprep.subr.bf16.mxu0 %v3098
      %4189 = vmatpush1.bf16.msra.mxu0 %v3097
      %4190 = vmatprep.subr.bf16.mxu0 %v3106
      %4191 = vmatpush1.bf16.msra.mxu0 %v3105
      %4192 = vmatprep.subr.bf16.mxu0 %v3114
      %4193 = vmatpush1.bf16.msra.mxu0 %v3113
      %4194 = vmatprep.subr.bf16.mxu0 %v3122
      %4195 = vmatpush1.bf16.msra.mxu0 %v3121
      %4196 = vmatprep.subr.bf16.mxu0 %v3130
      %4197 = vmatpush1.bf16.msra.mxu0 %v3129
      %4198 = vmatprep.subr.bf16.mxu0 %v3138
      %4199 = vmatpush1.bf16.msra.mxu0 %v3137
      %4200 = vmatprep.subr.bf16.mxu0 %v3146
      %4201 = vmatpush1.bf16.msra.mxu0 %v3145
      %4202 = vmatprep.subr.bf16.mxu0 %v3154
      %4203 = vmatpush1.bf16.msra.mxu0 %v3153
      %4204 = vmatprep.subr.bf16.mxu0 %v3162
      %4205 = vmatpush1.bf16.msra.mxu0 %v3161
      %4206 = vmatprep.subr.bf16.mxu0 %v3170
      %4207 = vmatpush1.bf16.msra.mxu0 %v3169
      %4208 = vmatprep.subr.bf16.mxu0 %v3178
      %4209 = vmatpush1.bf16.msra.mxu0 %v3177
      %4210 = vmatprep.subr.bf16.mxu0 %v3186
      %4211 = vmatpush1.bf16.msra.mxu0 %v3185
      %4212 = vmatprep.subr.bf16.mxu0 %v3194
      %4213 = vmatpush1.bf16.msra.mxu0 %v3193
      %4214 = vmatprep.mubr.bf16.mxu0 %v848
      %4215 = vmatmul.mubr.bf16.gmra.mrb[0].mxu0 %v847
      %v4216 = vpop.f32.mrb[0].mxu0
      %v4217 = vadd.f32 %v4174, %v4216
      %v4218 = vpop.f32.mrb[0].mxu0
      %v4219 = vadd.f32 %v4176, %v4218
      %v4220 = vpop.f32.mrb[0].mxu0
      %v4221 = vadd.f32 %v4178, %v4220
      %v4222 = vpop.f32.mrb[0].mxu0
      %v4223 = vadd.f32 %v4180, %v4222
      %4224 = vdwg.mxu0
      %4225 = vmatprep.subr.bf16.mxu0 %v3202
      %4226 = vmatpush1.bf16.msra.mxu0 %v3201
      %4227 = vmatprep.subr.bf16.mxu0 %v3210
      %4228 = vmatpush1.bf16.msra.mxu0 %v3209
      %4229 = vmatprep.subr.bf16.mxu0 %v3218
      %4230 = vmatpush1.bf16.msra.mxu0 %v3217
      %4231 = vmatprep.subr.bf16.mxu0 %v3226
      %4232 = vmatpush1.bf16.msra.mxu0 %v3225
      %4233 = vmatprep.subr.bf16.mxu0 %v3234
      %4234 = vmatpush1.bf16.msra.mxu0 %v3233
      %4235 = vmatprep.subr.bf16.mxu0 %v3242
      %4236 = vmatpush1.bf16.msra.mxu0 %v3241
      %4237 = vmatprep.subr.bf16.mxu0 %v3250
      %4238 = vmatpush1.bf16.msra.mxu0 %v3249
      %4239 = vmatprep.subr.bf16.mxu0 %v3258
      %4240 = vmatpush1.bf16.msra.mxu0 %v3257
      %4241 = vmatprep.subr.bf16.mxu0 %v3266
      %4242 = vmatpush1.bf16.msra.mxu0 %v3265
      %4243 = vmatprep.subr.bf16.mxu0 %v3274
      %4244 = vmatpush1.bf16.msra.mxu0 %v3273
      %4245 = vmatprep.subr.bf16.mxu0 %v3282
      %4246 = vmatpush1.bf16.msra.mxu0 %v3281
      %4247 = vmatprep.subr.bf16.mxu0 %v3290
      %4248 = vmatpush1.bf16.msra.mxu0 %v3289
      %4249 = vmatprep.subr.bf16.mxu0 %v3298
      %4250 = vmatpush1.bf16.msra.mxu0 %v3297
      %4251 = vmatprep.subr.bf16.mxu0 %v3306
      %4252 = vmatpush1.bf16.msra.mxu0 %v3305
      %4253 = vmatprep.subr.bf16.mxu0 %v3314
      %4254 = vmatpush1.bf16.msra.mxu0 %v3313
      %4255 = vmatprep.subr.bf16.mxu0 %v3322
      %4256 = vmatpush1.bf16.msra.mxu0 %v3321
      %4257 = vmatprep.mubr.bf16.mxu0 %v850
      %4258 = vmatmul.mubr.bf16.gmra.mrb[0].mxu0 %v849
      %v4259 = vpop.f32.mrb[0].mxu0
      %v4260 = vadd.f32 %v4217, %v4259
      %v4261 = vpop.f32.mrb[0].mxu0
      %v4262 = vadd.f32 %v4219, %v4261
      %v4263 = vpop.f32.mrb[0].mxu0
      %v4264 = vadd.f32 %v4221, %v4263
      %v4265 = vpop.f32.mrb[0].mxu0
      %v4266 = vadd.f32 %v4223, %v4265
      %4267 = vdwg.mxu0
      %4268 = vmatprep.subr.bf16.mxu0 %v3330
      %4269 = vmatpush1.bf16.msra.mxu0 %v3329
      %4270 = vmatprep.subr.bf16.mxu0 %v3338
      %4271 = vmatpush1.bf16.msra.mxu0 %v3337
      %4272 = vmatprep.subr.bf16.mxu0 %v3346
      %4273 = vmatpush1.bf16.msra.mxu0 %v3345
      %4274 = vmatprep.subr.bf16.mxu0 %v3354
      %4275 = vmatpush1.bf16.msra.mxu0 %v3353
      %4276 = vmatprep.subr.bf16.mxu0 %v3362
      %4277 = vmatpush1.bf16.msra.mxu0 %v3361
      %4278 = vmatprep.subr.bf16.mxu0 %v3370
      %4279 = vmatpush1.bf16.msra.mxu0 %v3369
      %4280 = vmatprep.subr.bf16.mxu0 %v3378
      %4281 = vmatpush1.bf16.msra.mxu0 %v3377
      %4282 = vmatprep.subr.bf16.mxu0 %v3386
      %4283 = vmatpush1.bf16.msra.mxu0 %v3385
      %4284 = vmatprep.subr.bf16.mxu0 %v3394
      %4285 = vmatpush1.bf16.msra.mxu0 %v3393
      %4286 = vmatprep.subr.bf16.mxu0 %v3402
      %4287 = vmatpush1.bf16.msra.mxu0 %v3401
      %4288 = vmatprep.subr.bf16.mxu0 %v3410
      %4289 = vmatpush1.bf16.msra.mxu0 %v3409
      %4290 = vmatprep.subr.bf16.mxu0 %v3418
      %4291 = vmatpush1.bf16.msra.mxu0 %v3417
      %4292 = vmatprep.subr.bf16.mxu0 %v3426
      %4293 = vmatpush1.bf16.msra.mxu0 %v3425
      %4294 = vmatprep.subr.bf16.mxu0 %v3434
      %4295 = vmatpush1.bf16.msra.mxu0 %v3433
      %4296 = vmatprep.subr.bf16.mxu0 %v3442
      %4297 = vmatpush1.bf16.msra.mxu0 %v3441
      %4298 = vmatprep.subr.bf16.mxu0 %v3450
      %4299 = vmatpush1.bf16.msra.mxu0 %v3449
      %4300 = vmatprep.mubr.bf16.mxu0 %v852
      %4301 = vmatmul.mubr.bf16.gmra.mrb[0].mxu0 %v851
      %v4302 = vpop.f32.mrb[0].mxu0
      %v4303 = vadd.f32 %v4260, %v4302
      %v4304 = vpop.f32.mrb[0].mxu0
      %v4305 = vadd.f32 %v4262, %v4304
      %v4306 = vpop.f32.mrb[0].mxu0
      %v4307 = vadd.f32 %v4264, %v4306
      %v4308 = vpop.f32.mrb[0].mxu0
      %v4309 = vadd.f32 %v4266, %v4308
      %4310 = vdwg.mxu0
      %4311 = vmatprep.subr.bf16.mxu0 %v2948
      %4312 = vmatpush1.bf16.msra.mxu0 %v2947
      %4313 = vmatprep.subr.bf16.mxu0 %v2956
      %4314 = vmatpush1.bf16.msra.mxu0 %v2955
      %4315 = vmatprep.subr.bf16.mxu0 %v2964
      %4316 = vmatpush1.bf16.msra.mxu0 %v2963
      %4317 = vmatprep.subr.bf16.mxu0 %v2972
      %4318 = vmatpush1.bf16.msra.mxu0 %v2971
      %4319 = vmatprep.subr.bf16.mxu0 %v2980
      %4320 = vmatpush1.bf16.msra.mxu0 %v2979
      %4321 = vmatprep.subr.bf16.mxu0 %v2988
      %4322 = vmatpush1.bf16.msra.mxu0 %v2987
      %4323 = vmatprep.subr.bf16.mxu0 %v2996
      %4324 = vmatpush1.bf16.msra.mxu0 %v2995
      %4325 = vmatprep.subr.bf16.mxu0 %v3004
      %4326 = vmatpush1.bf16.msra.mxu0 %v3003
      %4327 = vmatprep.subr.bf16.mxu0 %v3012
      %4328 = vmatpush1.bf16.msra.mxu0 %v3011
      %4329 = vmatprep.subr.bf16.mxu0 %v3020
      %4330 = vmatpush1.bf16.msra.mxu0 %v3019
      %4331 = vmatprep.subr.bf16.mxu0 %v3028
      %4332 = vmatpush1.bf16.msra.mxu0 %v3027
      %4333 = vmatprep.subr.bf16.mxu0 %v3036
      %4334 = vmatpush1.bf16.msra.mxu0 %v3035
      %4335 = vmatprep.subr.bf16.mxu0 %v3044
      %4336 = vmatpush1.bf16.msra.mxu0 %v3043
      %4337 = vmatprep.subr.bf16.mxu0 %v3052
      %4338 = vmatpush1.bf16.msra.mxu0 %v3051
      %4339 = vmatprep.subr.bf16.mxu0 %v3060
      %4340 = vmatpush1.bf16.msra.mxu0 %v3059
      %4341 = vmatprep.subr.bf16.mxu0 %v3068
      %4342 = vmatpush1.bf16.msra.mxu0 %v3067
      %4343 = vmatprep.mubr.bf16.mxu0 %v846
      %4344 = vmatmul.mubr.bf16.gmra.mrb[0].mxu0 %v845
      %v4345 = vpop.f32.mrb[0].mxu0
      %v4346 = vadd.f32 %v1386, %v4345
      %v4347 = vpop.f32.mrb[0].mxu0
      %v4348 = vadd.f32 %v1390, %v4347
      %v4349 = vpop.f32.mrb[0].mxu0
      %v4350 = vadd.f32 %v1386, %v4349
      %v4351 = vpop.f32.mrb[0].mxu0
      %v4352 = vadd.f32 %v1390, %v4351
      %4353 = vdwg.mxu0
      %4354 = vmatprep.subr.bf16.mxu0 %v3076
      %4355 = vmatpush1.bf16.msra.mxu0 %v3075
      %4356 = vmatprep.subr.bf16.mxu0 %v3084
      %4357 = vmatpush1.bf16.msra.mxu0 %v3083
      %4358 = vmatprep.subr.bf16.mxu0 %v3092
      %4359 = vmatpush1.bf16.msra.mxu0 %v3091
      %4360 = vmatprep.subr.bf16.mxu0 %v3100
      %4361 = vmatpush1.bf16.msra.mxu0 %v3099
      %4362 = vmatprep.subr.bf16.mxu0 %v3108
      %4363 = vmatpush1.bf16.msra.mxu0 %v3107
      %4364 = vmatprep.subr.bf16.mxu0 %v3116
      %4365 = vmatpush1.bf16.msra.mxu0 %v3115
      %4366 = vmatprep.subr.bf16.mxu0 %v3124
      %4367 = vmatpush1.bf16.msra.mxu0 %v3123
      %4368 = vmatprep.subr.bf16.mxu0 %v3132
      %4369 = vmatpush1.bf16.msra.mxu0 %v3131
      %4370 = vmatprep.subr.bf16.mxu0 %v3140
      %4371 = vmatpush1.bf16.msra.mxu0 %v3139
      %4372 = vmatprep.subr.bf16.mxu0 %v3148
      %4373 = vmatpush1.bf16.msra.mxu0 %v3147
      %4374 = vmatprep.subr.bf16.mxu0 %v3156
      %4375 = vmatpush1.bf16.msra.mxu0 %v3155
      %4376 = vmatprep.subr.bf16.mxu0 %v3164
      %4377 = vmatpush1.bf16.msra.mxu0 %v3163
      %4378 = vmatprep.subr.bf16.mxu0 %v3172
      %4379 = vmatpush1.bf16.msra.mxu0 %v3171
      %4380 = vmatprep.subr.bf16.mxu0 %v3180
      %4381 = vmatpush1.bf16.msra.mxu0 %v3179
      %4382 = vmatprep.subr.bf16.mxu0 %v3188
      %4383 = vmatpush1.bf16.msra.mxu0 %v3187
      %4384 = vmatprep.subr.bf16.mxu0 %v3196
      %4385 = vmatpush1.bf16.msra.mxu0 %v3195
      %4386 = vmatprep.mubr.bf16.mxu0 %v848
      %4387 = vmatmul.mubr.bf16.gmra.mrb[0].mxu0 %v847
      %v4388 = vpop.f32.mrb[0].mxu0
      %v4389 = vadd.f32 %v4346, %v4388
      %v4390 = vpop.f32.mrb[0].mxu0
      %v4391 = vadd.f32 %v4348, %v4390
      %v4392 = vpop.f32.mrb[0].mxu0
      %v4393 = vadd.f32 %v4350, %v4392
      %v4394 = vpop.f32.mrb[0].mxu0
      %v4395 = vadd.f32 %v4352, %v4394
      %4396 = vdwg.mxu0
      %4397 = vmatprep.subr.bf16.mxu0 %v3204
      %4398 = vmatpush1.bf16.msra.mxu0 %v3203
      %4399 = vmatprep.subr.bf16.mxu0 %v3212
      %4400 = vmatpush1.bf16.msra.mxu0 %v3211
      %4401 = vmatprep.subr.bf16.mxu0 %v3220
      %4402 = vmatpush1.bf16.msra.mxu0 %v3219
      %4403 = vmatprep.subr.bf16.mxu0 %v3228
      %4404 = vmatpush1.bf16.msra.mxu0 %v3227
      %4405 = vmatprep.subr.bf16.mxu0 %v3236
      %4406 = vmatpush1.bf16.msra.mxu0 %v3235
      %4407 = vmatprep.subr.bf16.mxu0 %v3244
      %4408 = vmatpush1.bf16.msra.mxu0 %v3243
      %4409 = vmatprep.subr.bf16.mxu0 %v3252
      %4410 = vmatpush1.bf16.msra.mxu0 %v3251
      %4411 = vmatprep.subr.bf16.mxu0 %v3260
      %4412 = vmatpush1.bf16.msra.mxu0 %v3259
      %4413 = vmatprep.subr.bf16.mxu0 %v3268
      %4414 = vmatpush1.bf16.msra.mxu0 %v3267
      %4415 = vmatprep.subr.bf16.mxu0 %v3276
      %4416 = vmatpush1.bf16.msra.mxu0 %v3275
      %4417 = vmatprep.subr.bf16.mxu0 %v3284
      %4418 = vmatpush1.bf16.msra.mxu0 %v3283
      %4419 = vmatprep.subr.bf16.mxu0 %v3292
      %4420 = vmatpush1.bf16.msra.mxu0 %v3291
      %4421 = vmatprep.subr.bf16.mxu0 %v3300
      %4422 = vmatpush1.bf16.msra.mxu0 %v3299
      %4423 = vmatprep.subr.bf16.mxu0 %v3308
      %4424 = vmatpush1.bf16.msra.mxu0 %v3307
      %4425 = vmatprep.subr.bf16.mxu0 %v3316
      %4426 = vmatpush1.bf16.msra.mxu0 %v3315
      %4427 = vmatprep.subr.bf16.mxu0 %v3324
      %4428 = vmatpush1.bf16.msra.mxu0 %v3323
      %4429 = vmatprep.mubr.bf16.mxu0 %v850
      %4430 = vmatmul.mubr.bf16.gmra.mrb[0].mxu0 %v849
      %v4431 = vpop.f32.mrb[0].mxu0
      %v4432 = vadd.f32 %v4389, %v4431
      %v4433 = vpop.f32.mrb[0].mxu0
      %v4434 = vadd.f32 %v4391, %v4433
      %v4435 = vpop.f32.mrb[0].mxu0
      %v4436 = vadd.f32 %v4393, %v4435
      %v4437 = vpop.f32.mrb[0].mxu0
      %v4438 = vadd.f32 %v4395, %v4437
      %4439 = vdwg.mxu0
      %4440 = vmatprep.subr.bf16.mxu0 %v3332
      %4441 = vmatpush1.bf16.msra.mxu0 %v3331
      %4442 = vmatprep.subr.bf16.mxu0 %v3340
      %4443 = vmatpush1.bf16.msra.mxu0 %v3339
      %4444 = vmatprep.subr.bf16.mxu0 %v3348
      %4445 = vmatpush1.bf16.msra.mxu0 %v3347
      %4446 = vmatprep.subr.bf16.mxu0 %v3356
      %4447 = vmatpush1.bf16.msra.mxu0 %v3355
      %4448 = vmatprep.subr.bf16.mxu0 %v3364
      %4449 = vmatpush1.bf16.msra.mxu0 %v3363
      %4450 = vmatprep.subr.bf16.mxu0 %v3372
      %4451 = vmatpush1.bf16.msra.mxu0 %v3371
      %4452 = vmatprep.subr.bf16.mxu0 %v3380
      %4453 = vmatpush1.bf16.msra.mxu0 %v3379
      %4454 = vmatprep.subr.bf16.mxu0 %v3388
      %4455 = vmatpush1.bf16.msra.mxu0 %v3387
      %4456 = vmatprep.subr.bf16.mxu0 %v3396
      %4457 = vmatpush1.bf16.msra.mxu0 %v3395
      %4458 = vmatprep.subr.bf16.mxu0 %v3404
      %4459 = vmatpush1.bf16.msra.mxu0 %v3403
      %4460 = vmatprep.subr.bf16.mxu0 %v3412
      %4461 = vmatpush1.bf16.msra.mxu0 %v3411
      %4462 = vmatprep.subr.bf16.mxu0 %v3420
      %4463 = vmatpush1.bf16.msra.mxu0 %v3419
      %4464 = vmatprep.subr.bf16.mxu0 %v3428
      %4465 = vmatpush1.bf16.msra.mxu0 %v3427
      %4466 = vmatprep.subr.bf16.mxu0 %v3436
      %4467 = vmatpush1.bf16.msra.mxu0 %v3435
      %4468 = vmatprep.subr.bf16.mxu0 %v3444
      %4469 = vmatpush1.bf16.msra.mxu0 %v3443
      %4470 = vmatprep.subr.bf16.mxu0 %v3452
      %4471 = vmatpush1.bf16.msra.mxu0 %v3451
      %4472 = vmatprep.mubr.bf16.mxu0 %v852
      %4473 = vmatmul.mubr.bf16.gmra.mrb[0].mxu0 %v851
      %v4474 = vpop.f32.mrb[0].mxu0
      %v4475 = vadd.f32 %v4432, %v4474
      %v4476 = vpop.f32.mrb[0].mxu0
      %v4477 = vadd.f32 %v4434, %v4476
      %v4478 = vpop.f32.mrb[0].mxu0
      %v4479 = vadd.f32 %v4436, %v4478
      %v4480 = vpop.f32.mrb[0].mxu0
      %v4481 = vadd.f32 %v4438, %v4480
      %4482 = vdwg.mxu0
      %4483 = vmatprep.subr.bf16.mxu0 %v2950
      %4484 = vmatpush1.bf16.msra.mxu0 %v2949
      %4485 = vmatprep.subr.bf16.mxu0 %v2958
      %4486 = vmatpush1.bf16.msra.mxu0 %v2957
      %4487 = vmatprep.subr.bf16.mxu0 %v2966
      %4488 = vmatpush1.bf16.msra.mxu0 %v2965
      %4489 = vmatprep.subr.bf16.mxu0 %v2974
      %4490 = vmatpush1.bf16.msra.mxu0 %v2973
      %4491 = vmatprep.subr.bf16.mxu0 %v2982
      %4492 = vmatpush1.bf16.msra.mxu0 %v2981
      %4493 = vmatprep.subr.bf16.mxu0 %v2990
      %4494 = vmatpush1.bf16.msra.mxu0 %v2989
      %4495 = vmatprep.subr.bf16.mxu0 %v2998
      %4496 = vmatpush1.bf16.msra.mxu0 %v2997
      %4497 = vmatprep.subr.bf16.mxu0 %v3006
      %4498 = vmatpush1.bf16.msra.mxu0 %v3005
      %4499 = vmatprep.subr.bf16.mxu0 %v3014
      %4500 = vmatpush1.bf16.msra.mxu0 %v3013
      %4501 = vmatprep.subr.bf16.mxu0 %v3022
      %4502 = vmatpush1.bf16.msra.mxu0 %v3021
      %4503 = vmatprep.subr.bf16.mxu0 %v3030
      %4504 = vmatpush1.bf16.msra.mxu0 %v3029
      %4505 = vmatprep.subr.bf16.mxu0 %v3038
      %4506 = vmatpush1.bf16.msra.mxu0 %v3037
      %4507 = vmatprep.subr.bf16.mxu0 %v3046
      %4508 = vmatpush1.bf16.msra.mxu0 %v3045
      %4509 = vmatprep.subr.bf16.mxu0 %v3054
      %4510 = vmatpush1.bf16.msra.mxu0 %v3053
      %4511 = vmatprep.subr.bf16.mxu0 %v3062
      %4512 = vmatpush1.bf16.msra.mxu0 %v3061
      %4513 = vmatprep.subr.bf16.mxu0 %v3070
      %4514 = vmatpush1.bf16.msra.mxu0 %v3069
      %4515 = vmatprep.mubr.bf16.mxu0 %v846
      %4516 = vmatmul.mubr.bf16.gmra.mrb[0].mxu0 %v845
      %v4517 = vpop.f32.mrb[0].mxu0
      %v4518 = vadd.f32 %v1394, %v4517
      %v4519 = vpop.f32.mrb[0].mxu0
      %v4520 = vadd.f32 %v1398, %v4519
      %v4521 = vpop.f32.mrb[0].mxu0
      %v4522 = vadd.f32 %v1394, %v4521
      %v4523 = vpop.f32.mrb[0].mxu0
      %v4524 = vadd.f32 %v1398, %v4523
      %4525 = vdwg.mxu0
      %4526 = vmatprep.subr.bf16.mxu0 %v3078
      %4527 = vmatpush1.bf16.msra.mxu0 %v3077
      %4528 = vmatprep.subr.bf16.mxu0 %v3086
      %4529 = vmatpush1.bf16.msra.mxu0 %v3085
      %4530 = vmatprep.subr.bf16.mxu0 %v3094
      %4531 = vmatpush1.bf16.msra.mxu0 %v3093
      %4532 = vmatprep.subr.bf16.mxu0 %v3102
      %4533 = vmatpush1.bf16.msra.mxu0 %v3101
      %4534 = vmatprep.subr.bf16.mxu0 %v3110
      %4535 = vmatpush1.bf16.msra.mxu0 %v3109
      %4536 = vmatprep.subr.bf16.mxu0 %v3118
      %4537 = vmatpush1.bf16.msra.mxu0 %v3117
      %4538 = vmatprep.subr.bf16.mxu0 %v3126
      %4539 = vmatpush1.bf16.msra.mxu0 %v3125
      %4540 = vmatprep.subr.bf16.mxu0 %v3134
      %4541 = vmatpush1.bf16.msra.mxu0 %v3133
      %4542 = vmatprep.subr.bf16.mxu0 %v3142
      %4543 = vmatpush1.bf16.msra.mxu0 %v3141
      %4544 = vmatprep.subr.bf16.mxu0 %v3150
      %4545 = vmatpush1.bf16.msra.mxu0 %v3149
      %4546 = vmatprep.subr.bf16.mxu0 %v3158
      %4547 = vmatpush1.bf16.msra.mxu0 %v3157
      %4548 = vmatprep.subr.bf16.mxu0 %v3166
      %4549 = vmatpush1.bf16.msra.mxu0 %v3165
      %4550 = vmatprep.subr.bf16.mxu0 %v3174
      %4551 = vmatpush1.bf16.msra.mxu0 %v3173
      %4552 = vmatprep.subr.bf16.mxu0 %v3182
      %4553 = vmatpush1.bf16.msra.mxu0 %v3181
      %4554 = vmatprep.subr.bf16.mxu0 %v3190
      %4555 = vmatpush1.bf16.msra.mxu0 %v3189
      %4556 = vmatprep.subr.bf16.mxu0 %v3198
      %4557 = vmatpush1.bf16.msra.mxu0 %v3197
      %4558 = vmatprep.mubr.bf16.mxu0 %v848
      %4559 = vmatmul.mubr.bf16.gmra.mrb[0].mxu0 %v847
      %v4560 = vpop.f32.mrb[0].mxu0
      %v4561 = vadd.f32 %v4518, %v4560
      %v4562 = vpop.f32.mrb[0].mxu0
      %v4563 = vadd.f32 %v4520, %v4562
      %v4564 = vpop.f32.mrb[0].mxu0
      %v4565 = vadd.f32 %v4522, %v4564
      %v4566 = vpop.f32.mrb[0].mxu0
      %v4567 = vadd.f32 %v4524, %v4566
      %4568 = vdwg.mxu0
      %4569 = vmatprep.subr.bf16.mxu0 %v3206
      %4570 = vmatpush1.bf16.msra.mxu0 %v3205
      %4571 = vmatprep.subr.bf16.mxu0 %v3214
      %4572 = vmatpush1.bf16.msra.mxu0 %v3213
      %4573 = vmatprep.subr.bf16.mxu0 %v3222
      %4574 = vmatpush1.bf16.msra.mxu0 %v3221
      %4575 = vmatprep.subr.bf16.mxu0 %v3230
      %4576 = vmatpush1.bf16.msra.mxu0 %v3229
      %4577 = vmatprep.subr.bf16.mxu0 %v3238
      %4578 = vmatpush1.bf16.msra.mxu0 %v3237
      %4579 = vmatprep.subr.bf16.mxu0 %v3246
      %4580 = vmatpush1.bf16.msra.mxu0 %v3245
      %4581 = vmatprep.subr.bf16.mxu0 %v3254
      %4582 = vmatpush1.bf16.msra.mxu0 %v3253
      %4583 = vmatprep.subr.bf16.mxu0 %v3262
      %4584 = vmatpush1.bf16.msra.mxu0 %v3261
      %4585 = vmatprep.subr.bf16.mxu0 %v3270
      %4586 = vmatpush1.bf16.msra.mxu0 %v3269
      %4587 = vmatprep.subr.bf16.mxu0 %v3278
      %4588 = vmatpush1.bf16.msra.mxu0 %v3277
      %4589 = vmatprep.subr.bf16.mxu0 %v3286
      %4590 = vmatpush1.bf16.msra.mxu0 %v3285
      %4591 = vmatprep.subr.bf16.mxu0 %v3294
      %4592 = vmatpush1.bf16.msra.mxu0 %v3293
      %4593 = vmatprep.subr.bf16.mxu0 %v3302
      %4594 = vmatpush1.bf16.msra.mxu0 %v3301
      %4595 = vmatprep.subr.bf16.mxu0 %v3310
      %4596 = vmatpush1.bf16.msra.mxu0 %v3309
      %4597 = vmatprep.subr.bf16.mxu0 %v3318
      %4598 = vmatpush1.bf16.msra.mxu0 %v3317
      %4599 = vmatprep.subr.bf16.mxu0 %v3326
      %4600 = vmatpush1.bf16.msra.mxu0 %v3325
      %4601 = vmatprep.mubr.bf16.mxu0 %v850
      %4602 = vmatmul.mubr.bf16.gmra.mrb[0].mxu0 %v849
      %v4603 = vpop.f32.mrb[0].mxu0
      %v4604 = vadd.f32 %v4561, %v4603
      %v4605 = vpop.f32.mrb[0].mxu0
      %v4606 = vadd.f32 %v4563, %v4605
      %v4607 = vpop.f32.mrb[0].mxu0
      %v4608 = vadd.f32 %v4565, %v4607
      %v4609 = vpop.f32.mrb[0].mxu0
      %v4610 = vadd.f32 %v4567, %v4609
      %4611 = vdwg.mxu0
      %4612 = vmatprep.subr.bf16.mxu0 %v3334
      %4613 = vmatpush1.bf16.msra.mxu0 %v3333
      %4614 = vmatprep.subr.bf16.mxu0 %v3342
      %4615 = vmatpush1.bf16.msra.mxu0 %v3341
      %4616 = vmatprep.subr.bf16.mxu0 %v3350
      %4617 = vmatpush1.bf16.msra.mxu0 %v3349
      %4618 = vmatprep.subr.bf16.mxu0 %v3358
      %4619 = vmatpush1.bf16.msra.mxu0 %v3357
      %4620 = vmatprep.subr.bf16.mxu0 %v3366
      %4621 = vmatpush1.bf16.msra.mxu0 %v3365
      %4622 = vmatprep.subr.bf16.mxu0 %v3374
      %4623 = vmatpush1.bf16.msra.mxu0 %v3373
      %4624 = vmatprep.subr.bf16.mxu0 %v3382
      %4625 = vmatpush1.bf16.msra.mxu0 %v3381
      %4626 = vmatprep.subr.bf16.mxu0 %v3390
      %4627 = vmatpush1.bf16.msra.mxu0 %v3389
      %4628 = vmatprep.subr.bf16.mxu0 %v3398
      %4629 = vmatpush1.bf16.msra.mxu0 %v3397
      %4630 = vmatprep.subr.bf16.mxu0 %v3406
      %4631 = vmatpush1.bf16.msra.mxu0 %v3405
      %4632 = vmatprep.subr.bf16.mxu0 %v3414
      %4633 = vmatpush1.bf16.msra.mxu0 %v3413
      %4634 = vmatprep.subr.bf16.mxu0 %v3422
      %4635 = vmatpush1.bf16.msra.mxu0 %v3421
      %4636 = vmatprep.subr.bf16.mxu0 %v3430
      %4637 = vmatpush1.bf16.msra.mxu0 %v3429
      %4638 = vmatprep.subr.bf16.mxu0 %v3438
      %4639 = vmatpush1.bf16.msra.mxu0 %v3437
      %4640 = vmatprep.subr.bf16.mxu0 %v3446
      %4641 = vmatpush1.bf16.msra.mxu0 %v3445
      %4642 = vmatprep.subr.bf16.mxu0 %v3454
      %4643 = vmatpush1.bf16.msra.mxu0 %v3453
      %4644 = vmatprep.mubr.bf16.mxu0 %v852
      %4645 = vmatmul.mubr.bf16.gmra.mrb[0].mxu0 %v851
      %v4646 = vpop.f32.mrb[0].mxu0
      %v4647 = vadd.f32 %v4604, %v4646
      %v4648 = vpop.f32.mrb[0].mxu0
      %v4649 = vadd.f32 %v4606, %v4648
      %v4650 = vpop.f32.mrb[0].mxu0
      %v4651 = vadd.f32 %v4608, %v4650
      %v4652 = vpop.f32.mrb[0].mxu0
      %v4653 = vadd.f32 %v4610, %v4652
      %4654 = vdwg.mxu0
      %v4655 = vmax.f32 %v4131, 0.0
      %v4656 = vmax.f32 %v4133, 0.0
      %v4657 = vmax.f32 %v4303, 0.0
      %v4658 = vmax.f32 %v4305, 0.0
      %v4659 = vmax.f32 %v4475, 0.0
      %v4660 = vmax.f32 %v4477, 0.0
      %v4661 = vmax.f32 %v4647, 0.0
      %v4662 = vmax.f32 %v4649, 0.0
      %v4663 = vmax.f32 %v4135, 0.0
      %v4664 = vmax.f32 %v4137, 0.0
      %v4665 = vmax.f32 %v4307, 0.0
      %v4666 = vmax.f32 %v4309, 0.0
      %v4667 = vmax.f32 %v4479, 0.0
      %v4668 = vmax.f32 %v4481, 0.0
      %v4669 = vmax.f32 %v4651, 0.0
      %v4670 = vmax.f32 %v4653, 0.0
      %v4671 = vpack.c.bf16 %v4663, %v4655
      %v4672 = vpack.c.bf16 %v4664, %v4656
      %v4673 = vpack.c.bf16 %v4665, %v4657
      %v4674 = vpack.c.bf16 %v4666, %v4658
      %v4675 = vpack.c.bf16 %v4667, %v4659
      %v4676 = vpack.c.bf16 %v4668, %v4660
      %v4677 = vpack.c.bf16 %v4669, %v4661
      %v4678 = vpack.c.bf16 %v4670, %v4662
      %v4679 = vld [vmem:[#allocation12] sm:$0xf]
      %v4680 = vld [vmem:[#allocation12 + $0x4] sm:$0xf]
      %v4681 = vld [vmem:[#allocation12 + $0x8] sm:$0xf]
      %v4682 = vld [vmem:[#allocation12 + $0xc] sm:$0xf]
      %v4683 = vld [vmem:[#allocation12 + $0x10] sm:$0xf]
      %v4684 = vld [vmem:[#allocation12 + $0x14] sm:$0xf]
      %v4685 = vld [vmem:[#allocation12 + $0x18] sm:$0xf]
      %v4686 = vld [vmem:[#allocation12 + $0x1c] sm:$0xf]
      %v4687 = vld [vmem:[#allocation12 + $0x20] sm:$0xf]
      %v4688 = vld [vmem:[#allocation12 + $0x24] sm:$0xf]
      %v4689 = vld [vmem:[#allocation12 + $0x28] sm:$0xf]
      %v4690 = vld [vmem:[#allocation12 + $0x2c] sm:$0xf]
      %v4691 = vld [vmem:[#allocation12 + $0x30] sm:$0xf]
      %v4692 = vld [vmem:[#allocation12 + $0x34] sm:$0xf]
      %v4693 = vld [vmem:[#allocation12 + $0x38] sm:$0xf]
      %v4694 = vld [vmem:[#allocation12 + $0x3c] sm:$0xf]
      %v4695 = vld [vmem:[#allocation12 + $0x40] sm:$0xf]
      %v4696 = vld [vmem:[#allocation12 + $0x44] sm:$0xf]
      %v4697 = vld [vmem:[#allocation12 + $0x48] sm:$0xf]
      %v4698 = vld [vmem:[#allocation12 + $0x4c] sm:$0xf]
      %v4699 = vld [vmem:[#allocation12 + $0x50] sm:$0xf]
      %v4700 = vld [vmem:[#allocation12 + $0x54] sm:$0xf]
      %v4701 = vld [vmem:[#allocation12 + $0x58] sm:$0xf]
      %v4702 = vld [vmem:[#allocation12 + $0x5c] sm:$0xf]
      %v4703 = vld [vmem:[#allocation12 + $0x60] sm:$0xf]
      %v4704 = vld [vmem:[#allocation12 + $0x64] sm:$0xf]
      %v4705 = vld [vmem:[#allocation12 + $0x68] sm:$0xf]
      %v4706 = vld [vmem:[#allocation12 + $0x6c] sm:$0xf]
      %v4707 = vld [vmem:[#allocation12 + $0x70] sm:$0xf]
      %v4708 = vld [vmem:[#allocation12 + $0x74] sm:$0xf]
      %v4709 = vld [vmem:[#allocation12 + $0x78] sm:$0xf]
      %v4710 = vld [vmem:[#allocation12 + $0x7c] sm:$0xf]
      %v4711 = vld [vmem:[#allocation12 + $0x80] sm:$0xf]
      %v4712 = vld [vmem:[#allocation12 + $0x84] sm:$0xf]
      %v4713 = vld [vmem:[#allocation12 + $0x88] sm:$0xf]
      %v4714 = vld [vmem:[#allocation12 + $0x8c] sm:$0xf]
      %v4715 = vld [vmem:[#allocation12 + $0x90] sm:$0xf]
      %v4716 = vld [vmem:[#allocation12 + $0x94] sm:$0xf]
      %v4717 = vld [vmem:[#allocation12 + $0x98] sm:$0xf]
      %v4718 = vld [vmem:[#allocation12 + $0x9c] sm:$0xf]
      %v4719 = vld [vmem:[#allocation12 + $0xa0] sm:$0xf]
      %v4720 = vld [vmem:[#allocation12 + $0xa4] sm:$0xf]
      %v4721 = vld [vmem:[#allocation12 + $0xa8] sm:$0xf]
      %v4722 = vld [vmem:[#allocation12 + $0xac] sm:$0xf]
      %v4723 = vld [vmem:[#allocation12 + $0xb0] sm:$0xf]
      %v4724 = vld [vmem:[#allocation12 + $0xb4] sm:$0xf]
      %v4725 = vld [vmem:[#allocation12 + $0xb8] sm:$0xf]
      %v4726 = vld [vmem:[#allocation12 + $0xbc] sm:$0xf]
      %v4727 = vld [vmem:[#allocation12 + $0xc0] sm:$0xf]
      %v4728 = vld [vmem:[#allocation12 + $0xc4] sm:$0xf]
      %v4729 = vld [vmem:[#allocation12 + $0xc8] sm:$0xf]
      %v4730 = vld [vmem:[#allocation12 + $0xcc] sm:$0xf]
      %v4731 = vld [vmem:[#allocation12 + $0xd0] sm:$0xf]
      %v4732 = vld [vmem:[#allocation12 + $0xd4] sm:$0xf]
      %v4733 = vld [vmem:[#allocation12 + $0xd8] sm:$0xf]
      %v4734 = vld [vmem:[#allocation12 + $0xdc] sm:$0xf]
      %v4735 = vld [vmem:[#allocation12 + $0xe0] sm:$0xf]
      %v4736 = vld [vmem:[#allocation12 + $0xe4] sm:$0xf]
      %v4737 = vld [vmem:[#allocation12 + $0xe8] sm:$0xf]
      %v4738 = vld [vmem:[#allocation12 + $0xec] sm:$0xf]
      %v4739 = vld [vmem:[#allocation12 + $0xf0] sm:$0xf]
      %v4740 = vld [vmem:[#allocation12 + $0xf4] sm:$0xf]
      %v4741 = vld [vmem:[#allocation12 + $0xf8] sm:$0xf]
      %v4742 = vld [vmem:[#allocation12 + $0xfc] sm:$0xf]
      %v4743 = vld [vmem:[#allocation12 + $0x100] sm:$0xf]
      %v4744 = vld [vmem:[#allocation12 + $0x104] sm:$0xf]
      %v4745 = vld [vmem:[#allocation12 + $0x108] sm:$0xf]
      %v4746 = vld [vmem:[#allocation12 + $0x10c] sm:$0xf]
      %v4747 = vld [vmem:[#allocation12 + $0x110] sm:$0xf]
      %v4748 = vld [vmem:[#allocation12 + $0x114] sm:$0xf]
      %v4749 = vld [vmem:[#allocation12 + $0x118] sm:$0xf]
      %v4750 = vld [vmem:[#allocation12 + $0x11c] sm:$0xf]
      %v4751 = vld [vmem:[#allocation12 + $0x120] sm:$0xf]
      %v4752 = vld [vmem:[#allocation12 + $0x124] sm:$0xf]
      %v4753 = vld [vmem:[#allocation12 + $0x128] sm:$0xf]
      %v4754 = vld [vmem:[#allocation12 + $0x12c] sm:$0xf]
      %v4755 = vld [vmem:[#allocation12 + $0x130] sm:$0xf]
      %v4756 = vld [vmem:[#allocation12 + $0x134] sm:$0xf]
      %v4757 = vld [vmem:[#allocation12 + $0x138] sm:$0xf]
      %v4758 = vld [vmem:[#allocation12 + $0x13c] sm:$0xf]
      %v4759 = vld [vmem:[#allocation12 + $0x140] sm:$0xf]
      %v4760 = vld [vmem:[#allocation12 + $0x144] sm:$0xf]
      %v4761 = vld [vmem:[#allocation12 + $0x148] sm:$0xf]
      %v4762 = vld [vmem:[#allocation12 + $0x14c] sm:$0xf]
      %v4763 = vld [vmem:[#allocation12 + $0x150] sm:$0xf]
      %v4764 = vld [vmem:[#allocation12 + $0x154] sm:$0xf]
      %v4765 = vld [vmem:[#allocation12 + $0x158] sm:$0xf]
      %v4766 = vld [vmem:[#allocation12 + $0x15c] sm:$0xf]
      %v4767 = vld [vmem:[#allocation12 + $0x160] sm:$0xf]
      %v4768 = vld [vmem:[#allocation12 + $0x164] sm:$0xf]
      %v4769 = vld [vmem:[#allocation12 + $0x168] sm:$0xf]
      %v4770 = vld [vmem:[#allocation12 + $0x16c] sm:$0xf]
      %v4771 = vld [vmem:[#allocation12 + $0x170] sm:$0xf]
      %v4772 = vld [vmem:[#allocation12 + $0x174] sm:$0xf]
      %v4773 = vld [vmem:[#allocation12 + $0x178] sm:$0xf]
      %v4774 = vld [vmem:[#allocation12 + $0x17c] sm:$0xf]
      %v4775 = vld [vmem:[#allocation12 + $0x180] sm:$0xf]
      %v4776 = vld [vmem:[#allocation12 + $0x184] sm:$0xf]
      %v4777 = vld [vmem:[#allocation12 + $0x188] sm:$0xf]
      %v4778 = vld [vmem:[#allocation12 + $0x18c] sm:$0xf]
      %v4779 = vld [vmem:[#allocation12 + $0x190] sm:$0xf]
      %v4780 = vld [vmem:[#allocation12 + $0x194] sm:$0xf]
      %v4781 = vld [vmem:[#allocation12 + $0x198] sm:$0xf]
      %v4782 = vld [vmem:[#allocation12 + $0x19c] sm:$0xf]
      %v4783 = vld [vmem:[#allocation12 + $0x1a0] sm:$0xf]
      %v4784 = vld [vmem:[#allocation12 + $0x1a4] sm:$0xf]
      %v4785 = vld [vmem:[#allocation12 + $0x1a8] sm:$0xf]
      %v4786 = vld [vmem:[#allocation12 + $0x1ac] sm:$0xf]
      %v4787 = vld [vmem:[#allocation12 + $0x1b0] sm:$0xf]
      %v4788 = vld [vmem:[#allocation12 + $0x1b4] sm:$0xf]
      %v4789 = vld [vmem:[#allocation12 + $0x1b8] sm:$0xf]
      %v4790 = vld [vmem:[#allocation12 + $0x1bc] sm:$0xf]
      %v4791 = vld [vmem:[#allocation12 + $0x1c0] sm:$0xf]
      %v4792 = vld [vmem:[#allocation12 + $0x1c4] sm:$0xf]
      %v4793 = vld [vmem:[#allocation12 + $0x1c8] sm:$0xf]
      %v4794 = vld [vmem:[#allocation12 + $0x1cc] sm:$0xf]
      %v4795 = vld [vmem:[#allocation12 + $0x1d0] sm:$0xf]
      %v4796 = vld [vmem:[#allocation12 + $0x1d4] sm:$0xf]
      %v4797 = vld [vmem:[#allocation12 + $0x1d8] sm:$0xf]
      %v4798 = vld [vmem:[#allocation12 + $0x1dc] sm:$0xf]
      %v4799 = vld [vmem:[#allocation12 + $0x1e0] sm:$0xf]
      %v4800 = vld [vmem:[#allocation12 + $0x1e4] sm:$0xf]
      %v4801 = vld [vmem:[#allocation12 + $0x1e8] sm:$0xf]
      %v4802 = vld [vmem:[#allocation12 + $0x1ec] sm:$0xf]
      %v4803 = vld [vmem:[#allocation12 + $0x1f0] sm:$0xf]
      %v4804 = vld [vmem:[#allocation12 + $0x1f4] sm:$0xf]
      %v4805 = vld [vmem:[#allocation12 + $0x1f8] sm:$0xf]
      %v4806 = vld [vmem:[#allocation12 + $0x1fc] sm:$0xf]
      %v4807 = vld [vmem:[#allocation14] sm:$0x1]
      %v4809 = vlaneseq
      %v4810 = vshrl.u32 %v4809, 7
      %v4811 = vsub.s32 0, %v4810
      %v4812 = vrot.slane %v4807, %v4811
      %v4942 = vunpack.c.l.b16 %v4679
      %v4943 = vunpack.c.l.b16 %v4680
      %v4944 = vunpack.c.l.b16 %v4681
      %v4945 = vunpack.c.l.b16 %v4682
      %v4946 = vunpack.c.l.b16 %v4683
      %v4947 = vunpack.c.l.b16 %v4684
      %v4948 = vunpack.c.l.b16 %v4685
      %v4949 = vunpack.c.l.b16 %v4686
      %v4950 = vunpack.c.l.b16 %v4687
      %v4951 = vunpack.c.l.b16 %v4688
      %v4952 = vunpack.c.l.b16 %v4689
      %v4953 = vunpack.c.l.b16 %v4690
      %v4954 = vunpack.c.l.b16 %v4691
      %v4955 = vunpack.c.l.b16 %v4692
      %v4956 = vunpack.c.l.b16 %v4693
      %v4957 = vunpack.c.l.b16 %v4694
      %v4958 = vunpack.c.l.b16 %v4695
      %v4959 = vunpack.c.l.b16 %v4696
      %v4960 = vunpack.c.l.b16 %v4697
      %v4961 = vunpack.c.l.b16 %v4698
      %v4962 = vunpack.c.l.b16 %v4699
      %v4963 = vunpack.c.l.b16 %v4700
      %v4964 = vunpack.c.l.b16 %v4701
      %v4965 = vunpack.c.l.b16 %v4702
      %v4966 = vunpack.c.l.b16 %v4703
      %v4967 = vunpack.c.l.b16 %v4704
      %v4968 = vunpack.c.l.b16 %v4705
      %v4969 = vunpack.c.l.b16 %v4706
      %v4970 = vunpack.c.l.b16 %v4707
      %v4971 = vunpack.c.l.b16 %v4708
      %v4972 = vunpack.c.l.b16 %v4709
      %v4973 = vunpack.c.l.b16 %v4710
      %v4974 = vunpack.c.l.b16 %v4711
      %v4975 = vunpack.c.l.b16 %v4712
      %v4976 = vunpack.c.l.b16 %v4713
      %v4977 = vunpack.c.l.b16 %v4714
      %v4978 = vunpack.c.l.b16 %v4715
      %v4979 = vunpack.c.l.b16 %v4716
      %v4980 = vunpack.c.l.b16 %v4717
      %v4981 = vunpack.c.l.b16 %v4718
      %v4982 = vunpack.c.l.b16 %v4719
      %v4983 = vunpack.c.l.b16 %v4720
      %v4984 = vunpack.c.l.b16 %v4721
      %v4985 = vunpack.c.l.b16 %v4722
      %v4986 = vunpack.c.l.b16 %v4723
      %v4987 = vunpack.c.l.b16 %v4724
      %v4988 = vunpack.c.l.b16 %v4725
      %v4989 = vunpack.c.l.b16 %v4726
      %v4990 = vunpack.c.l.b16 %v4727
      %v4991 = vunpack.c.l.b16 %v4728
      %v4992 = vunpack.c.l.b16 %v4729
      %v4993 = vunpack.c.l.b16 %v4730
      %v4994 = vunpack.c.l.b16 %v4731
      %v4995 = vunpack.c.l.b16 %v4732
      %v4996 = vunpack.c.l.b16 %v4733
      %v4997 = vunpack.c.l.b16 %v4734
      %v4998 = vunpack.c.l.b16 %v4735
      %v4999 = vunpack.c.l.b16 %v4736
      %v5000 = vunpack.c.l.b16 %v4737
      %v5001 = vunpack.c.l.b16 %v4738
      %v5002 = vunpack.c.l.b16 %v4739
      %v5003 = vunpack.c.l.b16 %v4740
      %v5004 = vunpack.c.l.b16 %v4741
      %v5005 = vunpack.c.l.b16 %v4742
      %v5006 = vunpack.c.l.b16 %v4743
      %v5007 = vunpack.c.l.b16 %v4744
      %v5008 = vunpack.c.l.b16 %v4745
      %v5009 = vunpack.c.l.b16 %v4746
      %v5010 = vunpack.c.l.b16 %v4747
      %v5011 = vunpack.c.l.b16 %v4748
      %v5012 = vunpack.c.l.b16 %v4749
      %v5013 = vunpack.c.l.b16 %v4750
      %v5014 = vunpack.c.l.b16 %v4751
      %v5015 = vunpack.c.l.b16 %v4752
      %v5016 = vunpack.c.l.b16 %v4753
      %v5017 = vunpack.c.l.b16 %v4754
      %v5018 = vunpack.c.l.b16 %v4755
      %v5019 = vunpack.c.l.b16 %v4756
      %v5020 = vunpack.c.l.b16 %v4757
      %v5021 = vunpack.c.l.b16 %v4758
      %v5022 = vunpack.c.l.b16 %v4759
      %v5023 = vunpack.c.l.b16 %v4760
      %v5024 = vunpack.c.l.b16 %v4761
      %v5025 = vunpack.c.l.b16 %v4762
      %v5026 = vunpack.c.l.b16 %v4763
      %v5027 = vunpack.c.l.b16 %v4764
      %v5028 = vunpack.c.l.b16 %v4765
      %v5029 = vunpack.c.l.b16 %v4766
      %v5030 = vunpack.c.l.b16 %v4767
      %v5031 = vunpack.c.l.b16 %v4768
      %v5032 = vunpack.c.l.b16 %v4769
      %v5033 = vunpack.c.l.b16 %v4770
      %v5034 = vunpack.c.l.b16 %v4771
      %v5035 = vunpack.c.l.b16 %v4772
      %v5036 = vunpack.c.l.b16 %v4773
      %v5037 = vunpack.c.l.b16 %v4774
      %v5038 = vunpack.c.l.b16 %v4775
      %v5039 = vunpack.c.l.b16 %v4776
      %v5040 = vunpack.c.l.b16 %v4777
      %v5041 = vunpack.c.l.b16 %v4778
      %v5042 = vunpack.c.l.b16 %v4779
      %v5043 = vunpack.c.l.b16 %v4780
      %v5044 = vunpack.c.l.b16 %v4781
      %v5045 = vunpack.c.l.b16 %v4782
      %v5046 = vunpack.c.l.b16 %v4783
      %v5047 = vunpack.c.l.b16 %v4784
      %v5048 = vunpack.c.l.b16 %v4785
      %v5049 = vunpack.c.l.b16 %v4786
      %v5050 = vunpack.c.l.b16 %v4787
      %v5051 = vunpack.c.l.b16 %v4788
      %v5052 = vunpack.c.l.b16 %v4789
      %v5053 = vunpack.c.l.b16 %v4790
      %v5054 = vunpack.c.l.b16 %v4791
      %v5055 = vunpack.c.l.b16 %v4792
      %v5056 = vunpack.c.l.b16 %v4793
      %v5057 = vunpack.c.l.b16 %v4794
      %v5058 = vunpack.c.l.b16 %v4795
      %v5059 = vunpack.c.l.b16 %v4796
      %v5060 = vunpack.c.l.b16 %v4797
      %v5061 = vunpack.c.l.b16 %v4798
      %v5062 = vunpack.c.l.b16 %v4799
      %v5063 = vunpack.c.l.b16 %v4800
      %v5064 = vunpack.c.l.b16 %v4801
      %v5065 = vunpack.c.l.b16 %v4802
      %v5066 = vunpack.c.l.b16 %v4803
      %v5067 = vunpack.c.l.b16 %v4804
      %v5068 = vunpack.c.l.b16 %v4805
      %v5069 = vunpack.c.l.b16 %v4806
      %v5070 = vpack.c.b16 %v4943, %v4942
      %v5071 = vpack.c.b16 %v4945, %v4944
      %v5072 = vpack.c.b16 %v4947, %v4946
      %v5073 = vpack.c.b16 %v4949, %v4948
      %v5074 = vpack.c.b16 %v4951, %v4950
      %v5075 = vpack.c.b16 %v4953, %v4952
      %v5076 = vpack.c.b16 %v4955, %v4954
      %v5077 = vpack.c.b16 %v4957, %v4956
      %v5078 = vpack.c.b16 %v4959, %v4958
      %v5079 = vpack.c.b16 %v4961, %v4960
      %v5080 = vpack.c.b16 %v4963, %v4962
      %v5081 = vpack.c.b16 %v4965, %v4964
      %v5082 = vpack.c.b16 %v4967, %v4966
      %v5083 = vpack.c.b16 %v4969, %v4968
      %v5084 = vpack.c.b16 %v4971, %v4970
      %v5085 = vpack.c.b16 %v4973, %v4972
      %v5086 = vpack.c.b16 %v4975, %v4974
      %v5087 = vpack.c.b16 %v4977, %v4976
      %v5088 = vpack.c.b16 %v4979, %v4978
      %v5089 = vpack.c.b16 %v4981, %v4980
      %v5090 = vpack.c.b16 %v4983, %v4982
      %v5091 = vpack.c.b16 %v4985, %v4984
      %v5092 = vpack.c.b16 %v4987, %v4986
      %v5093 = vpack.c.b16 %v4989, %v4988
      %v5094 = vpack.c.b16 %v4991, %v4990
      %v5095 = vpack.c.b16 %v4993, %v4992
      %v5096 = vpack.c.b16 %v4995, %v4994
      %v5097 = vpack.c.b16 %v4997, %v4996
      %v5098 = vpack.c.b16 %v4999, %v4998
      %v5099 = vpack.c.b16 %v5001, %v5000
      %v5100 = vpack.c.b16 %v5003, %v5002
      %v5101 = vpack.c.b16 %v5005, %v5004
      %v5102 = vpack.c.b16 %v5007, %v5006
      %v5103 = vpack.c.b16 %v5009, %v5008
      %v5104 = vpack.c.b16 %v5011, %v5010
      %v5105 = vpack.c.b16 %v5013, %v5012
      %v5106 = vpack.c.b16 %v5015, %v5014
      %v5107 = vpack.c.b16 %v5017, %v5016
      %v5108 = vpack.c.b16 %v5019, %v5018
      %v5109 = vpack.c.b16 %v5021, %v5020
      %v5110 = vpack.c.b16 %v5023, %v5022
      %v5111 = vpack.c.b16 %v5025, %v5024
      %v5112 = vpack.c.b16 %v5027, %v5026
      %v5113 = vpack.c.b16 %v5029, %v5028
      %v5114 = vpack.c.b16 %v5031, %v5030
      %v5115 = vpack.c.b16 %v5033, %v5032
      %v5116 = vpack.c.b16 %v5035, %v5034
      %v5117 = vpack.c.b16 %v5037, %v5036
      %v5118 = vpack.c.b16 %v5039, %v5038
      %v5119 = vpack.c.b16 %v5041, %v5040
      %v5120 = vpack.c.b16 %v5043, %v5042
      %v5121 = vpack.c.b16 %v5045, %v5044
      %v5122 = vpack.c.b16 %v5047, %v5046
      %v5123 = vpack.c.b16 %v5049, %v5048
      %v5124 = vpack.c.b16 %v5051, %v5050
      %v5125 = vpack.c.b16 %v5053, %v5052
      %v5126 = vpack.c.b16 %v5055, %v5054
      %v5127 = vpack.c.b16 %v5057, %v5056
      %v5128 = vpack.c.b16 %v5059, %v5058
      %v5129 = vpack.c.b16 %v5061, %v5060
      %v5130 = vpack.c.b16 %v5063, %v5062
      %v5131 = vpack.c.b16 %v5065, %v5064
      %v5132 = vpack.c.b16 %v5067, %v5066
      %v5133 = vpack.c.b16 %v5069, %v5068
      %5198 = vmatprep.subr.bf16.mxu0 0
      %5199 = vmatpush1.bf16.msra.mxu0 %v5070
      %5200 = vmatprep.subr.bf16.mxu0 0
      %5201 = vmatpush1.bf16.msra.mxu0 %v5071
      %5202 = vmatprep.subr.bf16.mxu0 0
      %5203 = vmatpush1.bf16.msra.mxu0 %v5072
      %5204 = vmatprep.subr.bf16.mxu0 0
      %5205 = vmatpush1.bf16.msra.mxu0 %v5073
      %5206 = vmatprep.subr.bf16.mxu0 0
      %5207 = vmatpush1.bf16.msra.mxu0 %v5074
      %5208 = vmatprep.subr.bf16.mxu0 0
      %5209 = vmatpush1.bf16.msra.mxu0 %v5075
      %5210 = vmatprep.subr.bf16.mxu0 0
      %5211 = vmatpush1.bf16.msra.mxu0 %v5076
      %5212 = vmatprep.subr.bf16.mxu0 0
      %5213 = vmatpush1.bf16.msra.mxu0 %v5077
      %5214 = vmatprep.subr.bf16.mxu0 0
      %5215 = vmatpush1.bf16.msra.mxu0 %v5078
      %5216 = vmatprep.subr.bf16.mxu0 0
      %5217 = vmatpush1.bf16.msra.mxu0 %v5079
      %5218 = vmatprep.subr.bf16.mxu0 0
      %5219 = vmatpush1.bf16.msra.mxu0 %v5080
      %5220 = vmatprep.subr.bf16.mxu0 0
      %5221 = vmatpush1.bf16.msra.mxu0 %v5081
      %5222 = vmatprep.subr.bf16.mxu0 0
      %5223 = vmatpush1.bf16.msra.mxu0 %v5082
      %5224 = vmatprep.subr.bf16.mxu0 0
      %5225 = vmatpush1.bf16.msra.mxu0 %v5083
      %5226 = vmatprep.subr.bf16.mxu0 0
      %5227 = vmatpush1.bf16.msra.mxu0 %v5084
      %5228 = vmatprep.subr.bf16.mxu0 0
      %5229 = vmatpush1.bf16.msra.mxu0 %v5085
      %5230 = vmatprep.mubr.bf16.mxu0 %v4672
      %5231 = vmatmul.mubr.bf16.gmra.mrb[0].mxu0 %v4671
      %v5232 = vpop.f32.mrb[0].mxu0
      %v5233 = vadd.f32 %v4812, %v5232
      %v5234 = vpop.f32.mrb[0].mxu0
      %v5235 = vpop.f32.mrb[0].mxu0
      %v5236 = vadd.f32 %v4812, %v5235
      %v5237 = vpop.f32.mrb[0].mxu0
      %5238 = vdwg.mxu0
      %5239 = vmatprep.subr.bf16.mxu0 0
      %5240 = vmatpush1.bf16.msra.mxu0 %v5086
      %5241 = vmatprep.subr.bf16.mxu0 0
      %5242 = vmatpush1.bf16.msra.mxu0 %v5087
      %5243 = vmatprep.subr.bf16.mxu0 0
      %5244 = vmatpush1.bf16.msra.mxu0 %v5088
      %5245 = vmatprep.subr.bf16.mxu0 0
      %5246 = vmatpush1.bf16.msra.mxu0 %v5089
      %5247 = vmatprep.subr.bf16.mxu0 0
      %5248 = vmatpush1.bf16.msra.mxu0 %v5090
      %5249 = vmatprep.subr.bf16.mxu0 0
      %5250 = vmatpush1.bf16.msra.mxu0 %v5091
      %5251 = vmatprep.subr.bf16.mxu0 0
      %5252 = vmatpush1.bf16.msra.mxu0 %v5092
      %5253 = vmatprep.subr.bf16.mxu0 0
      %5254 = vmatpush1.bf16.msra.mxu0 %v5093
      %5255 = vmatprep.subr.bf16.mxu0 0
      %5256 = vmatpush1.bf16.msra.mxu0 %v5094
      %5257 = vmatprep.subr.bf16.mxu0 0
      %5258 = vmatpush1.bf16.msra.mxu0 %v5095
      %5259 = vmatprep.subr.bf16.mxu0 0
      %5260 = vmatpush1.bf16.msra.mxu0 %v5096
      %5261 = vmatprep.subr.bf16.mxu0 0
      %5262 = vmatpush1.bf16.msra.mxu0 %v5097
      %5263 = vmatprep.subr.bf16.mxu0 0
      %5264 = vmatpush1.bf16.msra.mxu0 %v5098
      %5265 = vmatprep.subr.bf16.mxu0 0
      %5266 = vmatpush1.bf16.msra.mxu0 %v5099
      %5267 = vmatprep.subr.bf16.mxu0 0
      %5268 = vmatpush1.bf16.msra.mxu0 %v5100
      %5269 = vmatprep.subr.bf16.mxu0 0
      %5270 = vmatpush1.bf16.msra.mxu0 %v5101
      %5271 = vmatprep.mubr.bf16.mxu0 %v4674
      %5272 = vmatmul.mubr.bf16.gmra.mrb[0].mxu0 %v4673
      %v5273 = vpop.f32.mrb[0].mxu0
      %v5274 = vadd.f32 %v5233, %v5273
      %v5275 = vpop.f32.mrb[0].mxu0
      %v5276 = vpop.f32.mrb[0].mxu0
      %v5277 = vadd.f32 %v5236, %v5276
      %v5278 = vpop.f32.mrb[0].mxu0
      %5279 = vdwg.mxu0
      %5280 = vmatprep.subr.bf16.mxu0 0
      %5281 = vmatpush1.bf16.msra.mxu0 %v5102
      %5282 = vmatprep.subr.bf16.mxu0 0
      %5283 = vmatpush1.bf16.msra.mxu0 %v5103
      %5284 = vmatprep.subr.bf16.mxu0 0
      %5285 = vmatpush1.bf16.msra.mxu0 %v5104
      %5286 = vmatprep.subr.bf16.mxu0 0
      %5287 = vmatpush1.bf16.msra.mxu0 %v5105
      %5288 = vmatprep.subr.bf16.mxu0 0
      %5289 = vmatpush1.bf16.msra.mxu0 %v5106
      %5290 = vmatprep.subr.bf16.mxu0 0
      %5291 = vmatpush1.bf16.msra.mxu0 %v5107
      %5292 = vmatprep.subr.bf16.mxu0 0
      %5293 = vmatpush1.bf16.msra.mxu0 %v5108
      %5294 = vmatprep.subr.bf16.mxu0 0
      %5295 = vmatpush1.bf16.msra.mxu0 %v5109
      %5296 = vmatprep.subr.bf16.mxu0 0
      %5297 = vmatpush1.bf16.msra.mxu0 %v5110
      %5298 = vmatprep.subr.bf16.mxu0 0
      %5299 = vmatpush1.bf16.msra.mxu0 %v5111
      %5300 = vmatprep.subr.bf16.mxu0 0
      %5301 = vmatpush1.bf16.msra.mxu0 %v5112
      %5302 = vmatprep.subr.bf16.mxu0 0
      %5303 = vmatpush1.bf16.msra.mxu0 %v5113
      %5304 = vmatprep.subr.bf16.mxu0 0
      %5305 = vmatpush1.bf16.msra.mxu0 %v5114
      %5306 = vmatprep.subr.bf16.mxu0 0
      %5307 = vmatpush1.bf16.msra.mxu0 %v5115
      %5308 = vmatprep.subr.bf16.mxu0 0
      %5309 = vmatpush1.bf16.msra.mxu0 %v5116
      %5310 = vmatprep.subr.bf16.mxu0 0
      %5311 = vmatpush1.bf16.msra.mxu0 %v5117
      %5312 = vmatprep.mubr.bf16.mxu0 %v4676
      %5313 = vmatmul.mubr.bf16.gmra.mrb[0].mxu0 %v4675
      %v5314 = vpop.f32.mrb[0].mxu0
      %v5315 = vadd.f32 %v5274, %v5314
      %v5316 = vpop.f32.mrb[0].mxu0
      %v5317 = vpop.f32.mrb[0].mxu0
      %v5318 = vadd.f32 %v5277, %v5317
      %v5319 = vpop.f32.mrb[0].mxu0
      %5320 = vdwg.mxu0
      %5321 = vmatprep.subr.bf16.mxu0 0
      %5322 = vmatpush1.bf16.msra.mxu0 %v5118
      %5323 = vmatprep.subr.bf16.mxu0 0
      %5324 = vmatpush1.bf16.msra.mxu0 %v5119
      %5325 = vmatprep.subr.bf16.mxu0 0
      %5326 = vmatpush1.bf16.msra.mxu0 %v5120
      %5327 = vmatprep.subr.bf16.mxu0 0
      %5328 = vmatpush1.bf16.msra.mxu0 %v5121
      %5329 = vmatprep.subr.bf16.mxu0 0
      %5330 = vmatpush1.bf16.msra.mxu0 %v5122
      %5331 = vmatprep.subr.bf16.mxu0 0
      %5332 = vmatpush1.bf16.msra.mxu0 %v5123
      %5333 = vmatprep.subr.bf16.mxu0 0
      %5334 = vmatpush1.bf16.msra.mxu0 %v5124
      %5335 = vmatprep.subr.bf16.mxu0 0
      %5336 = vmatpush1.bf16.msra.mxu0 %v5125
      %5337 = vmatprep.subr.bf16.mxu0 0
      %5338 = vmatpush1.bf16.msra.mxu0 %v5126
      %5339 = vmatprep.subr.bf16.mxu0 0
      %5340 = vmatpush1.bf16.msra.mxu0 %v5127
      %5341 = vmatprep.subr.bf16.mxu0 0
      %5342 = vmatpush1.bf16.msra.mxu0 %v5128
      %5343 = vmatprep.subr.bf16.mxu0 0
      %5344 = vmatpush1.bf16.msra.mxu0 %v5129
      %5345 = vmatprep.subr.bf16.mxu0 0
      %5346 = vmatpush1.bf16.msra.mxu0 %v5130
      %5347 = vmatprep.subr.bf16.mxu0 0
      %5348 = vmatpush1.bf16.msra.mxu0 %v5131
      %5349 = vmatprep.subr.bf16.mxu0 0
      %5350 = vmatpush1.bf16.msra.mxu0 %v5132
      %5351 = vmatprep.subr.bf16.mxu0 0
      %5352 = vmatpush1.bf16.msra.mxu0 %v5133
      %5353 = vmatprep.mubr.bf16.mxu0 %v4678
      %5354 = vmatmul.mubr.bf16.gmra.mrb[0].mxu0 %v4677
      %v5355 = vpop.f32.mrb[0].mxu0
      %v5356 = vadd.f32 %v5315, %v5355
      %v5357 = vpop.f32.mrb[0].mxu0
      %v5358 = vpop.f32.mrb[0].mxu0
      %v5359 = vadd.f32 %v5318, %v5358
      %v5360 = vpop.f32.mrb[0].mxu0
      %5361 = vdwg.mxu0
      %5362 = vst [vmem:[#allocation15] sm:$0xff] %v5356
      %5363 = vst [vmem:[#allocation15 + $0x8] sm:$0xff] %v5359
      %v5364 = vlaneseq
      %v5365 = vand.u32 %v5364, 127
      %vm5366 = vcmp.lt.s32.totalorder %v5365, 8
      %v5367 = vsel %vm5366, %v5356, -inf
      %v5368 = vsel %vm5366, %v5359, -inf
      %5369 = vmax.xlane.f32.xlu0 %v5367
      %v5370 = vpop.xlane.xlu0 %5369
      %5371 = vmax.xlane.f32.xlu0 %v5368
      %v5372 = vpop.xlane.xlu0 %5371
      %v5373 = vsub.f32 %v5367, %v5370
      %v5374 = vsub.f32 %v5368, %v5372
      %v5375 = vmul.f32 %v5373, 1.442695
      %v5376 = vpow.pop %v5375
      %v5377 = vmul.f32 %v5374, 1.442695
      %v5378 = vpow.pop %v5377
      %5379 = vadd.xlane.f32.xlu0 %v5376
      %v5380 = vpop.xlane.xlu0 %5379
      %5381 = vadd.xlane.f32.xlu0 %v5378
      %v5382 = vpop.xlane.xlu0 %5381
      %v5383 = vrcp.pop %v5380
      %v5384 = vrcp.pop %v5382
      %v5385 = vmul.f32 %v5376, %v5383
      %v5386 = vmul.f32 %v5378, %v5384
      %5387 = vst [vmem:[#allocation16] sm:$0xff] %v5385
      %5388 = vst [vmem:[#allocation16 + $0x8] sm:$0xff] %v5386
    $region65: #{tpu_custom_call.1} parent=1 // pred_fallthru
      _
    // Predicated region
    $region66: #{tpu_custom_call.1} parent=1 // pred_check
      _
    $region67: #{tpu_custom_call.1} parent=1 // pred_check_branch
      %5390 = sbr.rel (0) target = $region69
    $region68: #{tpu_custom_call.1} parent=1 // pred_region
      %s5392 = ssub.s32 256, 256
      %5393 = vsyncadd [#allocation5], %s5392
      %s5394 = sshll.u32 [#allocation15], 4
      %s5395 = int_to_ptr.vmem [resolvable:$true] %s5394
      %5400 = dma.vmem_to_hbm [thread:$0]  %s5395, 256, %s7, [#allocation5], 128, 128, 8
    $region69: #{tpu_custom_call.1} parent=1 // pred_fallthru
      _
    // Predicated region
    $region70: #{tpu_custom_call.1} parent=1 // pred_check
      _
    $region71: #{tpu_custom_call.1} parent=1 // pred_check_branch
      %5402 = sbr.rel (0) target = $region73
    $region72: #{tpu_custom_call.1} parent=1 // pred_region
      %s5404 = ssub.s32 256, 256
      %5405 = vsyncadd [#allocation17], %s5404
      %s5406 = sshll.u32 [#allocation16], 4
      %s5407 = int_to_ptr.vmem [resolvable:$true] %s5406
      %5412 = dma.vmem_to_hbm [thread:$0]  %s5407, 256, %s8, [#allocation17], 128, 128, 8
    $region73: #{tpu_custom_call.1} parent=1 // pred_fallthru
      _
    // Predicated region
    $region74: #{tpu_custom_call.1} parent=1 // pred_check
      _
    $region75: #{tpu_custom_call.1} parent=1 // pred_check_branch
      %5414 = sbr.rel (0) target = $region77
    $region76: #{tpu_custom_call.1} parent=1 // pred_region
      %5415 = dma.done [#allocation5], 256
    $region77: #{tpu_custom_call.1} parent=1 // pred_fallthru
      _
    // Predicated region
    $region78: #{tpu_custom_call.1} parent=1 // pred_check
      _
    $region79: #{tpu_custom_call.1} parent=1 // pred_check_branch
      %5417 = sbr.rel (0) target = $region81
    $region80: #{tpu_custom_call.1} parent=1 // pred_region
      %5418 = dma.done [#allocation17], 256
    $region81: #{tpu_custom_call.1} parent=1 // pred_fallthru
      _
    %5419 = vsyncpa [#allocation4], 1
    %5420 = vsyncpa [#allocation7], 1
    %5421 = vsyncpa [#allocation10], 1
    %5422 = vsyncpa [#allocation13], 1
    %5423 = vsyncpa [#allocation5], 1
    %5424 = vsyncpa [#allocation17], 1

// kernel: tpu_custom_call.1
$region0: #{tpu_custom_call.1}
  #allocation0 [shape = 'u32[]', space=smem, size = 0x4, offset = 0x4, fixed_abs, tag = 'smem constant byte address 0x4 - core index']
  #allocation1 [shape = 'u32[144,128]{1,0:T(1,128)}', space=vmem, size = 0x12000, scoped, tag = 'internal scratch']
  #allocation2 [shape = 'f32[16,1024]{1,0:T(8,128)}', space=vmem, size = 0x10000, scoped, tag = 'scratch operand']
  %s0 = inlined_call_operand.hbm [shape: bf16[16,128], index: 0, kind: input, shape index: {}]
  %s1 = inlined_call_operand.hbm [shape: bf16[128,1024], index: 1, kind: input, shape index: {}]
  %s2 = inlined_call_operand.hbm [shape: f32[1,1024], index: 2, kind: input, shape index: {}]
  %s3 = inlined_call_operand.hbm [shape: bf16[1024,1024], index: 3, kind: input, shape index: {}]
  %s4 = inlined_call_operand.hbm [shape: f32[1,1024], index: 4, kind: input, shape index: {}]
  %s5 = inlined_call_operand.hbm [shape: bf16[1024,128], index: 5, kind: input, shape index: {}]
  %s6 = inlined_call_operand.hbm [shape: f32[1,128], index: 6, kind: input, shape index: {}]
  %s7 = inlined_call_operand.hbm [shape: f32[16,128], index: 7, kind: output, shape index: {0}]
  %s8 = inlined_call_operand.hbm [shape: f32[16,128], index: 8, kind: output, shape index: {1}]
  %9 = xla_tuple %s7, %s8
  %s10 = sld [smem:[#allocation0]]
  $region82: #{tpu_custom_call.1} parent=0
    _
  %s12 = ssub.s32 1, %s10
  %s13 = scalar_select 0, %s12, %s10
  $region1: #{tpu_custom_call.1} parent=0
    #allocation3 [shape = 'u8[4096]{0}', space=vmem, size = 0x1000, scoped, tag = 'input window, operand 0, single buffered']
    #allocation4 [shape = 's32[1]{0}', space=sflag, size = 0x4, scoped, tag = 'scoped memory for tpu_custom_call.1']
    #allocation5 [shape = 's32[1]{0}', space=sflag, size = 0x4, scoped, tag = 'scoped memory for tpu_custom_call.1']
    #allocation6 [shape = 'u8[262144]{0}', space=vmem, size = 0x40000, scoped, tag = 'input window, operand 1, single buffered']
    #allocation7 [shape = 's32[1]{0}', space=sflag, size = 0x4, scoped, tag = 'scoped memory for tpu_custom_call.1']
    #allocation8 [shape = 'u8[4096]{0}', space=vmem, size = 0x1000, scoped, tag = 'input window, operand 2, single buffered']
    #allocation9 [shape = 'u8[2097152]{0}', space=vmem, size = 0x200000, scoped, tag = 'input window, operand 3, single buffered']
    #allocation10 [shape = 's32[1]{0}', space=sflag, size = 0x4, scoped, tag = 'scoped memory for tpu_custom_call.1']
    #allocation11 [shape = 'u8[4096]{0}', space=vmem, size = 0x1000, scoped, tag = 'input window, operand 4, single buffered']
    #allocation12 [shape = 'u8[262144]{0}', space=vmem, size = 0x40000, scoped, tag = 'input window, operand 5, single buffered']
    #allocation13 [shape = 's32[1]{0}', space=sflag, size = 0x4, scoped, tag = 'scoped memory for tpu_custom_call.1']
    #allocation14 [shape = 'u8[512]{0}', space=vmem, size = 0x400, scoped, tag = 'input window, operand 6, single buffered']
    #allocation15 [shape = 'u8[8192]{0}', space=vmem, size = 0x2000, scoped, tag = 'output window, operand 0, single buffered']
    #allocation16 [shape = 'u8[8192]{0}', space=vmem, size = 0x2000, scoped, tag = 'output window, operand 1, single buffered']
    #allocation17 [shape = 's32[1]{0}', space=sflag, size = 0x4, scoped, tag = 'scoped memory for tpu_custom_call.1']
    %14 = vsyncpa [#allocation4], 0
    %15 = vsyncpa [#allocation7], 0
    %16 = vsyncpa [#allocation10], 0
    %17 = vsyncpa [#allocation13], 0
    %18 = vsyncpa [#allocation5], 0
    %19 = vsyncpa [#allocation17], 0
    // Predicated region
    $region2: #{tpu_custom_call.1} parent=1 // pred_check
      _
    $region3: #{tpu_custom_call.1} parent=1 // pred_check_branch
      %21 = sbr.rel (0) target = $region5
    $region4: #{tpu_custom_call.1} parent=1 // pred_region
      %s23 = ssub.s32 128, 128
      %24 = vsyncadd [#allocation4], %s23
      %s25 = sshll.u32 [#allocation3], 4
      %s26 = int_to_ptr.vmem [resolvable:$true] %s25
      %31 = dma.hbm_to_vmem [thread:$0]  %s0, 128, %s26, [#allocation4], 64, 64, 4
    $region5: #{tpu_custom_call.1} parent=1 // pred_fallthru
      _
    // Predicated region
    $region6: #{tpu_custom_call.1} parent=1 // pred_check
      _
    $region7: #{tpu_custom_call.1} parent=1 // pred_check_branch
      %33 = sbr.rel (0) target = $region9
    $region8: #{tpu_custom_call.1} parent=1 // pred_region
      %s35 = ssub.s32 8192, 8192
      %36 = vsyncadd [#allocation7], %s35
      %s37 = sshll.u32 [#allocation6], 4
      %s38 = int_to_ptr.vmem [resolvable:$true] %s37
      %43 = dma.hbm_to_vmem [thread:$0]  %s1, 8192, %s38, [#allocation7], 512, 512, 32
    $region9: #{tpu_custom_call.1} parent=1 // pred_fallthru
      _
    // Predicated region
    $region10: #{tpu_custom_call.1} parent=1 // pred_check
      _
    $region11: #{tpu_custom_call.1} parent=1 // pred_check_branch
      %45 = sbr.rel (0) target = $region13
    $region12: #{tpu_custom_call.1} parent=1 // pred_region
      %s47 = ssub.s32 128, 128
      %48 = vsyncadd [#allocation7], %s47
      %s50 = sshll.u32 [#allocation8], 4
      %s51 = int_to_ptr.vmem [resolvable:$true] %s50
      %53 = dma.hbm_to_vmem [thread:$0]  %s2, 128, %s51, [#allocation7]
    $region13: #{tpu_custom_call.1} parent=1 // pred_fallthru
      _
    // Predicated region
    $region14: #{tpu_custom_call.1} parent=1 // pred_check
      _
    $region15: #{tpu_custom_call.1} parent=1 // pred_check_branch
      %55 = sbr.rel (0) target = $region17
    $region16: #{tpu_custom_call.1} parent=1 // pred_region
      %s57 = ssub.s32 65536, 65536
      %58 = vsyncadd [#allocation10], %s57
      %s59 = sshll.u32 [#allocation9], 4
      %s60 = int_to_ptr.vmem [resolvable:$true] %s59
      %65 = dma.hbm_to_vmem [thread:$0]  %s3, 65536, %s60, [#allocation10], 512, 512, 32
    $region17: #{tpu_custom_call.1} parent=1 // pred_fallthru
      _
    // Predicated region
    $region18: #{tpu_custom_call.1} parent=1 // pred_check
      _
    $region19: #{tpu_custom_call.1} parent=1 // pred_check_branch
      %67 = sbr.rel (0) target = $region21
    $region20: #{tpu_custom_call.1} parent=1 // pred_region
      %s69 = ssub.s32 128, 128
      %70 = vsyncadd [#allocation10], %s69
      %s72 = sshll.u32 [#allocation11], 4
      %s73 = int_to_ptr.vmem [resolvable:$true] %s72
      %75 = dma.hbm_to_vmem [thread:$0]  %s4, 128, %s73, [#allocation10]
    $region21: #{tpu_custom_call.1} parent=1 // pred_fallthru
      _
    // Predicated region
    $region22: #{tpu_custom_call.1} parent=1 // pred_check
      _
    $region23: #{tpu_custom_call.1} parent=1 // pred_check_branch
      %77 = sbr.rel (0) target = $region25
    $region24: #{tpu_custom_call.1} parent=1 // pred_region
      %s79 = ssub.s32 8192, 8192
      %80 = vsyncadd [#allocation13], %s79
      %s81 = sshll.u32 [#allocation12], 4
      %s82 = int_to_ptr.vmem [resolvable:$true] %s81
      %87 = dma.hbm_to_vmem [thread:$0]  %s5, 8192, %s82, [#allocation13], 64, 64, 4
    $region25: #{tpu_custom_call.1} parent=1 // pred_fallthru
      _
    // Predicated region
    $region26: #{tpu_custom_call.1} parent=1 // pred_check
      _
    $region27: #{tpu_custom_call.1} parent=1 // pred_check_branch
      %89 = sbr.rel (0) target = $region29
    $region28: #{tpu_custom_call.1} parent=1 // pred_region
      %s91 = ssub.s32 16, 16
      %92 = vsyncadd [#allocation13], %s91
      %s94 = sshll.u32 [#allocation14], 4
      %s95 = int_to_ptr.vmem [resolvable:$true] %s94
      %97 = dma.hbm_to_vmem [thread:$0]  %s6, 16, %s95, [#allocation13]
    $region29: #{tpu_custom_call.1} parent=1 // pred_fallthru
      _
    // Predicated region
    $region30: #{tpu_custom_call.1} parent=1 // pred_check
      _
    $region31: #{tpu_custom_call.1} parent=1 // pred_check_branch
      %99 = sbr.rel (0) target = $region33
    $region32: #{tpu_custom_call.1} parent=1 // pred_region
      %100 = dma.done [#allocation4], 128
    $region33: #{tpu_custom_call.1} parent=1 // pred_fallthru
      _
    // Predicated region
    $region34: #{tpu_custom_call.1} parent=1 // pred_check
      _
    $region35: #{tpu_custom_call.1} parent=1 // pred_check_branch
      %102 = sbr.rel (0) target = $region37
    $region36: #{tpu_custom_call.1} parent=1 // pred_region
      %103 = dma.done [#allocation7], 8192
    $region37: #{tpu_custom_call.1} parent=1 // pred_fallthru
      _
    // Predicated region
    $region38: #{tpu_custom_call.1} parent=1 // pred_check
      _
    $region39: #{tpu_custom_call.1} parent=1 // pred_check_branch
      %105 = sbr.rel (0) target = $region41
    $region40: #{tpu_custom_call.1} parent=1 // pred_region
      %106 = dma.done [#allocation7], 128
    $region41: #{tpu_custom_call.1} parent=1 // pred_fallthru
      _
    // Predicated region
    $region42: #{tpu_custom_call.1} parent=1 // pred_check
      _
    $region43: #{tpu_custom_call.1} parent=1 // pred_check_branch
      %108 = sbr.rel (0) target = $region45
    $region44: #{tpu_custom_call.1} parent=1 // pred_region
      %109 = dma.done [#allocation10], 65536
    $region45: #{tpu_custom_call.1} parent=1 // pred_fallthru
      _
    // Predicated region
    $region46: #{tpu_custom_call.1} parent=1 // pred_check
      _
    $region47: #{tpu_custom_call.1} parent=1 // pred_check_branch
      %111 = sbr.rel (0) target = $region49
    $region48: #{tpu_custom_call.1} parent=1 // pred_region
      %112 = dma.done [#allocation10], 128
    $region49: #{tpu_custom_call.1} parent=1 // pred_fallthru
      _
    // Predicated region
    $region50: #{tpu_custom_call.1} parent=1 // pred_check
      _
    $region51: #{tpu_custom_call.1} parent=1 // pred_check_branch
      %114 = sbr.rel (0) target = $region53
    $region52: #{tpu_custom_call.1} parent=1 // pred_region
      %115 = dma.done [#allocation13], 8192
    $region53: #{tpu_custom_call.1} parent=1 // pred_fallthru
      _
    // Predicated region
    $region54: #{tpu_custom_call.1} parent=1 // pred_check
      _
    $region55: #{tpu_custom_call.1} parent=1 // pred_check_branch
      %117 = sbr.rel (0) target = $region57
    $region56: #{tpu_custom_call.1} parent=1 // pred_region
      %118 = dma.done [#allocation13], 16
    $region57: #{tpu_custom_call.1} parent=1 // pred_fallthru
      _
    %p120 = scmp.eq.s32.totalorder 0, 0
    // Predicated region
    $region58: #{tpu_custom_call.1} parent=1 // pred_check
      %p121 = pneg %p120
    $region59: #{tpu_custom_call.1} parent=1 // pred_check_branch
      %123 = sbr.rel (%p121) target = $region61
    $region60: #{tpu_custom_call.1} parent=1 // pred_region
      %124 = vst [vmem:[#allocation2] sm:$0xff] 0.0
      %125 = vst [vmem:[#allocation2 + $0x8] sm:$0xff] 0.0
      %126 = vst [vmem:[#allocation2 + $0x10] sm:$0xff] 0.0
      %127 = vst [vmem:[#allocation2 + $0x18] sm:$0xff] 0.0
      %128 = vst [vmem:[#allocation2 + $0x20] sm:$0xff] 0.0
      %129 = vst [vmem:[#allocation2 + $0x28] sm:$0xff] 0.0
      %130 = vst [vmem:[#allocation2 + $0x30] sm:$0xff] 0.0
      %131 = vst [vmem:[#allocation2 + $0x38] sm:$0xff] 0.0
      %132 = vst [vmem:[#allocation2 + $0x40] sm:$0xff] 0.0
      %133 = vst [vmem:[#allocation2 + $0x48] sm:$0xff] 0.0
      %134 = vst [vmem:[#allocation2 + $0x50] sm:$0xff] 0.0
      %135 = vst [vmem:[#allocation2 + $0x58] sm:$0xff] 0.0
      %136 = vst [vmem:[#allocation2 + $0x60] sm:$0xff] 0.0
      %137 = vst [vmem:[#allocation2 + $0x68] sm:$0xff] 0.0
      %138 = vst [vmem:[#allocation2 + $0x70] sm:$0xff] 0.0
      %139 = vst [vmem:[#allocation2 + $0x78] sm:$0xff] 0.0
    $region61: #{tpu_custom_call.1} parent=1 // pred_fallthru
      _
    %v140 = vld [vmem:[#allocation2] sm:$0xff]
    %v141 = vld [vmem:[#allocation2 + $0x8] sm:$0xff]
    %v142 = vld [vmem:[#allocation2 + $0x10] sm:$0xff]
    %v143 = vld [vmem:[#allocation2 + $0x18] sm:$0xff]
    %v144 = vld [vmem:[#allocation2 + $0x20] sm:$0xff]
    %v145 = vld [vmem:[#allocation2 + $0x28] sm:$0xff]
    %v146 = vld [vmem:[#allocation2 + $0x30] sm:$0xff]
    %v147 = vld [vmem:[#allocation2 + $0x38] sm:$0xff]
    %v148 = vld [vmem:[#allocation2 + $0x40] sm:$0xff]
    %v149 = vld [vmem:[#allocation2 + $0x48] sm:$0xff]
    %v150 = vld [vmem:[#allocation2 + $0x50] sm:$0xff]
    %v151 = vld [vmem:[#allocation2 + $0x58] sm:$0xff]
    %v152 = vld [vmem:[#allocation2 + $0x60] sm:$0xff]
    %v153 = vld [vmem:[#allocation2 + $0x68] sm:$0xff]
    %v154 = vld [vmem:[#allocation2 + $0x70] sm:$0xff]
    %v155 = vld [vmem:[#allocation2 + $0x78] sm:$0xff]
    %v156 = vld [vmem:[#allocation3] sm:$0xf]
    %v157 = vld [vmem:[#allocation3 + $0x4] sm:$0xf]
    %v158 = vld [vmem:[#allocation6] sm:$0xff]
    %v159 = vld [vmem:[#allocation6 + $0x8] sm:$0xff]
    %v160 = vld [vmem:[#allocation6 + $0x10] sm:$0xff]
    %v161 = vld [vmem:[#allocation6 + $0x18] sm:$0xff]
    %v162 = vld [vmem:[#allocation6 + $0x20] sm:$0xff]
    %v163 = vld [vmem:[#allocation6 + $0x28] sm:$0xff]
    %v164 = vld [vmem:[#allocation6 + $0x30] sm:$0xff]
    %v165 = vld [vmem:[#allocation6 + $0x38] sm:$0xff]
    %v166 = vld [vmem:[#allocation6 + $0x40] sm:$0xff]
    %v167 = vld [vmem:[#allocation6 + $0x48] sm:$0xff]
    %v168 = vld [vmem:[#allocation6 + $0x50] sm:$0xff]
    %v169 = vld [vmem:[#allocation6 + $0x58] sm:$0xff]
    %v170 = vld [vmem:[#allocation6 + $0x60] sm:$0xff]
    %v171 = vld [vmem:[#allocation6 + $0x68] sm:$0xff]
    %v172 = vld [vmem:[#allocation6 + $0x70] sm:$0xff]
    %v173 = vld [vmem:[#allocation6 + $0x78] sm:$0xff]
    %v174 = vld [vmem:[#allocation6 + $0x80] sm:$0xff]
    %v175 = vld [vmem:[#allocation6 + $0x88] sm:$0xff]
    %v176 = vld [vmem:[#allocation6 + $0x90] sm:$0xff]
    %v177 = vld [vmem:[#allocation6 + $0x98] sm:$0xff]
    %v178 = vld [vmem:[#allocation6 + $0xa0] sm:$0xff]
    %v179 = vld [vmem:[#allocation6 + $0xa8] sm:$0xff]
    %v180 = vld [vmem:[#allocation6 + $0xb0] sm:$0xff]
    %v181 = vld [vmem:[#allocation6 + $0xb8] sm:$0xff]
    %v182 = vld [vmem:[#allocation6 + $0xc0] sm:$0xff]
    %v183 = vld [vmem:[#allocation6 + $0xc8] sm:$0xff]
    %v184 = vld [vmem:[#allocation6 + $0xd0] sm:$0xff]
    %v185 = vld [vmem:[#allocation6 + $0xd8] sm:$0xff]
    %v186 = vld [vmem:[#allocation6 + $0xe0] sm:$0xff]
    %v187 = vld [vmem:[#allocation6 + $0xe8] sm:$0xff]
    %v188 = vld [vmem:[#allocation6 + $0xf0] sm:$0xff]
    %v189 = vld [vmem:[#allocation6 + $0xf8] sm:$0xff]
    %v190 = vld [vmem:[#allocation6 + $0x100] sm:$0xff]
    %v191 = vld [vmem:[#allocation6 + $0x108] sm:$0xff]
    %v192 = vld [vmem:[#allocation6 + $0x110] sm:$0xff]
    %v193 = vld [vmem:[#allocation6 + $0x118] sm:$0xff]
    %v194 = vld [vmem:[#allocation6 + $0x120] sm:$0xff]
    %v195 = vld [vmem:[#allocation6 + $0x128] sm:$0xff]
    %v196 = vld [vmem:[#allocation6 + $0x130] sm:$0xff]
    %v197 = vld [vmem:[#allocation6 + $0x138] sm:$0xff]
    %v198 = vld [vmem:[#allocation6 + $0x140] sm:$0xff]
    %v199 = vld [vmem:[#allocation6 + $0x148] sm:$0xff]
    %v200 = vld [vmem:[#allocation6 + $0x150] sm:$0xff]
    %v201 = vld [vmem:[#allocation6 + $0x158] sm:$0xff]
    %v202 = vld [vmem:[#allocation6 + $0x160] sm:$0xff]
    %v203 = vld [vmem:[#allocation6 + $0x168] sm:$0xff]
    %v204 = vld [vmem:[#allocation6 + $0x170] sm:$0xff]
    %v205 = vld [vmem:[#allocation6 + $0x178] sm:$0xff]
    %v206 = vld [vmem:[#allocation6 + $0x180] sm:$0xff]
    %v207 = vld [vmem:[#allocation6 + $0x188] sm:$0xff]
    %v208 = vld [vmem:[#allocation6 + $0x190] sm:$0xff]
    %v209 = vld [vmem:[#allocation6 + $0x198] sm:$0xff]
    %v210 = vld [vmem:[#allocation6 + $0x1a0] sm:$0xff]
    %v211 = vld [vmem:[#allocation6 + $0x1a8] sm:$0xff]
    %v212 = vld [vmem:[#allocation6 + $0x1b0] sm:$0xff]
    %v213 = vld [vmem:[#allocation6 + $0x1b8] sm:$0xff]
    %v214 = vld [vmem:[#allocation6 + $0x1c0] sm:$0xff]
    %v215 = vld [vmem:[#allocation6 + $0x1c8] sm:$0xff]
    %v216 = vld [vmem:[#allocation6 + $0x1d0] sm:$0xff]
    %v217 = vld [vmem:[#allocation6 + $0x1d8] sm:$0xff]
    %v218 = vld [vmem:[#allocation6 + $0x1e0] sm:$0xff]
    %v219 = vld [vmem:[#allocation6 + $0x1e8] sm:$0xff]
    %v220 = vld [vmem:[#allocation6 + $0x1f0] sm:$0xff]
    %v221 = vld [vmem:[#allocation6 + $0x1f8] sm:$0xff]
    %v224 = vunpack.c.l.b16 %v156
    %v225 = vunpack.c.l.b16 %v157
    %v226 = vpack.c.b16 %v225, %v224
    %v292 = vunpack.c.l.b16 %v158
    %v293 = vunpack.c.h.b16 %v158
    %v294 = vunpack.c.l.b16 %v159
    %v295 = vunpack.c.h.b16 %v159
    %v296 = vunpack.c.l.b16 %v160
    %v297 = vunpack.c.h.b16 %v160
    %v298 = vunpack.c.l.b16 %v161
    %v299 = vunpack.c.h.b16 %v161
    %v300 = vunpack.c.l.b16 %v162
    %v301 = vunpack.c.h.b16 %v162
    %v302 = vunpack.c.l.b16 %v163
    %v303 = vunpack.c.h.b16 %v163
    %v304 = vunpack.c.l.b16 %v164
    %v305 = vunpack.c.h.b16 %v164
    %v306 = vunpack.c.l.b16 %v165
    %v307 = vunpack.c.h.b16 %v165
    %v308 = vunpack.c.l.b16 %v166
    %v309 = vunpack.c.h.b16 %v166
    %v310 = vunpack.c.l.b16 %v167
    %v311 = vunpack.c.h.b16 %v167
    %v312 = vunpack.c.l.b16 %v168
    %v313 = vunpack.c.h.b16 %v168
    %v314 = vunpack.c.l.b16 %v169
    %v315 = vunpack.c.h.b16 %v169
    %v316 = vunpack.c.l.b16 %v170
    %v317 = vunpack.c.h.b16 %v170
    %v318 = vunpack.c.l.b16 %v171
    %v319 = vunpack.c.h.b16 %v171
    %v320 = vunpack.c.l.b16 %v172
    %v321 = vunpack.c.h.b16 %v172
    %v322 = vunpack.c.l.b16 %v173
    %v323 = vunpack.c.h.b16 %v173
    %v324 = vunpack.c.l.b16 %v174
    %v325 = vunpack.c.h.b16 %v174
    %v326 = vunpack.c.l.b16 %v175
    %v327 = vunpack.c.h.b16 %v175
    %v328 = vunpack.c.l.b16 %v176
    %v329 = vunpack.c.h.b16 %v176
    %v330 = vunpack.c.l.b16 %v177
    %v331 = vunpack.c.h.b16 %v177
    %v332 = vunpack.c.l.b16 %v178
    %v333 = vunpack.c.h.b16 %v178
    %v334 = vunpack.c.l.b16 %v179
    %v335 = vunpack.c.h.b16 %v179
    %v336 = vunpack.c.l.b16 %v180
    %v337 = vunpack.c.h.b16 %v180
    %v338 = vunpack.c.l.b16 %v181
    %v339 = vunpack.c.h.b16 %v181
    %v340 = vunpack.c.l.b16 %v182
    %v341 = vunpack.c.h.b16 %v182
    %v342 = vunpack.c.l.b16 %v183
    %v343 = vunpack.c.h.b16 %v183
    %v344 = vunpack.c.l.b16 %v184
    %v345 = vunpack.c.h.b16 %v184
    %v346 = vunpack.c.l.b16 %v185
    %v347 = vunpack.c.h.b16 %v185
    %v348 = vunpack.c.l.b16 %v186
    %v349 = vunpack.c.h.b16 %v186
    %v350 = vunpack.c.l.b16 %v187
    %v351 = vunpack.c.h.b16 %v187
    %v352 = vunpack.c.l.b16 %v188
    %v353 = vunpack.c.h.b16 %v188
    %v354 = vunpack.c.l.b16 %v189
    %v355 = vunpack.c.h.b16 %v189
    %v356 = vunpack.c.l.b16 %v190
    %v357 = vunpack.c.h.b16 %v190
    %v358 = vunpack.c.l.b16 %v191
    %v359 = vunpack.c.h.b16 %v191
    %v360 = vunpack.c.l.b16 %v192
    %v361 = vunpack.c.h.b16 %v192
    %v362 = vunpack.c.l.b16 %v193
    %v363 = vunpack.c.h.b16 %v193
    %v364 = vunpack.c.l.b16 %v194
    %v365 = vunpack.c.h.b16 %v194
    %v366 = vunpack.c.l.b16 %v195
    %v367 = vunpack.c.h.b16 %v195
    %v368 = vunpack.c.l.b16 %v196
    %v369 = vunpack.c.h.b16 %v196
    %v370 = vunpack.c.l.b16 %v197
    %v371 = vunpack.c.h.b16 %v197
    %v372 = vunpack.c.l.b16 %v198
    %v373 = vunpack.c.h.b16 %v198
    %v374 = vunpack.c.l.b16 %v199
    %v375 = vunpack.c.h.b16 %v199
    %v376 = vunpack.c.l.b16 %v200
    %v377 = vunpack.c.h.b16 %v200
    %v378 = vunpack.c.l.b16 %v201
    %v379 = vunpack.c.h.b16 %v201
    %v380 = vunpack.c.l.b16 %v202
    %v381 = vunpack.c.h.b16 %v202
    %v382 = vunpack.c.l.b16 %v203
    %v383 = vunpack.c.h.b16 %v203
    %v384 = vunpack.c.l.b16 %v204
    %v385 = vunpack.c.h.b16 %v204
    %v386 = vunpack.c.l.b16 %v205
    %v387 = vunpack.c.h.b16 %v205
    %v388 = vunpack.c.l.b16 %v206
    %v389 = vunpack.c.h.b16 %v206
    %v390 = vunpack.c.l.b16 %v207
    %v391 = vunpack.c.h.b16 %v207
    %v392 = vunpack.c.l.b16 %v208
    %v393 = vunpack.c.h.b16 %v208
    %v394 = vunpack.c.l.b16 %v209
    %v395 = vunpack.c.h.b16 %v209
    %v396 = vunpack.c.l.b16 %v210
    %v397 = vunpack.c.h.b16 %v210
    %v398 = vunpack.c.l.b16 %v211
    %v399 = vunpack.c.h.b16 %v211
    %v400 = vunpack.c.l.b16 %v212
    %v401 = vunpack.c.h.b16 %v212
    %v402 = vunpack.c.l.b16 %v213
    %v403 = vunpack.c.h.b16 %v213
    %v404 = vunpack.c.l.b16 %v214
    %v405 = vunpack.c.h.b16 %v214
    %v406 = vunpack.c.l.b16 %v215
    %v407 = vunpack.c.h.b16 %v215
    %v408 = vunpack.c.l.b16 %v216
    %v409 = vunpack.c.h.b16 %v216
    %v410 = vunpack.c.l.b16 %v217
    %v411 = vunpack.c.h.b16 %v217
    %v412 = vunpack.c.l.b16 %v218
    %v413 = vunpack.c.h.b16 %v218
    %v414 = vunpack.c.l.b16 %v219
    %v415 = vunpack.c.h.b16 %v219
    %v416 = vunpack.c.l.b16 %v220
    %v417 = vunpack.c.h.b16 %v220
    %v418 = vunpack.c.l.b16 %v221
    %v419 = vunpack.c.h.b16 %v221
    %v420 = vpack.c.b16 %v300, %v292
    %v421 = vpack.c.b16 %v301, %v293
    %v422 = vpack.c.b16 %v302, %v294
    %v423 = vpack.c.b16 %v303, %v295
    %v424 = vpack.c.b16 %v304, %v296
    %v425 = vpack.c.b16 %v305, %v297
    %v426 = vpack.c.b16 %v306, %v298
    %v427 = vpack.c.b16 %v307, %v299
    %v428 = vpack.c.b16 %v316, %v308
    %v429 = vpack.c.b16 %v317, %v309
    %v430 = vpack.c.b16 %v318, %v310
    %v431 = vpack.c.b16 %v319, %v311
    %v432 = vpack.c.b16 %v320, %v312
    %v433 = vpack.c.b16 %v321, %v313
    %v434 = vpack.c.b16 %v322, %v314
    %v435 = vpack.c.b16 %v323, %v315
    %v436 = vpack.c.b16 %v332, %v324
    %v437 = vpack.c.b16 %v333, %v325
    %v438 = vpack.c.b16 %v334, %v326
    %v439 = vpack.c.b16 %v335, %v327
    %v440 = vpack.c.b16 %v336, %v328
    %v441 = vpack.c.b16 %v337, %v329
    %v442 = vpack.c.b16 %v338, %v330
    %v443 = vpack.c.b16 %v339, %v331
    %v444 = vpack.c.b16 %v348, %v340
    %v445 = vpack.c.b16 %v349, %v341
    %v446 = vpack.c.b16 %v350, %v342
    %v447 = vpack.c.b16 %v351, %v343
    %v448 = vpack.c.b16 %v352, %v344
    %v449 = vpack.c.b16 %v353, %v345
    %v450 = vpack.c.b16 %v354, %v346
    %v451 = vpack.c.b16 %v355, %v347
    %v452 = vpack.c.b16 %v364, %v356
    %v453 = vpack.c.b16 %v365, %v357
    %v454 = vpack.c.b16 %v366, %v358
    %v455 = vpack.c.b16 %v367, %v359
    %v456 = vpack.c.b16 %v368, %v360
    %v457 = vpack.c.b16 %v369, %v361
    %v458 = vpack.c.b16 %v370, %v362
    %v459 = vpack.c.b16 %v371, %v363
    %v460 = vpack.c.b16 %v380, %v372
    %v461 = vpack.c.b16 %v381, %v373
    %v462 = vpack.c.b16 %v382, %v374
    %v463 = vpack.c.b16 %v383, %v375
    %v464 = vpack.c.b16 %v384, %v376
    %v465 = vpack.c.b16 %v385, %v377
    %v466 = vpack.c.b16 %v386, %v378
    %v467 = vpack.c.b16 %v387, %v379
    %v468 = vpack.c.b16 %v396, %v388
    %v469 = vpack.c.b16 %v397, %v389
    %v470 = vpack.c.b16 %v398, %v390
    %v471 = vpack.c.b16 %v399, %v391
    %v472 = vpack.c.b16 %v400, %v392
    %v473 = vpack.c.b16 %v401, %v393
    %v474 = vpack.c.b16 %v402, %v394
    %v475 = vpack.c.b16 %v403, %v395
    %v476 = vpack.c.b16 %v412, %v404
    %v477 = vpack.c.b16 %v413, %v405
    %v478 = vpack.c.b16 %v414, %v406
    %v479 = vpack.c.b16 %v415, %v407
    %v480 = vpack.c.b16 %v416, %v408
    %v481 = vpack.c.b16 %v417, %v409
    %v482 = vpack.c.b16 %v418, %v410
    %v483 = vpack.c.b16 %v419, %v411
    %548 = vmatprep.subr.bf16.mxu0 %v421
    %549 = vmatpush1.bf16.msra.mxu0 %v420
    %550 = vmatprep.subr.bf16.mxu0 %v429
    %551 = vmatpush1.bf16.msra.mxu0 %v428
    %552 = vmatprep.subr.bf16.mxu0 %v437
    %553 = vmatpush1.bf16.msra.mxu0 %v436
    %554 = vmatprep.subr.bf16.mxu0 %v445
    %555 = vmatpush1.bf16.msra.mxu0 %v444
    %556 = vmatprep.subr.bf16.mxu0 %v453
    %557 = vmatpush1.bf16.msra.mxu0 %v452
    %558 = vmatprep.subr.bf16.mxu0 %v461
    %559 = vmatpush1.bf16.msra.mxu0 %v460
    %560 = vmatprep.subr.bf16.mxu0 %v469
    %561 = vmatpush1.bf16.msra.mxu0 %v468
    %562 = vmatprep.subr.bf16.mxu0 %v477
    %563 = vmatpush1.bf16.msra.mxu0 %v476
    %564 = vmatprep.subr.bf16.mxu0 0
    %565 = vmatpush1.bf16.msra.mxu0 0
    %566 = vmatprep.subr.bf16.mxu0 0
    %567 = vmatpush1.bf16.msra.mxu0 0
    %568 = vmatprep.subr.bf16.mxu0 0
    %569 = vmatpush1.bf16.msra.mxu0 0
    %570 = vmatprep.subr.bf16.mxu0 0
    %571 = vmatpush1.bf16.msra.mxu0 0
    %572 = vmatprep.subr.bf16.mxu0 0
    %573 = vmatpush1.bf16.msra.mxu0 0
    %574 = vmatprep.subr.bf16.mxu0 0
    %575 = vmatpush1.bf16.msra.mxu0 0
    %576 = vmatprep.subr.bf16.mxu0 0
    %577 = vmatpush1.bf16.msra.mxu0 0
    %578 = vmatprep.subr.bf16.mxu0 0
    %579 = vmatpush1.bf16.msra.mxu0 0
    %580 = vmatprep.mubr.bf16.mxu0 0
    %581 = vmatmul.mubr.bf16.gmra.mrb[0].mxu0 %v226
    %v582 = vpop.f32.mrb[0].mxu0
    %v583 = vadd.f32 0.0, %v582
    %v584 = vpop.f32.mrb[0].mxu0
    %v585 = vadd.f32 0.0, %v584
    %v586 = vpop.f32.mrb[0].mxu0
    %v587 = vadd.f32 0.0, %v586
    %v588 = vpop.f32.mrb[0].mxu0
    %v589 = vadd.f32 0.0, %v588
    %590 = vdwg.mxu0
    %591 = vmatprep.subr.bf16.mxu0 %v423
    %592 = vmatpush1.bf16.msra.mxu0 %v422
    %593 = vmatprep.subr.bf16.mxu0 %v431
    %594 = vmatpush1.bf16.msra.mxu0 %v430
    %595 = vmatprep.subr.bf16.mxu0 %v439
    %596 = vmatpush1.bf16.msra.mxu0 %v438
    %597 = vmatprep.subr.bf16.mxu0 %v447
    %598 = vmatpush1.bf16.msra.mxu0 %v446
    %599 = vmatprep.subr.bf16.mxu0 %v455
    %600 = vmatpush1.bf16.msra.mxu0 %v454
    %601 = vmatprep.subr.bf16.mxu0 %v463
    %602 = vmatpush1.bf16.msra.mxu0 %v462
    %603 = vmatprep.subr.bf16.mxu0 %v471
    %604 = vmatpush1.bf16.msra.mxu0 %v470
    %605 = vmatprep.subr.bf16.mxu0 %v479
    %606 = vmatpush1.bf16.msra.mxu0 %v478
    %607 = vmatprep.subr.bf16.mxu0 0
    %608 = vmatpush1.bf16.msra.mxu0 0
    %609 = vmatprep.subr.bf16.mxu0 0
    %610 = vmatpush1.bf16.msra.mxu0 0
    %611 = vmatprep.subr.bf16.mxu0 0
    %612 = vmatpush1.bf16.msra.mxu0 0
    %613 = vmatprep.subr.bf16.mxu0 0
    %614 = vmatpush1.bf16.msra.mxu0 0
    %615 = vmatprep.subr.bf16.mxu0 0
    %616 = vmatpush1.bf16.msra.mxu0 0
    %617 = vmatprep.subr.bf16.mxu0 0
    %618 = vmatpush1.bf16.msra.mxu0 0
    %619 = vmatprep.subr.bf16.mxu0 0
    %620 = vmatpush1.bf16.msra.mxu0 0
    %621 = vmatprep.subr.bf16.mxu0 0
    %622 = vmatpush1.bf16.msra.mxu0 0
    %623 = vmatprep.mubr.bf16.mxu0 0
    %624 = vmatmul.mubr.bf16.gmra.mrb[0].mxu0 %v226
    %v625 = vpop.f32.mrb[0].mxu0
    %v626 = vadd.f32 0.0, %v625
    %v627 = vpop.f32.mrb[0].mxu0
    %v628 = vadd.f32 0.0, %v627
    %v629 = vpop.f32.mrb[0].mxu0
    %v630 = vadd.f32 0.0, %v629
    %v631 = vpop.f32.mrb[0].mxu0
    %v632 = vadd.f32 0.0, %v631
    %633 = vdwg.mxu0
    %634 = vmatprep.subr.bf16.mxu0 %v425
    %635 = vmatpush1.bf16.msra.mxu0 %v424
    %636 = vmatprep.subr.bf16.mxu0 %v433
    %637 = vmatpush1.bf16.msra.mxu0 %v432
    %638 = vmatprep.subr.bf16.mxu0 %v441
    %639 = vmatpush1.bf16.msra.mxu0 %v440
    %640 = vmatprep.subr.bf16.mxu0 %v449
    %641 = vmatpush1.bf16.msra.mxu0 %v448
    %642 = vmatprep.subr.bf16.mxu0 %v457
    %643 = vmatpush1.bf16.msra.mxu0 %v456
    %644 = vmatprep.subr.bf16.mxu0 %v465
    %645 = vmatpush1.bf16.msra.mxu0 %v464
    %646 = vmatprep.subr.bf16.mxu0 %v473
    %647 = vmatpush1.bf16.msra.mxu0 %v472
    %648 = vmatprep.subr.bf16.mxu0 %v481
    %649 = vmatpush1.bf16.msra.mxu0 %v480
    %650 = vmatprep.subr.bf16.mxu0 0
    %651 = vmatpush1.bf16.msra.mxu0 0
    %652 = vmatprep.subr.bf16.mxu0 0
    %653 = vmatpush1.bf16.msra.mxu0 0
    %654 = vmatprep.subr.bf16.mxu0 0
    %655 = vmatpush1.bf16.msra.mxu0 0
    %656 = vmatprep.subr.bf16.mxu0 0
    %657 = vmatpush1.bf16.msra.mxu0 0
    %658 = vmatprep.subr.bf16.mxu0 0
    %659 = vmatpush1.bf16.msra.mxu0 0
    %660 = vmatprep.subr.bf16.mxu0 0
    %661 = vmatpush1.bf16.msra.mxu0 0
    %662 = vmatprep.subr.bf16.mxu0 0
    %663 = vmatpush1.bf16.msra.mxu0 0
    %664 = vmatprep.subr.bf16.mxu0 0
    %665 = vmatpush1.bf16.msra.mxu0 0
    %666 = vmatprep.mubr.bf16.mxu0 0
    %667 = vmatmul.mubr.bf16.gmra.mrb[0].mxu0 %v226
    %v668 = vpop.f32.mrb[0].mxu0
    %v669 = vadd.f32 0.0, %v668
    %v670 = vpop.f32.mrb[0].mxu0
    %v671 = vadd.f32 0.0, %v670
    %v672 = vpop.f32.mrb[0].mxu0
    %v673 = vadd.f32 0.0, %v672
    %v674 = vpop.f32.mrb[0].mxu0
    %v675 = vadd.f32 0.0, %v674
    %676 = vdwg.mxu0
    %677 = vmatprep.subr.bf16.mxu0 %v427
    %678 = vmatpush1.bf16.msra.mxu0 %v426
    %679 = vmatprep.subr.bf16.mxu0 %v435
    %680 = vmatpush1.bf16.msra.mxu0 %v434
    %681 = vmatprep.subr.bf16.mxu0 %v443
    %682 = vmatpush1.bf16.msra.mxu0 %v442
    %683 = vmatprep.subr.bf16.mxu0 %v451
    %684 = vmatpush1.bf16.msra.mxu0 %v450
    %685 = vmatprep.subr.bf16.mxu0 %v459
    %686 = vmatpush1.bf16.msra.mxu0 %v458
    %687 = vmatprep.subr.bf16.mxu0 %v467
    %688 = vmatpush1.bf16.msra.mxu0 %v466
    %689 = vmatprep.subr.bf16.mxu0 %v475
    %690 = vmatpush1.bf16.msra.mxu0 %v474
    %691 = vmatprep.subr.bf16.mxu0 %v483
    %692 = vmatpush1.bf16.msra.mxu0 %v482
    %693 = vmatprep.subr.bf16.mxu0 0
    %694 = vmatpush1.bf16.msra.mxu0 0
    %695 = vmatprep.subr.bf16.mxu0 0
    %696 = vmatpush1.bf16.msra.mxu0 0
    %697 = vmatprep.subr.bf16.mxu0 0
    %698 = vmatpush1.bf16.msra.mxu0 0
    %699 = vmatprep.subr.bf16.mxu0 0
    %700 = vmatpush1.bf16.msra.mxu0 0
    %701 = vmatprep.subr.bf16.mxu0 0
    %702 = vmatpush1.bf16.msra.mxu0 0
    %703 = vmatprep.subr.bf16.mxu0 0
    %704 = vmatpush1.bf16.msra.mxu0 0
    %705 = vmatprep.subr.bf16.mxu0 0
    %706 = vmatpush1.bf16.msra.mxu0 0
    %707 = vmatprep.subr.bf16.mxu0 0
    %708 = vmatpush1.bf16.msra.mxu0 0
    %709 = vmatprep.mubr.bf16.mxu0 0
    %710 = vmatmul.mubr.bf16.gmra.mrb[0].mxu0 %v226
    %v711 = vpop.f32.mrb[0].mxu0
    %v712 = vadd.f32 0.0, %v711
    %v713 = vpop.f32.mrb[0].mxu0
    %v714 = vadd.f32 0.0, %v713
    %v715 = vpop.f32.mrb[0].mxu0
    %v716 = vadd.f32 0.0, %v715
    %v717 = vpop.f32.mrb[0].mxu0
    %v718 = vadd.f32 0.0, %v717
    %719 = vdwg.mxu0
    %v720 = vadd.f32 %v140, %v583
    %v721 = vadd.f32 %v141, %v585
    %v722 = vadd.f32 %v142, %v626
    %v723 = vadd.f32 %v143, %v628
    %v724 = vadd.f32 %v144, %v669
    %v725 = vadd.f32 %v145, %v671
    %v726 = vadd.f32 %v146, %v712
    %v727 = vadd.f32 %v147, %v714
    %v728 = vadd.f32 %v148, %v587
    %v729 = vadd.f32 %v149, %v589
    %v730 = vadd.f32 %v150, %v630
    %v731 = vadd.f32 %v151, %v632
    %v732 = vadd.f32 %v152, %v673
    %v733 = vadd.f32 %v153, %v675
    %v734 = vadd.f32 %v154, %v716
    %v735 = vadd.f32 %v155, %v718
    %736 = vst [vmem:[#allocation2] sm:$0xff] %v720
    %737 = vst [vmem:[#allocation2 + $0x8] sm:$0xff] %v721
    %738 = vst [vmem:[#allocation2 + $0x10] sm:$0xff] %v722
    %739 = vst [vmem:[#allocation2 + $0x18] sm:$0xff] %v723
    %740 = vst [vmem:[#allocation2 + $0x20] sm:$0xff] %v724
    %741 = vst [vmem:[#allocation2 + $0x28] sm:$0xff] %v725
    %742 = vst [vmem:[#allocation2 + $0x30] sm:$0xff] %v726
    %743 = vst [vmem:[#allocation2 + $0x38] sm:$0xff] %v727
    %744 = vst [vmem:[#allocation2 + $0x40] sm:$0xff] %v728
    %745 = vst [vmem:[#allocation2 + $0x48] sm:$0xff] %v729
    %746 = vst [vmem:[#allocation2 + $0x50] sm:$0xff] %v730
    %747 = vst [vmem:[#allocation2 + $0x58] sm:$0xff] %v731
    %748 = vst [vmem:[#allocation2 + $0x60] sm:$0xff] %v732
    %749 = vst [vmem:[#allocation2 + $0x68] sm:$0xff] %v733
    %750 = vst [vmem:[#allocation2 + $0x70] sm:$0xff] %v734
    %751 = vst [vmem:[#allocation2 + $0x78] sm:$0xff] %v735
    // Predicated region
    $region62: #{tpu_custom_call.1} parent=1 // pred_check
      %p752 = pneg %p120
    $region63: #{tpu_custom_call.1} parent=1 // pred_check_branch
      %754 = sbr.rel (%p752) target = $region65
    $region64: #{tpu_custom_call.1} parent=1 // pred_region
      %v755 = vld [vmem:[#allocation2] sm:$0xff]
      %v756 = vld [vmem:[#allocation2 + $0x8] sm:$0xff]
      %v757 = vld [vmem:[#allocation2 + $0x10] sm:$0xff]
      %v758 = vld [vmem:[#allocation2 + $0x18] sm:$0xff]
      %v759 = vld [vmem:[#allocation2 + $0x20] sm:$0xff]
      %v760 = vld [vmem:[#allocation2 + $0x28] sm:$0xff]
      %v761 = vld [vmem:[#allocation2 + $0x30] sm:$0xff]
      %v762 = vld [vmem:[#allocation2 + $0x38] sm:$0xff]
      %v763 = vld [vmem:[#allocation2 + $0x40] sm:$0xff]
      %v764 = vld [vmem:[#allocation2 + $0x48] sm:$0xff]
      %v765 = vld [vmem:[#allocation2 + $0x50] sm:$0xff]
      %v766 = vld [vmem:[#allocation2 + $0x58] sm:$0xff]
      %v767 = vld [vmem:[#allocation2 + $0x60] sm:$0xff]
      %v768 = vld [vmem:[#allocation2 + $0x68] sm:$0xff]
      %v769 = vld [vmem:[#allocation2 + $0x70] sm:$0xff]
      %v770 = vld [vmem:[#allocation2 + $0x78] sm:$0xff]
      %v771 = vld [vmem:[#allocation8] sm:$0xff]
      %v773 = vlaneseq
      %v774 = vshrl.u32 %v773, 7
      %v775 = vsub.s32 0, %v774
      %v776 = vrot.slane %v771, %v775
      %v777 = vlaneseq
      %v778 = vshrl.u32 %v777, 7
      %v779 = vsub.s32 1, %v778
      %v780 = vrot.slane %v771, %v779
      %v781 = vlaneseq
      %v782 = vshrl.u32 %v781, 7
      %v783 = vsub.s32 2, %v782
      %v784 = vrot.slane %v771, %v783
      %v785 = vlaneseq
      %v786 = vshrl.u32 %v785, 7
      %v787 = vsub.s32 3, %v786
      %v788 = vrot.slane %v771, %v787
      %v789 = vlaneseq
      %v790 = vshrl.u32 %v789, 7
      %v791 = vsub.s32 4, %v790
      %v792 = vrot.slane %v771, %v791
      %v793 = vlaneseq
      %v794 = vshrl.u32 %v793, 7
      %v795 = vsub.s32 5, %v794
      %v796 = vrot.slane %v771, %v795
      %v797 = vlaneseq
      %v798 = vshrl.u32 %v797, 7
      %v799 = vsub.s32 6, %v798
      %v800 = vrot.slane %v771, %v799
      %v801 = vlaneseq
      %v802 = vshrl.u32 %v801, 7
      %v803 = vsub.s32 7, %v802
      %v804 = vrot.slane %v771, %v803
      %v813 = vadd.f32 %v755, %v776
      %v814 = vadd.f32 %v756, %v780
      %v815 = vadd.f32 %v757, %v784
      %v816 = vadd.f32 %v758, %v788
      %v817 = vadd.f32 %v759, %v792
      %v818 = vadd.f32 %v760, %v796
      %v819 = vadd.f32 %v761, %v800
      %v820 = vadd.f32 %v762, %v804
      %v821 = vadd.f32 %v763, %v776
      %v822 = vadd.f32 %v764, %v780
      %v823 = vadd.f32 %v765, %v784
      %v824 = vadd.f32 %v766, %v788
      %v825 = vadd.f32 %v767, %v792
      %v826 = vadd.f32 %v768, %v796
      %v827 = vadd.f32 %v769, %v800
      %v828 = vadd.f32 %v770, %v804
      %v829 = vmax.f32 %v813, 0.0
      %v830 = vmax.f32 %v814, 0.0
      %v831 = vmax.f32 %v815, 0.0
      %v832 = vmax.f32 %v816, 0.0
      %v833 = vmax.f32 %v817, 0.0
      %v834 = vmax.f32 %v818, 0.0
      %v835 = vmax.f32 %v819, 0.0
      %v836 = vmax.f32 %v820, 0.0
      %v837 = vmax.f32 %v821, 0.0
      %v838 = vmax.f32 %v822, 0.0
      %v839 = vmax.f32 %v823, 0.0
      %v840 = vmax.f32 %v824, 0.0
      %v841 = vmax.f32 %v825, 0.0
      %v842 = vmax.f32 %v826, 0.0
      %v843 = vmax.f32 %v827, 0.0
      %v844 = vmax.f32 %v828, 0.0
      %v845 = vpack.c.bf16 %v837, %v829
      %v846 = vpack.c.bf16 %v838, %v830
      %v847 = vpack.c.bf16 %v839, %v831
      %v848 = vpack.c.bf16 %v840, %v832
      %v849 = vpack.c.bf16 %v841, %v833
      %v850 = vpack.c.bf16 %v842, %v834
      %v851 = vpack.c.bf16 %v843, %v835
      %v852 = vpack.c.bf16 %v844, %v836
      %v853 = vld [vmem:[#allocation9] sm:$0xff]
      %v854 = vld [vmem:[#allocation9 + $0x8] sm:$0xff]
      %v855 = vld [vmem:[#allocation9 + $0x10] sm:$0xff]
      %v856 = vld [vmem:[#allocation9 + $0x18] sm:$0xff]
      %v857 = vld [vmem:[#allocation9 + $0x20] sm:$0xff]
      %v858 = vld [vmem:[#allocation9 + $0x28] sm:$0xff]
      %v859 = vld [vmem:[#allocation9 + $0x30] sm:$0xff]
      %v860 = vld [vmem:[#allocation9 + $0x38] sm:$0xff]
      %v861 = vld [vmem:[#allocation9 + $0x40] sm:$0xff]
      %v862 = vld [vmem:[#allocation9 + $0x48] sm:$0xff]
      %v863 = vld [vmem:[#allocation9 + $0x50] sm:$0xff]
      %v864 = vld [vmem:[#allocation9 + $0x58] sm:$0xff]
      %v865 = vld [vmem:[#allocation9 + $0x60] sm:$0xff]
      %v866 = vld [vmem:[#allocation9 + $0x68] sm:$0xff]
      %v867 = vld [vmem:[#allocation9 + $0x70] sm:$0xff]
      %v868 = vld [vmem:[#allocation9 + $0x78] sm:$0xff]
      %v869 = vld [vmem:[#allocation9 + $0x80] sm:$0xff]
      %v870 = vld [vmem:[#allocation9 + $0x88] sm:$0xff]
      %v871 = vld [vmem:[#allocation9 + $0x90] sm:$0xff]
      %v872 = vld [vmem:[#allocation9 + $0x98] sm:$0xff]
      %v873 = vld [vmem:[#allocation9 + $0xa0] sm:$0xff]
      %v874 = vld [vmem:[#allocation9 + $0xa8] sm:$0xff]
      %v875 = vld [vmem:[#allocation9 + $0xb0] sm:$0xff]
      %v876 = vld [vmem:[#allocation9 + $0xb8] sm:$0xff]
      %v877 = vld [vmem:[#allocation9 + $0xc0] sm:$0xff]
      %v878 = vld [vmem:[#allocation9 + $0xc8] sm:$0xff]
      %v879 = vld [vmem:[#allocation9 + $0xd0] sm:$0xff]
      %v880 = vld [vmem:[#allocation9 + $0xd8] sm:$0xff]
      %v881 = vld [vmem:[#allocation9 + $0xe0] sm:$0xff]
      %v882 = vld [vmem:[#allocation9 + $0xe8] sm:$0xff]
      %v883 = vld [vmem:[#allocation9 + $0xf0] sm:$0xff]
      %v884 = vld [vmem:[#allocation9 + $0xf8] sm:$0xff]
      %v885 = vld [vmem:[#allocation9 + $0x100] sm:$0xff]
      %v886 = vld [vmem:[#allocation9 + $0x108] sm:$0xff]
      %v887 = vld [vmem:[#allocation9 + $0x110] sm:$0xff]
      %v888 = vld [vmem:[#allocation9 + $0x118] sm:$0xff]
      %v889 = vld [vmem:[#allocation9 + $0x120] sm:$0xff]
      %v890 = vld [vmem:[#allocation9 + $0x128] sm:$0xff]
      %v891 = vld [vmem:[#allocation9 + $0x130] sm:$0xff]
      %v892 = vld [vmem:[#allocation9 + $0x138] sm:$0xff]
      %v893 = vld [vmem:[#allocation9 + $0x140] sm:$0xff]
      %v894 = vld [vmem:[#allocation9 + $0x148] sm:$0xff]
      %v895 = vld [vmem:[#allocation9 + $0x150] sm:$0xff]
      %v896 = vld [vmem:[#allocation9 + $0x158] sm:$0xff]
      %v897 = vld [vmem:[#allocation9 + $0x160] sm:$0xff]
      %v898 = vld [vmem:[#allocation9 + $0x168] sm:$0xff]
      %v899 = vld [vmem:[#allocation9 + $0x170] sm:$0xff]
      %v900 = vld [vmem:[#allocation9 + $0x178] sm:$0xff]
      %v901 = vld [vmem:[#allocation9 + $0x180] sm:$0xff]
      %v902 = vld [vmem:[#allocation9 + $0x188] sm:$0xff]
      %v903 = vld [vmem:[#allocation9 + $0x190] sm:$0xff]
      %v904 = vld [vmem:[#allocation9 + $0x198] sm:$0xff]
      %v905 = vld [vmem:[#allocation9 + $0x1a0] sm:$0xff]
      %v906 = vld [vmem:[#allocation9 + $0x1a8] sm:$0xff]
      %v907 = vld [vmem:[#allocation9 + $0x1b0] sm:$0xff]
      %v908 = vld [vmem:[#allocation9 + $0x1b8] sm:$0xff]
      %v909 = vld [vmem:[#allocation9 + $0x1c0] sm:$0xff]
      %v910 = vld [vmem:[#allocation9 + $0x1c8] sm:$0xff]
      %v911 = vld [vmem:[#allocation9 + $0x1d0] sm:$0xff]
      %v912 = vld [vmem:[#allocation9 + $0x1d8] sm:$0xff]
      %v913 = vld [vmem:[#allocation9 + $0x1e0] sm:$0xff]
      %v914 = vld [vmem:[#allocation9 + $0x1e8] sm:$0xff]
      %v915 = vld [vmem:[#allocation9 + $0x1f0] sm:$0xff]
      %v916 = vld [vmem:[#allocation9 + $0x1f8] sm:$0xff]
      %v917 = vld [vmem:[#allocation9 + $0x200] sm:$0xff]
      %v918 = vld [vmem:[#allocation9 + $0x208] sm:$0xff]
      %v919 = vld [vmem:[#allocation9 + $0x210] sm:$0xff]
      %v920 = vld [vmem:[#allocation9 + $0x218] sm:$0xff]
      %v921 = vld [vmem:[#allocation9 + $0x220] sm:$0xff]
      %v922 = vld [vmem:[#allocation9 + $0x228] sm:$0xff]
      %v923 = vld [vmem:[#allocation9 + $0x230] sm:$0xff]
      %v924 = vld [vmem:[#allocation9 + $0x238] sm:$0xff]
      %v925 = vld [vmem:[#allocation9 + $0x240] sm:$0xff]
      %v926 = vld [vmem:[#allocation9 + $0x248] sm:$0xff]
      %v927 = vld [vmem:[#allocation9 + $0x250] sm:$0xff]
      %v928 = vld [vmem:[#allocation9 + $0x258] sm:$0xff]
      %v929 = vld [vmem:[#allocation9 + $0x260] sm:$0xff]
      %v930 = vld [vmem:[#allocation9 + $0x268] sm:$0xff]
      %v931 = vld [vmem:[#allocation9 + $0x270] sm:$0xff]
      %v932 = vld [vmem:[#allocation9 + $0x278] sm:$0xff]
      %v933 = vld [vmem:[#allocation9 + $0x280] sm:$0xff]
      %v934 = vld [vmem:[#allocation9 + $0x288] sm:$0xff]
      %v935 = vld [vmem:[#allocation9 + $0x290] sm:$0xff]
      %v936 = vld [vmem:[#allocation9 + $0x298] sm:$0xff]
      %v937 = vld [vmem:[#allocation9 + $0x2a0] sm:$0xff]
      %v938 = vld [vmem:[#allocation9 + $0x2a8] sm:$0xff]
      %v939 = vld [vmem:[#allocation9 + $0x2b0] sm:$0xff]
      %v940 = vld [vmem:[#allocation9 + $0x2b8] sm:$0xff]
      %v941 = vld [vmem:[#allocation9 + $0x2c0] sm:$0xff]
      %v942 = vld [vmem:[#allocation9 + $0x2c8] sm:$0xff]
      %v943 = vld [vmem:[#allocation9 + $0x2d0] sm:$0xff]
      %v944 = vld [vmem:[#allocation9 + $0x2d8] sm:$0xff]
      %v945 = vld [vmem:[#allocation9 + $0x2e0] sm:$0xff]
      %v946 = vld [vmem:[#allocation9 + $0x2e8] sm:$0xff]
      %v947 = vld [vmem:[#allocation9 + $0x2f0] sm:$0xff]
      %v948 = vld [vmem:[#allocation9 + $0x2f8] sm:$0xff]
      %v949 = vld [vmem:[#allocation9 + $0x300] sm:$0xff]
      %v950 = vld [vmem:[#allocation9 + $0x308] sm:$0xff]
      %v951 = vld [vmem:[#allocation9 + $0x310] sm:$0xff]
      %v952 = vld [vmem:[#allocation9 + $0x318] sm:$0xff]
      %v953 = vld [vmem:[#allocation9 + $0x320] sm:$0xff]
      %v954 = vld [vmem:[#allocation9 + $0x328] sm:$0xff]
      %v955 = vld [vmem:[#allocation9 + $0x330] sm:$0xff]
      %v956 = vld [vmem:[#allocation9 + $0x338] sm:$0xff]
      %v957 = vld [vmem:[#allocation9 + $0x340] sm:$0xff]
      %v958 = vld [vmem:[#allocation9 + $0x348] sm:$0xff]
      %v959 = vld [vmem:[#allocation9 + $0x350] sm:$0xff]
      %v960 = vld [vmem:[#allocation9 + $0x358] sm:$0xff]
      %v961 = vld [vmem:[#allocation9 + $0x360] sm:$0xff]
      %v962 = vld [vmem:[#allocation9 + $0x368] sm:$0xff]
      %v963 = vld [vmem:[#allocation9 + $0x370] sm:$0xff]
      %v964 = vld [vmem:[#allocation9 + $0x378] sm:$0xff]
      %v965 = vld [vmem:[#allocation9 + $0x380] sm:$0xff]
      %v966 = vld [vmem:[#allocation9 + $0x388] sm:$0xff]
      %v967 = vld [vmem:[#allocation9 + $0x390] sm:$0xff]
      %v968 = vld [vmem:[#allocation9 + $0x398] sm:$0xff]
      %v969 = vld [vmem:[#allocation9 + $0x3a0] sm:$0xff]
      %v970 = vld [vmem:[#allocation9 + $0x3a8] sm:$0xff]
      %v971 = vld [vmem:[#allocation9 + $0x3b0] sm:$0xff]
      %v972 = vld [vmem:[#allocation9 + $0x3b8] sm:$0xff]
      %v973 = vld [vmem:[#allocation9 + $0x3c0] sm:$0xff]
      %v974 = vld [vmem:[#allocation9 + $0x3c8] sm:$0xff]
      %v975 = vld [vmem:[#allocation9 + $0x3d0] sm:$0xff]
      %v976 = vld [vmem:[#allocation9 + $0x3d8] sm:$0xff]
      %v977 = vld [vmem:[#allocation9 + $0x3e0] sm:$0xff]
      %v978 = vld [vmem:[#allocation9 + $0x3e8] sm:$0xff]
      %v979 = vld [vmem:[#allocation9 + $0x3f0] sm:$0xff]
      %v980 = vld [vmem:[#allocation9 + $0x3f8] sm:$0xff]
      %v981 = vld [vmem:[#allocation9 + $0x400] sm:$0xff]
      %v982 = vld [vmem:[#allocation9 + $0x408] sm:$0xff]
      %v983 = vld [vmem:[#allocation9 + $0x410] sm:$0xff]
      %v984 = vld [vmem:[#allocation9 + $0x418] sm:$0xff]
      %v985 = vld [vmem:[#allocation9 + $0x420] sm:$0xff]
      %v986 = vld [vmem:[#allocation9 + $0x428] sm:$0xff]
      %v987 = vld [vmem:[#allocation9 + $0x430] sm:$0xff]
      %v988 = vld [vmem:[#allocation9 + $0x438] sm:$0xff]
      %v989 = vld [vmem:[#allocation9 + $0x440] sm:$0xff]
      %v990 = vld [vmem:[#allocation9 + $0x448] sm:$0xff]
      %v991 = vld [vmem:[#allocation9 + $0x450] sm:$0xff]
      %v992 = vld [vmem:[#allocation9 + $0x458] sm:$0xff]
      %v993 = vld [vmem:[#allocation9 + $0x460] sm:$0xff]
      %v994 = vld [vmem:[#allocation9 + $0x468] sm:$0xff]
      %v995 = vld [vmem:[#allocation9 + $0x470] sm:$0xff]
      %v996 = vld [vmem:[#allocation9 + $0x478] sm:$0xff]
      %v997 = vld [vmem:[#allocation9 + $0x480] sm:$0xff]
      %v998 = vld [vmem:[#allocation9 + $0x488] sm:$0xff]
      %v999 = vld [vmem:[#allocation9 + $0x490] sm:$0xff]
      %v1000 = vld [vmem:[#allocation9 + $0x498] sm:$0xff]
      %v1001 = vld [vmem:[#allocation9 + $0x4a0] sm:$0xff]
      %v1002 = vld [vmem:[#allocation9 + $0x4a8] sm:$0xff]
      %v1003 = vld [vmem:[#allocation9 + $0x4b0] sm:$0xff]
      %v1004 = vld [vmem:[#allocation9 + $0x4b8] sm:$0xff]
      %v1005 = vld [vmem:[#allocation9 + $0x4c0] sm:$0xff]
      %v1006 = vld [vmem:[#allocation9 + $0x4c8] sm:$0xff]
      %v1007 = vld [vmem:[#allocation9 + $0x4d0] sm:$0xff]
      %v1008 = vld [vmem:[#allocation9 + $0x4d8] sm:$0xff]
      %v1009 = vld [vmem:[#allocation9 + $0x4e0] sm:$0xff]
      %v1010 = vld [vmem:[#allocation9 + $0x4e8] sm:$0xff]
      %v1011 = vld [vmem:[#allocation9 + $0x4f0] sm:$0xff]
      %v1012 = vld [vmem:[#allocation9 + $0x4f8] sm:$0xff]
      %v1013 = vld [vmem:[#allocation9 + $0x500] sm:$0xff]
      %v1014 = vld [vmem:[#allocation9 + $0x508] sm:$0xff]
      %v1015 = vld [vmem:[#allocation9 + $0x510] sm:$0xff]
      %v1016 = vld [vmem:[#allocation9 + $0x518] sm:$0xff]
      %v1017 = vld [vmem:[#allocation9 + $0x520] sm:$0xff]
      %v1018 = vld [vmem:[#allocation9 + $0x528] sm:$0xff]
      %v1019 = vld [vmem:[#allocation9 + $0x530] sm:$0xff]
      %v1020 = vld [vmem:[#allocation9 + $0x538] sm:$0xff]
      %v1021 = vld [vmem:[#allocation9 + $0x540] sm:$0xff]
      %v1022 = vld [vmem:[#allocation9 + $0x548] sm:$0xff]
      %v1023 = vld [vmem:[#allocation9 + $0x550] sm:$0xff]
      %v1024 = vld [vmem:[#allocation9 + $0x558] sm:$0xff]
      %v1025 = vld [vmem:[#allocation9 + $0x560] sm:$0xff]
      %v1026 = vld [vmem:[#allocation9 + $0x568] sm:$0xff]
      %v1027 = vld [vmem:[#allocation9 + $0x570] sm:$0xff]
      %v1028 = vld [vmem:[#allocation9 + $0x578] sm:$0xff]
      %v1029 = vld [vmem:[#allocation9 + $0x580] sm:$0xff]
      %v1030 = vld [vmem:[#allocation9 + $0x588] sm:$0xff]
      %v1031 = vld [vmem:[#allocation9 + $0x590] sm:$0xff]
      %v1032 = vld [vmem:[#allocation9 + $0x598] sm:$0xff]
      %v1033 = vld [vmem:[#allocation9 + $0x5a0] sm:$0xff]
      %v1034 = vld [vmem:[#allocation9 + $0x5a8] sm:$0xff]
      %v1035 = vld [vmem:[#allocation9 + $0x5b0] sm:$0xff]
      %v1036 = vld [vmem:[#allocation9 + $0x5b8] sm:$0xff]
      %v1037 = vld [vmem:[#allocation9 + $0x5c0] sm:$0xff]
      %v1038 = vld [vmem:[#allocation9 + $0x5c8] sm:$0xff]
      %v1039 = vld [vmem:[#allocation9 + $0x5d0] sm:$0xff]
      %v1040 = vld [vmem:[#allocation9 + $0x5d8] sm:$0xff]
      %v1041 = vld [vmem:[#allocation9 + $0x5e0] sm:$0xff]
      %v1042 = vld [vmem:[#allocation9 + $0x5e8] sm:$0xff]
      %v1043 = vld [vmem:[#allocation9 + $0x5f0] sm:$0xff]
      %v1044 = vld [vmem:[#allocation9 + $0x5f8] sm:$0xff]
      %v1045 = vld [vmem:[#allocation9 + $0x600] sm:$0xff]
      %v1046 = vld [vmem:[#allocation9 + $0x608] sm:$0xff]
      %v1047 = vld [vmem:[#allocation9 + $0x610] sm:$0xff]
      %v1048 = vld [vmem:[#allocation9 + $0x618] sm:$0xff]
      %v1049 = vld [vmem:[#allocation9 + $0x620] sm:$0xff]
      %v1050 = vld [vmem:[#allocation9 + $0x628] sm:$0xff]
      %v1051 = vld [vmem:[#allocation9 + $0x630] sm:$0xff]
      %v1052 = vld [vmem:[#allocation9 + $0x638] sm:$0xff]
      %v1053 = vld [vmem:[#allocation9 + $0x640] sm:$0xff]
      %v1054 = vld [vmem:[#allocation9 + $0x648] sm:$0xff]
      %v1055 = vld [vmem:[#allocation9 + $0x650] sm:$0xff]
      %v1056 = vld [vmem:[#allocation9 + $0x658] sm:$0xff]
      %v1057 = vld [vmem:[#allocation9 + $0x660] sm:$0xff]
      %v1058 = vld [vmem:[#allocation9 + $0x668] sm:$0xff]
      %v1059 = vld [vmem:[#allocation9 + $0x670] sm:$0xff]
      %v1060 = vld [vmem:[#allocation9 + $0x678] sm:$0xff]
      %v1061 = vld [vmem:[#allocation9 + $0x680] sm:$0xff]
      %v1062 = vld [vmem:[#allocation9 + $0x688] sm:$0xff]
      %v1063 = vld [vmem:[#allocation9 + $0x690] sm:$0xff]
      %v1064 = vld [vmem:[#allocation9 + $0x698] sm:$0xff]
      %v1065 = vld [vmem:[#allocation9 + $0x6a0] sm:$0xff]
      %v1066 = vld [vmem:[#allocation9 + $0x6a8] sm:$0xff]
      %v1067 = vld [vmem:[#allocation9 + $0x6b0] sm:$0xff]
      %v1068 = vld [vmem:[#allocation9 + $0x6b8] sm:$0xff]
      %v1069 = vld [vmem:[#allocation9 + $0x6c0] sm:$0xff]
      %v1070 = vld [vmem:[#allocation9 + $0x6c8] sm:$0xff]
      %v1071 = vld [vmem:[#allocation9 + $0x6d0] sm:$0xff]
      %v1072 = vld [vmem:[#allocation9 + $0x6d8] sm:$0xff]
      %v1073 = vld [vmem:[#allocation9 + $0x6e0] sm:$0xff]
      %v1074 = vld [vmem:[#allocation9 + $0x6e8] sm:$0xff]
      %v1075 = vld [vmem:[#allocation9 + $0x6f0] sm:$0xff]
      %v1076 = vld [vmem:[#allocation9 + $0x6f8] sm:$0xff]
      %v1077 = vld [vmem:[#allocation9 + $0x700] sm:$0xff]
      %v1078 = vld [vmem:[#allocation9 + $0x708] sm:$0xff]
      %v1079 = vld [vmem:[#allocation9 + $0x710] sm:$0xff]
      %v1080 = vld [vmem:[#allocation9 + $0x718] sm:$0xff]
      %v1081 = vld [vmem:[#allocation9 + $0x720] sm:$0xff]
      %v1082 = vld [vmem:[#allocation9 + $0x728] sm:$0xff]
      %v1083 = vld [vmem:[#allocation9 + $0x730] sm:$0xff]
      %v1084 = vld [vmem:[#allocation9 + $0x738] sm:$0xff]
      %v1085 = vld [vmem:[#allocation9 + $0x740] sm:$0xff]
      %v1086 = vld [vmem:[#allocation9 + $0x748] sm:$0xff]
      %v1087 = vld [vmem:[#allocation9 + $0x750] sm:$0xff]
      %v1088 = vld [vmem:[#allocation9 + $0x758] sm:$0xff]
      %v1089 = vld [vmem:[#allocation9 + $0x760] sm:$0xff]
      %v1090 = vld [vmem:[#allocation9 + $0x768] sm:$0xff]
      %v1091 = vld [vmem:[#allocation9 + $0x770] sm:$0xff]
      %v1092 = vld [vmem:[#allocation9 + $0x778] sm:$0xff]
      %v1093 = vld [vmem:[#allocation9 + $0x780] sm:$0xff]
      %v1094 = vld [vmem:[#allocation9 + $0x788] sm:$0xff]
      %v1095 = vld [vmem:[#allocation9 + $0x790] sm:$0xff]
      %v1096 = vld [vmem:[#allocation9 + $0x798] sm:$0xff]
      %v1097 = vld [vmem:[#allocation9 + $0x7a0] sm:$0xff]
      %v1098 = vld [vmem:[#allocation9 + $0x7a8] sm:$0xff]
      %v1099 = vld [vmem:[#allocation9 + $0x7b0] sm:$0xff]
      %v1100 = vld [vmem:[#allocation9 + $0x7b8] sm:$0xff]
      %v1101 = vld [vmem:[#allocation9 + $0x7c0] sm:$0xff]
      %v1102 = vld [vmem:[#allocation9 + $0x7c8] sm:$0xff]
      %v1103 = vld [vmem:[#allocation9 + $0x7d0] sm:$0xff]
      %v1104 = vld [vmem:[#allocation9 + $0x7d8] sm:$0xff]
      %v1105 = vld [vmem:[#allocation9 + $0x7e0] sm:$0xff]
      %v1106 = vld [vmem:[#allocation9 + $0x7e8] sm:$0xff]
      %v1107 = vld [vmem:[#allocation9 + $0x7f0] sm:$0xff]
      %v1108 = vld [vmem:[#allocation9 + $0x7f8] sm:$0xff]
      %v1109 = vld [vmem:[#allocation9 + $0x800] sm:$0xff]
      %v1110 = vld [vmem:[#allocation9 + $0x808] sm:$0xff]
      %v1111 = vld [vmem:[#allocation9 + $0x810] sm:$0xff]
      %v1112 = vld [vmem:[#allocation9 + $0x818] sm:$0xff]
      %v1113 = vld [vmem:[#allocation9 + $0x820] sm:$0xff]
      %v1114 = vld [vmem:[#allocation9 + $0x828] sm:$0xff]
      %v1115 = vld [vmem:[#allocation9 + $0x830] sm:$0xff]
      %v1116 = vld [vmem:[#allocation9 + $0x838] sm:$0xff]
      %v1117 = vld [vmem:[#allocation9 + $0x840] sm:$0xff]
      %v1118 = vld [vmem:[#allocation9 + $0x848] sm:$0xff]
      %v1119 = vld [vmem:[#allocation9 + $0x850] sm:$0xff]
      %v1120 = vld [vmem:[#allocation9 + $0x858] sm:$0xff]
      %v1121 = vld [vmem:[#allocation9 + $0x860] sm:$0xff]
      %v1122 = vld [vmem:[#allocation9 + $0x868] sm:$0xff]
      %v1123 = vld [vmem:[#allocation9 + $0x870] sm:$0xff]
      %v1124 = vld [vmem:[#allocation9 + $0x878] sm:$0xff]
      %v1125 = vld [vmem:[#allocation9 + $0x880] sm:$0xff]
      %v1126 = vld [vmem:[#allocation9 + $0x888] sm:$0xff]
      %v1127 = vld [vmem:[#allocation9 + $0x890] sm:$0xff]
      %v1128 = vld [vmem:[#allocation9 + $0x898] sm:$0xff]
      %v1129 = vld [vmem:[#allocation9 + $0x8a0] sm:$0xff]
      %v1130 = vld [vmem:[#allocation9 + $0x8a8] sm:$0xff]
      %v1131 = vld [vmem:[#allocation9 + $0x8b0] sm:$0xff]
      %v1132 = vld [vmem:[#allocation9 + $0x8b8] sm:$0xff]
      %v1133 = vld [vmem:[#allocation9 + $0x8c0] sm:$0xff]
      %v1134 = vld [vmem:[#allocation9 + $0x8c8] sm:$0xff]
      %v1135 = vld [vmem:[#allocation9 + $0x8d0] sm:$0xff]
      %v1136 = vld [vmem:[#allocation9 + $0x8d8] sm:$0xff]
      %v1137 = vld [vmem:[#allocation9 + $0x8e0] sm:$0xff]
      %v1138 = vld [vmem:[#allocation9 + $0x8e8] sm:$0xff]
      %v1139 = vld [vmem:[#allocation9 + $0x8f0] sm:$0xff]
      %v1140 = vld [vmem:[#allocation9 + $0x8f8] sm:$0xff]
      %v1141 = vld [vmem:[#allocation9 + $0x900] sm:$0xff]
      %v1142 = vld [vmem:[#allocation9 + $0x908] sm:$0xff]
      %v1143 = vld [vmem:[#allocation9 + $0x910] sm:$0xff]
      %v1144 = vld [vmem:[#allocation9 + $0x918] sm:$0xff]
      %v1145 = vld [vmem:[#allocation9 + $0x920] sm:$0xff]
      %v1146 = vld [vmem:[#allocation9 + $0x928] sm:$0xff]
      %v1147 = vld [vmem:[#allocation9 + $0x930] sm:$0xff]
      %v1148 = vld [vmem:[#allocation9 + $0x938] sm:$0xff]
      %v1149 = vld [vmem:[#allocation9 + $0x940] sm:$0xff]
      %v1150 = vld [vmem:[#allocation9 + $0x948] sm:$0xff]
      %v1151 = vld [vmem:[#allocation9 + $0x950] sm:$0xff]
      %v1152 = vld [vmem:[#allocation9 + $0x958] sm:$0xff]
      %v1153 = vld [vmem:[#allocation9 + $0x960] sm:$0xff]
      %v1154 = vld [vmem:[#allocation9 + $0x968] sm:$0xff]
      %v1155 = vld [vmem:[#allocation9 + $0x970] sm:$0xff]
      %v1156 = vld [vmem:[#allocation9 + $0x978] sm:$0xff]
      %v1157 = vld [vmem:[#allocation9 + $0x980] sm:$0xff]
      %v1158 = vld [vmem:[#allocation9 + $0x988] sm:$0xff]
      %v1159 = vld [vmem:[#allocation9 + $0x990] sm:$0xff]
      %v1160 = vld [vmem:[#allocation9 + $0x998] sm:$0xff]
      %v1161 = vld [vmem:[#allocation9 + $0x9a0] sm:$0xff]
      %v1162 = vld [vmem:[#allocation9 + $0x9a8] sm:$0xff]
      %v1163 = vld [vmem:[#allocation9 + $0x9b0] sm:$0xff]
      %v1164 = vld [vmem:[#allocation9 + $0x9b8] sm:$0xff]
      %v1165 = vld [vmem:[#allocation9 + $0x9c0] sm:$0xff]
      %v1166 = vld [vmem:[#allocation9 + $0x9c8] sm:$0xff]
      %v1167 = vld [vmem:[#allocation9 + $0x9d0] sm:$0xff]
      %v1168 = vld [vmem:[#allocation9 + $0x9d8] sm:$0xff]
      %v1169 = vld [vmem:[#allocation9 + $0x9e0] sm:$0xff]
      %v1170 = vld [vmem:[#allocation9 + $0x9e8] sm:$0xff]
      %v1171 = vld [vmem:[#allocation9 + $0x9f0] sm:$0xff]
      %v1172 = vld [vmem:[#allocation9 + $0x9f8] sm:$0xff]
      %v1173 = vld [vmem:[#allocation9 + $0xa00] sm:$0xff]
      %v1174 = vld [vmem:[#allocation9 + $0xa08] sm:$0xff]
      %v1175 = vld [vmem:[#allocation9 + $0xa10] sm:$0xff]
      %v1176 = vld [vmem:[#allocation9 + $0xa18] sm:$0xff]
      %v1177 = vld [vmem:[#allocation9 + $0xa20] sm:$0xff]
      %v1178 = vld [vmem:[#allocation9 + $0xa28] sm:$0xff]
      %v1179 = vld [vmem:[#allocation9 + $0xa30] sm:$0xff]
      %v1180 = vld [vmem:[#allocation9 + $0xa38] sm:$0xff]
      %v1181 = vld [vmem:[#allocation9 + $0xa40] sm:$0xff]
      %v1182 = vld [vmem:[#allocation9 + $0xa48] sm:$0xff]
      %v1183 = vld [vmem:[#allocation9 + $0xa50] sm:$0xff]
      %v1184 = vld [vmem:[#allocation9 + $0xa58] sm:$0xff]
      %v1185 = vld [vmem:[#allocation9 + $0xa60] sm:$0xff]
      %v1186 = vld [vmem:[#allocation9 + $0xa68] sm:$0xff]
      %v1187 = vld [vmem:[#allocation9 + $0xa70] sm:$0xff]
      %v1188 = vld [vmem:[#allocation9 + $0xa78] sm:$0xff]
      %v1189 = vld [vmem:[#allocation9 + $0xa80] sm:$0xff]
      %v1190 = vld [vmem:[#allocation9 + $0xa88] sm:$0xff]
      %v1191 = vld [vmem:[#allocation9 + $0xa90] sm:$0xff]
      %v1192 = vld [vmem:[#allocation9 + $0xa98] sm:$0xff]
      %v1193 = vld [vmem:[#allocation9 + $0xaa0] sm:$0xff]
      %v1194 = vld [vmem:[#allocation9 + $0xaa8] sm:$0xff]
      %v1195 = vld [vmem:[#allocation9 + $0xab0] sm:$0xff]
      %v1196 = vld [vmem:[#allocation9 + $0xab8] sm:$0xff]
      %v1197 = vld [vmem:[#allocation9 + $0xac0] sm:$0xff]
      %v1198 = vld [vmem:[#allocation9 + $0xac8] sm:$0xff]
      %v1199 = vld [vmem:[#allocation9 + $0xad0] sm:$0xff]
      %v1200 = vld [vmem:[#allocation9 + $0xad8] sm:$0xff]
      %v1201 = vld [vmem:[#allocation9 + $0xae0] sm:$0xff]
      %v1202 = vld [vmem:[#allocation9 + $0xae8] sm:$0xff]
      %v1203 = vld [vmem:[#allocation9 + $0xaf0] sm:$0xff]
      %v1204 = vld [vmem:[#allocation9 + $0xaf8] sm:$0xff]
      %v1205 = vld [vmem:[#allocation9 + $0xb00] sm:$0xff]
      %v1206 = vld [vmem:[#allocation9 + $0xb08] sm:$0xff]
      %v1207 = vld [vmem:[#allocation9 + $0xb10] sm:$0xff]
      %v1208 = vld [vmem:[#allocation9 + $0xb18] sm:$0xff]
      %v1209 = vld [vmem:[#allocation9 + $0xb20] sm:$0xff]
      %v1210 = vld [vmem:[#allocation9 + $0xb28] sm:$0xff]
      %v1211 = vld [vmem:[#allocation9 + $0xb30] sm:$0xff]
      %v1212 = vld [vmem:[#allocation9 + $0xb38] sm:$0xff]
      %v1213 = vld [vmem:[#allocation9 + $0xb40] sm:$0xff]
      %v1214 = vld [vmem:[#allocation9 + $0xb48] sm:$0xff]
      %v1215 = vld [vmem:[#allocation9 + $0xb50] sm:$0xff]
      %v1216 = vld [vmem:[#allocation9 + $0xb58] sm:$0xff]
      %v1217 = vld [vmem:[#allocation9 + $0xb60] sm:$0xff]
      %v1218 = vld [vmem:[#allocation9 + $0xb68] sm:$0xff]
      %v1219 = vld [vmem:[#allocation9 + $0xb70] sm:$0xff]
      %v1220 = vld [vmem:[#allocation9 + $0xb78] sm:$0xff]
      %v1221 = vld [vmem:[#allocation9 + $0xb80] sm:$0xff]
      %v1222 = vld [vmem:[#allocation9 + $0xb88] sm:$0xff]
      %v1223 = vld [vmem:[#allocation9 + $0xb90] sm:$0xff]
      %v1224 = vld [vmem:[#allocation9 + $0xb98] sm:$0xff]
      %v1225 = vld [vmem:[#allocation9 + $0xba0] sm:$0xff]
      %v1226 = vld [vmem:[#allocation9 + $0xba8] sm:$0xff]
      %v1227 = vld [vmem:[#allocation9 + $0xbb0] sm:$0xff]
      %v1228 = vld [vmem:[#allocation9 + $0xbb8] sm:$0xff]
      %v1229 = vld [vmem:[#allocation9 + $0xbc0] sm:$0xff]
      %v1230 = vld [vmem:[#allocation9 + $0xbc8] sm:$0xff]
      %v1231 = vld [vmem:[#allocation9 + $0xbd0] sm:$0xff]
      %v1232 = vld [vmem:[#allocation9 + $0xbd8] sm:$0xff]
      %v1233 = vld [vmem:[#allocation9 + $0xbe0] sm:$0xff]
      %v1234 = vld [vmem:[#allocation9 + $0xbe8] sm:$0xff]
      %v1235 = vld [vmem:[#allocation9 + $0xbf0] sm:$0xff]
      %v1236 = vld [vmem:[#allocation9 + $0xbf8] sm:$0xff]
      %v1237 = vld [vmem:[#allocation9 + $0xc00] sm:$0xff]
      %v1238 = vld [vmem:[#allocation9 + $0xc08] sm:$0xff]
      %v1239 = vld [vmem:[#allocation9 + $0xc10] sm:$0xff]
      %v1240 = vld [vmem:[#allocation9 + $0xc18] sm:$0xff]
      %v1241 = vld [vmem:[#allocation9 + $0xc20] sm:$0xff]
      %v1242 = vld [vmem:[#allocation9 + $0xc28] sm:$0xff]
      %v1243 = vld [vmem:[#allocation9 + $0xc30] sm:$0xff]
      %v1244 = vld [vmem:[#allocation9 + $0xc38] sm:$0xff]
      %v1245 = vld [vmem:[#allocation9 + $0xc40] sm:$0xff]
      %v1246 = vld [vmem:[#allocation9 + $0xc48] sm:$0xff]
      %v1247 = vld [vmem:[#allocation9 + $0xc50] sm:$0xff]
      %v1248 = vld [vmem:[#allocation9 + $0xc58] sm:$0xff]
      %v1249 = vld [vmem:[#allocation9 + $0xc60] sm:$0xff]
      %v1250 = vld [vmem:[#allocation9 + $0xc68] sm:$0xff]
      %v1251 = vld [vmem:[#allocation9 + $0xc70] sm:$0xff]
      %v1252 = vld [vmem:[#allocation9 + $0xc78] sm:$0xff]
      %v1253 = vld [vmem:[#allocation9 + $0xc80] sm:$0xff]
      %v1254 = vld [vmem:[#allocation9 + $0xc88] sm:$0xff]
      %v1255 = vld [vmem:[#allocation9 + $0xc90] sm:$0xff]
      %v1256 = vld [vmem:[#allocation9 + $0xc98] sm:$0xff]
      %v1257 = vld [vmem:[#allocation9 + $0xca0] sm:$0xff]
      %v1258 = vld [vmem:[#allocation9 + $0xca8] sm:$0xff]
      %v1259 = vld [vmem:[#allocation9 + $0xcb0] sm:$0xff]
      %v1260 = vld [vmem:[#allocation9 + $0xcb8] sm:$0xff]
      %v1261 = vld [vmem:[#allocation9 + $0xcc0] sm:$0xff]
      %v1262 = vld [vmem:[#allocation9 + $0xcc8] sm:$0xff]
      %v1263 = vld [vmem:[#allocation9 + $0xcd0] sm:$0xff]
      %v1264 = vld [vmem:[#allocation9 + $0xcd8] sm:$0xff]
      %v1265 = vld [vmem:[#allocation9 + $0xce0] sm:$0xff]
      %v1266 = vld [vmem:[#allocation9 + $0xce8] sm:$0xff]
      %v1267 = vld [vmem:[#allocation9 + $0xcf0] sm:$0xff]
      %v1268 = vld [vmem:[#allocation9 + $0xcf8] sm:$0xff]
      %v1269 = vld [vmem:[#allocation9 + $0xd00] sm:$0xff]
      %v1270 = vld [vmem:[#allocation9 + $0xd08] sm:$0xff]
      %v1271 = vld [vmem:[#allocation9 + $0xd10] sm:$0xff]
      %v1272 = vld [vmem:[#allocation9 + $0xd18] sm:$0xff]
      %v1273 = vld [vmem:[#allocation9 + $0xd20] sm:$0xff]
      %v1274 = vld [vmem:[#allocation9 + $0xd28] sm:$0xff]
      %v1275 = vld [vmem:[#allocation9 + $0xd30] sm:$0xff]
      %v1276 = vld [vmem:[#allocation9 + $0xd38] sm:$0xff]
      %v1277 = vld [vmem:[#allocation9 + $0xd40] sm:$0xff]
      %v1278 = vld [vmem:[#allocation9 + $0xd48] sm:$0xff]
      %v1279 = vld [vmem:[#allocation9 + $0xd50] sm:$0xff]
      %v1280 = vld [vmem:[#allocation9 + $0xd58] sm:$0xff]
      %v1281 = vld [vmem:[#allocation9 + $0xd60] sm:$0xff]
      %v1282 = vld [vmem:[#allocation9 + $0xd68] sm:$0xff]
      %v1283 = vld [vmem:[#allocation9 + $0xd70] sm:$0xff]
      %v1284 = vld [vmem:[#allocation9 + $0xd78] sm:$0xff]
      %v1285 = vld [vmem:[#allocation9 + $0xd80] sm:$0xff]
      %v1286 = vld [vmem:[#allocation9 + $0xd88] sm:$0xff]
      %v1287 = vld [vmem:[#allocation9 + $0xd90] sm:$0xff]
      %v1288 = vld [vmem:[#allocation9 + $0xd98] sm:$0xff]
      %v1289 = vld [vmem:[#allocation9 + $0xda0] sm:$0xff]
      %v1290 = vld [vmem:[#allocation9 + $0xda8] sm:$0xff]
      %v1291 = vld [vmem:[#allocation9 + $0xdb0] sm:$0xff]
      %v1292 = vld [vmem:[#allocation9 + $0xdb8] sm:$0xff]
      %v1293 = vld [vmem:[#allocation9 + $0xdc0] sm:$0xff]
      %v1294 = vld [vmem:[#allocation9 + $0xdc8] sm:$0xff]
      %v1295 = vld [vmem:[#allocation9 + $0xdd0] sm:$0xff]
      %v1296 = vld [vmem:[#allocation9 + $0xdd8] sm:$0xff]
      %v1297 = vld [vmem:[#allocation9 + $0xde0] sm:$0xff]
      %v1298 = vld [vmem:[#allocation9 + $0xde8] sm:$0xff]
      %v1299 = vld [vmem:[#allocation9 + $0xdf0] sm:$0xff]
      %v1300 = vld [vmem:[#allocation9 + $0xdf8] sm:$0xff]
      %v1301 = vld [vmem:[#allocation9 + $0xe00] sm:$0xff]
      %v1302 = vld [vmem:[#allocation9 + $0xe08] sm:$0xff]
      %v1303 = vld [vmem:[#allocation9 + $0xe10] sm:$0xff]
      %v1304 = vld [vmem:[#allocation9 + $0xe18] sm:$0xff]
      %v1305 = vld [vmem:[#allocation9 + $0xe20] sm:$0xff]
      %v1306 = vld [vmem:[#allocation9 + $0xe28] sm:$0xff]
      %v1307 = vld [vmem:[#allocation9 + $0xe30] sm:$0xff]
      %v1308 = vld [vmem:[#allocation9 + $0xe38] sm:$0xff]
      %v1309 = vld [vmem:[#allocation9 + $0xe40] sm:$0xff]
      %v1310 = vld [vmem:[#allocation9 + $0xe48] sm:$0xff]
      %v1311 = vld [vmem:[#allocation9 + $0xe50] sm:$0xff]
      %v1312 = vld [vmem:[#allocation9 + $0xe58] sm:$0xff]
      %v1313 = vld [vmem:[#allocation9 + $0xe60] sm:$0xff]
      %v1314 = vld [vmem:[#allocation9 + $0xe68] sm:$0xff]
      %v1315 = vld [vmem:[#allocation9 + $0xe70] sm:$0xff]
      %v1316 = vld [vmem:[#allocation9 + $0xe78] sm:$0xff]
      %v1317 = vld [vmem:[#allocation9 + $0xe80] sm:$0xff]
      %v1318 = vld [vmem:[#allocation9 + $0xe88] sm:$0xff]
      %v1319 = vld [vmem:[#allocation9 + $0xe90] sm:$0xff]
      %v1320 = vld [vmem:[#allocation9 + $0xe98] sm:$0xff]
      %v1321 = vld [vmem:[#allocation9 + $0xea0] sm:$0xff]
      %v1322 = vld [vmem:[#allocation9 + $0xea8] sm:$0xff]
      %v1323 = vld [vmem:[#allocation9 + $0xeb0] sm:$0xff]
      %v1324 = vld [vmem:[#allocation9 + $0xeb8] sm:$0xff]
      %v1325 = vld [vmem:[#allocation9 + $0xec0] sm:$0xff]
      %v1326 = vld [vmem:[#allocation9 + $0xec8] sm:$0xff]
      %v1327 = vld [vmem:[#allocation9 + $0xed0] sm:$0xff]
      %v1328 = vld [vmem:[#allocation9 + $0xed8] sm:$0xff]
      %v1329 = vld [vmem:[#allocation9 + $0xee0] sm:$0xff]
      %v1330 = vld [vmem:[#allocation9 + $0xee8] sm:$0xff]
      %v1331 = vld [vmem:[#allocation9 + $0xef0] sm:$0xff]
      %v1332 = vld [vmem:[#allocation9 + $0xef8] sm:$0xff]
      %v1333 = vld [vmem:[#allocation9 + $0xf00] sm:$0xff]
      %v1334 = vld [vmem:[#allocation9 + $0xf08] sm:$0xff]
      %v1335 = vld [vmem:[#allocation9 + $0xf10] sm:$0xff]
      %v1336 = vld [vmem:[#allocation9 + $0xf18] sm:$0xff]
      %v1337 = vld [vmem:[#allocation9 + $0xf20] sm:$0xff]
      %v1338 = vld [vmem:[#allocation9 + $0xf28] sm:$0xff]
      %v1339 = vld [vmem:[#allocation9 + $0xf30] sm:$0xff]
      %v1340 = vld [vmem:[#allocation9 + $0xf38] sm:$0xff]
      %v1341 = vld [vmem:[#allocation9 + $0xf40] sm:$0xff]
      %v1342 = vld [vmem:[#allocation9 + $0xf48] sm:$0xff]
      %v1343 = vld [vmem:[#allocation9 + $0xf50] sm:$0xff]
      %v1344 = vld [vmem:[#allocation9 + $0xf58] sm:$0xff]
      %v1345 = vld [vmem:[#allocation9 + $0xf60] sm:$0xff]
      %v1346 = vld [vmem:[#allocation9 + $0xf68] sm:$0xff]
      %v1347 = vld [vmem:[#allocation9 + $0xf70] sm:$0xff]
      %v1348 = vld [vmem:[#allocation9 + $0xf78] sm:$0xff]
      %v1349 = vld [vmem:[#allocation9 + $0xf80] sm:$0xff]
      %v1350 = vld [vmem:[#allocation9 + $0xf88] sm:$0xff]
      %v1351 = vld [vmem:[#allocation9 + $0xf90] sm:$0xff]
      %v1352 = vld [vmem:[#allocation9 + $0xf98] sm:$0xff]
      %v1353 = vld [vmem:[#allocation9 + $0xfa0] sm:$0xff]
      %v1354 = vld [vmem:[#allocation9 + $0xfa8] sm:$0xff]
      %v1355 = vld [vmem:[#allocation9 + $0xfb0] sm:$0xff]
      %v1356 = vld [vmem:[#allocation9 + $0xfb8] sm:$0xff]
      %v1357 = vld [vmem:[#allocation9 + $0xfc0] sm:$0xff]
      %v1358 = vld [vmem:[#allocation9 + $0xfc8] sm:$0xff]
      %v1359 = vld [vmem:[#allocation9 + $0xfd0] sm:$0xff]
      %v1360 = vld [vmem:[#allocation9 + $0xfd8] sm:$0xff]
      %v1361 = vld [vmem:[#allocation9 + $0xfe0] sm:$0xff]
      %v1362 = vld [vmem:[#allocation9 + $0xfe8] sm:$0xff]
      %v1363 = vld [vmem:[#allocation9 + $0xff0] sm:$0xff]
      %v1364 = vld [vmem:[#allocation9 + $0xff8] sm:$0xff]
      %v1365 = vld [vmem:[#allocation11] sm:$0xff]
      %v1367 = vlaneseq
      %v1368 = vshrl.u32 %v1367, 7
      %v1369 = vsub.s32 0, %v1368
      %v1370 = vrot.slane %v1365, %v1369
      %v1371 = vlaneseq
      %v1372 = vshrl.u32 %v1371, 7
      %v1373 = vsub.s32 1, %v1372
      %v1374 = vrot.slane %v1365, %v1373
      %v1375 = vlaneseq
      %v1376 = vshrl.u32 %v1375, 7
      %v1377 = vsub.s32 2, %v1376
      %v1378 = vrot.slane %v1365, %v1377
      %v1379 = vlaneseq
      %v1380 = vshrl.u32 %v1379, 7
      %v1381 = vsub.s32 3, %v1380
      %v1382 = vrot.slane %v1365, %v1381
      %v1383 = vlaneseq
      %v1384 = vshrl.u32 %v1383, 7
      %v1385 = vsub.s32 4, %v1384
      %v1386 = vrot.slane %v1365, %v1385
      %v1387 = vlaneseq
      %v1388 = vshrl.u32 %v1387, 7
      %v1389 = vsub.s32 5, %v1388
      %v1390 = vrot.slane %v1365, %v1389
      %v1391 = vlaneseq
      %v1392 = vshrl.u32 %v1391, 7
      %v1393 = vsub.s32 6, %v1392
      %v1394 = vrot.slane %v1365, %v1393
      %v1395 = vlaneseq
      %v1396 = vshrl.u32 %v1395, 7
      %v1397 = vsub.s32 7, %v1396
      %v1398 = vrot.slane %v1365, %v1397
      %v1919 = vunpack.c.l.b16 %v853
      %v1920 = vunpack.c.h.b16 %v853
      %v1921 = vunpack.c.l.b16 %v854
      %v1922 = vunpack.c.h.b16 %v854
      %v1923 = vunpack.c.l.b16 %v855
      %v1924 = vunpack.c.h.b16 %v855
      %v1925 = vunpack.c.l.b16 %v856
      %v1926 = vunpack.c.h.b16 %v856
      %v1927 = vunpack.c.l.b16 %v857
      %v1928 = vunpack.c.h.b16 %v857
      %v1929 = vunpack.c.l.b16 %v858
      %v1930 = vunpack.c.h.b16 %v858
      %v1931 = vunpack.c.l.b16 %v859
      %v1932 = vunpack.c.h.b16 %v859
      %v1933 = vunpack.c.l.b16 %v860
      %v1934 = vunpack.c.h.b16 %v860
      %v1935 = vunpack.c.l.b16 %v861
      %v1936 = vunpack.c.h.b16 %v861
      %v1937 = vunpack.c.l.b16 %v862
      %v1938 = vunpack.c.h.b16 %v862
      %v1939 = vunpack.c.l.b16 %v863
      %v1940 = vunpack.c.h.b16 %v863
      %v1941 = vunpack.c.l.b16 %v864
      %v1942 = vunpack.c.h.b16 %v864
      %v1943 = vunpack.c.l.b16 %v865
      %v1944 = vunpack.c.h.b16 %v865
      %v1945 = vunpack.c.l.b16 %v866
      %v1946 = vunpack.c.h.b16 %v866
      %v1947 = vunpack.c.l.b16 %v867
      %v1948 = vunpack.c.h.b16 %v867
      %v1949 = vunpack.c.l.b16 %v868
      %v1950 = vunpack.c.h.b16 %v868
      %v1951 = vunpack.c.l.b16 %v869
      %v1952 = vunpack.c.h.b16 %v869
      %v1953 = vunpack.c.l.b16 %v870
      %v1954 = vunpack.c.h.b16 %v870
      %v1955 = vunpack.c.l.b16 %v871
      %v1956 = vunpack.c.h.b16 %v871
      %v1957 = vunpack.c.l.b16 %v872
      %v1958 = vunpack.c.h.b16 %v872
      %v1959 = vunpack.c.l.b16 %v873
      %v1960 = vunpack.c.h.b16 %v873
      %v1961 = vunpack.c.l.b16 %v874
      %v1962 = vunpack.c.h.b16 %v874
      %v1963 = vunpack.c.l.b16 %v875
      %v1964 = vunpack.c.h.b16 %v875
      %v1965 = vunpack.c.l.b16 %v876
      %v1966 = vunpack.c.h.b16 %v876
      %v1967 = vunpack.c.l.b16 %v877
      %v1968 = vunpack.c.h.b16 %v877
      %v1969 = vunpack.c.l.b16 %v878
      %v1970 = vunpack.c.h.b16 %v878
      %v1971 = vunpack.c.l.b16 %v879
      %v1972 = vunpack.c.h.b16 %v879
      %v1973 = vunpack.c.l.b16 %v880
      %v1974 = vunpack.c.h.b16 %v880
      %v1975 = vunpack.c.l.b16 %v881
      %v1976 = vunpack.c.h.b16 %v881
      %v1977 = vunpack.c.l.b16 %v882
      %v1978 = vunpack.c.h.b16 %v882
      %v1979 = vunpack.c.l.b16 %v883
      %v1980 = vunpack.c.h.b16 %v883
      %v1981 = vunpack.c.l.b16 %v884
      %v1982 = vunpack.c.h.b16 %v884
      %v1983 = vunpack.c.l.b16 %v885
      %v1984 = vunpack.c.h.b16 %v885
      %v1985 = vunpack.c.l.b16 %v886
      %v1986 = vunpack.c.h.b16 %v886
      %v1987 = vunpack.c.l.b16 %v887
      %v1988 = vunpack.c.h.b16 %v887
      %v1989 = vunpack.c.l.b16 %v888
      %v1990 = vunpack.c.h.b16 %v888
      %v1991 = vunpack.c.l.b16 %v889
      %v1992 = vunpack.c.h.b16 %v889
      %v1993 = vunpack.c.l.b16 %v890
      %v1994 = vunpack.c.h.b16 %v890
      %v1995 = vunpack.c.l.b16 %v891
      %v1996 = vunpack.c.h.b16 %v891
      %v1997 = vunpack.c.l.b16 %v892
      %v1998 = vunpack.c.h.b16 %v892
      %v1999 = vunpack.c.l.b16 %v893
      %v2000 = vunpack.c.h.b16 %v893
      %v2001 = vunpack.c.l.b16 %v894
      %v2002 = vunpack.c.h.b16 %v894
      %v2003 = vunpack.c.l.b16 %v895
      %v2004 = vunpack.c.h.b16 %v895
      %v2005 = vunpack.c.l.b16 %v896
      %v2006 = vunpack.c.h.b16 %v896
      %v2007 = vunpack.c.l.b16 %v897
      %v2008 = vunpack.c.h.b16 %v897
      %v2009 = vunpack.c.l.b16 %v898
      %v2010 = vunpack.c.h.b16 %v898
      %v2011 = vunpack.c.l.b16 %v899
      %v2012 = vunpack.c.h.b16 %v899
      %v2013 = vunpack.c.l.b16 %v900
      %v2014 = vunpack.c.h.b16 %v900
      %v2015 = vunpack.c.l.b16 %v901
      %v2016 = vunpack.c.h.b16 %v901
      %v2017 = vunpack.c.l.b16 %v902
      %v2018 = vunpack.c.h.b16 %v902
      %v2019 = vunpack.c.l.b16 %v903
      %v2020 = vunpack.c.h.b16 %v903
      %v2021 = vunpack.c.l.b16 %v904
      %v2022 = vunpack.c.h.b16 %v904
      %v2023 = vunpack.c.l.b16 %v905
      %v2024 = vunpack.c.h.b16 %v905
      %v2025 = vunpack.c.l.b16 %v906
      %v2026 = vunpack.c.h.b16 %v906
      %v2027 = vunpack.c.l.b16 %v907
      %v2028 = vunpack.c.h.b16 %v907
      %v2029 = vunpack.c.l.b16 %v908
      %v2030 = vunpack.c.h.b16 %v908
      %v2031 = vunpack.c.l.b16 %v909
      %v2032 = vunpack.c.h.b16 %v909
      %v2033 = vunpack.c.l.b16 %v910
      %v2034 = vunpack.c.h.b16 %v910
      %v2035 = vunpack.c.l.b16 %v911
      %v2036 = vunpack.c.h.b16 %v911
      %v2037 = vunpack.c.l.b16 %v912
      %v2038 = vunpack.c.h.b16 %v912
      %v2039 = vunpack.c.l.b16 %v913
      %v2040 = vunpack.c.h.b16 %v913
      %v2041 = vunpack.c.l.b16 %v914
      %v2042 = vunpack.c.h.b16 %v914
      %v2043 = vunpack.c.l.b16 %v915
      %v2044 = vunpack.c.h.b16 %v915
      %v2045 = vunpack.c.l.b16 %v916
      %v2046 = vunpack.c.h.b16 %v916
      %v2047 = vunpack.c.l.b16 %v917
      %v2048 = vunpack.c.h.b16 %v917
      %v2049 = vunpack.c.l.b16 %v918
      %v2050 = vunpack.c.h.b16 %v918
      %v2051 = vunpack.c.l.b16 %v919
      %v2052 = vunpack.c.h.b16 %v919
      %v2053 = vunpack.c.l.b16 %v920
      %v2054 = vunpack.c.h.b16 %v920
      %v2055 = vunpack.c.l.b16 %v921
      %v2056 = vunpack.c.h.b16 %v921
      %v2057 = vunpack.c.l.b16 %v922
      %v2058 = vunpack.c.h.b16 %v922
      %v2059 = vunpack.c.l.b16 %v923
      %v2060 = vunpack.c.h.b16 %v923
      %v2061 = vunpack.c.l.b16 %v924
      %v2062 = vunpack.c.h.b16 %v924
      %v2063 = vunpack.c.l.b16 %v925
      %v2064 = vunpack.c.h.b16 %v925
      %v2065 = vunpack.c.l.b16 %v926
      %v2066 = vunpack.c.h.b16 %v926
      %v2067 = vunpack.c.l.b16 %v927
      %v2068 = vunpack.c.h.b16 %v927
      %v2069 = vunpack.c.l.b16 %v928
      %v2070 = vunpack.c.h.b16 %v928
      %v2071 = vunpack.c.l.b16 %v929
      %v2072 = vunpack.c.h.b16 %v929
      %v2073 = vunpack.c.l.b16 %v930
      %v2074 = vunpack.c.h.b16 %v930
      %v2075 = vunpack.c.l.b16 %v931
      %v2076 = vunpack.c.h.b16 %v931
      %v2077 = vunpack.c.l.b16 %v932
      %v2078 = vunpack.c.h.b16 %v932
      %v2079 = vunpack.c.l.b16 %v933
      %v2080 = vunpack.c.h.b16 %v933
      %v2081 = vunpack.c.l.b16 %v934
      %v2082 = vunpack.c.h.b16 %v934
      %v2083 = vunpack.c.l.b16 %v935
      %v2084 = vunpack.c.h.b16 %v935
      %v2085 = vunpack.c.l.b16 %v936
      %v2086 = vunpack.c.h.b16 %v936
      %v2087 = vunpack.c.l.b16 %v937
      %v2088 = vunpack.c.h.b16 %v937
      %v2089 = vunpack.c.l.b16 %v938
      %v2090 = vunpack.c.h.b16 %v938
      %v2091 = vunpack.c.l.b16 %v939
      %v2092 = vunpack.c.h.b16 %v939
      %v2093 = vunpack.c.l.b16 %v940
      %v2094 = vunpack.c.h.b16 %v940
      %v2095 = vunpack.c.l.b16 %v941
      %v2096 = vunpack.c.h.b16 %v941
      %v2097 = vunpack.c.l.b16 %v942
      %v2098 = vunpack.c.h.b16 %v942
      %v2099 = vunpack.c.l.b16 %v943
      %v2100 = vunpack.c.h.b16 %v943
      %v2101 = vunpack.c.l.b16 %v944
      %v2102 = vunpack.c.h.b16 %v944
      %v2103 = vunpack.c.l.b16 %v945
      %v2104 = vunpack.c.h.b16 %v945
      %v2105 = vunpack.c.l.b16 %v946
      %v2106 = vunpack.c.h.b16 %v946
      %v2107 = vunpack.c.l.b16 %v947
      %v2108 = vunpack.c.h.b16 %v947
      %v2109 = vunpack.c.l.b16 %v948
      %v2110 = vunpack.c.h.b16 %v948
      %v2111 = vunpack.c.l.b16 %v949
      %v2112 = vunpack.c.h.b16 %v949
      %v2113 = vunpack.c.l.b16 %v950
      %v2114 = vunpack.c.h.b16 %v950
      %v2115 = vunpack.c.l.b16 %v951
      %v2116 = vunpack.c.h.b16 %v951
      %v2117 = vunpack.c.l.b16 %v952
      %v2118 = vunpack.c.h.b16 %v952
      %v2119 = vunpack.c.l.b16 %v953
      %v2120 = vunpack.c.h.b16 %v953
      %v2121 = vunpack.c.l.b16 %v954
      %v2122 = vunpack.c.h.b16 %v954
      %v2123 = vunpack.c.l.b16 %v955
      %v2124 = vunpack.c.h.b16 %v955
      %v2125 = vunpack.c.l.b16 %v956
      %v2126 = vunpack.c.h.b16 %v956
      %v2127 = vunpack.c.l.b16 %v957
      %v2128 = vunpack.c.h.b16 %v957
      %v2129 = vunpack.c.l.b16 %v958
      %v2130 = vunpack.c.h.b16 %v958
      %v2131 = vunpack.c.l.b16 %v959
      %v2132 = vunpack.c.h.b16 %v959
      %v2133 = vunpack.c.l.b16 %v960
      %v2134 = vunpack.c.h.b16 %v960
      %v2135 = vunpack.c.l.b16 %v961
      %v2136 = vunpack.c.h.b16 %v961
      %v2137 = vunpack.c.l.b16 %v962
      %v2138 = vunpack.c.h.b16 %v962
      %v2139 = vunpack.c.l.b16 %v963
      %v2140 = vunpack.c.h.b16 %v963
      %v2141 = vunpack.c.l.b16 %v964
      %v2142 = vunpack.c.h.b16 %v964
      %v2143 = vunpack.c.l.b16 %v965
      %v2144 = vunpack.c.h.b16 %v965
      %v2145 = vunpack.c.l.b16 %v966
      %v2146 = vunpack.c.h.b16 %v966
      %v2147 = vunpack.c.l.b16 %v967
      %v2148 = vunpack.c.h.b16 %v967
      %v2149 = vunpack.c.l.b16 %v968
      %v2150 = vunpack.c.h.b16 %v968
      %v2151 = vunpack.c.l.b16 %v969
      %v2152 = vunpack.c.h.b16 %v969
      %v2153 = vunpack.c.l.b16 %v970
      %v2154 = vunpack.c.h.b16 %v970
      %v2155 = vunpack.c.l.b16 %v971
      %v2156 = vunpack.c.h.b16 %v971
      %v2157 = vunpack.c.l.b16 %v972
      %v2158 = vunpack.c.h.b16 %v972
      %v2159 = vunpack.c.l.b16 %v973
      %v2160 = vunpack.c.h.b16 %v973
      %v2161 = vunpack.c.l.b16 %v974
      %v2162 = vunpack.c.h.b16 %v974
      %v2163 = vunpack.c.l.b16 %v975
      %v2164 = vunpack.c.h.b16 %v975
      %v2165 = vunpack.c.l.b16 %v976
      %v2166 = vunpack.c.h.b16 %v976
      %v2167 = vunpack.c.l.b16 %v977
      %v2168 = vunpack.c.h.b16 %v977
      %v2169 = vunpack.c.l.b16 %v978
      %v2170 = vunpack.c.h.b16 %v978
      %v2171 = vunpack.c.l.b16 %v979
      %v2172 = vunpack.c.h.b16 %v979
      %v2173 = vunpack.c.l.b16 %v980
      %v2174 = vunpack.c.h.b16 %v980
      %v2175 = vunpack.c.l.b16 %v981
      %v2176 = vunpack.c.h.b16 %v981
      %v2177 = vunpack.c.l.b16 %v982
      %v2178 = vunpack.c.h.b16 %v982
      %v2179 = vunpack.c.l.b16 %v983
      %v2180 = vunpack.c.h.b16 %v983
      %v2181 = vunpack.c.l.b16 %v984
      %v2182 = vunpack.c.h.b16 %v984
      %v2183 = vunpack.c.l.b16 %v985
      %v2184 = vunpack.c.h.b16 %v985
      %v2185 = vunpack.c.l.b16 %v986
      %v2186 = vunpack.c.h.b16 %v986
      %v2187 = vunpack.c.l.b16 %v987
      %v2188 = vunpack.c.h.b16 %v987
      %v2189 = vunpack.c.l.b16 %v988
      %v2190 = vunpack.c.h.b16 %v988
      %v2191 = vunpack.c.l.b16 %v989
      %v2192 = vunpack.c.h.b16 %v989
      %v2193 = vunpack.c.l.b16 %v990
      %v2194 = vunpack.c.h.b16 %v990
      %v2195 = vunpack.c.l.b16 %v991
      %v2196 = vunpack.c.h.b16 %v991
      %v2197 = vunpack.c.l.b16 %v992
      %v2198 = vunpack.c.h.b16 %v992
      %v2199 = vunpack.c.l.b16 %v993
      %v2200 = vunpack.c.h.b16 %v993
      %v2201 = vunpack.c.l.b16 %v994
      %v2202 = vunpack.c.h.b16 %v994
      %v2203 = vunpack.c.l.b16 %v995
      %v2204 = vunpack.c.h.b16 %v995
      %v2205 = vunpack.c.l.b16 %v996
      %v2206 = vunpack.c.h.b16 %v996
      %v2207 = vunpack.c.l.b16 %v997
      %v2208 = vunpack.c.h.b16 %v997
      %v2209 = vunpack.c.l.b16 %v998
      %v2210 = vunpack.c.h.b16 %v998
      %v2211 = vunpack.c.l.b16 %v999
      %v2212 = vunpack.c.h.b16 %v999
      %v2213 = vunpack.c.l.b16 %v1000
      %v2214 = vunpack.c.h.b16 %v1000
      %v2215 = vunpack.c.l.b16 %v1001
      %v2216 = vunpack.c.h.b16 %v1001
      %v2217 = vunpack.c.l.b16 %v1002
      %v2218 = vunpack.c.h.b16 %v1002
      %v2219 = vunpack.c.l.b16 %v1003
      %v2220 = vunpack.c.h.b16 %v1003
      %v2221 = vunpack.c.l.b16 %v1004
      %v2222 = vunpack.c.h.b16 %v1004
      %v2223 = vunpack.c.l.b16 %v1005
      %v2224 = vunpack.c.h.b16 %v1005
      %v2225 = vunpack.c.l.b16 %v1006
      %v2226 = vunpack.c.h.b16 %v1006
      %v2227 = vunpack.c.l.b16 %v1007
      %v2228 = vunpack.c.h.b16 %v1007
      %v2229 = vunpack.c.l.b16 %v1008
      %v2230 = vunpack.c.h.b16 %v1008
      %v2231 = vunpack.c.l.b16 %v1009
      %v2232 = vunpack.c.h.b16 %v1009
      %v2233 = vunpack.c.l.b16 %v1010
      %v2234 = vunpack.c.h.b16 %v1010
      %v2235 = vunpack.c.l.b16 %v1011
      %v2236 = vunpack.c.h.b16 %v1011
      %v2237 = vunpack.c.l.b16 %v1012
      %v2238 = vunpack.c.h.b16 %v1012
      %v2239 = vunpack.c.l.b16 %v1013
      %v2240 = vunpack.c.h.b16 %v1013
      %v2241 = vunpack.c.l.b16 %v1014
      %v2242 = vunpack.c.h.b16 %v1014
      %v2243 = vunpack.c.l.b16 %v1015
      %v2244 = vunpack.c.h.b16 %v1015
      %v2245 = vunpack.c.l.b16 %v1016
      %v2246 = vunpack.c.h.b16 %v1016
      %v2247 = vunpack.c.l.b16 %v1017
      %v2248 = vunpack.c.h.b16 %v1017
      %v2249 = vunpack.c.l.b16 %v1018
      %v2250 = vunpack.c.h.b16 %v1018
      %v2251 = vunpack.c.l.b16 %v1019
      %v2252 = vunpack.c.h.b16 %v1019
      %v2253 = vunpack.c.l.b16 %v1020
      %v2254 = vunpack.c.h.b16 %v1020
      %v2255 = vunpack.c.l.b16 %v1021
      %v2256 = vunpack.c.h.b16 %v1021
      %v2257 = vunpack.c.l.b16 %v1022
      %v2258 = vunpack.c.h.b16 %v1022
      %v2259 = vunpack.c.l.b16 %v1023
      %v2260 = vunpack.c.h.b16 %v1023
      %v2261 = vunpack.c.l.b16 %v1024
      %v2262 = vunpack.c.h.b16 %v1024
      %v2263 = vunpack.c.l.b16 %v1025
      %v2264 = vunpack.c.h.b16 %v1025
      %v2265 = vunpack.c.l.b16 %v1026
      %v2266 = vunpack.c.h.b16 %v1026
      %v2267 = vunpack.c.l.b16 %v1027
      %v2268 = vunpack.c.h.b16 %v1027
      %v2269 = vunpack.c.l.b16 %v1028
      %v2270 = vunpack.c.h.b16 %v1028
      %v2271 = vunpack.c.l.b16 %v1029
      %v2272 = vunpack.c.h.b16 %v1029
      %v2273 = vunpack.c.l.b16 %v1030
      %v2274 = vunpack.c.h.b16 %v1030
      %v2275 = vunpack.c.l.b16 %v1031
      %v2276 = vunpack.c.h.b16 %v1031
      %v2277 = vunpack.c.l.b16 %v1032
      %v2278 = vunpack.c.h.b16 %v1032
      %v2279 = vunpack.c.l.b16 %v1033
      %v2280 = vunpack.c.h.b16 %v1033
      %v2281 = vunpack.c.l.b16 %v1034
      %v2282 = vunpack.c.h.b16 %v1034
      %v2283 = vunpack.c.l.b16 %v1035
      %v2284 = vunpack.c.h.b16 %v1035
      %v2285 = vunpack.c.l.b16 %v1036
      %v2286 = vunpack.c.h.b16 %v1036
      %v2287 = vunpack.c.l.b16 %v1037
      %v2288 = vunpack.c.h.b16 %v1037
      %v2289 = vunpack.c.l.b16 %v1038
      %v2290 = vunpack.c.h.b16 %v1038
      %v2291 = vunpack.c.l.b16 %v1039
      %v2292 = vunpack.c.h.b16 %v1039
      %v2293 = vunpack.c.l.b16 %v1040
      %v2294 = vunpack.c.h.b16 %v1040
      %v2295 = vunpack.c.l.b16 %v1041
      %v2296 = vunpack.c.h.b16 %v1041
      %v2297 = vunpack.c.l.b16 %v1042
      %v2298 = vunpack.c.h.b16 %v1042
      %v2299 = vunpack.c.l.b16 %v1043
      %v2300 = vunpack.c.h.b16 %v1043
      %v2301 = vunpack.c.l.b16 %v1044
      %v2302 = vunpack.c.h.b16 %v1044
      %v2303 = vunpack.c.l.b16 %v1045
      %v2304 = vunpack.c.h.b16 %v1045
      %v2305 = vunpack.c.l.b16 %v1046
      %v2306 = vunpack.c.h.b16 %v1046
      %v2307 = vunpack.c.l.b16 %v1047
      %v2308 = vunpack.c.h.b16 %v1047
      %v2309 = vunpack.c.l.b16 %v1048
      %v2310 = vunpack.c.h.b16 %v1048
      %v2311 = vunpack.c.l.b16 %v1049
      %v2312 = vunpack.c.h.b16 %v1049
      %v2313 = vunpack.c.l.b16 %v1050
      %v2314 = vunpack.c.h.b16 %v1050
      %v2315 = vunpack.c.l.b16 %v1051
      %v2316 = vunpack.c.h.b16 %v1051
      %v2317 = vunpack.c.l.b16 %v1052
      %v2318 = vunpack.c.h.b16 %v1052
      %v2319 = vunpack.c.l.b16 %v1053
      %v2320 = vunpack.c.h.b16 %v1053
      %v2321 = vunpack.c.l.b16 %v1054
      %v2322 = vunpack.c.h.b16 %v1054
      %v2323 = vunpack.c.l.b16 %v1055
      %v2324 = vunpack.c.h.b16 %v1055
      %v2325 = vunpack.c.l.b16 %v1056
      %v2326 = vunpack.c.h.b16 %v1056
      %v2327 = vunpack.c.l.b16 %v1057
      %v2328 = vunpack.c.h.b16 %v1057
      %v2329 = vunpack.c.l.b16 %v1058
      %v2330 = vunpack.c.h.b16 %v1058
      %v2331 = vunpack.c.l.b16 %v1059
      %v2332 = vunpack.c.h.b16 %v1059
      %v2333 = vunpack.c.l.b16 %v1060
      %v2334 = vunpack.c.h.b16 %v1060
      %v2335 = vunpack.c.l.b16 %v1061
      %v2336 = vunpack.c.h.b16 %v1061
      %v2337 = vunpack.c.l.b16 %v1062
      %v2338 = vunpack.c.h.b16 %v1062
      %v2339 = vunpack.c.l.b16 %v1063
      %v2340 = vunpack.c.h.b16 %v1063
      %v2341 = vunpack.c.l.b16 %v1064
      %v2342 = vunpack.c.h.b16 %v1064
      %v2343 = vunpack.c.l.b16 %v1065
      %v2344 = vunpack.c.h.b16 %v1065
      %v2345 = vunpack.c.l.b16 %v1066
      %v2346 = vunpack.c.h.b16 %v1066
      %v2347 = vunpack.c.l.b16 %v1067
      %v2348 = vunpack.c.h.b16 %v1067
      %v2349 = vunpack.c.l.b16 %v1068
      %v2350 = vunpack.c.h.b16 %v1068
      %v2351 = vunpack.c.l.b16 %v1069
      %v2352 = vunpack.c.h.b16 %v1069
      %v2353 = vunpack.c.l.b16 %v1070
      %v2354 = vunpack.c.h.b16 %v1070
      %v2355 = vunpack.c.l.b16 %v1071
      %v2356 = vunpack.c.h.b16 %v1071
      %v2357 = vunpack.c.l.b16 %v1072
      %v2358 = vunpack.c.h.b16 %v1072
      %v2359 = vunpack.c.l.b16 %v1073
      %v2360 = vunpack.c.h.b16 %v1073
      %v2361 = vunpack.c.l.b16 %v1074
      %v2362 = vunpack.c.h.b16 %v1074
      %v2363 = vunpack.c.l.b16 %v1075
      %v2364 = vunpack.c.h.b16 %v1075
      %v2365 = vunpack.c.l.b16 %v1076
      %v2366 = vunpack.c.h.b16 %v1076
      %v2367 = vunpack.c.l.b16 %v1077
      %v2368 = vunpack.c.h.b16 %v1077
      %v2369 = vunpack.c.l.b16 %v1078
      %v2370 = vunpack.c.h.b16 %v1078
      %v2371 = vunpack.c.l.b16 %v1079
      %v2372 = vunpack.c.h.b16 %v1079
      %v2373 = vunpack.c.l.b16 %v1080
      %v2374 = vunpack.c.h.b16 %v1080
      %v2375 = vunpack.c.l.b16 %v1081
      %v2376 = vunpack.c.h.b16 %v1081
      %v2377 = vunpack.c.l.b16 %v1082
      %v2378 = vunpack.c.h.b16 %v1082
      %v2379 = vunpack.c.l.b16 %v1083
      %v2380 = vunpack.c.h.b16 %v1083
      %v2381 = vunpack.c.l.b16 %v1084
      %v2382 = vunpack.c.h.b16 %v1084
      %v2383 = vunpack.c.l.b16 %v1085
      %v2384 = vunpack.c.h.b16 %v1085
      %v2385 = vunpack.c.l.b16 %v1086
      %v2386 = vunpack.c.h.b16 %v1086
      %v2387 = vunpack.c.l.b16 %v1087
      %v2388 = vunpack.c.h.b16 %v1087
      %v2389 = vunpack.c.l.b16 %v1088
      %v2390 = vunpack.c.h.b16 %v1088
      %v2391 = vunpack.c.l.b16 %v1089
      %v2392 = vunpack.c.h.b16 %v1089
      %v2393 = vunpack.c.l.b16 %v1090
      %v2394 = vunpack.c.h.b16 %v1090
      %v2395 = vunpack.c.l.b16 %v1091
      %v2396 = vunpack.c.h.b16 %v1091
      %v2397 = vunpack.c.l.b16 %v1092
      %v2398 = vunpack.c.h.b16 %v1092
      %v2399 = vunpack.c.l.b16 %v1093
      %v2400 = vunpack.c.h.b16 %v1093
      %v2401 = vunpack.c.l.b16 %v1094
      %v2402 = vunpack.c.h.b16 %v1094
      %v2403 = vunpack.c.l.b16 %v1095
      %v2404 = vunpack.c.h.b16 %v1095
      %v2405 = vunpack.c.l.b16 %v1096
      %v2406 = vunpack.c.h.b16 %v1096
      %v2407 = vunpack.c.l.b16 %v1097
      %v2408 = vunpack.c.h.b16 %v1097
      %v2409 = vunpack.c.l.b16 %v1098
      %v2410 = vunpack.c.h.b16 %v1098
      %v2411 = vunpack.c.l.b16 %v1099
      %v2412 = vunpack.c.h.b16 %v1099
      %v2413 = vunpack.c.l.b16 %v1100
      %v2414 = vunpack.c.h.b16 %v1100
      %v2415 = vunpack.c.l.b16 %v1101
      %v2416 = vunpack.c.h.b16 %v1101
      %v2417 = vunpack.c.l.b16 %v1102
      %v2418 = vunpack.c.h.b16 %v1102
      %v2419 = vunpack.c.l.b16 %v1103
      %v2420 = vunpack.c.h.b16 %v1103
      %v2421 = vunpack.c.l.b16 %v1104
      %v2422 = vunpack.c.h.b16 %v1104
      %v2423 = vunpack.c.l.b16 %v1105
      %v2424 = vunpack.c.h.b16 %v1105
      %v2425 = vunpack.c.l.b16 %v1106
      %v2426 = vunpack.c.h.b16 %v1106
      %v2427 = vunpack.c.l.b16 %v1107
      %v2428 = vunpack.c.h.b16 %v1107
      %v2429 = vunpack.c.l.b16 %v1108
      %v2430 = vunpack.c.h.b16 %v1108
      %v2431 = vunpack.c.l.b16 %v1109
      %v2432 = vunpack.c.h.b16 %v1109
      %v2433 = vunpack.c.l.b16 %v1110
      %v2434 = vunpack.c.h.b16 %v1110
      %v2435 = vunpack.c.l.b16 %v1111
      %v2436 = vunpack.c.h.b16 %v1111
      %v2437 = vunpack.c.l.b16 %v1112
      %v2438 = vunpack.c.h.b16 %v1112
      %v2439 = vunpack.c.l.b16 %v1113
      %v2440 = vunpack.c.h.b16 %v1113
      %v2441 = vunpack.c.l.b16 %v1114
      %v2442 = vunpack.c.h.b16 %v1114
      %v2443 = vunpack.c.l.b16 %v1115
      %v2444 = vunpack.c.h.b16 %v1115
      %v2445 = vunpack.c.l.b16 %v1116
      %v2446 = vunpack.c.h.b16 %v1116
      %v2447 = vunpack.c.l.b16 %v1117
      %v2448 = vunpack.c.h.b16 %v1117
      %v2449 = vunpack.c.l.b16 %v1118
      %v2450 = vunpack.c.h.b16 %v1118
      %v2451 = vunpack.c.l.b16 %v1119
      %v2452 = vunpack.c.h.b16 %v1119
      %v2453 = vunpack.c.l.b16 %v1120
      %v2454 = vunpack.c.h.b16 %v1120
      %v2455 = vunpack.c.l.b16 %v1121
      %v2456 = vunpack.c.h.b16 %v1121
      %v2457 = vunpack.c.l.b16 %v1122
      %v2458 = vunpack.c.h.b16 %v1122
      %v2459 = vunpack.c.l.b16 %v1123
      %v2460 = vunpack.c.h.b16 %v1123
      %v2461 = vunpack.c.l.b16 %v1124
      %v2462 = vunpack.c.h.b16 %v1124
      %v2463 = vunpack.c.l.b16 %v1125
      %v2464 = vunpack.c.h.b16 %v1125
      %v2465 = vunpack.c.l.b16 %v1126
      %v2466 = vunpack.c.h.b16 %v1126
      %v2467 = vunpack.c.l.b16 %v1127
      %v2468 = vunpack.c.h.b16 %v1127
      %v2469 = vunpack.c.l.b16 %v1128
      %v2470 = vunpack.c.h.b16 %v1128
      %v2471 = vunpack.c.l.b16 %v1129
      %v2472 = vunpack.c.h.b16 %v1129
      %v2473 = vunpack.c.l.b16 %v1130
      %v2474 = vunpack.c.h.b16 %v1130
      %v2475 = vunpack.c.l.b16 %v1131
      %v2476 = vunpack.c.h.b16 %v1131
      %v2477 = vunpack.c.l.b16 %v1132
      %v2478 = vunpack.c.h.b16 %v1132
      %v2479 = vunpack.c.l.b16 %v1133
      %v2480 = vunpack.c.h.b16 %v1133
      %v2481 = vunpack.c.l.b16 %v1134
      %v2482 = vunpack.c.h.b16 %v1134
      %v2483 = vunpack.c.l.b16 %v1135
      %v2484 = vunpack.c.h.b16 %v1135
      %v2485 = vunpack.c.l.b16 %v1136
      %v2486 = vunpack.c.h.b16 %v1136
      %v2487 = vunpack.c.l.b16 %v1137
      %v2488 = vunpack.c.h.b16 %v1137
      %v2489 = vunpack.c.l.b16 %v1138
      %v2490 = vunpack.c.h.b16 %v1138
      %v2491 = vunpack.c.l.b16 %v1139
      %v2492 = vunpack.c.h.b16 %v1139
      %v2493 = vunpack.c.l.b16 %v1140
      %v2494 = vunpack.c.h.b16 %v1140
      %v2495 = vunpack.c.l.b16 %v1141
      %v2496 = vunpack.c.h.b16 %v1141
      %v2497 = vunpack.c.l.b16 %v1142
      %v2498 = vunpack.c.h.b16 %v1142
      %v2499 = vunpack.c.l.b16 %v1143
      %v2500 = vunpack.c.h.b16 %v1143
      %v2501 = vunpack.c.l.b16 %v1144
      %v2502 = vunpack.c.h.b16 %v1144
      %v2503 = vunpack.c.l.b16 %v1145
      %v2504 = vunpack.c.h.b16 %v1145
      %v2505 = vunpack.c.l.b16 %v1146
      %v2506 = vunpack.c.h.b16 %v1146
      %v2507 = vunpack.c.l.b16 %v1147
      %v2508 = vunpack.c.h.b16 %v1147
      %v2509 = vunpack.c.l.b16 %v1148
      %v2510 = vunpack.c.h.b16 %v1148
      %v2511 = vunpack.c.l.b16 %v1149
      %v2512 = vunpack.c.h.b16 %v1149
      %v2513 = vunpack.c.l.b16 %v1150
      %v2514 = vunpack.c.h.b16 %v1150
      %v2515 = vunpack.c.l.b16 %v1151
      %v2516 = vunpack.c.h.b16 %v1151
      %v2517 = vunpack.c.l.b16 %v1152
      %v2518 = vunpack.c.h.b16 %v1152
      %v2519 = vunpack.c.l.b16 %v1153
      %v2520 = vunpack.c.h.b16 %v1153
      %v2521 = vunpack.c.l.b16 %v1154
      %v2522 = vunpack.c.h.b16 %v1154
      %v2523 = vunpack.c.l.b16 %v1155
      %v2524 = vunpack.c.h.b16 %v1155
      %v2525 = vunpack.c.l.b16 %v1156
      %v2526 = vunpack.c.h.b16 %v1156
      %v2527 = vunpack.c.l.b16 %v1157
      %v2528 = vunpack.c.h.b16 %v1157
      %v2529 = vunpack.c.l.b16 %v1158
      %v2530 = vunpack.c.h.b16 %v1158
      %v2531 = vunpack.c.l.b16 %v1159
      %v2532 = vunpack.c.h.b16 %v1159
      %v2533 = vunpack.c.l.b16 %v1160
      %v2534 = vunpack.c.h.b16 %v1160
      %v2535 = vunpack.c.l.b16 %v1161
      %v2536 = vunpack.c.h.b16 %v1161
      %v2537 = vunpack.c.l.b16 %v1162
      %v2538 = vunpack.c.h.b16 %v1162
      %v2539 = vunpack.c.l.b16 %v1163
      %v2540 = vunpack.c.h.b16 %v1163
      %v2541 = vunpack.c.l.b16 %v1164
      %v2542 = vunpack.c.h.b16 %v1164
      %v2543 = vunpack.c.l.b16 %v1165
      %v2544 = vunpack.c.h.b16 %v1165
      %v2545 = vunpack.c.l.b16 %v1166
      %v2546 = vunpack.c.h.b16 %v1166
      %v2547 = vunpack.c.l.b16 %v1167
      %v2548 = vunpack.c.h.b16 %v1167
      %v2549 = vunpack.c.l.b16 %v1168
      %v2550 = vunpack.c.h.b16 %v1168
      %v2551 = vunpack.c.l.b16 %v1169
      %v2552 = vunpack.c.h.b16 %v1169
      %v2553 = vunpack.c.l.b16 %v1170
      %v2554 = vunpack.c.h.b16 %v1170
      %v2555 = vunpack.c.l.b16 %v1171
      %v2556 = vunpack.c.h.b16 %v1171
      %v2557 = vunpack.c.l.b16 %v1172
      %v2558 = vunpack.c.h.b16 %v1172
      %v2559 = vunpack.c.l.b16 %v1173
      %v2560 = vunpack.c.h.b16 %v1173
      %v2561 = vunpack.c.l.b16 %v1174
      %v2562 = vunpack.c.h.b16 %v1174
      %v2563 = vunpack.c.l.b16 %v1175
      %v2564 = vunpack.c.h.b16 %v1175
      %v2565 = vunpack.c.l.b16 %v1176
      %v2566 = vunpack.c.h.b16 %v1176
      %v2567 = vunpack.c.l.b16 %v1177
      %v2568 = vunpack.c.h.b16 %v1177
      %v2569 = vunpack.c.l.b16 %v1178
      %v2570 = vunpack.c.h.b16 %v1178
      %v2571 = vunpack.c.l.b16 %v1179
      %v2572 = vunpack.c.h.b16 %v1179
      %v2573 = vunpack.c.l.b16 %v1180
      %v2574 = vunpack.c.h.b16 %v1180
      %v2575 = vunpack.c.l.b16 %v1181
      %v2576 = vunpack.c.h.b16 %v1181
      %v2577 = vunpack.c.l.b16 %v1182
      %v2578 = vunpack.c.h.b16 %v1182
      %v2579 = vunpack.c.l.b16 %v1183
      %v2580 = vunpack.c.h.b16 %v1183
      %v2581 = vunpack.c.l.b16 %v1184
      %v2582 = vunpack.c.h.b16 %v1184
      %v2583 = vunpack.c.l.b16 %v1185
      %v2584 = vunpack.c.h.b16 %v1185
      %v2585 = vunpack.c.l.b16 %v1186
      %v2586 = vunpack.c.h.b16 %v1186
      %v2587 = vunpack.c.l.b16 %v1187
      %v2588 = vunpack.c.h.b16 %v1187
      %v2589 = vunpack.c.l.b16 %v1188
      %v2590 = vunpack.c.h.b16 %v1188
      %v2591 = vunpack.c.l.b16 %v1189
      %v2592 = vunpack.c.h.b16 %v1189
      %v2593 = vunpack.c.l.b16 %v1190
      %v2594 = vunpack.c.h.b16 %v1190
      %v2595 = vunpack.c.l.b16 %v1191
      %v2596 = vunpack.c.h.b16 %v1191
      %v2597 = vunpack.c.l.b16 %v1192
      %v2598 = vunpack.c.h.b16 %v1192
      %v2599 = vunpack.c.l.b16 %v1193
      %v2600 = vunpack.c.h.b16 %v1193
      %v2601 = vunpack.c.l.b16 %v1194
      %v2602 = vunpack.c.h.b16 %v1194
      %v2603 = vunpack.c.l.b16 %v1195
      %v2604 = vunpack.c.h.b16 %v1195
      %v2605 = vunpack.c.l.b16 %v1196
      %v2606 = vunpack.c.h.b16 %v1196
      %v2607 = vunpack.c.l.b16 %v1197
      %v2608 = vunpack.c.h.b16 %v1197
      %v2609 = vunpack.c.l.b16 %v1198
      %v2610 = vunpack.c.h.b16 %v1198
      %v2611 = vunpack.c.l.b16 %v1199
      %v2612 = vunpack.c.h.b16 %v1199
      %v2613 = vunpack.c.l.b16 %v1200
      %v2614 = vunpack.c.h.b16 %v1200
      %v2615 = vunpack.c.l.b16 %v1201
      %v2616 = vunpack.c.h.b16 %v1201
      %v2617 = vunpack.c.l.b16 %v1202
      %v2618 = vunpack.c.h.b16 %v1202
      %v2619 = vunpack.c.l.b16 %v1203
      %v2620 = vunpack.c.h.b16 %v1203
      %v2621 = vunpack.c.l.b16 %v1204
      %v2622 = vunpack.c.h.b16 %v1204
      %v2623 = vunpack.c.l.b16 %v1205
      %v2624 = vunpack.c.h.b16 %v1205
      %v2625 = vunpack.c.l.b16 %v1206
      %v2626 = vunpack.c.h.b16 %v1206
      %v2627 = vunpack.c.l.b16 %v1207
      %v2628 = vunpack.c.h.b16 %v1207
      %v2629 = vunpack.c.l.b16 %v1208
      %v2630 = vunpack.c.h.b16 %v1208
      %v2631 = vunpack.c.l.b16 %v1209
      %v2632 = vunpack.c.h.b16 %v1209
      %v2633 = vunpack.c.l.b16 %v1210
      %v2634 = vunpack.c.h.b16 %v1210
      %v2635 = vunpack.c.l.b16 %v1211
      %v2636 = vunpack.c.h.b16 %v1211
      %v2637 = vunpack.c.l.b16 %v1212
      %v2638 = vunpack.c.h.b16 %v1212
      %v2639 = vunpack.c.l.b16 %v1213
      %v2640 = vunpack.c.h.b16 %v1213
      %v2641 = vunpack.c.l.b16 %v1214
      %v2642 = vunpack.c.h.b16 %v1214
      %v2643 = vunpack.c.l.b16 %v1215
      %v2644 = vunpack.c.h.b16 %v1215
      %v2645 = vunpack.c.l.b16 %v1216
      %v2646 = vunpack.c.h.b16 %v1216
      %v2647 = vunpack.c.l.b16 %v1217
      %v2648 = vunpack.c.h.b16 %v1217
      %v2649 = vunpack.c.l.b16 %v1218
      %v2650 = vunpack.c.h.b16 %v1218
      %v2651 = vunpack.c.l.b16 %v1219
      %v2652 = vunpack.c.h.b16 %v1219
      %v2653 = vunpack.c.l.b16 %v1220
      %v2654 = vunpack.c.h.b16 %v1220
      %v2655 = vunpack.c.l.b16 %v1221
      %v2656 = vunpack.c.h.b16 %v1221
      %v2657 = vunpack.c.l.b16 %v1222
      %v2658 = vunpack.c.h.b16 %v1222
      %v2659 = vunpack.c.l.b16 %v1223
      %v2660 = vunpack.c.h.b16 %v1223
      %v2661 = vunpack.c.l.b16 %v1224
      %v2662 = vunpack.c.h.b16 %v1224
      %v2663 = vunpack.c.l.b16 %v1225
      %v2664 = vunpack.c.h.b16 %v1225
      %v2665 = vunpack.c.l.b16 %v1226
      %v2666 = vunpack.c.h.b16 %v1226
      %v2667 = vunpack.c.l.b16 %v1227
      %v2668 = vunpack.c.h.b16 %v1227
      %v2669 = vunpack.c.l.b16 %v1228
      %v2670 = vunpack.c.h.b16 %v1228
      %v2671 = vunpack.c.l.b16 %v1229
      %v2672 = vunpack.c.h.b16 %v1229
      %v2673 = vunpack.c.l.b16 %v1230
      %v2674 = vunpack.c.h.b16 %v1230
      %v2675 = vunpack.c.l.b16 %v1231
      %v2676 = vunpack.c.h.b16 %v1231
      %v2677 = vunpack.c.l.b16 %v1232
      %v2678 = vunpack.c.h.b16 %v1232
      %v2679 = vunpack.c.l.b16 %v1233
      %v2680 = vunpack.c.h.b16 %v1233
      %v2681 = vunpack.c.l.b16 %v1234
      %v2682 = vunpack.c.h.b16 %v1234
      %v2683 = vunpack.c.l.b16 %v1235
      %v2684 = vunpack.c.h.b16 %v1235
      %v2685 = vunpack.c.l.b16 %v1236
      %v2686 = vunpack.c.h.b16 %v1236
      %v2687 = vunpack.c.l.b16 %v1237
      %v2688 = vunpack.c.h.b16 %v1237
      %v2689 = vunpack.c.l.b16 %v1238
      %v2690 = vunpack.c.h.b16 %v1238
      %v2691 = vunpack.c.l.b16 %v1239
      %v2692 = vunpack.c.h.b16 %v1239
      %v2693 = vunpack.c.l.b16 %v1240
      %v2694 = vunpack.c.h.b16 %v1240
      %v2695 = vunpack.c.l.b16 %v1241
      %v2696 = vunpack.c.h.b16 %v1241
      %v2697 = vunpack.c.l.b16 %v1242
      %v2698 = vunpack.c.h.b16 %v1242
      %v2699 = vunpack.c.l.b16 %v1243
      %v2700 = vunpack.c.h.b16 %v1243
      %v2701 = vunpack.c.l.b16 %v1244
      %v2702 = vunpack.c.h.b16 %v1244
      %v2703 = vunpack.c.l.b16 %v1245
      %v2704 = vunpack.c.h.b16 %v1245
      %v2705 = vunpack.c.l.b16 %v1246
      %v2706 = vunpack.c.h.b16 %v1246
      %v2707 = vunpack.c.l.b16 %v1247
      %v2708 = vunpack.c.h.b16 %v1247
      %v2709 = vunpack.c.l.b16 %v1248
      %v2710 = vunpack.c.h.b16 %v1248
      %v2711 = vunpack.c.l.b16 %v1249
      %v2712 = vunpack.c.h.b16 %v1249
      %v2713 = vunpack.c.l.b16 %v1250
      %v2714 = vunpack.c.h.b16 %v1250
      %v2715 = vunpack.c.l.b16 %v1251
      %v2716 = vunpack.c.h.b16 %v1251
      %v2717 = vunpack.c.l.b16 %v1252
      %v2718 = vunpack.c.h.b16 %v1252
      %v2719 = vunpack.c.l.b16 %v1253
      %v2720 = vunpack.c.h.b16 %v1253
      %v2721 = vunpack.c.l.b16 %v1254
      %v2722 = vunpack.c.h.b16 %v1254
      %v2723 = vunpack.c.l.b16 %v1255
      %v2724 = vunpack.c.h.b16 %v1255
      %v2725 = vunpack.c.l.b16 %v1256
      %v2726 = vunpack.c.h.b16 %v1256
      %v2727 = vunpack.c.l.b16 %v1257
      %v2728 = vunpack.c.h.b16 %v1257
      %v2729 = vunpack.c.l.b16 %v1258
      %v2730 = vunpack.c.h.b16 %v1258
      %v2731 = vunpack.c.l.b16 %v1259
      %v2732 = vunpack.c.h.b16 %v1259
      %v2733 = vunpack.c.l.b16 %v1260
      %v2734 = vunpack.c.h.b16 %v1260
      %v2735 = vunpack.c.l.b16 %v1261
      %v2736 = vunpack.c.h.b16 %v1261
      %v2737 = vunpack.c.l.b16 %v1262
      %v2738 = vunpack.c.h.b16 %v1262
      %v2739 = vunpack.c.l.b16 %v1263
      %v2740 = vunpack.c.h.b16 %v1263
      %v2741 = vunpack.c.l.b16 %v1264
      %v2742 = vunpack.c.h.b16 %v1264
      %v2743 = vunpack.c.l.b16 %v1265
      %v2744 = vunpack.c.h.b16 %v1265
      %v2745 = vunpack.c.l.b16 %v1266
      %v2746 = vunpack.c.h.b16 %v1266
      %v2747 = vunpack.c.l.b16 %v1267
      %v2748 = vunpack.c.h.b16 %v1267
      %v2749 = vunpack.c.l.b16 %v1268
      %v2750 = vunpack.c.h.b16 %v1268
      %v2751 = vunpack.c.l.b16 %v1269
      %v2752 = vunpack.c.h.b16 %v1269
      %v2753 = vunpack.c.l.b16 %v1270
      %v2754 = vunpack.c.h.b16 %v1270
      %v2755 = vunpack.c.l.b16 %v1271
      %v2756 = vunpack.c.h.b16 %v1271
      %v2757 = vunpack.c.l.b16 %v1272
      %v2758 = vunpack.c.h.b16 %v1272
      %v2759 = vunpack.c.l.b16 %v1273
      %v2760 = vunpack.c.h.b16 %v1273
      %v2761 = vunpack.c.l.b16 %v1274
      %v2762 = vunpack.c.h.b16 %v1274
      %v2763 = vunpack.c.l.b16 %v1275
      %v2764 = vunpack.c.h.b16 %v1275
      %v2765 = vunpack.c.l.b16 %v1276
      %v2766 = vunpack.c.h.b16 %v1276
      %v2767 = vunpack.c.l.b16 %v1277
      %v2768 = vunpack.c.h.b16 %v1277
      %v2769 = vunpack.c.l.b16 %v1278
      %v2770 = vunpack.c.h.b16 %v1278
      %v2771 = vunpack.c.l.b16 %v1279
      %v2772 = vunpack.c.h.b16 %v1279
      %v2773 = vunpack.c.l.b16 %v1280
      %v2774 = vunpack.c.h.b16 %v1280
      %v2775 = vunpack.c.l.b16 %v1281
      %v2776 = vunpack.c.h.b16 %v1281
      %v2777 = vunpack.c.l.b16 %v1282
      %v2778 = vunpack.c.h.b16 %v1282
      %v2779 = vunpack.c.l.b16 %v1283
      %v2780 = vunpack.c.h.b16 %v1283
      %v2781 = vunpack.c.l.b16 %v1284
      %v2782 = vunpack.c.h.b16 %v1284
      %v2783 = vunpack.c.l.b16 %v1285
      %v2784 = vunpack.c.h.b16 %v1285
      %v2785 = vunpack.c.l.b16 %v1286
      %v2786 = vunpack.c.h.b16 %v1286
      %v2787 = vunpack.c.l.b16 %v1287
      %v2788 = vunpack.c.h.b16 %v1287
      %v2789 = vunpack.c.l.b16 %v1288
      %v2790 = vunpack.c.h.b16 %v1288
      %v2791 = vunpack.c.l.b16 %v1289
      %v2792 = vunpack.c.h.b16 %v1289
      %v2793 = vunpack.c.l.b16 %v1290
      %v2794 = vunpack.c.h.b16 %v1290
      %v2795 = vunpack.c.l.b16 %v1291
      %v2796 = vunpack.c.h.b16 %v1291
      %v2797 = vunpack.c.l.b16 %v1292
      %v2798 = vunpack.c.h.b16 %v1292
      %v2799 = vunpack.c.l.b16 %v1293
      %v2800 = vunpack.c.h.b16 %v1293
      %v2801 = vunpack.c.l.b16 %v1294
      %v2802 = vunpack.c.h.b16 %v1294
      %v2803 = vunpack.c.l.b16 %v1295
      %v2804 = vunpack.c.h.b16 %v1295
      %v2805 = vunpack.c.l.b16 %v1296
      %v2806 = vunpack.c.h.b16 %v1296
      %v2807 = vunpack.c.l.b16 %v1297
      %v2808 = vunpack.c.h.b16 %v1297
      %v2809 = vunpack.c.l.b16 %v1298
      %v2810 = vunpack.c.h.b16 %v1298
      %v2811 = vunpack.c.l.b16 %v1299
      %v2812 = vunpack.c.h.b16 %v1299
      %v2813 = vunpack.c.l.b16 %v1300
      %v2814 = vunpack.c.h.b16 %v1300
      %v2815 = vunpack.c.l.b16 %v1301
      %v2816 = vunpack.c.h.b16 %v1301
      %v2817 = vunpack.c.l.b16 %v1302
      %v2818 = vunpack.c.h.b16 %v1302
      %v2819 = vunpack.c.l.b16 %v1303
      %v2820 = vunpack.c.h.b16 %v1303
      %v2821 = vunpack.c.l.b16 %v1304
      %v2822 = vunpack.c.h.b16 %v1304
      %v2823 = vunpack.c.l.b16 %v1305
      %v2824 = vunpack.c.h.b16 %v1305
      %v2825 = vunpack.c.l.b16 %v1306
      %v2826 = vunpack.c.h.b16 %v1306
      %v2827 = vunpack.c.l.b16 %v1307
      %v2828 = vunpack.c.h.b16 %v1307
      %v2829 = vunpack.c.l.b16 %v1308
      %v2830 = vunpack.c.h.b16 %v1308
      %v2831 = vunpack.c.l.b16 %v1309
      %v2832 = vunpack.c.h.b16 %v1309
      %v2833 = vunpack.c.l.b16 %v1310
      %v2834 = vunpack.c.h.b16 %v1310
      %v2835 = vunpack.c.l.b16 %v1311
      %v2836 = vunpack.c.h.b16 %v1311
      %v2837 = vunpack.c.l.b16 %v1312
      %v2838 = vunpack.c.h.b16 %v1312
      %v2839 = vunpack.c.l.b16 %v1313
      %v2840 = vunpack.c.h.b16 %v1313
      %v2841 = vunpack.c.l.b16 %v1314
      %v2842 = vunpack.c.h.b16 %v1314
      %v2843 = vunpack.c.l.b16 %v1315
      %v2844 = vunpack.c.h.b16 %v1315
      %v2845 = vunpack.c.l.b16 %v1316
      %v2846 = vunpack.c.h.b16 %v1316
      %v2847 = vunpack.c.l.b16 %v1317
      %v2848 = vunpack.c.h.b16 %v1317
      %v2849 = vunpack.c.l.b16 %v1318
      %v2850 = vunpack.c.h.b16 %v1318
      %v2851 = vunpack.c.l.b16 %v1319
      %v2852 = vunpack.c.h.b16 %v1319
      %v2853 = vunpack.c.l.b16 %v1320
      %v2854 = vunpack.c.h.b16 %v1320
      %v2855 = vunpack.c.l.b16 %v1321
      %v2856 = vunpack.c.h.b16 %v1321
      %v2857 = vunpack.c.l.b16 %v1322
      %v2858 = vunpack.c.h.b16 %v1322
      %v2859 = vunpack.c.l.b16 %v1323
      %v2860 = vunpack.c.h.b16 %v1323
      %v2861 = vunpack.c.l.b16 %v1324
      %v2862 = vunpack.c.h.b16 %v1324
      %v2863 = vunpack.c.l.b16 %v1325
      %v2864 = vunpack.c.h.b16 %v1325
      %v2865 = vunpack.c.l.b16 %v1326
      %v2866 = vunpack.c.h.b16 %v1326
      %v2867 = vunpack.c.l.b16 %v1327
      %v2868 = vunpack.c.h.b16 %v1327
      %v2869 = vunpack.c.l.b16 %v1328
      %v2870 = vunpack.c.h.b16 %v1328
      %v2871 = vunpack.c.l.b16 %v1329
      %v2872 = vunpack.c.h.b16 %v1329
      %v2873 = vunpack.c.l.b16 %v1330
      %v2874 = vunpack.c.h.b16 %v1330
      %v2875 = vunpack.c.l.b16 %v1331
      %v2876 = vunpack.c.h.b16 %v1331
      %v2877 = vunpack.c.l.b16 %v1332
      %v2878 = vunpack.c.h.b16 %v1332
      %v2879 = vunpack.c.l.b16 %v1333
      %v2880 = vunpack.c.h.b16 %v1333
      %v2881 = vunpack.c.l.b16 %v1334
      %v2882 = vunpack.c.h.b16 %v1334
      %v2883 = vunpack.c.l.b16 %v1335
      %v2884 = vunpack.c.h.b16 %v1335
      %v2885 = vunpack.c.l.b16 %v1336
      %v2886 = vunpack.c.h.b16 %v1336
      %v2887 = vunpack.c.l.b16 %v1337
      %v2888 = vunpack.c.h.b16 %v1337
      %v2889 = vunpack.c.l.b16 %v1338
      %v2890 = vunpack.c.h.b16 %v1338
      %v2891 = vunpack.c.l.b16 %v1339
      %v2892 = vunpack.c.h.b16 %v1339
      %v2893 = vunpack.c.l.b16 %v1340
      %v2894 = vunpack.c.h.b16 %v1340
      %v2895 = vunpack.c.l.b16 %v1341
      %v2896 = vunpack.c.h.b16 %v1341
      %v2897 = vunpack.c.l.b16 %v1342
      %v2898 = vunpack.c.h.b16 %v1342
      %v2899 = vunpack.c.l.b16 %v1343
      %v2900 = vunpack.c.h.b16 %v1343
      %v2901 = vunpack.c.l.b16 %v1344
      %v2902 = vunpack.c.h.b16 %v1344
      %v2903 = vunpack.c.l.b16 %v1345
      %v2904 = vunpack.c.h.b16 %v1345
      %v2905 = vunpack.c.l.b16 %v1346
      %v2906 = vunpack.c.h.b16 %v1346
      %v2907 = vunpack.c.l.b16 %v1347
      %v2908 = vunpack.c.h.b16 %v1347
      %v2909 = vunpack.c.l.b16 %v1348
      %v2910 = vunpack.c.h.b16 %v1348
      %v2911 = vunpack.c.l.b16 %v1349
      %v2912 = vunpack.c.h.b16 %v1349
      %v2913 = vunpack.c.l.b16 %v1350
      %v2914 = vunpack.c.h.b16 %v1350
      %v2915 = vunpack.c.l.b16 %v1351
      %v2916 = vunpack.c.h.b16 %v1351
      %v2917 = vunpack.c.l.b16 %v1352
      %v2918 = vunpack.c.h.b16 %v1352
      %v2919 = vunpack.c.l.b16 %v1353
      %v2920 = vunpack.c.h.b16 %v1353
      %v2921 = vunpack.c.l.b16 %v1354
      %v2922 = vunpack.c.h.b16 %v1354
      %v2923 = vunpack.c.l.b16 %v1355
      %v2924 = vunpack.c.h.b16 %v1355
      %v2925 = vunpack.c.l.b16 %v1356
      %v2926 = vunpack.c.h.b16 %v1356
      %v2927 = vunpack.c.l.b16 %v1357
      %v2928 = vunpack.c.h.b16 %v1357
      %v2929 = vunpack.c.l.b16 %v1358
      %v2930 = vunpack.c.h.b16 %v1358
      %v2931 = vunpack.c.l.b16 %v1359
      %v2932 = vunpack.c.h.b16 %v1359
      %v2933 = vunpack.c.l.b16 %v1360
      %v2934 = vunpack.c.h.b16 %v1360
      %v2935 = vunpack.c.l.b16 %v1361
      %v2936 = vunpack.c.h.b16 %v1361
      %v2937 = vunpack.c.l.b16 %v1362
      %v2938 = vunpack.c.h.b16 %v1362
      %v2939 = vunpack.c.l.b16 %v1363
      %v2940 = vunpack.c.h.b16 %v1363
      %v2941 = vunpack.c.l.b16 %v1364
      %v2942 = vunpack.c.h.b16 %v1364
      %v2943 = vpack.c.b16 %v1927, %v1919
      %v2944 = vpack.c.b16 %v1928, %v1920
      %v2945 = vpack.c.b16 %v1929, %v1921
      %v2946 = vpack.c.b16 %v1930, %v1922
      %v2947 = vpack.c.b16 %v1931, %v1923
      %v2948 = vpack.c.b16 %v1932, %v1924
      %v2949 = vpack.c.b16 %v1933, %v1925
      %v2950 = vpack.c.b16 %v1934, %v1926
      %v2951 = vpack.c.b16 %v1943, %v1935
      %v2952 = vpack.c.b16 %v1944, %v1936
      %v2953 = vpack.c.b16 %v1945, %v1937
      %v2954 = vpack.c.b16 %v1946, %v1938
      %v2955 = vpack.c.b16 %v1947, %v1939
      %v2956 = vpack.c.b16 %v1948, %v1940
      %v2957 = vpack.c.b16 %v1949, %v1941
      %v2958 = vpack.c.b16 %v1950, %v1942
      %v2959 = vpack.c.b16 %v1959, %v1951
      %v2960 = vpack.c.b16 %v1960, %v1952
      %v2961 = vpack.c.b16 %v1961, %v1953
      %v2962 = vpack.c.b16 %v1962, %v1954
      %v2963 = vpack.c.b16 %v1963, %v1955
      %v2964 = vpack.c.b16 %v1964, %v1956
      %v2965 = vpack.c.b16 %v1965, %v1957
      %v2966 = vpack.c.b16 %v1966, %v1958
      %v2967 = vpack.c.b16 %v1975, %v1967
      %v2968 = vpack.c.b16 %v1976, %v1968
      %v2969 = vpack.c.b16 %v1977, %v1969
      %v2970 = vpack.c.b16 %v1978, %v1970
      %v2971 = vpack.c.b16 %v1979, %v1971
      %v2972 = vpack.c.b16 %v1980, %v1972
      %v2973 = vpack.c.b16 %v1981, %v1973
      %v2974 = vpack.c.b16 %v1982, %v1974
      %v2975 = vpack.c.b16 %v1991, %v1983
      %v2976 = vpack.c.b16 %v1992, %v1984
      %v2977 = vpack.c.b16 %v1993, %v1985
      %v2978 = vpack.c.b16 %v1994, %v1986
      %v2979 = vpack.c.b16 %v1995, %v1987
      %v2980 = vpack.c.b16 %v1996, %v1988
      %v2981 = vpack.c.b16 %v1997, %v1989
      %v2982 = vpack.c.b16 %v1998, %v1990
      %v2983 = vpack.c.b16 %v2007, %v1999
      %v2984 = vpack.c.b16 %v2008, %v2000
      %v2985 = vpack.c.b16 %v2009, %v2001
      %v2986 = vpack.c.b16 %v2010, %v2002
      %v2987 = vpack.c.b16 %v2011, %v2003
      %v2988 = vpack.c.b16 %v2012, %v2004
      %v2989 = vpack.c.b16 %v2013, %v2005
      %v2990 = vpack.c.b16 %v2014, %v2006
      %v2991 = vpack.c.b16 %v2023, %v2015
      %v2992 = vpack.c.b16 %v2024, %v2016
      %v2993 = vpack.c.b16 %v2025, %v2017
      %v2994 = vpack.c.b16 %v2026, %v2018
      %v2995 = vpack.c.b16 %v2027, %v2019
      %v2996 = vpack.c.b16 %v2028, %v2020
      %v2997 = vpack.c.b16 %v2029, %v2021
      %v2998 = vpack.c.b16 %v2030, %v2022
      %v2999 = vpack.c.b16 %v2039, %v2031
      %v3000 = vpack.c.b16 %v2040, %v2032
      %v3001 = vpack.c.b16 %v2041, %v2033
      %v3002 = vpack.c.b16 %v2042, %v2034
      %v3003 = vpack.c.b16 %v2043, %v2035
      %v3004 = vpack.c.b16 %v2044, %v2036
      %v3005 = vpack.c.b16 %v2045, %v2037
      %v3006 = vpack.c.b16 %v2046, %v2038
      %v3007 = vpack.c.b16 %v2055, %v2047
      %v3008 = vpack.c.b16 %v2056, %v2048
      %v3009 = vpack.c.b16 %v2057, %v2049
      %v3010 = vpack.c.b16 %v2058, %v2050
      %v3011 = vpack.c.b16 %v2059, %v2051
      %v3012 = vpack.c.b16 %v2060, %v2052
      %v3013 = vpack.c.b16 %v2061, %v2053
      %v3014 = vpack.c.b16 %v2062, %v2054
      %v3015 = vpack.c.b16 %v2071, %v2063
      %v3016 = vpack.c.b16 %v2072, %v2064
      %v3017 = vpack.c.b16 %v2073, %v2065
      %v3018 = vpack.c.b16 %v2074, %v2066
      %v3019 = vpack.c.b16 %v2075, %v2067
      %v3020 = vpack.c.b16 %v2076, %v2068
      %v3021 = vpack.c.b16 %v2077, %v2069
      %v3022 = vpack.c.b16 %v2078, %v2070
      %v3023 = vpack.c.b16 %v2087, %v2079
      %v3024 = vpack.c.b16 %v2088, %v2080
      %v3025 = vpack.c.b16 %v2089, %v2081
      %v3026 = vpack.c.b16 %v2090, %v2082
      %v3027 = vpack.c.b16 %v2091, %v2083
      %v3028 = vpack.c.b16 %v2092, %v2084
      %v3029 = vpack.c.b16 %v2093, %v2085
      %v3030 = vpack.c.b16 %v2094, %v2086
      %v3031 = vpack.c.b16 %v2103, %v2095
      %v3032 = vpack.c.b16 %v2104, %v2096
      %v3033 = vpack.c.b16 %v2105, %v2097
      %v3034 = vpack.c.b16 %v2106, %v2098
      %v3035 = vpack.c.b16 %v2107, %v2099
      %v3036 = vpack.c.b16 %v2108, %v2100
      %v3037 = vpack.c.b16 %v2109, %v2101
      %v3038 = vpack.c.b16 %v2110, %v2102
      %v3039 = vpack.c.b16 %v2119, %v2111
      %v3040 = vpack.c.b16 %v2120, %v2112
      %v3041 = vpack.c.b16 %v2121, %v2113
      %v3042 = vpack.c.b16 %v2122, %v2114
      %v3043 = vpack.c.b16 %v2123, %v2115
      %v3044 = vpack.c.b16 %v2124, %v2116
      %v3045 = vpack.c.b16 %v2125, %v2117
      %v3046 = vpack.c.b16 %v2126, %v2118
      %v3047 = vpack.c.b16 %v2135, %v2127
      %v3048 = vpack.c.b16 %v2136, %v2128
      %v3049 = vpack.c.b16 %v2137, %v2129
      %v3050 = vpack.c.b16 %v2138, %v2130
      %v3051 = vpack.c.b16 %v2139, %v2131
      %v3052 = vpack.c.b16 %v2140, %v2132
      %v3053 = vpack.c.b16 %v2141, %v2133
      %v3054 = vpack.c.b16 %v2142, %v2134
      %v3055 = vpack.c.b16 %v2151, %v2143
      %v3056 = vpack.c.b16 %v2152, %v2144
      %v3057 = vpack.c.b16 %v2153, %v2145
      %v3058 = vpack.c.b16 %v2154, %v2146
      %v3059 = vpack.c.b16 %v2155, %v2147
      %v3060 = vpack.c.b16 %v2156, %v2148
      %v3061 = vpack.c.b16 %v2157, %v2149
      %v3062 = vpack.c.b16 %v2158, %v2150
      %v3063 = vpack.c.b16 %v2167, %v2159
      %v3064 = vpack.c.b16 %v2168, %v2160
      %v3065 = vpack.c.b16 %v2169, %v2161
      %v3066 = vpack.c.b16 %v2170, %v2162
      %v3067 = vpack.c.b16 %v2171, %v2163
      %v3068 = vpack.c.b16 %v2172, %v2164
      %v3069 = vpack.c.b16 %v2173, %v2165
      %v3070 = vpack.c.b16 %v2174, %v2166
      %v3071 = vpack.c.b16 %v2183, %v2175
      %v3072 = vpack.c.b16 %v2184, %v2176
      %v3073 = vpack.c.b16 %v2185, %v2177
      %v3074 = vpack.c.b16 %v2186, %v2178
      %v3075 = vpack.c.b16 %v2187, %v2179
      %v3076 = vpack.c.b16 %v2188, %v2180
      %v3077 = vpack.c.b16 %v2189, %v2181
      %v3078 = vpack.c.b16 %v2190, %v2182
      %v3079 = vpack.c.b16 %v2199, %v2191
      %v3080 = vpack.c.b16 %v2200, %v2192
      %v3081 = vpack.c.b16 %v2201, %v2193
      %v3082 = vpack.c.b16 %v2202, %v2194
      %v3083 = vpack.c.b16 %v2203, %v2195
      %v3084 = vpack.c.b16 %v2204, %v2196
      %v3085 = vpack.c.b16 %v2205, %v2197
      %v3086 = vpack.c.b16 %v2206, %v2198
      %v3087 = vpack.c.b16 %v2215, %v2207
      %v3088 = vpack.c.b16 %v2216, %v2208
      %v3089 = vpack.c.b16 %v2217, %v2209
      %v3090 = vpack.c.b16 %v2218, %v2210
      %v3091 = vpack.c.b16 %v2219, %v2211
      %v3092 = vpack.c.b16 %v2220, %v2212
      %v3093 = vpack.c.b16 %v2221, %v2213
      %v3094 = vpack.c.b16 %v2222, %v2214
      %v3095 = vpack.c.b16 %v2231, %v2223
      %v3096 = vpack.c.b16 %v2232, %v2224
      %v3097 = vpack.c.b16 %v2233, %v2225
      %v3098 = vpack.c.b16 %v2234, %v2226
      %v3099 = vpack.c.b16 %v2235, %v2227
      %v3100 = vpack.c.b16 %v2236, %v2228
      %v3101 = vpack.c.b16 %v2237, %v2229
      %v3102 = vpack.c.b16 %v2238, %v2230
      %v3103 = vpack.c.b16 %v2247, %v2239
      %v3104 = vpack.c.b16 %v2248, %v2240
      %v3105 = vpack.c.b16 %v2249, %v2241
      %v3106 = vpack.c.b16 %v2250, %v2242
      %v3107 = vpack.c.b16 %v2251, %v2243
      %v3108 = vpack.c.b16 %v2252, %v2244
      %v3109 = vpack.c.b16 %v2253, %v2245
      %v3110 = vpack.c.b16 %v2254, %v2246
      %v3111 = vpack.c.b16 %v2263, %v2255
      %v3112 = vpack.c.b16 %v2264, %v2256
      %v3113 = vpack.c.b16 %v2265, %v2257
      %v3114 = vpack.c.b16 %v2266, %v2258
      %v3115 = vpack.c.b16 %v2267, %v2259
      %v3116 = vpack.c.b16 %v2268, %v2260
      %v3117 = vpack.c.b16 %v2269, %v2261
      %v3118 = vpack.c.b16 %v2270, %v2262
      %v3119 = vpack.c.b16 %v2279, %v2271
      %v3120 = vpack.c.b16 %v2280, %v2272
      %v3121 = vpack.c.b16 %v2281, %v2273
      %v3122 = vpack.c.b16 %v2282, %v2274
      %v3123 = vpack.c.b16 %v2283, %v2275
      %v3124 = vpack.c.b16 %v2284, %v2276
      %v3125 = vpack.c.b16 %v2285, %v2277
      %v3126 = vpack.c.b16 %v2286, %v2278
      %v3127 = vpack.c.b16 %v2295, %v2287
      %v3128 = vpack.c.b16 %v2296, %v2288
      %v3129 = vpack.c.b16 %v2297, %v2289
      %v3130 = vpack.c.b16 %v2298, %v2290
      %v3131 = vpack.c.b16 %v2299, %v2291
      %v3132 = vpack.c.b16 %v2300, %v2292
      %v3133 = vpack.c.b16 %v2301, %v2293
      %v3134 = vpack.c.b16 %v2302, %v2294
      %v3135 = vpack.c.b16 %v2311, %v2303
      %v3136 = vpack.c.b16 %v2312, %v2304
      %v3137 = vpack.c.b16 %v2313, %v2305
      %v3138 = vpack.c.b16 %v2314, %v2306
      %v3139 = vpack.c.b16 %v2315, %v2307
      %v3140 = vpack.c.b16 %v2316, %v2308
      %v3141 = vpack.c.b16 %v2317, %v2309
      %v3142 = vpack.c.b16 %v2318, %v2310
      %v3143 = vpack.c.b16 %v2327, %v2319
      %v3144 = vpack.c.b16 %v2328, %v2320
      %v3145 = vpack.c.b16 %v2329, %v2321
      %v3146 = vpack.c.b16 %v2330, %v2322
      %v3147 = vpack.c.b16 %v2331, %v2323
      %v3148 = vpack.c.b16 %v2332, %v2324
      %v3149 = vpack.c.b16 %v2333, %v2325
      %v3150 = vpack.c.b16 %v2334, %v2326
      %v3151 = vpack.c.b16 %v2343, %v2335
      %v3152 = vpack.c.b16 %v2344, %v2336
      %v3153 = vpack.c.b16 %v2345, %v2337
      %v3154 = vpack.c.b16 %v2346, %v2338
      %v3155 = vpack.c.b16 %v2347, %v2339
      %v3156 = vpack.c.b16 %v2348, %v2340
      %v3157 = vpack.c.b16 %v2349, %v2341
      %v3158 = vpack.c.b16 %v2350, %v2342
      %v3159 = vpack.c.b16 %v2359, %v2351
      %v3160 = vpack.c.b16 %v2360, %v2352
      %v3161 = vpack.c.b16 %v2361, %v2353
      %v3162 = vpack.c.b16 %v2362, %v2354
      %v3163 = vpack.c.b16 %v2363, %v2355
      %v3164 = vpack.c.b16 %v2364, %v2356
      %v3165 = vpack.c.b16 %v2365, %v2357
      %v3166 = vpack.c.b16 %v2366, %v2358
      %v3167 = vpack.c.b16 %v2375, %v2367
      %v3168 = vpack.c.b16 %v2376, %v2368
      %v3169 = vpack.c.b16 %v2377, %v2369
      %v3170 = vpack.c.b16 %v2378, %v2370
      %v3171 = vpack.c.b16 %v2379, %v2371
      %v3172 = vpack.c.b16 %v2380, %v2372
      %v3173 = vpack.c.b16 %v2381, %v2373
      %v3174 = vpack.c.b16 %v2382, %v2374
      %v3175 = vpack.c.b16 %v2391, %v2383
      %v3176 = vpack.c.b16 %v2392, %v2384
      %v3177 = vpack.c.b16 %v2393, %v2385
      %v3178 = vpack.c.b16 %v2394, %v2386
      %v3179 = vpack.c.b16 %v2395, %v2387
      %v3180 = vpack.c.b16 %v2396, %v2388
      %v3181 = vpack.c.b16 %v2397, %v2389
      %v3182 = vpack.c.b16 %v2398, %v2390
      %v3183 = vpack.c.b16 %v2407, %v2399
      %v3184 = vpack.c.b16 %v2408, %v2400
      %v3185 = vpack.c.b16 %v2409, %v2401
      %v3186 = vpack.c.b16 %v2410, %v2402
      %v3187 = vpack.c.b16 %v2411, %v2403
      %v3188 = vpack.c.b16 %v2412, %v2404
      %v3189 = vpack.c.b16 %v2413, %v2405
      %v3190 = vpack.c.b16 %v2414, %v2406
      %v3191 = vpack.c.b16 %v2423, %v2415
      %v3192 = vpack.c.b16 %v2424, %v2416
      %v3193 = vpack.c.b16 %v2425, %v2417
      %v3194 = vpack.c.b16 %v2426, %v2418
      %v3195 = vpack.c.b16 %v2427, %v2419
      %v3196 = vpack.c.b16 %v2428, %v2420
      %v3197 = vpack.c.b16 %v2429, %v2421
      %v3198 = vpack.c.b16 %v2430, %v2422
      %v3199 = vpack.c.b16 %v2439, %v2431
      %v3200 = vpack.c.b16 %v2440, %v2432
      %v3201 = vpack.c.b16 %v2441, %v2433
      %v3202 = vpack.c.b16 %v2442, %v2434
      %v3203 = vpack.c.b16 %v2443, %v2435
      %v3204 = vpack.c.b16 %v2444, %v2436
      %v3205 = vpack.c.b16 %v2445, %v2437
      %v3206 = vpack.c.b16 %v2446, %v2438
      %v3207 = vpack.c.b16 %v2455, %v2447
      %v3208 = vpack.c.b16 %v2456, %v2448
      %v3209 = vpack.c.b16 %v2457, %v2449
      %v3210 = vpack.c.b16 %v2458, %v2450
      %v3211 = vpack.c.b16 %v2459, %v2451
      %v3212 = vpack.c.b16 %v2460, %v2452
      %v3213 = vpack.c.b16 %v2461, %v2453
      %v3214 = vpack.c.b16 %v2462, %v2454
      %v3215 = vpack.c.b16 %v2471, %v2463
      %v3216 = vpack.c.b16 %v2472, %v2464
      %v3217 = vpack.c.b16 %v2473, %v2465
      %v3218 = vpack.c.b16 %v2474, %v2466
      %v3219 = vpack.c.b16 %v2475, %v2467
      %v3220 = vpack.c.b16 %v2476, %v2468
      %v3221 = vpack.c.b16 %v2477, %v2469
      %v3222 = vpack.c.b16 %v2478, %v2470
      %v3223 = vpack.c.b16 %v2487, %v2479
      %v3224 = vpack.c.b16 %v2488, %v2480
      %v3225 = vpack.c.b16 %v2489, %v2481
      %v3226 = vpack.c.b16 %v2490, %v2482
      %v3227 = vpack.c.b16 %v2491, %v2483
      %v3228 = vpack.c.b16 %v2492, %v2484
      %v3229 = vpack.c.b16 %v2493, %v2485
      %v3230 = vpack.c.b16 %v2494, %v2486
      %v3231 = vpack.c.b16 %v2503, %v2495
      %v3232 = vpack.c.b16 %v2504, %v2496
      %v3233 = vpack.c.b16 %v2505, %v2497
      %v3234 = vpack.c.b16 %v2506, %v2498
      %v3235 = vpack.c.b16 %v2507, %v2499
      %v3236 = vpack.c.b16 %v2508, %v2500
      %v3237 = vpack.c.b16 %v2509, %v2501
      %v3238 = vpack.c.b16 %v2510, %v2502
      %v3239 = vpack.c.b16 %v2519, %v2511
      %v3240 = vpack.c.b16 %v2520, %v2512
      %v3241 = vpack.c.b16 %v2521, %v2513
      %v3242 = vpack.c.b16 %v2522, %v2514
      %v3243 = vpack.c.b16 %v2523, %v2515
      %v3244 = vpack.c.b16 %v2524, %v2516
      %v3245 = vpack.c.b16 %v2525, %v2517
      %v3246 = vpack.c.b16 %v2526, %v2518
      %v3247 = vpack.c.b16 %v2535, %v2527
      %v3248 = vpack.c.b16 %v2536, %v2528
      %v3249 = vpack.c.b16 %v2537, %v2529
      %v3250 = vpack.c.b16 %v2538, %v2530
      %v3251 = vpack.c.b16 %v2539, %v2531
      %v3252 = vpack.c.b16 %v2540, %v2532
      %v3253 = vpack.c.b16 %v2541, %v2533
      %v3254 = vpack.c.b16 %v2542, %v2534
      %v3255 = vpack.c.b16 %v2551, %v2543
      %v3256 = vpack.c.b16 %v2552, %v2544
      %v3257 = vpack.c.b16 %v2553, %v2545
      %v3258 = vpack.c.b16 %v2554, %v2546
      %v3259 = vpack.c.b16 %v2555, %v2547
      %v3260 = vpack.c.b16 %v2556, %v2548
      %v3261 = vpack.c.b16 %v2557, %v2549
      %v3262 = vpack.c.b16 %v2558, %v2550
      %v3263 = vpack.c.b16 %v2567, %v2559
      %v3264 = vpack.c.b16 %v2568, %v2560
      %v3265 = vpack.c.b16 %v2569, %v2561
      %v3266 = vpack.c.b16 %v2570, %v2562
      %v3267 = vpack.c.b16 %v2571, %v2563
      %v3268 = vpack.c.b16 %v2572, %v2564
      %v3269 = vpack.c.b16 %v2573, %v2565
      %v3270 = vpack.c.b16 %v2574, %v2566
      %v3271 = vpack.c.b16 %v2583, %v2575
      %v3272 = vpack.c.b16 %v2584, %v2576
      %v3273 = vpack.c.b16 %v2585, %v2577
      %v3274 = vpack.c.b16 %v2586, %v2578
      %v3275 = vpack.c.b16 %v2587, %v2579
      %v3276 = vpack.c.b16 %v2588, %v2580
      %v3277 = vpack.c.b16 %v2589, %v2581
      %v3278 = vpack.c.b16 %v2590, %v2582
      %v3279 = vpack.c.b16 %v2599, %v2591
      %v3280 = vpack.c.b16 %v2600, %v2592
      %v3281 = vpack.c.b16 %v2601, %v2593
      %v3282 = vpack.c.b16 %v2602, %v2594
      %v3283 = vpack.c.b16 %v2603, %v2595
      %v3284 = vpack.c.b16 %v2604, %v2596
      %v3285 = vpack.c.b16 %v2605, %v2597
      %v3286 = vpack.c.b16 %v2606, %v2598
      %v3287 = vpack.c.b16 %v2615, %v2607
      %v3288 = vpack.c.b16 %v2616, %v2608
      %v3289 = vpack.c.b16 %v2617, %v2609
      %v3290 = vpack.c.b16 %v2618, %v2610
      %v3291 = vpack.c.b16 %v2619, %v2611
      %v3292 = vpack.c.b16 %v2620, %v2612
      %v3293 = vpack.c.b16 %v2621, %v2613
      %v3294 = vpack.c.b16 %v2622, %v2614
      %v3295 = vpack.c.b16 %v2631, %v2623
      %v3296 = vpack.c.b16 %v2632, %v2624
      %v3297 = vpack.c.b16 %v2633, %v2625
      %v3298 = vpack.c.b16 %v2634, %v2626
      %v3299 = vpack.c.b16 %v2635, %v2627
      %v3300 = vpack.c.b16 %v2636, %v2628
      %v3301 = vpack.c.b16 %v2637, %v2629
      %v3302 = vpack.c.b16 %v2638, %v2630
      %v3303 = vpack.c.b16 %v2647, %v2639
      %v3304 = vpack.c.b16 %v2648, %v2640
      %v3305 = vpack.c.b16 %v2649, %v2641
      %v3306 = vpack.c.b16 %v2650, %v2642
      %v3307 = vpack.c.b16 %v2651, %v2643
      %v3308 = vpack.c.b16 %v2652, %v2644
      %v3309 = vpack.c.b16 %v2653, %v2645
      %v3310 = vpack.c.b16 %v2654, %v2646
      %v3311 = vpack.c.b16 %v2663, %v2655
      %v3312 = vpack.c.b16 %v2664, %v2656
      %v3313 = vpack.c.b16 %v2665, %v2657
      %v3314 = vpack.c.b16 %v2666, %v2658
      %v3315 = vpack.c.b16 %v2667, %v2659
      %v3316 = vpack.c.b16 %v2668, %v2660
      %v3317 = vpack.c.b16 %v2669, %v2661
      %v3318 = vpack.c.b16 %v2670, %v2662
      %v3319 = vpack.c.b16 %v2679, %v2671
      %v3320 = vpack.c.b16 %v2680, %v2672
      %v3321 = vpack.c.b16 %v2681, %v2673
      %v3322 = vpack.c.b16 %v2682, %v2674
      %v3323 = vpack.c.b16 %v2683, %v2675
      %v3324 = vpack.c.b16 %v2684, %v2676
      %v3325 = vpack.c.b16 %v2685, %v2677
      %v3326 = vpack.c.b16 %v2686, %v2678
      %v3327 = vpack.c.b16 %v2695, %v2687
      %v3328 = vpack.c.b16 %v2696, %v2688
      %v3329 = vpack.c.b16 %v2697, %v2689
      %v3330 = vpack.c.b16 %v2698, %v2690
      %v3331 = vpack.c.b16 %v2699, %v2691
      %v3332 = vpack.c.b16 %v2700, %v2692
      %v3333 = vpack.c.b16 %v2701, %v2693
      %v3334 = vpack.c.b16 %v2702, %v2694
      %v3335 = vpack.c.b16 %v2711, %v2703
      %v3336 = vpack.c.b16 %v2712, %v2704
      %v3337 = vpack.c.b16 %v2713, %v2705
      %v3338 = vpack.c.b16 %v2714, %v2706
      %v3339 = vpack.c.b16 %v2715, %v2707
      %v3340 = vpack.c.b16 %v2716, %v2708
      %v3341 = vpack.c.b16 %v2717, %v2709
      %v3342 = vpack.c.b16 %v2718, %v2710
      %v3343 = vpack.c.b16 %v2727, %v2719
      %v3344 = vpack.c.b16 %v2728, %v2720
      %v3345 = vpack.c.b16 %v2729, %v2721
      %v3346 = vpack.c.b16 %v2730, %v2722
      %v3347 = vpack.c.b16 %v2731, %v2723
      %v3348 = vpack.c.b16 %v2732, %v2724
      %v3349 = vpack.c.b16 %v2733, %v2725
      %v3350 = vpack.c.b16 %v2734, %v2726
      %v3351 = vpack.c.b16 %v2743, %v2735
      %v3352 = vpack.c.b16 %v2744, %v2736
      %v3353 = vpack.c.b16 %v2745, %v2737
      %v3354 = vpack.c.b16 %v2746, %v2738
      %v3355 = vpack.c.b16 %v2747, %v2739
      %v3356 = vpack.c.b16 %v2748, %v2740
      %v3357 = vpack.c.b16 %v2749, %v2741
      %v3358 = vpack.c.b16 %v2750, %v2742
      %v3359 = vpack.c.b16 %v2759, %v2751
      %v3360 = vpack.c.b16 %v2760, %v2752
      %v3361 = vpack.c.b16 %v2761, %v2753
      %v3362 = vpack.c.b16 %v2762, %v2754
      %v3363 = vpack.c.b16 %v2763, %v2755
      %v3364 = vpack.c.b16 %v2764, %v2756
      %v3365 = vpack.c.b16 %v2765, %v2757
      %v3366 = vpack.c.b16 %v2766, %v2758
      %v3367 = vpack.c.b16 %v2775, %v2767
      %v3368 = vpack.c.b16 %v2776, %v2768
      %v3369 = vpack.c.b16 %v2777, %v2769
      %v3370 = vpack.c.b16 %v2778, %v2770
      %v3371 = vpack.c.b16 %v2779, %v2771
      %v3372 = vpack.c.b16 %v2780, %v2772
      %v3373 = vpack.c.b16 %v2781, %v2773
      %v3374 = vpack.c.b16 %v2782, %v2774
      %v3375 = vpack.c.b16 %v2791, %v2783
      %v3376 = vpack.c.b16 %v2792, %v2784
      %v3377 = vpack.c.b16 %v2793, %v2785
      %v3378 = vpack.c.b16 %v2794, %v2786
      %v3379 = vpack.c.b16 %v2795, %v2787
      %v3380 = vpack.c.b16 %v2796, %v2788
      %v3381 = vpack.c.b16 %v2797, %v2789
      %v3382 = vpack.c.b16 %v2798, %v2790
      %v3383 = vpack.c.b16 %v2807, %v2799
      %v3384 = vpack.c.b16 %v2808, %v2800
      %v3385 = vpack.c.b16 %v2809, %v2801
      %v3386 = vpack.c.b16 %v2810, %v2802
      %v3387 = vpack.c.b16 %v2811, %v2803
      %v3388 = vpack.c.b16 %v2812, %v2804
      %v3389 = vpack.c.b16 %v2813, %v2805
      %v3390 = vpack.c.b16 %v2814, %v2806
      %v3391 = vpack.c.b16 %v2823, %v2815
      %v3392 = vpack.c.b16 %v2824, %v2816
      %v3393 = vpack.c.b16 %v2825, %v2817
      %v3394 = vpack.c.b16 %v2826, %v2818
      %v3395 = vpack.c.b16 %v2827, %v2819
      %v3396 = vpack.c.b16 %v2828, %v2820
      %v3397 = vpack.c.b16 %v2829, %v2821
      %v3398 = vpack.c.b16 %v2830, %v2822
      %v3399 = vpack.c.b16 %v2839, %v2831
      %v3400 = vpack.c.b16 %v2840, %v2832
      %v3401 = vpack.c.b16 %v2841, %v2833
      %v3402 = vpack.c.b16 %v2842, %v2834
      %v3403 = vpack.c.b16 %v2843, %v2835
      %v3404 = vpack.c.b16 %v2844, %v2836
      %v3405 = vpack.c.b16 %v2845, %v2837
      %v3406 = vpack.c.b16 %v2846, %v2838
      %v3407 = vpack.c.b16 %v2855, %v2847
      %v3408 = vpack.c.b16 %v2856, %v2848
      %v3409 = vpack.c.b16 %v2857, %v2849
      %v3410 = vpack.c.b16 %v2858, %v2850
      %v3411 = vpack.c.b16 %v2859, %v2851
      %v3412 = vpack.c.b16 %v2860, %v2852
      %v3413 = vpack.c.b16 %v2861, %v2853
      %v3414 = vpack.c.b16 %v2862, %v2854
      %v3415 = vpack.c.b16 %v2871, %v2863
      %v3416 = vpack.c.b16 %v2872, %v2864
      %v3417 = vpack.c.b16 %v2873, %v2865
      %v3418 = vpack.c.b16 %v2874, %v2866
      %v3419 = vpack.c.b16 %v2875, %v2867
      %v3420 = vpack.c.b16 %v2876, %v2868
      %v3421 = vpack.c.b16 %v2877, %v2869
      %v3422 = vpack.c.b16 %v2878, %v2870
      %v3423 = vpack.c.b16 %v2887, %v2879
      %v3424 = vpack.c.b16 %v2888, %v2880
      %v3425 = vpack.c.b16 %v2889, %v2881
      %v3426 = vpack.c.b16 %v2890, %v2882
      %v3427 = vpack.c.b16 %v2891, %v2883
      %v3428 = vpack.c.b16 %v2892, %v2884
      %v3429 = vpack.c.b16 %v2893, %v2885
      %v3430 = vpack.c.b16 %v2894, %v2886
      %v3431 = vpack.c.b16 %v2903, %v2895
      %v3432 = vpack.c.b16 %v2904, %v2896
      %v3433 = vpack.c.b16 %v2905, %v2897
      %v3434 = vpack.c.b16 %v2906, %v2898
      %v3435 = vpack.c.b16 %v2907, %v2899
      %v3436 = vpack.c.b16 %v2908, %v2900
      %v3437 = vpack.c.b16 %v2909, %v2901
      %v3438 = vpack.c.b16 %v2910, %v2902
      %v3439 = vpack.c.b16 %v2919, %v2911
      %v3440 = vpack.c.b16 %v2920, %v2912
      %v3441 = vpack.c.b16 %v2921, %v2913
      %v3442 = vpack.c.b16 %v2922, %v2914
      %v3443 = vpack.c.b16 %v2923, %v2915
      %v3444 = vpack.c.b16 %v2924, %v2916
      %v3445 = vpack.c.b16 %v2925, %v2917
      %v3446 = vpack.c.b16 %v2926, %v2918
      %v3447 = vpack.c.b16 %v2935, %v2927
      %v3448 = vpack.c.b16 %v2936, %v2928
      %v3449 = vpack.c.b16 %v2937, %v2929
      %v3450 = vpack.c.b16 %v2938, %v2930
      %v3451 = vpack.c.b16 %v2939, %v2931
      %v3452 = vpack.c.b16 %v2940, %v2932
      %v3453 = vpack.c.b16 %v2941, %v2933
      %v3454 = vpack.c.b16 %v2942, %v2934
      %3967 = vmatprep.subr.bf16.mxu0 %v2944
      %3968 = vmatpush1.bf16.msra.mxu0 %v2943
      %3969 = vmatprep.subr.bf16.mxu0 %v2952
      %3970 = vmatpush1.bf16.msra.mxu0 %v2951
      %3971 = vmatprep.subr.bf16.mxu0 %v2960
      %3972 = vmatpush1.bf16.msra.mxu0 %v2959
      %3973 = vmatprep.subr.bf16.mxu0 %v2968
      %3974 = vmatpush1.bf16.msra.mxu0 %v2967
      %3975 = vmatprep.subr.bf16.mxu0 %v2976
      %3976 = vmatpush1.bf16.msra.mxu0 %v2975
      %3977 = vmatprep.subr.bf16.mxu0 %v2984
      %3978 = vmatpush1.bf16.msra.mxu0 %v2983
      %3979 = vmatprep.subr.bf16.mxu0 %v2992
      %3980 = vmatpush1.bf16.msra.mxu0 %v2991
      %3981 = vmatprep.subr.bf16.mxu0 %v3000
      %3982 = vmatpush1.bf16.msra.mxu0 %v2999
      %3983 = vmatprep.subr.bf16.mxu0 %v3008
      %3984 = vmatpush1.bf16.msra.mxu0 %v3007
      %3985 = vmatprep.subr.bf16.mxu0 %v3016
      %3986 = vmatpush1.bf16.msra.mxu0 %v3015
      %3987 = vmatprep.subr.bf16.mxu0 %v3024
      %3988 = vmatpush1.bf16.msra.mxu0 %v3023
      %3989 = vmatprep.subr.bf16.mxu0 %v3032
      %3990 = vmatpush1.bf16.msra.mxu0 %v3031
      %3991 = vmatprep.subr.bf16.mxu0 %v3040
      %3992 = vmatpush1.bf16.msra.mxu0 %v3039
      %3993 = vmatprep.subr.bf16.mxu0 %v3048
      %3994 = vmatpush1.bf16.msra.mxu0 %v3047
      %3995 = vmatprep.subr.bf16.mxu0 %v3056
      %3996 = vmatpush1.bf16.msra.mxu0 %v3055
      %3997 = vmatprep.subr.bf16.mxu0 %v3064
      %3998 = vmatpush1.bf16.msra.mxu0 %v3063
      %3999 = vmatprep.mubr.bf16.mxu0 %v846
      %4000 = vmatmul.mubr.bf16.gmra.mrb[0].mxu0 %v845
      %v4001 = vpop.f32.mrb[0].mxu0
      %v4002 = vadd.f32 %v1370, %v4001
      %v4003 = vpop.f32.mrb[0].mxu0
      %v4004 = vadd.f32 %v1374, %v4003
      %v4005 = vpop.f32.mrb[0].mxu0
      %v4006 = vadd.f32 %v1370, %v4005
      %v4007 = vpop.f32.mrb[0].mxu0
      %v4008 = vadd.f32 %v1374, %v4007
      %4009 = vdwg.mxu0
      %4010 = vmatprep.subr.bf16.mxu0 %v3072
      %4011 = vmatpush1.bf16.msra.mxu0 %v3071
      %4012 = vmatprep.subr.bf16.mxu0 %v3080
      %4013 = vmatpush1.bf16.msra.mxu0 %v3079
      %4014 = vmatprep.subr.bf16.mxu0 %v3088
      %4015 = vmatpush1.bf16.msra.mxu0 %v3087
      %4016 = vmatprep.subr.bf16.mxu0 %v3096
      %4017 = vmatpush1.bf16.msra.mxu0 %v3095
      %4018 = vmatprep.subr.bf16.mxu0 %v3104
      %4019 = vmatpush1.bf16.msra.mxu0 %v3103
      %4020 = vmatprep.subr.bf16.mxu0 %v3112
      %4021 = vmatpush1.bf16.msra.mxu0 %v3111
      %4022 = vmatprep.subr.bf16.mxu0 %v3120
      %4023 = vmatpush1.bf16.msra.mxu0 %v3119
      %4024 = vmatprep.subr.bf16.mxu0 %v3128
      %4025 = vmatpush1.bf16.msra.mxu0 %v3127
      %4026 = vmatprep.subr.bf16.mxu0 %v3136
      %4027 = vmatpush1.bf16.msra.mxu0 %v3135
      %4028 = vmatprep.subr.bf16.mxu0 %v3144
      %4029 = vmatpush1.bf16.msra.mxu0 %v3143
      %4030 = vmatprep.subr.bf16.mxu0 %v3152
      %4031 = vmatpush1.bf16.msra.mxu0 %v3151
      %4032 = vmatprep.subr.bf16.mxu0 %v3160
      %4033 = vmatpush1.bf16.msra.mxu0 %v3159
      %4034 = vmatprep.subr.bf16.mxu0 %v3168
      %4035 = vmatpush1.bf16.msra.mxu0 %v3167
      %4036 = vmatprep.subr.bf16.mxu0 %v3176
      %4037 = vmatpush1.bf16.msra.mxu0 %v3175
      %4038 = vmatprep.subr.bf16.mxu0 %v3184
      %4039 = vmatpush1.bf16.msra.mxu0 %v3183
      %4040 = vmatprep.subr.bf16.mxu0 %v3192
      %4041 = vmatpush1.bf16.msra.mxu0 %v3191
      %4042 = vmatprep.mubr.bf16.mxu0 %v848
      %4043 = vmatmul.mubr.bf16.gmra.mrb[0].mxu0 %v847
      %v4044 = vpop.f32.mrb[0].mxu0
      %v4045 = vadd.f32 %v4002, %v4044
      %v4046 = vpop.f32.mrb[0].mxu0
      %v4047 = vadd.f32 %v4004, %v4046
      %v4048 = vpop.f32.mrb[0].mxu0
      %v4049 = vadd.f32 %v4006, %v4048
      %v4050 = vpop.f32.mrb[0].mxu0
      %v4051 = vadd.f32 %v4008, %v4050
      %4052 = vdwg.mxu0
      %4053 = vmatprep.subr.bf16.mxu0 %v3200
      %4054 = vmatpush1.bf16.msra.mxu0 %v3199
      %4055 = vmatprep.subr.bf16.mxu0 %v3208
      %4056 = vmatpush1.bf16.msra.mxu0 %v3207
      %4057 = vmatprep.subr.bf16.mxu0 %v3216
      %4058 = vmatpush1.bf16.msra.mxu0 %v3215
      %4059 = vmatprep.subr.bf16.mxu0 %v3224
      %4060 = vmatpush1.bf16.msra.mxu0 %v3223
      %4061 = vmatprep.subr.bf16.mxu0 %v3232
      %4062 = vmatpush1.bf16.msra.mxu0 %v3231
      %4063 = vmatprep.subr.bf16.mxu0 %v3240
      %4064 = vmatpush1.bf16.msra.mxu0 %v3239
      %4065 = vmatprep.subr.bf16.mxu0 %v3248
      %4066 = vmatpush1.bf16.msra.mxu0 %v3247
      %4067 = vmatprep.subr.bf16.mxu0 %v3256
      %4068 = vmatpush1.bf16.msra.mxu0 %v3255
      %4069 = vmatprep.subr.bf16.mxu0 %v3264
      %4070 = vmatpush1.bf16.msra.mxu0 %v3263
      %4071 = vmatprep.subr.bf16.mxu0 %v3272
      %4072 = vmatpush1.bf16.msra.mxu0 %v3271
      %4073 = vmatprep.subr.bf16.mxu0 %v3280
      %4074 = vmatpush1.bf16.msra.mxu0 %v3279
      %4075 = vmatprep.subr.bf16.mxu0 %v3288
      %4076 = vmatpush1.bf16.msra.mxu0 %v3287
      %4077 = vmatprep.subr.bf16.mxu0 %v3296
      %4078 = vmatpush1.bf16.msra.mxu0 %v3295
      %4079 = vmatprep.subr.bf16.mxu0 %v3304
      %4080 = vmatpush1.bf16.msra.mxu0 %v3303
      %4081 = vmatprep.subr.bf16.mxu0 %v3312
      %4082 = vmatpush1.bf16.msra.mxu0 %v3311
      %4083 = vmatprep.subr.bf16.mxu0 %v3320
      %4084 = vmatpush1.bf16.msra.mxu0 %v3319
      %4085 = vmatprep.mubr.bf16.mxu0 %v850
      %4086 = vmatmul.mubr.bf16.gmra.mrb[0].mxu0 %v849
      %v4087 = vpop.f32.mrb[0].mxu0
      %v4088 = vadd.f32 %v4045, %v4087
      %v4089 = vpop.f32.mrb[0].mxu0
      %v4090 = vadd.f32 %v4047, %v4089
      %v4091 = vpop.f32.mrb[0].mxu0
      %v4092 = vadd.f32 %v4049, %v4091
      %v4093 = vpop.f32.mrb[0].mxu0
      %v4094 = vadd.f32 %v4051, %v4093
      %4095 = vdwg.mxu0
      %4096 = vmatprep.subr.bf16.mxu0 %v3328
      %4097 = vmatpush1.bf16.msra.mxu0 %v3327
      %4098 = vmatprep.subr.bf16.mxu0 %v3336
      %4099 = vmatpush1.bf16.msra.mxu0 %v3335
      %4100 = vmatprep.subr.bf16.mxu0 %v3344
      %4101 = vmatpush1.bf16.msra.mxu0 %v3343
      %4102 = vmatprep.subr.bf16.mxu0 %v3352
      %4103 = vmatpush1.bf16.msra.mxu0 %v3351
      %4104 = vmatprep.subr.bf16.mxu0 %v3360
      %4105 = vmatpush1.bf16.msra.mxu0 %v3359
      %4106 = vmatprep.subr.bf16.mxu0 %v3368
      %4107 = vmatpush1.bf16.msra.mxu0 %v3367
      %4108 = vmatprep.subr.bf16.mxu0 %v3376
      %4109 = vmatpush1.bf16.msra.mxu0 %v3375
      %4110 = vmatprep.subr.bf16.mxu0 %v3384
      %4111 = vmatpush1.bf16.msra.mxu0 %v3383
      %4112 = vmatprep.subr.bf16.mxu0 %v3392
      %4113 = vmatpush1.bf16.msra.mxu0 %v3391
      %4114 = vmatprep.subr.bf16.mxu0 %v3400
      %4115 = vmatpush1.bf16.msra.mxu0 %v3399
      %4116 = vmatprep.subr.bf16.mxu0 %v3408
      %4117 = vmatpush1.bf16.msra.mxu0 %v3407
      %4118 = vmatprep.subr.bf16.mxu0 %v3416
      %4119 = vmatpush1.bf16.msra.mxu0 %v3415
      %4120 = vmatprep.subr.bf16.mxu0 %v3424
      %4121 = vmatpush1.bf16.msra.mxu0 %v3423
      %4122 = vmatprep.subr.bf16.mxu0 %v3432
      %4123 = vmatpush1.bf16.msra.mxu0 %v3431
      %4124 = vmatprep.subr.bf16.mxu0 %v3440
      %4125 = vmatpush1.bf16.msra.mxu0 %v3439
      %4126 = vmatprep.subr.bf16.mxu0 %v3448
      %4127 = vmatpush1.bf16.msra.mxu0 %v3447
      %4128 = vmatprep.mubr.bf16.mxu0 %v852
      %4129 = vmatmul.mubr.bf16.gmra.mrb[0].mxu0 %v851
      %v4130 = vpop.f32.mrb[0].mxu0
      %v4131 = vadd.f32 %v4088, %v4130
      %v4132 = vpop.f32.mrb[0].mxu0
      %v4133 = vadd.f32 %v4090, %v4132
      %v4134 = vpop.f32.mrb[0].mxu0
      %v4135 = vadd.f32 %v4092, %v4134
      %v4136 = vpop.f32.mrb[0].mxu0
      %v4137 = vadd.f32 %v4094, %v4136
      %4138 = vdwg.mxu0
      %4139 = vmatprep.subr.bf16.mxu0 %v2946
      %4140 = vmatpush1.bf16.msra.mxu0 %v2945
      %4141 = vmatprep.subr.bf16.mxu0 %v2954
      %4142 = vmatpush1.bf16.msra.mxu0 %v2953
      %4143 = vmatprep.subr.bf16.mxu0 %v2962
      %4144 = vmatpush1.bf16.msra.mxu0 %v2961
      %4145 = vmatprep.subr.bf16.mxu0 %v2970
      %4146 = vmatpush1.bf16.msra.mxu0 %v2969
      %4147 = vmatprep.subr.bf16.mxu0 %v2978
      %4148 = vmatpush1.bf16.msra.mxu0 %v2977
      %4149 = vmatprep.subr.bf16.mxu0 %v2986
      %4150 = vmatpush1.bf16.msra.mxu0 %v2985
      %4151 = vmatprep.subr.bf16.mxu0 %v2994
      %4152 = vmatpush1.bf16.msra.mxu0 %v2993
      %4153 = vmatprep.subr.bf16.mxu0 %v3002
      %4154 = vmatpush1.bf16.msra.mxu0 %v3001
      %4155 = vmatprep.subr.bf16.mxu0 %v3010
      %4156 = vmatpush1.bf16.msra.mxu0 %v3009
      %4157 = vmatprep.subr.bf16.mxu0 %v3018
      %4158 = vmatpush1.bf16.msra.mxu0 %v3017
      %4159 = vmatprep.subr.bf16.mxu0 %v3026
      %4160 = vmatpush1.bf16.msra.mxu0 %v3025
      %4161 = vmatprep.subr.bf16.mxu0 %v3034
      %4162 = vmatpush1.bf16.msra.mxu0 %v3033
      %4163 = vmatprep.subr.bf16.mxu0 %v3042
      %4164 = vmatpush1.bf16.msra.mxu0 %v3041
      %4165 = vmatprep.subr.bf16.mxu0 %v3050
      %4166 = vmatpush1.bf16.msra.mxu0 %v3049
      %4167 = vmatprep.subr.bf16.mxu0 %v3058
      %4168 = vmatpush1.bf16.msra.mxu0 %v3057
      %4169 = vmatprep.subr.bf16.mxu0 %v3066
      %4170 = vmatpush1.bf16.msra.mxu0 %v3065
      %4171 = vmatprep.mubr.bf16.mxu0 %v846
      %4172 = vmatmul.mubr.bf16.gmra.mrb[0].mxu0 %v845
      %v4173 = vpop.f32.mrb[0].mxu0
      %v4174 = vadd.f32 %v1378, %v4173
      %v4175 = vpop.f32.mrb[0].mxu0
      %v4176 = vadd.f32 %v1382, %v4175
      %v4177 = vpop.f32.mrb[0].mxu0
      %v4178 = vadd.f32 %v1378, %v4177
      %v4179 = vpop.f32.mrb[0].mxu0
      %v4180 = vadd.f32 %v1382, %v4179
      %4181 = vdwg.mxu0
      %4182 = vmatprep.subr.bf16.mxu0 %v3074
      %4183 = vmatpush1.bf16.msra.mxu0 %v3073
      %4184 = vmatprep.subr.bf16.mxu0 %v3082
      %4185 = vmatpush1.bf16.msra.mxu0 %v3081
      %4186 = vmatprep.subr.bf16.mxu0 %v3090
      %4187 = vmatpush1.bf16.msra.mxu0 %v3089
      %4188 = vmatprep.subr.bf16.mxu0 %v3098
      %4189 = vmatpush1.bf16.msra.mxu0 %v3097
      %4190 = vmatprep.subr.bf16.mxu0 %v3106
      %4191 = vmatpush1.bf16.msra.mxu0 %v3105
      %4192 = vmatprep.subr.bf16.mxu0 %v3114
      %4193 = vmatpush1.bf16.msra.mxu0 %v3113
      %4194 = vmatprep.subr.bf16.mxu0 %v3122
      %4195 = vmatpush1.bf16.msra.mxu0 %v3121
      %4196 = vmatprep.subr.bf16.mxu0 %v3130
      %4197 = vmatpush1.bf16.msra.mxu0 %v3129
      %4198 = vmatprep.subr.bf16.mxu0 %v3138
      %4199 = vmatpush1.bf16.msra.mxu0 %v3137
      %4200 = vmatprep.subr.bf16.mxu0 %v3146
      %4201 = vmatpush1.bf16.msra.mxu0 %v3145
      %4202 = vmatprep.subr.bf16.mxu0 %v3154
      %4203 = vmatpush1.bf16.msra.mxu0 %v3153
      %4204 = vmatprep.subr.bf16.mxu0 %v3162
      %4205 = vmatpush1.bf16.msra.mxu0 %v3161
      %4206 = vmatprep.subr.bf16.mxu0 %v3170
      %4207 = vmatpush1.bf16.msra.mxu0 %v3169
      %4208 = vmatprep.subr.bf16.mxu0 %v3178
      %4209 = vmatpush1.bf16.msra.mxu0 %v3177
      %4210 = vmatprep.subr.bf16.mxu0 %v3186
      %4211 = vmatpush1.bf16.msra.mxu0 %v3185
      %4212 = vmatprep.subr.bf16.mxu0 %v3194
      %4213 = vmatpush1.bf16.msra.mxu0 %v3193
      %4214 = vmatprep.mubr.bf16.mxu0 %v848
      %4215 = vmatmul.mubr.bf16.gmra.mrb[0].mxu0 %v847
      %v4216 = vpop.f32.mrb[0].mxu0
      %v4217 = vadd.f32 %v4174, %v4216
      %v4218 = vpop.f32.mrb[0].mxu0
      %v4219 = vadd.f32 %v4176, %v4218
      %v4220 = vpop.f32.mrb[0].mxu0
      %v4221 = vadd.f32 %v4178, %v4220
      %v4222 = vpop.f32.mrb[0].mxu0
      %v4223 = vadd.f32 %v4180, %v4222
      %4224 = vdwg.mxu0
      %4225 = vmatprep.subr.bf16.mxu0 %v3202
      %4226 = vmatpush1.bf16.msra.mxu0 %v3201
      %4227 = vmatprep.subr.bf16.mxu0 %v3210
      %4228 = vmatpush1.bf16.msra.mxu0 %v3209
      %4229 = vmatprep.subr.bf16.mxu0 %v3218
      %4230 = vmatpush1.bf16.msra.mxu0 %v3217
      %4231 = vmatprep.subr.bf16.mxu0 %v3226
      %4232 = vmatpush1.bf16.msra.mxu0 %v3225
      %4233 = vmatprep.subr.bf16.mxu0 %v3234
      %4234 = vmatpush1.bf16.msra.mxu0 %v3233
      %4235 = vmatprep.subr.bf16.mxu0 %v3242
      %4236 = vmatpush1.bf16.msra.mxu0 %v3241
      %4237 = vmatprep.subr.bf16.mxu0 %v3250
      %4238 = vmatpush1.bf16.msra.mxu0 %v3249
      %4239 = vmatprep.subr.bf16.mxu0 %v3258
      %4240 = vmatpush1.bf16.msra.mxu0 %v3257
      %4241 = vmatprep.subr.bf16.mxu0 %v3266
      %4242 = vmatpush1.bf16.msra.mxu0 %v3265
      %4243 = vmatprep.subr.bf16.mxu0 %v3274
      %4244 = vmatpush1.bf16.msra.mxu0 %v3273
      %4245 = vmatprep.subr.bf16.mxu0 %v3282
      %4246 = vmatpush1.bf16.msra.mxu0 %v3281
      %4247 = vmatprep.subr.bf16.mxu0 %v3290
      %4248 = vmatpush1.bf16.msra.mxu0 %v3289
      %4249 = vmatprep.subr.bf16.mxu0 %v3298
      %4250 = vmatpush1.bf16.msra.mxu0 %v3297
      %4251 = vmatprep.subr.bf16.mxu0 %v3306
      %4252 = vmatpush1.bf16.msra.mxu0 %v3305
      %4253 = vmatprep.subr.bf16.mxu0 %v3314
      %4254 = vmatpush1.bf16.msra.mxu0 %v3313
      %4255 = vmatprep.subr.bf16.mxu0 %v3322
      %4256 = vmatpush1.bf16.msra.mxu0 %v3321
      %4257 = vmatprep.mubr.bf16.mxu0 %v850
      %4258 = vmatmul.mubr.bf16.gmra.mrb[0].mxu0 %v849
      %v4259 = vpop.f32.mrb[0].mxu0
      %v4260 = vadd.f32 %v4217, %v4259
      %v4261 = vpop.f32.mrb[0].mxu0
      %v4262 = vadd.f32 %v4219, %v4261
      %v4263 = vpop.f32.mrb[0].mxu0
      %v4264 = vadd.f32 %v4221, %v4263
      %v4265 = vpop.f32.mrb[0].mxu0
      %v4266 = vadd.f32 %v4223, %v4265
      %4267 = vdwg.mxu0
      %4268 = vmatprep.subr.bf16.mxu0 %v3330
      %4269 = vmatpush1.bf16.msra.mxu0 %v3329
      %4270 = vmatprep.subr.bf16.mxu0 %v3338
      %4271 = vmatpush1.bf16.msra.mxu0 %v3337
      %4272 = vmatprep.subr.bf16.mxu0 %v3346
      %4273 = vmatpush1.bf16.msra.mxu0 %v3345
      %4274 = vmatprep.subr.bf16.mxu0 %v3354
      %4275 = vmatpush1.bf16.msra.mxu0 %v3353
      %4276 = vmatprep.subr.bf16.mxu0 %v3362
      %4277 = vmatpush1.bf16.msra.mxu0 %v3361
      %4278 = vmatprep.subr.bf16.mxu0 %v3370
      %4279 = vmatpush1.bf16.msra.mxu0 %v3369
      %4280 = vmatprep.subr.bf16.mxu0 %v3378
      %4281 = vmatpush1.bf16.msra.mxu0 %v3377
      %4282 = vmatprep.subr.bf16.mxu0 %v3386
      %4283 = vmatpush1.bf16.msra.mxu0 %v3385
      %4284 = vmatprep.subr.bf16.mxu0 %v3394
      %4285 = vmatpush1.bf16.msra.mxu0 %v3393
      %4286 = vmatprep.subr.bf16.mxu0 %v3402
      %4287 = vmatpush1.bf16.msra.mxu0 %v3401
      %4288 = vmatprep.subr.bf16.mxu0 %v3410
      %4289 = vmatpush1.bf16.msra.mxu0 %v3409
      %4290 = vmatprep.subr.bf16.mxu0 %v3418
      %4291 = vmatpush1.bf16.msra.mxu0 %v3417
      %4292 = vmatprep.subr.bf16.mxu0 %v3426
      %4293 = vmatpush1.bf16.msra.mxu0 %v3425
      %4294 = vmatprep.subr.bf16.mxu0 %v3434
      %4295 = vmatpush1.bf16.msra.mxu0 %v3433
      %4296 = vmatprep.subr.bf16.mxu0 %v3442
      %4297 = vmatpush1.bf16.msra.mxu0 %v3441
      %4298 = vmatprep.subr.bf16.mxu0 %v3450
      %4299 = vmatpush1.bf16.msra.mxu0 %v3449
      %4300 = vmatprep.mubr.bf16.mxu0 %v852
      %4301 = vmatmul.mubr.bf16.gmra.mrb[0].mxu0 %v851
      %v4302 = vpop.f32.mrb[0].mxu0
      %v4303 = vadd.f32 %v4260, %v4302
      %v4304 = vpop.f32.mrb[0].mxu0
      %v4305 = vadd.f32 %v4262, %v4304
      %v4306 = vpop.f32.mrb[0].mxu0
      %v4307 = vadd.f32 %v4264, %v4306
      %v4308 = vpop.f32.mrb[0].mxu0
      %v4309 = vadd.f32 %v4266, %v4308
      %4310 = vdwg.mxu0
      %4311 = vmatprep.subr.bf16.mxu0 %v2948
      %4312 = vmatpush1.bf16.msra.mxu0 %v2947
      %4313 = vmatprep.subr.bf16.mxu0 %v2956
      %4314 = vmatpush1.bf16.msra.mxu0 %v2955
      %4315 = vmatprep.subr.bf16.mxu0 %v2964
      %4316 = vmatpush1.bf16.msra.mxu0 %v2963
      %4317 = vmatprep.subr.bf16.mxu0 %v2972
      %4318 = vmatpush1.bf16.msra.mxu0 %v2971
      %4319 = vmatprep.subr.bf16.mxu0 %v2980
      %4320 = vmatpush1.bf16.msra.mxu0 %v2979
      %4321 = vmatprep.subr.bf16.mxu0 %v2988
      %4322 = vmatpush1.bf16.msra.mxu0 %v2987
      %4323 = vmatprep.subr.bf16.mxu0 %v2996
      %4324 = vmatpush1.bf16.msra.mxu0 %v2995
      %4325 = vmatprep.subr.bf16.mxu0 %v3004
      %4326 = vmatpush1.bf16.msra.mxu0 %v3003
      %4327 = vmatprep.subr.bf16.mxu0 %v3012
      %4328 = vmatpush1.bf16.msra.mxu0 %v3011
      %4329 = vmatprep.subr.bf16.mxu0 %v3020
      %4330 = vmatpush1.bf16.msra.mxu0 %v3019
      %4331 = vmatprep.subr.bf16.mxu0 %v3028
      %4332 = vmatpush1.bf16.msra.mxu0 %v3027
      %4333 = vmatprep.subr.bf16.mxu0 %v3036
      %4334 = vmatpush1.bf16.msra.mxu0 %v3035
      %4335 = vmatprep.subr.bf16.mxu0 %v3044
      %4336 = vmatpush1.bf16.msra.mxu0 %v3043
      %4337 = vmatprep.subr.bf16.mxu0 %v3052
      %4338 = vmatpush1.bf16.msra.mxu0 %v3051
      %4339 = vmatprep.subr.bf16.mxu0 %v3060
      %4340 = vmatpush1.bf16.msra.mxu0 %v3059
      %4341 = vmatprep.subr.bf16.mxu0 %v3068
      %4342 = vmatpush1.bf16.msra.mxu0 %v3067
      %4343 = vmatprep.mubr.bf16.mxu0 %v846
      %4344 = vmatmul.mubr.bf16.gmra.mrb[0].mxu0 %v845
      %v4345 = vpop.f32.mrb[0].mxu0
      %v4346 = vadd.f32 %v1386, %v4345
      %v4347 = vpop.f32.mrb[0].mxu0
      %v4348 = vadd.f32 %v1390, %v4347
      %v4349 = vpop.f32.mrb[0].mxu0
      %v4350 = vadd.f32 %v1386, %v4349
      %v4351 = vpop.f32.mrb[0].mxu0
      %v4352 = vadd.f32 %v1390, %v4351
      %4353 = vdwg.mxu0
      %4354 = vmatprep.subr.bf16.mxu0 %v3076
      %4355 = vmatpush1.bf16.msra.mxu0 %v3075
      %4356 = vmatprep.subr.bf16.mxu0 %v3084
      %4357 = vmatpush1.bf16.msra.mxu0 %v3083
      %4358 = vmatprep.subr.bf16.mxu0 %v3092
      %4359 = vmatpush1.bf16.msra.mxu0 %v3091
      %4360 = vmatprep.subr.bf16.mxu0 %v3100
      %4361 = vmatpush1.bf16.msra.mxu0 %v3099
      %4362 = vmatprep.subr.bf16.mxu0 %v3108
      %4363 = vmatpush1.bf16.msra.mxu0 %v3107
      %4364 = vmatprep.subr.bf16.mxu0 %v3116
      %4365 = vmatpush1.bf16.msra.mxu0 %v3115
      %4366 = vmatprep.subr.bf16.mxu0 %v3124
      %4367 = vmatpush1.bf16.msra.mxu0 %v3123
      %4368 = vmatprep.subr.bf16.mxu0 %v3132
      %4369 = vmatpush1.bf16.msra.mxu0 %v3131
      %4370 = vmatprep.subr.bf16.mxu0 %v3140
      %4371 = vmatpush1.bf16.msra.mxu0 %v3139
      %4372 = vmatprep.subr.bf16.mxu0 %v3148
      %4373 = vmatpush1.bf16.msra.mxu0 %v3147
      %4374 = vmatprep.subr.bf16.mxu0 %v3156
      %4375 = vmatpush1.bf16.msra.mxu0 %v3155
      %4376 = vmatprep.subr.bf16.mxu0 %v3164
      %4377 = vmatpush1.bf16.msra.mxu0 %v3163
      %4378 = vmatprep.subr.bf16.mxu0 %v3172
      %4379 = vmatpush1.bf16.msra.mxu0 %v3171
      %4380 = vmatprep.subr.bf16.mxu0 %v3180
      %4381 = vmatpush1.bf16.msra.mxu0 %v3179
      %4382 = vmatprep.subr.bf16.mxu0 %v3188
      %4383 = vmatpush1.bf16.msra.mxu0 %v3187
      %4384 = vmatprep.subr.bf16.mxu0 %v3196
      %4385 = vmatpush1.bf16.msra.mxu0 %v3195
      %4386 = vmatprep.mubr.bf16.mxu0 %v848
      %4387 = vmatmul.mubr.bf16.gmra.mrb[0].mxu0 %v847
      %v4388 = vpop.f32.mrb[0].mxu0
      %v4389 = vadd.f32 %v4346, %v4388
      %v4390 = vpop.f32.mrb[0].mxu0
      %v4391 = vadd.f32 %v4348, %v4390
      %v4392 = vpop.f32.mrb[0].mxu0
      %v4393 = vadd.f32 %v4350, %v4392
      %v4394 = vpop.f32.mrb[0].mxu0
      %v4395 = vadd.f32 %v4352, %v4394
      %4396 = vdwg.mxu0
      %4397 = vmatprep.subr.bf16.mxu0 %v3204
      %4398 = vmatpush1.bf16.msra.mxu0 %v3203
      %4399 = vmatprep.subr.bf16.mxu0 %v3212
      %4400 = vmatpush1.bf16.msra.mxu0 %v3211
      %4401 = vmatprep.subr.bf16.mxu0 %v3220
      %4402 = vmatpush1.bf16.msra.mxu0 %v3219
      %4403 = vmatprep.subr.bf16.mxu0 %v3228
      %4404 = vmatpush1.bf16.msra.mxu0 %v3227
      %4405 = vmatprep.subr.bf16.mxu0 %v3236
      %4406 = vmatpush1.bf16.msra.mxu0 %v3235
      %4407 = vmatprep.subr.bf16.mxu0 %v3244
      %4408 = vmatpush1.bf16.msra.mxu0 %v3243
      %4409 = vmatprep.subr.bf16.mxu0 %v3252
      %4410 = vmatpush1.bf16.msra.mxu0 %v3251
      %4411 = vmatprep.subr.bf16.mxu0 %v3260
      %4412 = vmatpush1.bf16.msra.mxu0 %v3259
      %4413 = vmatprep.subr.bf16.mxu0 %v3268
      %4414 = vmatpush1.bf16.msra.mxu0 %v3267
      %4415 = vmatprep.subr.bf16.mxu0 %v3276
      %4416 = vmatpush1.bf16.msra.mxu0 %v3275
      %4417 = vmatprep.subr.bf16.mxu0 %v3284
      %4418 = vmatpush1.bf16.msra.mxu0 %v3283
      %4419 = vmatprep.subr.bf16.mxu0 %v3292
      %4420 = vmatpush1.bf16.msra.mxu0 %v3291
      %4421 = vmatprep.subr.bf16.mxu0 %v3300
      %4422 = vmatpush1.bf16.msra.mxu0 %v3299
      %4423 = vmatprep.subr.bf16.mxu0 %v3308
      %4424 = vmatpush1.bf16.msra.mxu0 %v3307
      %4425 = vmatprep.subr.bf16.mxu0 %v3316
      %4426 = vmatpush1.bf16.msra.mxu0 %v3315
      %4427 = vmatprep.subr.bf16.mxu0 %v3324
      %4428 = vmatpush1.bf16.msra.mxu0 %v3323
      %4429 = vmatprep.mubr.bf16.mxu0 %v850
      %4430 = vmatmul.mubr.bf16.gmra.mrb[0].mxu0 %v849
      %v4431 = vpop.f32.mrb[0].mxu0
      %v4432 = vadd.f32 %v4389, %v4431
      %v4433 = vpop.f32.mrb[0].mxu0
      %v4434 = vadd.f32 %v4391, %v4433
      %v4435 = vpop.f32.mrb[0].mxu0
      %v4436 = vadd.f32 %v4393, %v4435
      %v4437 = vpop.f32.mrb[0].mxu0
      %v4438 = vadd.f32 %v4395, %v4437
      %4439 = vdwg.mxu0
      %4440 = vmatprep.subr.bf16.mxu0 %v3332
      %4441 = vmatpush1.bf16.msra.mxu0 %v3331
      %4442 = vmatprep.subr.bf16.mxu0 %v3340
      %4443 = vmatpush1.bf16.msra.mxu0 %v3339
      %4444 = vmatprep.subr.bf16.mxu0 %v3348
      %4445 = vmatpush1.bf16.msra.mxu0 %v3347
      %4446 = vmatprep.subr.bf16.mxu0 %v3356
      %4447 = vmatpush1.bf16.msra.mxu0 %v3355
      %4448 = vmatprep.subr.bf16.mxu0 %v3364
      %4449 = vmatpush1.bf16.msra.mxu0 %v3363
      %4450 = vmatprep.subr.bf16.mxu0 %v3372
      %4451 = vmatpush1.bf16.msra.mxu0 %v3371
      %4452 = vmatprep.subr.bf16.mxu0 %v3380
      %4453 = vmatpush1.bf16.msra.mxu0 %v3379
      %4454 = vmatprep.subr.bf16.mxu0 %v3388
      %4455 = vmatpush1.bf16.msra.mxu0 %v3387
      %4456 = vmatprep.subr.bf16.mxu0 %v3396
      %4457 = vmatpush1.bf16.msra.mxu0 %v3395
      %4458 = vmatprep.subr.bf16.mxu0 %v3404
      %4459 = vmatpush1.bf16.msra.mxu0 %v3403
      %4460 = vmatprep.subr.bf16.mxu0 %v3412
      %4461 = vmatpush1.bf16.msra.mxu0 %v3411
      %4462 = vmatprep.subr.bf16.mxu0 %v3420
      %4463 = vmatpush1.bf16.msra.mxu0 %v3419
      %4464 = vmatprep.subr.bf16.mxu0 %v3428
      %4465 = vmatpush1.bf16.msra.mxu0 %v3427
      %4466 = vmatprep.subr.bf16.mxu0 %v3436
      %4467 = vmatpush1.bf16.msra.mxu0 %v3435
      %4468 = vmatprep.subr.bf16.mxu0 %v3444
      %4469 = vmatpush1.bf16.msra.mxu0 %v3443
      %4470 = vmatprep.subr.bf16.mxu0 %v3452
      %4471 = vmatpush1.bf16.msra.mxu0 %v3451
      %4472 = vmatprep.mubr.bf16.mxu0 %v852
      %4473 = vmatmul.mubr.bf16.gmra.mrb[0].mxu0 %v851
      %v4474 = vpop.f32.mrb[0].mxu0
      %v4475 = vadd.f32 %v4432, %v4474
      %v4476 = vpop.f32.mrb[0].mxu0
      %v4477 = vadd.f32 %v4434, %v4476
      %v4478 = vpop.f32.mrb[0].mxu0
      %v4479 = vadd.f32 %v4436, %v4478
      %v4480 = vpop.f32.mrb[0].mxu0
      %v4481 = vadd.f32 %v4438, %v4480
      %4482 = vdwg.mxu0
      %4483 = vmatprep.subr.bf16.mxu0 %v2950
      %4484 = vmatpush1.bf16.msra.mxu0 %v2949
      %4485 = vmatprep.subr.bf16.mxu0 %v2958
      %4486 = vmatpush1.bf16.msra.mxu0 %v2957
      %4487 = vmatprep.subr.bf16.mxu0 %v2966
      %4488 = vmatpush1.bf16.msra.mxu0 %v2965
      %4489 = vmatprep.subr.bf16.mxu0 %v2974
      %4490 = vmatpush1.bf16.msra.mxu0 %v2973
      %4491 = vmatprep.subr.bf16.mxu0 %v2982
      %4492 = vmatpush1.bf16.msra.mxu0 %v2981
      %4493 = vmatprep.subr.bf16.mxu0 %v2990
      %4494 = vmatpush1.bf16.msra.mxu0 %v2989
      %4495 = vmatprep.subr.bf16.mxu0 %v2998
      %4496 = vmatpush1.bf16.msra.mxu0 %v2997
      %4497 = vmatprep.subr.bf16.mxu0 %v3006
      %4498 = vmatpush1.bf16.msra.mxu0 %v3005
      %4499 = vmatprep.subr.bf16.mxu0 %v3014
      %4500 = vmatpush1.bf16.msra.mxu0 %v3013
      %4501 = vmatprep.subr.bf16.mxu0 %v3022
      %4502 = vmatpush1.bf16.msra.mxu0 %v3021
      %4503 = vmatprep.subr.bf16.mxu0 %v3030
      %4504 = vmatpush1.bf16.msra.mxu0 %v3029
      %4505 = vmatprep.subr.bf16.mxu0 %v3038
      %4506 = vmatpush1.bf16.msra.mxu0 %v3037
      %4507 = vmatprep.subr.bf16.mxu0 %v3046
      %4508 = vmatpush1.bf16.msra.mxu0 %v3045
      %4509 = vmatprep.subr.bf16.mxu0 %v3054
      %4510 = vmatpush1.bf16.msra.mxu0 %v3053
      %4511 = vmatprep.subr.bf16.mxu0 %v3062
      %4512 = vmatpush1.bf16.msra.mxu0 %v3061
      %4513 = vmatprep.subr.bf16.mxu0 %v3070
      %4514 = vmatpush1.bf16.msra.mxu0 %v3069
      %4515 = vmatprep.mubr.bf16.mxu0 %v846
      %4516 = vmatmul.mubr.bf16.gmra.mrb[0].mxu0 %v845
      %v4517 = vpop.f32.mrb[0].mxu0
      %v4518 = vadd.f32 %v1394, %v4517
      %v4519 = vpop.f32.mrb[0].mxu0
      %v4520 = vadd.f32 %v1398, %v4519
      %v4521 = vpop.f32.mrb[0].mxu0
      %v4522 = vadd.f32 %v1394, %v4521
      %v4523 = vpop.f32.mrb[0].mxu0
      %v4524 = vadd.f32 %v1398, %v4523
      %4525 = vdwg.mxu0
      %4526 = vmatprep.subr.bf16.mxu0 %v3078
      %4527 = vmatpush1.bf16.msra.mxu0 %v3077
      %4528 = vmatprep.subr.bf16.mxu0 %v3086
      %4529 = vmatpush1.bf16.msra.mxu0 %v3085
      %4530 = vmatprep.subr.bf16.mxu0 %v3094
      %4531 = vmatpush1.bf16.msra.mxu0 %v3093
      %4532 = vmatprep.subr.bf16.mxu0 %v3102
      %4533 = vmatpush1.bf16.msra.mxu0 %v3101
      %4534 = vmatprep.subr.bf16.mxu0 %v3110
      %4535 = vmatpush1.bf16.msra.mxu0 %v3109
      %4536 = vmatprep.subr.bf16.mxu0 %v3118
      %4537 = vmatpush1.bf16.msra.mxu0 %v3117
      %4538 = vmatprep.subr.bf16.mxu0 %v3126
      %4539 = vmatpush1.bf16.msra.mxu0 %v3125
      %4540 = vmatprep.subr.bf16.mxu0 %v3134
      %4541 = vmatpush1.bf16.msra.mxu0 %v3133
      %4542 = vmatprep.subr.bf16.mxu0 %v3142
      %4543 = vmatpush1.bf16.msra.mxu0 %v3141
      %4544 = vmatprep.subr.bf16.mxu0 %v3150
      %4545 = vmatpush1.bf16.msra.mxu0 %v3149
      %4546 = vmatprep.subr.bf16.mxu0 %v3158
      %4547 = vmatpush1.bf16.msra.mxu0 %v3157
      %4548 = vmatprep.subr.bf16.mxu0 %v3166
      %4549 = vmatpush1.bf16.msra.mxu0 %v3165
      %4550 = vmatprep.subr.bf16.mxu0 %v3174
      %4551 = vmatpush1.bf16.msra.mxu0 %v3173
      %4552 = vmatprep.subr.bf16.mxu0 %v3182
      %4553 = vmatpush1.bf16.msra.mxu0 %v3181
      %4554 = vmatprep.subr.bf16.mxu0 %v3190
      %4555 = vmatpush1.bf16.msra.mxu0 %v3189
      %4556 = vmatprep.subr.bf16.mxu0 %v3198
      %4557 = vmatpush1.bf16.msra.mxu0 %v3197
      %4558 = vmatprep.mubr.bf16.mxu0 %v848
      %4559 = vmatmul.mubr.bf16.gmra.mrb[0].mxu0 %v847
      %v4560 = vpop.f32.mrb[0].mxu0
      %v4561 = vadd.f32 %v4518, %v4560
      %v4562 = vpop.f32.mrb[0].mxu0
      %v4563 = vadd.f32 %v4520, %v4562
      %v4564 = vpop.f32.mrb[0].mxu0
      %v4565 = vadd.f32 %v4522, %v4564
      %v4566 = vpop.f32.mrb[0].mxu0
      %v4567 = vadd.f32 %v4524, %v4566
      %4568 = vdwg.mxu0
      %4569 = vmatprep.subr.bf16.mxu0 %v3206
      %4570 = vmatpush1.bf16.msra.mxu0 %v3205
      %4571 = vmatprep.subr.bf16.mxu0 %v3214
      %4572 = vmatpush1.bf16.msra.mxu0 %v3213
      %4573 = vmatprep.subr.bf16.mxu0 %v3222
      %4574 = vmatpush1.bf16.msra.mxu0 %v3221
      %4575 = vmatprep.subr.bf16.mxu0 %v3230
      %4576 = vmatpush1.bf16.msra.mxu0 %v3229
      %4577 = vmatprep.subr.bf16.mxu0 %v3238
      %4578 = vmatpush1.bf16.msra.mxu0 %v3237
      %4579 = vmatprep.subr.bf16.mxu0 %v3246
      %4580 = vmatpush1.bf16.msra.mxu0 %v3245
      %4581 = vmatprep.subr.bf16.mxu0 %v3254
      %4582 = vmatpush1.bf16.msra.mxu0 %v3253
      %4583 = vmatprep.subr.bf16.mxu0 %v3262
      %4584 = vmatpush1.bf16.msra.mxu0 %v3261
      %4585 = vmatprep.subr.bf16.mxu0 %v3270
      %4586 = vmatpush1.bf16.msra.mxu0 %v3269
      %4587 = vmatprep.subr.bf16.mxu0 %v3278
      %4588 = vmatpush1.bf16.msra.mxu0 %v3277
      %4589 = vmatprep.subr.bf16.mxu0 %v3286
      %4590 = vmatpush1.bf16.msra.mxu0 %v3285
      %4591 = vmatprep.subr.bf16.mxu0 %v3294
      %4592 = vmatpush1.bf16.msra.mxu0 %v3293
      %4593 = vmatprep.subr.bf16.mxu0 %v3302
      %4594 = vmatpush1.bf16.msra.mxu0 %v3301
      %4595 = vmatprep.subr.bf16.mxu0 %v3310
      %4596 = vmatpush1.bf16.msra.mxu0 %v3309
      %4597 = vmatprep.subr.bf16.mxu0 %v3318
      %4598 = vmatpush1.bf16.msra.mxu0 %v3317
      %4599 = vmatprep.subr.bf16.mxu0 %v3326
      %4600 = vmatpush1.bf16.msra.mxu0 %v3325
      %4601 = vmatprep.mubr.bf16.mxu0 %v850
      %4602 = vmatmul.mubr.bf16.gmra.mrb[0].mxu0 %v849
      %v4603 = vpop.f32.mrb[0].mxu0
      %v4604 = vadd.f32 %v4561, %v4603
      %v4605 = vpop.f32.mrb[0].mxu0
      %v4606 = vadd.f32 %v4563, %v4605
      %v4607 = vpop.f32.mrb[0].mxu0
      %v4608 = vadd.f32 %v4565, %v4607
      %v4609 = vpop.f32.mrb[0].mxu0
      %v4610 = vadd.f32 %v4567, %v4609
      %4611 = vdwg.mxu0
      %4612 = vmatprep.subr.bf16.mxu0 %v3334
      %4613 = vmatpush1.bf16.msra.mxu0 %v3333
      %4614 = vmatprep.subr.bf16.mxu0 %v3342
      %4615 = vmatpush1.bf16.msra.mxu0 %v3341
      %4616 = vmatprep.subr.bf16.mxu0 %v3350
      %4617 = vmatpush1.bf16.msra.mxu0 %v3349
      %4618 = vmatprep.subr.bf16.mxu0 %v3358
      %4619 = vmatpush1.bf16.msra.mxu0 %v3357
      %4620 = vmatprep.subr.bf16.mxu0 %v3366
      %4621 = vmatpush1.bf16.msra.mxu0 %v3365
      %4622 = vmatprep.subr.bf16.mxu0 %v3374
      %4623 = vmatpush1.bf16.msra.mxu0 %v3373
      %4624 = vmatprep.subr.bf16.mxu0 %v3382
      %4625 = vmatpush1.bf16.msra.mxu0 %v3381
      %4626 = vmatprep.subr.bf16.mxu0 %v3390
      %4627 = vmatpush1.bf16.msra.mxu0 %v3389
      %4628 = vmatprep.subr.bf16.mxu0 %v3398
      %4629 = vmatpush1.bf16.msra.mxu0 %v3397
      %4630 = vmatprep.subr.bf16.mxu0 %v3406
      %4631 = vmatpush1.bf16.msra.mxu0 %v3405
      %4632 = vmatprep.subr.bf16.mxu0 %v3414
      %4633 = vmatpush1.bf16.msra.mxu0 %v3413
      %4634 = vmatprep.subr.bf16.mxu0 %v3422
      %4635 = vmatpush1.bf16.msra.mxu0 %v3421
      %4636 = vmatprep.subr.bf16.mxu0 %v3430
      %4637 = vmatpush1.bf16.msra.mxu0 %v3429
      %4638 = vmatprep.subr.bf16.mxu0 %v3438
      %4639 = vmatpush1.bf16.msra.mxu0 %v3437
      %4640 = vmatprep.subr.bf16.mxu0 %v3446
      %4641 = vmatpush1.bf16.msra.mxu0 %v3445
      %4642 = vmatprep.subr.bf16.mxu0 %v3454
      %4643 = vmatpush1.bf16.msra.mxu0 %v3453
      %4644 = vmatprep.mubr.bf16.mxu0 %v852
      %4645 = vmatmul.mubr.bf16.gmra.mrb[0].mxu0 %v851
      %v4646 = vpop.f32.mrb[0].mxu0
      %v4647 = vadd.f32 %v4604, %v4646
      %v4648 = vpop.f32.mrb[0].mxu0
      %v4649 = vadd.f32 %v4606, %v4648
      %v4650 = vpop.f32.mrb[0].mxu0
      %v4651 = vadd.f32 %v4608, %v4650
      %v4652 = vpop.f32.mrb[0].mxu0
      %v4653 = vadd.f32 %v4610, %v4652
      %4654 = vdwg.mxu0
      %v4655 = vmax.f32 %v4131, 0.0
      %v4656 = vmax.f32 %v4133, 0.0
      %v4657 = vmax.f32 %v4303, 0.0
      %v4658 = vmax.f32 %v4305, 0.0
      %v4659 = vmax.f32 %v4475, 0.0
      %v4660 = vmax.f32 %v4477, 0.0
      %v4661 = vmax.f32 %v4647, 0.0
      %v4662 = vmax.f32 %v4649, 0.0
      %v4663 = vmax.f32 %v4135, 0.0
      %v4664 = vmax.f32 %v4137, 0.0
      %v4665 = vmax.f32 %v4307, 0.0
      %v4666 = vmax.f32 %v4309, 0.0
      %v4667 = vmax.f32 %v4479, 0.0
      %v4668 = vmax.f32 %v4481, 0.0
      %v4669 = vmax.f32 %v4651, 0.0
      %v4670 = vmax.f32 %v4653, 0.0
      %v4671 = vpack.c.bf16 %v4663, %v4655
      %v4672 = vpack.c.bf16 %v4664, %v4656
      %v4673 = vpack.c.bf16 %v4665, %v4657
      %v4674 = vpack.c.bf16 %v4666, %v4658
      %v4675 = vpack.c.bf16 %v4667, %v4659
      %v4676 = vpack.c.bf16 %v4668, %v4660
      %v4677 = vpack.c.bf16 %v4669, %v4661
      %v4678 = vpack.c.bf16 %v4670, %v4662
      %v4679 = vld [vmem:[#allocation12] sm:$0xf]
      %v4680 = vld [vmem:[#allocation12 + $0x4] sm:$0xf]
      %v4681 = vld [vmem:[#allocation12 + $0x8] sm:$0xf]
      %v4682 = vld [vmem:[#allocation12 + $0xc] sm:$0xf]
      %v4683 = vld [vmem:[#allocation12 + $0x10] sm:$0xf]
      %v4684 = vld [vmem:[#allocation12 + $0x14] sm:$0xf]
      %v4685 = vld [vmem:[#allocation12 + $0x18] sm:$0xf]
      %v4686 = vld [vmem:[#allocation12 + $0x1c] sm:$0xf]
      %v4687 = vld [vmem:[#allocation12 + $0x20] sm:$0xf]
      %v4688 = vld [vmem:[#allocation12 + $0x24] sm:$0xf]
      %v4689 = vld [vmem:[#allocation12 + $0x28] sm:$0xf]
      %v4690 = vld [vmem:[#allocation12 + $0x2c] sm:$0xf]
      %v4691 = vld [vmem:[#allocation12 + $0x30] sm:$0xf]
      %v4692 = vld [vmem:[#allocation12 + $0x34] sm:$0xf]
      %v4693 = vld [vmem:[#allocation12 + $0x38] sm:$0xf]
      %v4694 = vld [vmem:[#allocation12 + $0x3c] sm:$0xf]
      %v4695 = vld [vmem:[#allocation12 + $0x40] sm:$0xf]
      %v4696 = vld [vmem:[#allocation12 + $0x44] sm:$0xf]
      %v4697 = vld [vmem:[#allocation12 + $0x48] sm:$0xf]
      %v4698 = vld [vmem:[#allocation12 + $0x4c] sm:$0xf]
      %v4699 = vld [vmem:[#allocation12 + $0x50] sm:$0xf]
      %v4700 = vld [vmem:[#allocation12 + $0x54] sm:$0xf]
      %v4701 = vld [vmem:[#allocation12 + $0x58] sm:$0xf]
      %v4702 = vld [vmem:[#allocation12 + $0x5c] sm:$0xf]
      %v4703 = vld [vmem:[#allocation12 + $0x60] sm:$0xf]
      %v4704 = vld [vmem:[#allocation12 + $0x64] sm:$0xf]
      %v4705 = vld [vmem:[#allocation12 + $0x68] sm:$0xf]
      %v4706 = vld [vmem:[#allocation12 + $0x6c] sm:$0xf]
      %v4707 = vld [vmem:[#allocation12 + $0x70] sm:$0xf]
      %v4708 = vld [vmem:[#allocation12 + $0x74] sm:$0xf]
      %v4709 = vld [vmem:[#allocation12 + $0x78] sm:$0xf]
      %v4710 = vld [vmem:[#allocation12 + $0x7c] sm:$0xf]
      %v4711 = vld [vmem:[#allocation12 + $0x80] sm:$0xf]
      %v4712 = vld [vmem:[#allocation12 + $0x84] sm:$0xf]
      %v4713 = vld [vmem:[#allocation12 + $0x88] sm:$0xf]
      %v4714 = vld [vmem:[#allocation12 + $0x8c] sm:$0xf]
      %v4715 = vld [vmem:[#allocation12 + $0x90] sm:$0xf]
      %v4716 = vld [vmem:[#allocation12 + $0x94] sm:$0xf]
      %v4717 = vld [vmem:[#allocation12 + $0x98] sm:$0xf]
      %v4718 = vld [vmem:[#allocation12 + $0x9c] sm:$0xf]
      %v4719 = vld [vmem:[#allocation12 + $0xa0] sm:$0xf]
      %v4720 = vld [vmem:[#allocation12 + $0xa4] sm:$0xf]
      %v4721 = vld [vmem:[#allocation12 + $0xa8] sm:$0xf]
      %v4722 = vld [vmem:[#allocation12 + $0xac] sm:$0xf]
      %v4723 = vld [vmem:[#allocation12 + $0xb0] sm:$0xf]
      %v4724 = vld [vmem:[#allocation12 + $0xb4] sm:$0xf]
      %v4725 = vld [vmem:[#allocation12 + $0xb8] sm:$0xf]
      %v4726 = vld [vmem:[#allocation12 + $0xbc] sm:$0xf]
      %v4727 = vld [vmem:[#allocation12 + $0xc0] sm:$0xf]
      %v4728 = vld [vmem:[#allocation12 + $0xc4] sm:$0xf]
      %v4729 = vld [vmem:[#allocation12 + $0xc8] sm:$0xf]
      %v4730 = vld [vmem:[#allocation12 + $0xcc] sm:$0xf]
      %v4731 = vld [vmem:[#allocation12 + $0xd0] sm:$0xf]
      %v4732 = vld [vmem:[#allocation12 + $0xd4] sm:$0xf]
      %v4733 = vld [vmem:[#allocation12 + $0xd8] sm:$0xf]
      %v4734 = vld [vmem:[#allocation12 + $0xdc] sm:$0xf]
      %v4735 = vld [vmem:[#allocation12 + $0xe0] sm:$0xf]
      %v4736 = vld [vmem:[#allocation12 + $0xe4] sm:$0xf]
      %v4737 = vld [vmem:[#allocation12 + $0xe8] sm:$0xf]
      %v4738 = vld [vmem:[#allocation12 + $0xec] sm:$0xf]
      %v4739 = vld [vmem:[#allocation12 + $0xf0] sm:$0xf]
      %v4740 = vld [vmem:[#allocation12 + $0xf4] sm:$0xf]
      %v4741 = vld [vmem:[#allocation12 + $0xf8] sm:$0xf]
      %v4742 = vld [vmem:[#allocation12 + $0xfc] sm:$0xf]
      %v4743 = vld [vmem:[#allocation12 + $0x100] sm:$0xf]
      %v4744 = vld [vmem:[#allocation12 + $0x104] sm:$0xf]
      %v4745 = vld [vmem:[#allocation12 + $0x108] sm:$0xf]
      %v4746 = vld [vmem:[#allocation12 + $0x10c] sm:$0xf]
      %v4747 = vld [vmem:[#allocation12 + $0x110] sm:$0xf]
      %v4748 = vld [vmem:[#allocation12 + $0x114] sm:$0xf]
      %v4749 = vld [vmem:[#allocation12 + $0x118] sm:$0xf]
      %v4750 = vld [vmem:[#allocation12 + $0x11c] sm:$0xf]
      %v4751 = vld [vmem:[#allocation12 + $0x120] sm:$0xf]
      %v4752 = vld [vmem:[#allocation12 + $0x124] sm:$0xf]
      %v4753 = vld [vmem:[#allocation12 + $0x128] sm:$0xf]
      %v4754 = vld [vmem:[#allocation12 + $0x12c] sm:$0xf]
      %v4755 = vld [vmem:[#allocation12 + $0x130] sm:$0xf]
      %v4756 = vld [vmem:[#allocation12 + $0x134] sm:$0xf]
      %v4757 = vld [vmem:[#allocation12 + $0x138] sm:$0xf]
      %v4758 = vld [vmem:[#allocation12 + $0x13c] sm:$0xf]
      %v4759 = vld [vmem:[#allocation12 + $0x140] sm:$0xf]
      %v4760 = vld [vmem:[#allocation12 + $0x144] sm:$0xf]
      %v4761 = vld [vmem:[#allocation12 + $0x148] sm:$0xf]
      %v4762 = vld [vmem:[#allocation12 + $0x14c] sm:$0xf]
      %v4763 = vld [vmem:[#allocation12 + $0x150] sm:$0xf]
      %v4764 = vld [vmem:[#allocation12 + $0x154] sm:$0xf]
      %v4765 = vld [vmem:[#allocation12 + $0x158] sm:$0xf]
      %v4766 = vld [vmem:[#allocation12 + $0x15c] sm:$0xf]
      %v4767 = vld [vmem:[#allocation12 + $0x160] sm:$0xf]
      %v4768 = vld [vmem:[#allocation12 + $0x164] sm:$0xf]
      %v4769 = vld [vmem:[#allocation12 + $0x168] sm:$0xf]
      %v4770 = vld [vmem:[#allocation12 + $0x16c] sm:$0xf]
      %v4771 = vld [vmem:[#allocation12 + $0x170] sm:$0xf]
      %v4772 = vld [vmem:[#allocation12 + $0x174] sm:$0xf]
      %v4773 = vld [vmem:[#allocation12 + $0x178] sm:$0xf]
      %v4774 = vld [vmem:[#allocation12 + $0x17c] sm:$0xf]
      %v4775 = vld [vmem:[#allocation12 + $0x180] sm:$0xf]
      %v4776 = vld [vmem:[#allocation12 + $0x184] sm:$0xf]
      %v4777 = vld [vmem:[#allocation12 + $0x188] sm:$0xf]
      %v4778 = vld [vmem:[#allocation12 + $0x18c] sm:$0xf]
      %v4779 = vld [vmem:[#allocation12 + $0x190] sm:$0xf]
      %v4780 = vld [vmem:[#allocation12 + $0x194] sm:$0xf]
      %v4781 = vld [vmem:[#allocation12 + $0x198] sm:$0xf]
      %v4782 = vld [vmem:[#allocation12 + $0x19c] sm:$0xf]
      %v4783 = vld [vmem:[#allocation12 + $0x1a0] sm:$0xf]
      %v4784 = vld [vmem:[#allocation12 + $0x1a4] sm:$0xf]
      %v4785 = vld [vmem:[#allocation12 + $0x1a8] sm:$0xf]
      %v4786 = vld [vmem:[#allocation12 + $0x1ac] sm:$0xf]
      %v4787 = vld [vmem:[#allocation12 + $0x1b0] sm:$0xf]
      %v4788 = vld [vmem:[#allocation12 + $0x1b4] sm:$0xf]
      %v4789 = vld [vmem:[#allocation12 + $0x1b8] sm:$0xf]
      %v4790 = vld [vmem:[#allocation12 + $0x1bc] sm:$0xf]
      %v4791 = vld [vmem:[#allocation12 + $0x1c0] sm:$0xf]
      %v4792 = vld [vmem:[#allocation12 + $0x1c4] sm:$0xf]
      %v4793 = vld [vmem:[#allocation12 + $0x1c8] sm:$0xf]
      %v4794 = vld [vmem:[#allocation12 + $0x1cc] sm:$0xf]
      %v4795 = vld [vmem:[#allocation12 + $0x1d0] sm:$0xf]
      %v4796 = vld [vmem:[#allocation12 + $0x1d4] sm:$0xf]
      %v4797 = vld [vmem:[#allocation12 + $0x1d8] sm:$0xf]
      %v4798 = vld [vmem:[#allocation12 + $0x1dc] sm:$0xf]
      %v4799 = vld [vmem:[#allocation12 + $0x1e0] sm:$0xf]
      %v4800 = vld [vmem:[#allocation12 + $0x1e4] sm:$0xf]
      %v4801 = vld [vmem:[#allocation12 + $0x1e8] sm:$0xf]
      %v4802 = vld [vmem:[#allocation12 + $0x1ec] sm:$0xf]
      %v4803 = vld [vmem:[#allocation12 + $0x1f0] sm:$0xf]
      %v4804 = vld [vmem:[#allocation12 + $0x1f4] sm:$0xf]
      %v4805 = vld [vmem:[#allocation12 + $0x1f8] sm:$0xf]
      %v4806 = vld [vmem:[#allocation12 + $0x1fc] sm:$0xf]
      %v4807 = vld [vmem:[#allocation14] sm:$0x1]
      %v4809 = vlaneseq
      %v4810 = vshrl.u32 %v4809, 7
      %v4811 = vsub.s32 0, %v4810
      %v4812 = vrot.slane %v4807, %v4811
      %v4942 = vunpack.c.l.b16 %v4679
      %v4943 = vunpack.c.l.b16 %v4680
      %v4944 = vunpack.c.l.b16 %v4681
      %v4945 = vunpack.c.l.b16 %v4682
      %v4946 = vunpack.c.l.b16 %v4683
      %v4947 = vunpack.c.l.b16 %v4684
      %v4948 = vunpack.c.l.b16 %v4685
      %v4949 = vunpack.c.l.b16 %v4686
      %v4950 = vunpack.c.l.b16 %v4687
      %v4951 = vunpack.c.l.b16 %v4688
      %v4952 = vunpack.c.l.b16 %v4689
      %v4953 = vunpack.c.l.b16 %v4690
      %v4954 = vunpack.c.l.b16 %v4691
      %v4955 = vunpack.c.l.b16 %v4692
      %v4956 = vunpack.c.l.b16 %v4693
      %v4957 = vunpack.c.l.b16 %v4694
      %v4958 = vunpack.c.l.b16 %v4695
      %v4959 = vunpack.c.l.b16 %v4696
      %v4960 = vunpack.c.l.b16 %v4697
      %v4961 = vunpack.c.l.b16 %v4698
      %v4962 = vunpack.c.l.b16 %v4699
      %v4963 = vunpack.c.l.b16 %v4700
      %v4964 = vunpack.c.l.b16 %v4701
      %v4965 = vunpack.c.l.b16 %v4702
      %v4966 = vunpack.c.l.b16 %v4703
      %v4967 = vunpack.c.l.b16 %v4704
      %v4968 = vunpack.c.l.b16 %v4705
      %v4969 = vunpack.c.l.b16 %v4706
      %v4970 = vunpack.c.l.b16 %v4707
      %v4971 = vunpack.c.l.b16 %v4708
      %v4972 = vunpack.c.l.b16 %v4709
      %v4973 = vunpack.c.l.b16 %v4710
      %v4974 = vunpack.c.l.b16 %v4711
      %v4975 = vunpack.c.l.b16 %v4712
      %v4976 = vunpack.c.l.b16 %v4713
      %v4977 = vunpack.c.l.b16 %v4714
      %v4978 = vunpack.c.l.b16 %v4715
      %v4979 = vunpack.c.l.b16 %v4716
      %v4980 = vunpack.c.l.b16 %v4717
      %v4981 = vunpack.c.l.b16 %v4718
      %v4982 = vunpack.c.l.b16 %v4719
      %v4983 = vunpack.c.l.b16 %v4720
      %v4984 = vunpack.c.l.b16 %v4721
      %v4985 = vunpack.c.l.b16 %v4722
      %v4986 = vunpack.c.l.b16 %v4723
      %v4987 = vunpack.c.l.b16 %v4724
      %v4988 = vunpack.c.l.b16 %v4725
      %v4989 = vunpack.c.l.b16 %v4726
      %v4990 = vunpack.c.l.b16 %v4727
      %v4991 = vunpack.c.l.b16 %v4728
      %v4992 = vunpack.c.l.b16 %v4729
      %v4993 = vunpack.c.l.b16 %v4730
      %v4994 = vunpack.c.l.b16 %v4731
      %v4995 = vunpack.c.l.b16 %v4732
      %v4996 = vunpack.c.l.b16 %v4733
      %v4997 = vunpack.c.l.b16 %v4734
      %v4998 = vunpack.c.l.b16 %v4735
      %v4999 = vunpack.c.l.b16 %v4736
      %v5000 = vunpack.c.l.b16 %v4737
      %v5001 = vunpack.c.l.b16 %v4738
      %v5002 = vunpack.c.l.b16 %v4739
      %v5003 = vunpack.c.l.b16 %v4740
      %v5004 = vunpack.c.l.b16 %v4741
      %v5005 = vunpack.c.l.b16 %v4742
      %v5006 = vunpack.c.l.b16 %v4743
      %v5007 = vunpack.c.l.b16 %v4744
      %v5008 = vunpack.c.l.b16 %v4745
      %v5009 = vunpack.c.l.b16 %v4746
      %v5010 = vunpack.c.l.b16 %v4747
      %v5011 = vunpack.c.l.b16 %v4748
      %v5012 = vunpack.c.l.b16 %v4749
      %v5013 = vunpack.c.l.b16 %v4750
      %v5014 = vunpack.c.l.b16 %v4751
      %v5015 = vunpack.c.l.b16 %v4752
      %v5016 = vunpack.c.l.b16 %v4753
      %v5017 = vunpack.c.l.b16 %v4754
      %v5018 = vunpack.c.l.b16 %v4755
      %v5019 = vunpack.c.l.b16 %v4756
      %v5020 = vunpack.c.l.b16 %v4757
      %v5021 = vunpack.c.l.b16 %v4758
      %v5022 = vunpack.c.l.b16 %v4759
      %v5023 = vunpack.c.l.b16 %v4760
      %v5024 = vunpack.c.l.b16 %v4761
      %v5025 = vunpack.c.l.b16 %v4762
      %v5026 = vunpack.c.l.b16 %v4763
      %v5027 = vunpack.c.l.b16 %v4764
      %v5028 = vunpack.c.l.b16 %v4765
      %v5029 = vunpack.c.l.b16 %v4766
      %v5030 = vunpack.c.l.b16 %v4767
      %v5031 = vunpack.c.l.b16 %v4768
      %v5032 = vunpack.c.l.b16 %v4769
      %v5033 = vunpack.c.l.b16 %v4770
      %v5034 = vunpack.c.l.b16 %v4771
      %v5035 = vunpack.c.l.b16 %v4772
      %v5036 = vunpack.c.l.b16 %v4773
      %v5037 = vunpack.c.l.b16 %v4774
      %v5038 = vunpack.c.l.b16 %v4775
      %v5039 = vunpack.c.l.b16 %v4776
      %v5040 = vunpack.c.l.b16 %v4777
      %v5041 = vunpack.c.l.b16 %v4778
      %v5042 = vunpack.c.l.b16 %v4779
      %v5043 = vunpack.c.l.b16 %v4780
      %v5044 = vunpack.c.l.b16 %v4781
      %v5045 = vunpack.c.l.b16 %v4782
      %v5046 = vunpack.c.l.b16 %v4783
      %v5047 = vunpack.c.l.b16 %v4784
      %v5048 = vunpack.c.l.b16 %v4785
      %v5049 = vunpack.c.l.b16 %v4786
      %v5050 = vunpack.c.l.b16 %v4787
      %v5051 = vunpack.c.l.b16 %v4788
      %v5052 = vunpack.c.l.b16 %v4789
      %v5053 = vunpack.c.l.b16 %v4790
      %v5054 = vunpack.c.l.b16 %v4791
      %v5055 = vunpack.c.l.b16 %v4792
      %v5056 = vunpack.c.l.b16 %v4793
      %v5057 = vunpack.c.l.b16 %v4794
      %v5058 = vunpack.c.l.b16 %v4795
      %v5059 = vunpack.c.l.b16 %v4796
      %v5060 = vunpack.c.l.b16 %v4797
      %v5061 = vunpack.c.l.b16 %v4798
      %v5062 = vunpack.c.l.b16 %v4799
      %v5063 = vunpack.c.l.b16 %v4800
      %v5064 = vunpack.c.l.b16 %v4801
      %v5065 = vunpack.c.l.b16 %v4802
      %v5066 = vunpack.c.l.b16 %v4803
      %v5067 = vunpack.c.l.b16 %v4804
      %v5068 = vunpack.c.l.b16 %v4805
      %v5069 = vunpack.c.l.b16 %v4806
      %v5070 = vpack.c.b16 %v4943, %v4942
      %v5071 = vpack.c.b16 %v4945, %v4944
      %v5072 = vpack.c.b16 %v4947, %v4946
      %v5073 = vpack.c.b16 %v4949, %v4948
      %v5074 = vpack.c.b16 %v4951, %v4950
      %v5075 = vpack.c.b16 %v4953, %v4952
      %v5076 = vpack.c.b16 %v4955, %v4954
      %v5077 = vpack.c.b16 %v4957, %v4956
      %v5078 = vpack.c.b16 %v4959, %v4958
      %v5079 = vpack.c.b16 %v4961, %v4960
      %v5080 = vpack.c.b16 %v4963, %v4962
      %v5081 = vpack.c.b16 %v4965, %v4964
      %v5082 = vpack.c.b16 %v4967, %v4966
      %v5083 = vpack.c.b16 %v4969, %v4968
      %v5084 = vpack.c.b16 %v4971, %v4970
      %v5085 = vpack.c.b16 %v4973, %v4972
      %v5086 = vpack.c.b16 %v4975, %v4974
      %v5087 = vpack.c.b16 %v4977, %v4976
      %v5088 = vpack.c.b16 %v4979, %v4978
      %v5089 = vpack.c.b16 %v4981, %v4980
      %v5090 = vpack.c.b16 %v4983, %v4982
      %v5091 = vpack.c.b16 %v4985, %v4984
      %v5092 = vpack.c.b16 %v4987, %v4986
      %v5093 = vpack.c.b16 %v4989, %v4988
      %v5094 = vpack.c.b16 %v4991, %v4990
      %v5095 = vpack.c.b16 %v4993, %v4992
      %v5096 = vpack.c.b16 %v4995, %v4994
      %v5097 = vpack.c.b16 %v4997, %v4996
      %v5098 = vpack.c.b16 %v4999, %v4998
      %v5099 = vpack.c.b16 %v5001, %v5000
      %v5100 = vpack.c.b16 %v5003, %v5002
      %v5101 = vpack.c.b16 %v5005, %v5004
      %v5102 = vpack.c.b16 %v5007, %v5006
      %v5103 = vpack.c.b16 %v5009, %v5008
      %v5104 = vpack.c.b16 %v5011, %v5010
      %v5105 = vpack.c.b16 %v5013, %v5012
      %v5106 = vpack.c.b16 %v5015, %v5014
      %v5107 = vpack.c.b16 %v5017, %v5016
      %v5108 = vpack.c.b16 %v5019, %v5018
      %v5109 = vpack.c.b16 %v5021, %v5020
      %v5110 = vpack.c.b16 %v5023, %v5022
      %v5111 = vpack.c.b16 %v5025, %v5024
      %v5112 = vpack.c.b16 %v5027, %v5026
      %v5113 = vpack.c.b16 %v5029, %v5028
      %v5114 = vpack.c.b16 %v5031, %v5030
      %v5115 = vpack.c.b16 %v5033, %v5032
      %v5116 = vpack.c.b16 %v5035, %v5034
      %v5117 = vpack.c.b16 %v5037, %v5036
      %v5118 = vpack.c.b16 %v5039, %v5038
      %v5119 = vpack.c.b16 %v5041, %v5040
      %v5120 = vpack.c.b16 %v5043, %v5042
      %v5121 = vpack.c.b16 %v5045, %v5044
      %v5122 = vpack.c.b16 %v5047, %v5046
      %v5123 = vpack.c.b16 %v5049, %v5048
      %v5124 = vpack.c.b16 %v5051, %v5050
      %v5125 = vpack.c.b16 %v5053, %v5052
      %v5126 = vpack.c.b16 %v5055, %v5054
      %v5127 = vpack.c.b16 %v5057, %v5056
      %v5128 = vpack.c.b16 %v5059, %v5058
      %v5129 = vpack.c.b16 %v5061, %v5060
      %v5130 = vpack.c.b16 %v5063, %v5062
      %v5131 = vpack.c.b16 %v5065, %v5064
      %v5132 = vpack.c.b16 %v5067, %v5066
      %v5133 = vpack.c.b16 %v5069, %v5068
      %5198 = vmatprep.subr.bf16.mxu0 0
      %5199 = vmatpush1.bf16.msra.mxu0 %v5070
      %5200 = vmatprep.subr.bf16.mxu0 0
      %5201 = vmatpush1.bf16.msra.mxu0 %v5071
      %5202 = vmatprep.subr.bf16.mxu0 0
      %5203 = vmatpush1.bf16.msra.mxu0 %v5072
      %5204 = vmatprep.subr.bf16.mxu0 0
      %5205 = vmatpush1.bf16.msra.mxu0 %v5073
      %5206 = vmatprep.subr.bf16.mxu0 0
      %5207 = vmatpush1.bf16.msra.mxu0 %v5074
      %5208 = vmatprep.subr.bf16.mxu0 0
      %5209 = vmatpush1.bf16.msra.mxu0 %v5075
      %5210 = vmatprep.subr.bf16.mxu0 0
      %5211 = vmatpush1.bf16.msra.mxu0 %v5076
      %5212 = vmatprep.subr.bf16.mxu0 0
      %5213 = vmatpush1.bf16.msra.mxu0 %v5077
      %5214 = vmatprep.subr.bf16.mxu0 0
      %5215 = vmatpush1.bf16.msra.mxu0 %v5078
      %5216 = vmatprep.subr.bf16.mxu0 0
      %5217 = vmatpush1.bf16.msra.mxu0 %v5079
      %5218 = vmatprep.subr.bf16.mxu0 0
      %5219 = vmatpush1.bf16.msra.mxu0 %v5080
      %5220 = vmatprep.subr.bf16.mxu0 0
      %5221 = vmatpush1.bf16.msra.mxu0 %v5081
      %5222 = vmatprep.subr.bf16.mxu0 0
      %5223 = vmatpush1.bf16.msra.mxu0 %v5082
      %5224 = vmatprep.subr.bf16.mxu0 0
      %5225 = vmatpush1.bf16.msra.mxu0 %v5083
      %5226 = vmatprep.subr.bf16.mxu0 0
      %5227 = vmatpush1.bf16.msra.mxu0 %v5084
      %5228 = vmatprep.subr.bf16.mxu0 0
      %5229 = vmatpush1.bf16.msra.mxu0 %v5085
      %5230 = vmatprep.mubr.bf16.mxu0 %v4672
      %5231 = vmatmul.mubr.bf16.gmra.mrb[0].mxu0 %v4671
      %v5232 = vpop.f32.mrb[0].mxu0
      %v5233 = vadd.f32 %v4812, %v5232
      %v5234 = vpop.f32.mrb[0].mxu0
      %v5235 = vpop.f32.mrb[0].mxu0
      %v5236 = vadd.f32 %v4812, %v5235
      %v5237 = vpop.f32.mrb[0].mxu0
      %5238 = vdwg.mxu0
      %5239 = vmatprep.subr.bf16.mxu0 0
      %5240 = vmatpush1.bf16.msra.mxu0 %v5086
      %5241 = vmatprep.subr.bf16.mxu0 0
      %5242 = vmatpush1.bf16.msra.mxu0 %v5087
      %5243 = vmatprep.subr.bf16.mxu0 0
      %5244 = vmatpush1.bf16.msra.mxu0 %v5088
      %5245 = vmatprep.subr.bf16.mxu0 0
      %5246 = vmatpush1.bf16.msra.mxu0 %v5089
      %5247 = vmatprep.subr.bf16.mxu0 0
      %5248 = vmatpush1.bf16.msra.mxu0 %v5090
      %5249 = vmatprep.subr.bf16.mxu0 0
      %5250 = vmatpush1.bf16.msra.mxu0 %v5091
      %5251 = vmatprep.subr.bf16.mxu0 0
      %5252 = vmatpush1.bf16.msra.mxu0 %v5092
      %5253 = vmatprep.subr.bf16.mxu0 0
      %5254 = vmatpush1.bf16.msra.mxu0 %v5093
      %5255 = vmatprep.subr.bf16.mxu0 0
      %5256 = vmatpush1.bf16.msra.mxu0 %v5094
      %5257 = vmatprep.subr.bf16.mxu0 0
      %5258 = vmatpush1.bf16.msra.mxu0 %v5095
      %5259 = vmatprep.subr.bf16.mxu0 0
      %5260 = vmatpush1.bf16.msra.mxu0 %v5096
      %5261 = vmatprep.subr.bf16.mxu0 0
      %5262 = vmatpush1.bf16.msra.mxu0 %v5097
      %5263 = vmatprep.subr.bf16.mxu0 0
      %5264 = vmatpush1.bf16.msra.mxu0 %v5098
      %5265 = vmatprep.subr.bf16.mxu0 0
      %5266 = vmatpush1.bf16.msra.mxu0 %v5099
      %5267 = vmatprep.subr.bf16.mxu0 0
      %5268 = vmatpush1.bf16.msra.mxu0 %v5100
      %5269 = vmatprep.subr.bf16.mxu0 0
      %5270 = vmatpush1.bf16.msra.mxu0 %v5101
      %5271 = vmatprep.mubr.bf16.mxu0 %v4674
      %5272 = vmatmul.mubr.bf16.gmra.mrb[0].mxu0 %v4673
      %v5273 = vpop.f32.mrb[0].mxu0
      %v5274 = vadd.f32 %v5233, %v5273
      %v5275 = vpop.f32.mrb[0].mxu0
      %v5276 = vpop.f32.mrb[0].mxu0
      %v5277 = vadd.f32 %v5236, %v5276
      %v5278 = vpop.f32.mrb[0].mxu0
      %5279 = vdwg.mxu0
      %5280 = vmatprep.subr.bf16.mxu0 0
      %5281 = vmatpush1.bf16.msra.mxu0 %v5102
      %5282 = vmatprep.subr.bf16.mxu0 0
      %5283 = vmatpush1.bf16.msra.mxu0 %v5103
      %5284 = vmatprep.subr.bf16.mxu0 0
      %5285 = vmatpush1.bf16.msra.mxu0 %v5104
      %5286 = vmatprep.subr.bf16.mxu0 0
      %5287 = vmatpush1.bf16.msra.mxu0 %v5105
      %5288 = vmatprep.subr.bf16.mxu0 0
      %5289 = vmatpush1.bf16.msra.mxu0 %v5106
      %5290 = vmatprep.subr.bf16.mxu0 0
      %5291 = vmatpush1.bf16.msra.mxu0 %v5107
      %5292 = vmatprep.subr.bf16.mxu0 0
      %5293 = vmatpush1.bf16.msra.mxu0 %v5108
      %5294 = vmatprep.subr.bf16.mxu0 0
      %5295 = vmatpush1.bf16.msra.mxu0 %v5109
      %5296 = vmatprep.subr.bf16.mxu0 0
      %5297 = vmatpush1.bf16.msra.mxu0 %v5110
      %5298 = vmatprep.subr.bf16.mxu0 0
      %5299 = vmatpush1.bf16.msra.mxu0 %v5111
      %5300 = vmatprep.subr.bf16.mxu0 0
      %5301 = vmatpush1.bf16.msra.mxu0 %v5112
      %5302 = vmatprep.subr.bf16.mxu0 0
      %5303 = vmatpush1.bf16.msra.mxu0 %v5113
      %5304 = vmatprep.subr.bf16.mxu0 0
      %5305 = vmatpush1.bf16.msra.mxu0 %v5114
      %5306 = vmatprep.subr.bf16.mxu0 0
      %5307 = vmatpush1.bf16.msra.mxu0 %v5115
      %5308 = vmatprep.subr.bf16.mxu0 0
      %5309 = vmatpush1.bf16.msra.mxu0 %v5116
      %5310 = vmatprep.subr.bf16.mxu0 0
      %5311 = vmatpush1.bf16.msra.mxu0 %v5117
      %5312 = vmatprep.mubr.bf16.mxu0 %v4676
      %5313 = vmatmul.mubr.bf16.gmra.mrb[0].mxu0 %v4675
      %v5314 = vpop.f32.mrb[0].mxu0
      %v5315 = vadd.f32 %v5274, %v5314
      %v5316 = vpop.f32.mrb[0].mxu0
      %v5317 = vpop.f32.mrb[0].mxu0
      %v5318 = vadd.f32 %v5277, %v5317
      %v5319 = vpop.f32.mrb[0].mxu0
      %5320 = vdwg.mxu0
      %5321 = vmatprep.subr.bf16.mxu0 0
      %5322 = vmatpush1.bf16.msra.mxu0 %v5118
      %5323 = vmatprep.subr.bf16.mxu0 0
      %5324 = vmatpush1.bf16.msra.mxu0 %v5119
      %5325 = vmatprep.subr.bf16.mxu0 0
      %5326 = vmatpush1.bf16.msra.mxu0 %v5120
      %5327 = vmatprep.subr.bf16.mxu0 0
      %5328 = vmatpush1.bf16.msra.mxu0 %v5121
      %5329 = vmatprep.subr.bf16.mxu0 0
      %5330 = vmatpush1.bf16.msra.mxu0 %v5122
      %5331 = vmatprep.subr.bf16.mxu0 0
      %5332 = vmatpush1.bf16.msra.mxu0 %v5123
      %5333 = vmatprep.subr.bf16.mxu0 0
      %5334 = vmatpush1.bf16.msra.mxu0 %v5124
      %5335 = vmatprep.subr.bf16.mxu0 0
      %5336 = vmatpush1.bf16.msra.mxu0 %v5125
      %5337 = vmatprep.subr.bf16.mxu0 0
      %5338 = vmatpush1.bf16.msra.mxu0 %v5126
      %5339 = vmatprep.subr.bf16.mxu0 0
      %5340 = vmatpush1.bf16.msra.mxu0 %v5127
      %5341 = vmatprep.subr.bf16.mxu0 0
      %5342 = vmatpush1.bf16.msra.mxu0 %v5128
      %5343 = vmatprep.subr.bf16.mxu0 0
      %5344 = vmatpush1.bf16.msra.mxu0 %v5129
      %5345 = vmatprep.subr.bf16.mxu0 0
      %5346 = vmatpush1.bf16.msra.mxu0 %v5130
      %5347 = vmatprep.subr.bf16.mxu0 0
      %5348 = vmatpush1.bf16.msra.mxu0 %v5131
      %5349 = vmatprep.subr.bf16.mxu0 0
      %5350 = vmatpush1.bf16.msra.mxu0 %v5132
      %5351 = vmatprep.subr.bf16.mxu0 0
      %5352 = vmatpush1.bf16.msra.mxu0 %v5133
      %5353 = vmatprep.mubr.bf16.mxu0 %v4678
      %5354 = vmatmul.mubr.bf16.gmra.mrb[0].mxu0 %v4677
      %v5355 = vpop.f32.mrb[0].mxu0
      %v5356 = vadd.f32 %v5315, %v5355
      %v5357 = vpop.f32.mrb[0].mxu0
      %v5358 = vpop.f32.mrb[0].mxu0
      %v5359 = vadd.f32 %v5318, %v5358
      %v5360 = vpop.f32.mrb[0].mxu0
      %5361 = vdwg.mxu0
      %5362 = vst [vmem:[#allocation15] sm:$0xff] %v5356
      %5363 = vst [vmem:[#allocation15 + $0x8] sm:$0xff] %v5359
      %v5364 = vlaneseq
      %v5365 = vand.u32 %v5364, 127
      %vm5366 = vcmp.lt.s32.totalorder %v5365, 8
      %v5367 = vsel %vm5366, %v5356, -inf
      %v5368 = vsel %vm5366, %v5359, -inf
      %5369 = vmax.xlane.f32.xlu0 %v5367
      %v5370 = vpop.xlane.xlu0 %5369
      %5371 = vmax.xlane.f32.xlu0 %v5368
      %v5372 = vpop.xlane.xlu0 %5371
      %v5373 = vsub.f32 %v5367, %v5370
      %v5374 = vsub.f32 %v5368, %v5372
      %v5375 = vmul.f32 %v5373, 1.442695
      %v5376 = vpow.pop %v5375
      %v5377 = vmul.f32 %v5374, 1.442695
      %v5378 = vpow.pop %v5377
      %5379 = vadd.xlane.f32.xlu0 %v5376
      %v5380 = vpop.xlane.xlu0 %5379
      %5381 = vadd.xlane.f32.xlu0 %v5378
      %v5382 = vpop.xlane.xlu0 %5381
      %v5383 = vrcp.pop %v5380
      %v5384 = vrcp.pop %v5382
      %v5385 = vmul.f32 %v5376, %v5383
      %v5386 = vmul.f32 %v5378, %v5384
      %5387 = vst [vmem:[#allocation16] sm:$0xff] %v5385
      %5388 = vst [vmem:[#allocation16 + $0x8] sm:$0xff] %v5386
    $region65: #{tpu_custom_call.1} parent=1 // pred_fallthru
      _
    // Predicated region
    $region66: #{tpu_custom_call.1} parent=1 // pred_check
      _
    $region67: #{tpu_custom_call.1} parent=1 // pred_check_branch
      %5390 = sbr.rel (0) target = $region69
    $region68: #{tpu_custom_call.1} parent=1 // pred_region
      %s5392 = ssub.s32 256, 256
      %5393 = vsyncadd [#allocation5], %s5392
      %s5394 = sshll.u32 [#allocation15], 4
      %s5395 = int_to_ptr.vmem [resolvable:$true] %s5394
      %5400 = dma.vmem_to_hbm [thread:$0]  %s5395, 256, %s7, [#allocation5], 128, 128, 8
    $region69: #{tpu_custom_call.1} parent=1 // pred_fallthru
      _
    // Predicated region
    $region70: #{tpu_custom_call.1} parent=1 // pred_check
      _
    $region71: #{tpu_custom_call.1} parent=1 // pred_check_branch
      %5402 = sbr.rel (0) target = $region73
    $region72: #{tpu_custom_call.1} parent=1 // pred_region
      %s5404 = ssub.s32 256, 256
      %5405 = vsyncadd [#allocation17], %s5404
      %s5406 = sshll.u32 [#allocation16], 4
      %s5407 = int_to_ptr.vmem [resolvable:$true] %s5406
      %5412 = dma.vmem_to_hbm [thread:$0]  %s5407, 256, %s8, [#allocation17], 128, 128, 8
    $region73: #{tpu_custom_call.1} parent=1 // pred_fallthru
      _
    // Predicated region
    $region74: #{tpu_custom_call.1} parent=1 // pred_check
      _
    $region75: #{tpu_custom_call.1} parent=1 // pred_check_branch
      %5414 = sbr.rel (0) target = $region77
    $region76: #{tpu_custom_call.1} parent=1 // pred_region
      %5415 = dma.done [#allocation5], 256
    $region77: #{tpu_custom_call.1} parent=1 // pred_fallthru
      _
    // Predicated region
    $region78: #{tpu_custom_call.1} parent=1 // pred_check
      _
    $region79: #{tpu_custom_call.1} parent=1 // pred_check_branch
      %5417 = sbr.rel (0) target = $region81
    $region80: #{tpu_custom_call.1} parent=1 // pred_region
      %5418 = dma.done [#allocation17], 256
    $region81: #{tpu_custom_call.1} parent=1 // pred_fallthru
      _
    %5419 = vsyncpa [#allocation4], 1
    %5420 = vsyncpa [#allocation7], 1
    %5421 = vsyncpa [#allocation10], 1
    %5422 = vsyncpa [#allocation13], 1
    %5423 = vsyncpa [#allocation5], 1
    %5424 = vsyncpa [#allocation17], 1

</llo_original>
